<compile_context>
chip_gen: v6e
topology: v6e:2x2x1
jax: 0.10.0
libtpu: 0.0.40
codegen_flags: <defaults>
</compile_context>

<pallas_src>
import math
import functools

import jax
import jax.numpy as jnp
from jax.experimental import pallas as pl
from jax.experimental.pallas import tpu as pltpu


# ----------------------------- in-kernel helpers -----------------------------

def _erf(x):
    # Abramowitz & Stegun 7.1.26 rational approximation (|err| < 1.5e-7) so
    # exact (erf-based) nn.GELU semantics lower on every Mosaic version.
    a1, a2, a3, a4, a5 = 0.254829592, -0.284496736, 1.421413741, -1.453152027, 1.061405429
    p = 0.3275911
    s = jnp.where(x >= 0.0, 1.0, -1.0)
    z = jnp.abs(x)
    t = 1.0 / (1.0 + p * z)
    poly = ((((a5 * t + a4) * t + a3) * t + a2) * t + a1) * t
    return s * (1.0 - poly * jnp.exp(-z * z))


def _gelu_exact(x):
    return 0.5 * x * (1.0 + _erf(x / math.sqrt(2.0)))


def _layernorm(x, gamma, beta, eps=1e-5):
    mu = jnp.mean(x, axis=-1, keepdims=True)
    var = jnp.mean((x - mu) ** 2, axis=-1, keepdims=True)
    return (x - mu) * jax.lax.rsqrt(var + eps) * gamma + beta


def _softmax(x):
    m = jnp.max(x, axis=-1, keepdims=True)
    e = jnp.exp(x - m)
    return e / jnp.sum(e, axis=-1, keepdims=True)


# --------------------------------- fused kernel -------------------------------

def discriminator_kernel(
        patches_ref, wp_ref, addend_ref,
        l_wm_ref, l_w2_ref, l_vec_ref,
        g_wm_ref, g_w2_ref, g_vec_ref,
        head_ln_ref, head_w_ref, head_b_ref,
        o_ref,
        *, batch, n_tok, num_heads, emb, depth_local, depth_global):

    bf16 = jnp.bfloat16
    d_head = emb // num_heads
    branch = pl.program_id(0)        # 0 -> local stack+head, 1 -> global

    # --- patch embedding on the whole (B*n_tok, patch_dim) slab.
    # cls rows are zero rows in `patches` (so proj is 0 there); `addend` holds
    # cls+pos[0] on cls rows and bias+pos[1:] on patch rows -> no concatenates.
    proj = jnp.dot(patches_ref[...].astype(bf16), wp_ref[...],
                   preferred_element_type=jnp.float32)
    tokens = proj + addend_ref[...]                         # (B*n_tok, E) f32

    def encoder_layer(x, wm, w2, vec):
        # wm : (E, 9E) bf16 = [wqkv(3E) | pad(E) | w1(4E) | wo(E)]  (wq pre-scaled)
        # vec: (4, 4E) f32  = [[g1|b1|g2|b2], [bq*s|bk|bv|bo], [bb1], [bb2|0]]
        wqkv = wm[:, 0:3 * emb]
        w1m = wm[:, 4 * emb:8 * emb]
        wom = wm[:, 8 * emb:9 * emb]
        g1 = vec[0:1, 0:emb]
        b1 = vec[0:1, emb:2 * emb]
        g2 = vec[0:1, 2 * emb:3 * emb]
        b2 = vec[0:1, 3 * emb:4 * emb]
        bqkv = vec[1:2, 0:3 * emb]
        bo = vec[1:2, 3 * emb:4 * emb]
        bb1 = vec[2:3, :]
        bb2 = vec[3:4, 0:emb]

        # ---- sublayer 1: x + MHA(LN(x))   (fused QKV, batched attention)
        h = _layernorm(x, g1, b1)
        qkv = jnp.dot(h.astype(bf16), wqkv,
                      preferred_element_type=jnp.float32) + bqkv      # (M, 3E)
        qkv3 = qkv.reshape(batch, n_tok, 3 * emb).astype(bf16)        # (B, N, 3E)
        ctx_heads = []
        for hd in range(num_heads):                                   # static, small
            c0 = hd * d_head
            qh = qkv3[:, :, c0:c0 + d_head]
            kh = qkv3[:, :, emb + c0:emb + c0 + d_head]
            vh = qkv3[:, :, 2 * emb + c0:2 * emb + c0 + d_head]
            energy = jnp.einsum("bqd,bkd->bqk", qh, kh,
                                preferred_element_type=jnp.float32)
            att = _softmax(energy)                # scale already folded into wq/bq
            ctx_heads.append(jnp.einsum("bqk,bkd->bqd", att.astype(bf16), vh,
                                        preferred_element_type=jnp.float32))
        ctx = jnp.concatenate(ctx_heads, axis=-1).reshape(batch * n_tok, emb)
        x = x + jnp.dot(ctx.astype(bf16), wom,
                        preferred_element_type=jnp.float32) + bo

        # ---- sublayer 2: x + FFN(LN(x))
        h2 = _layernorm(x, g2, b2)
        f = _gelu_exact(jnp.dot(h2.astype(bf16), w1m,
                                preferred_element_type=jnp.float32) + bb1)
        x = x + jnp.dot(f.astype(bf16), w2,
                        preferred_element_type=jnp.float32) + bb2
        return x

    def class_head(x, hi):
        # Reduce 'b n e -> b e' (mean) -> LayerNorm -> Linear
        m = jnp.mean(x.reshape(batch, n_tok, emb), axis=1)            # (B, E)
        hln = head_ln_ref[hi]                                         # (2, E)
        hn = _layernorm(m, hln[0:1, :], hln[1:2, :])
        return jnp.dot(hn, head_w_ref[hi],
                       preferred_element_type=jnp.float32) + head_b_ref[hi]

    @pl.when(branch == 0)
    def _():
        x = tokens
        for di in range(depth_local):          # depth 1-2 -> keep static unroll
            x = encoder_layer(x, l_wm_ref[di], l_w2_ref[di], l_vec_ref[di])
        res = class_head(x, 0)
        o_ref[...] = res.reshape((1,) + res.shape).astype(o_ref.dtype)

    @pl.when(branch == 1)
    def _():
        x = tokens
        for di in range(depth_global):
            x = encoder_layer(x, g_wm_ref[di], g_w2_ref[di], g_vec_ref[di])
        res = class_head(x, 1)
        o_ref[...] = res.reshape((1,) + res.shape).astype(o_ref.dtype)


# ------------------------------ pallas_call wrapper ----------------------------

def discriminator_forward(x, params, patch_size, num_heads):
    # x: NCHW (B, C, 1, L).  einops 'b c (h s1) (w s2) -> b (h w) (s1 s2 c)', s1=1.
    B, C, H, W = x.shape
    n_w = W // patch_size
    n_patch = H * n_w
    patch_dim = patch_size * C
    pos = params["pos"]
    n_tok, emb = pos.shape
    assert n_tok == n_patch + 1
    n_classes = params["head_local"]["w"].shape[-1]
    depth_local = len(params["local_blocks"])
    depth_global = len(params["global_blocks"])
    M = B * n_tok
    scale = 1.0 / math.sqrt(emb)     # PyTorch ref: softmax(q.k / sqrt(emb_size))
    f32 = jnp.float32

    # ---------------- host-side layout plumbing (no in-kernel concats) --------
    p = x.reshape(B, C, H, 1, n_w, patch_size)
    p = jnp.transpose(p, (0, 2, 4, 3, 5, 1))               # b h w s1 s2 c
    patches = p.reshape(B, n_patch, patch_dim)
    padded = jnp.concatenate(                               # zero row at cls slot
        [jnp.zeros((B, 1, patch_dim), patches.dtype), patches], axis=1
    ).reshape(M, patch_dim)
    add_one = jnp.concatenate(                              # (n_tok, E)
        [params["cls"] + pos[0:1], params["bp"] + pos[1:]], axis=0)
    addend = jnp.tile(add_one, (B, 1)).astype(f32)          # (M, E)

    def pack_stack(blocks):
        wms, w2s, vecs = [], [], []
        zpad = jnp.zeros((emb, emb), f32)
        for blk in blocks:
            wqkv = jnp.concatenate([blk["wq"] * scale, blk["wk"], blk["wv"]], axis=1)
            wms.append(jnp.concatenate([wqkv, zpad, blk["w1"], blk["wo"]], axis=1))
            w2s.append(blk["w2"])
            row0 = jnp.concatenate([blk["g1"], blk["be1"], blk["g2"], blk["be2"]], axis=1)
            row1 = jnp.concatenate([blk["bq"] * scale, blk["bk"], blk["bv"], blk["bo"]], axis=1)
            row2 = blk["bb1"]
            row3 = jnp.concatenate([blk["bb2"], jnp.zeros((1, 3 * emb), f32)], axis=1)
            vecs.append(jnp.concatenate([row0, row1, row2, row3], axis=0))
        return (jnp.stack(wms).astype(jnp.bfloat16),        # (depth, E, 9E)
                jnp.stack(w2s).astype(jnp.bfloat16),        # (depth, 4E, E)
                jnp.stack(vecs).astype(f32))                # (depth, 4, 4E)

    l_wm, l_w2, l_vec = pack_stack(params["local_blocks"])
    g_wm, g_w2, g_vec = pack_stack(params["global_blocks"])

    head_ln = jnp.stack([
        jnp.concatenate([params["head_local"]["g"], params["head_local"]["b"]], axis=0),
        jnp.concatenate([params["head_global"]["g"], params["head_global"]["b"]], axis=0)])
    head_w = jnp.stack([params["head_local"]["w"], params["head_global"]["w"]])
    head_b = jnp.stack([params["head_local"]["bias"], params["head_global"]["bias"]])
    wp = params["wp"].astype(jnp.bfloat16)

    kern = functools.partial(
        discriminator_kernel, batch=B, n_tok=n_tok, num_heads=num_heads,
        emb=emb, depth_local=depth_local, depth_global=depth_global)

    def full_spec(arr):
        shp = arr.shape
        return pl.BlockSpec(shp, lambda br: (0,) * len(shp))

    operands = (padded, wp, addend, l_wm, l_w2, l_vec,
                g_wm, g_w2, g_vec, head_ln, head_w, head_b)

    both = pl.pallas_call(
        kern,
        grid=(2,),                       # branch axis: local / global
        in_specs=[full_spec(a) for a in operands],
        out_specs=pl.BlockSpec((1, B, n_classes), lambda br: (br, 0, 0)),
        out_shape=jax.ShapeDtypeStruct((2, B, n_classes), jnp.float32),
        compiler_params=pltpu.CompilerParams(
            dimension_semantics=("parallel",),   # 2 TensorCores on v7x
            vmem_limit_bytes=32 * 1024 * 1024),
    )(*operands)

    return 0.5 * (both[0] + both[1])


# ------------------------------ parameter setup --------------------------------

def _linear_init(key, in_dim, out_dim):
    # nn.Linear default init U(-1/sqrt(in), 1/sqrt(in)); weight stored
    # PRE-TRANSPOSED as (in, out) so the in-kernel linear is `x @ w + b`.
    k1, k2 = jax.random.split(key)
    bound = 1.0 / math.sqrt(in_dim)
    w = jax.random.uniform(k1, (in_dim, out_dim), jnp.float32, -bound, bound)
    b = jax.random.uniform(k2, (1, out_dim), jnp.float32, -bound, bound)
    return w, b


def _make_block_params(key, emb, expansion=4):
    ks = jax.random.split(key, 6)
    wq, bq = _linear_init(ks[0], emb, emb)
    wk, bk = _linear_init(ks[1], emb, emb)
    wv, bv = _linear_init(ks[2], emb, emb)
    wo, bo = _linear_init(ks[3], emb, emb)
    w1, bb1 = _linear_init(ks[4], emb, expansion * emb)
    w2, bb2 = _linear_init(ks[5], expansion * emb, emb)
    ones = jnp.ones((1, emb), jnp.float32)
    zeros = jnp.zeros((1, emb), jnp.float32)
    return dict(g1=ones, be1=zeros, wq=wq, bq=bq, wk=wk, bk=bk, wv=wv, bv=bv,
                wo=wo, bo=bo, g2=ones, be2=zeros, w1=w1, bb1=bb1, w2=w2, bb2=bb2)


def _make_head_params(key, emb, n_classes):
    w, bias = _linear_init(key, emb, n_classes)
    return dict(g=jnp.ones((1, emb), jnp.float32), b=jnp.zeros((1, emb), jnp.float32),
                w=w, bias=bias)


def make_discriminator_params(key, in_channels, patch_size, emb_size, seq_length,
                              depth, n_classes):
    n_tok = seq_length // patch_size + 1
    keys = jax.random.split(key, 5)
    wp, bp = _linear_init(keys[0], patch_size * in_channels, emb_size)
    cls_tok = jax.random.normal(keys[1], (1, emb_size), jnp.float32)
    pos = jax.random.normal(keys[2], (n_tok, emb_size), jnp.float32)

    depth_local = max(1, depth // 2)
    kl = jax.random.split(keys[3], depth_local + 1)
    kg = jax.random.split(keys[4], depth + 1)
    local_blocks = [_make_block_params(kl[i], emb_size) for i in range(depth_local)]
    global_blocks = [_make_block_params(kg[i], emb_size) for i in range(depth)]
    head_local = _make_head_params(kl[-1], emb_size, n_classes)
    head_global = _make_head_params(kg[-1], emb_size, n_classes)
    return dict(wp=wp, bp=bp, cls=cls_tok, pos=pos,
                local_blocks=local_blocks, global_blocks=global_blocks,
                head_local=head_local, head_global=head_global)


# ----------------------------------- main ---------------------------------------

if __name__ == "__main__":
    # Small, consistent shapes: seq_length divisible by patch_size, emb divisible by heads.
    B, C = 2, 1
    patch_size = 8
    seq_length = 64
    emb_size = 32
    depth = 2
    n_classes = 1
    num_heads = 4

    key = jax.random.PRNGKey(0)
    kx, kp = jax.random.split(key)
    x = jax.random.normal(kx, (B, C, 1, seq_length), jnp.float32)

    params = make_discriminator_params(kp, C, patch_size, emb_size, seq_length,
                                       depth, n_classes)

    out = discriminator_forward(x, params, patch_size, num_heads)
    out = jax.block_until_ready(out)
    assert out.shape == (B, n_classes)
    print("KERNEL_OK")
</pallas_src>

<mosaic_0001>
module attributes {stable_mosaic.version = 11 : i64} {
  func.func @discriminator_kernel(%arg0: i32, %arg1: memref<18x8xf32, #tpu.memory_space<vmem>>, %arg2: memref<8x32xbf16, #tpu.memory_space<vmem>>, %arg3: memref<18x32xf32, #tpu.memory_space<vmem>>, %arg4: memref<1x32x288xbf16, #tpu.memory_space<vmem>>, %arg5: memref<1x128x32xbf16, #tpu.memory_space<vmem>>, %arg6: memref<1x4x128xf32, #tpu.memory_space<vmem>>, %arg7: memref<2x32x288xbf16, #tpu.memory_space<vmem>>, %arg8: memref<2x128x32xbf16, #tpu.memory_space<vmem>>, %arg9: memref<2x4x128xf32, #tpu.memory_space<vmem>>, %arg10: memref<2x2x32xf32, #tpu.memory_space<vmem>>, %arg11: memref<2x32x1xf32, #tpu.memory_space<vmem>>, %arg12: memref<2x1x1xf32, #tpu.memory_space<vmem>>, %arg13: memref<1x2x1xf32, #tpu.memory_space<vmem>>) attributes {dimension_semantics = [#tpu.dimension_semantics<parallel>], iteration_bounds = array<i64: 2>, scalar_prefetch = 0 : i64, scratch_operands = 0 : i64, tpu.core_type = #tpu.core_type<tc>, window_params = [{pipeline_mode = #tpu.pipeline_mode<synchronous>, transform_indices = @transform_0, window_bounds = array<i64: 18, 8>}, {pipeline_mode = #tpu.pipeline_mode<synchronous>, transform_indices = @transform_1, window_bounds = array<i64: 8, 32>}, {pipeline_mode = #tpu.pipeline_mode<synchronous>, transform_indices = @transform_2, window_bounds = array<i64: 18, 32>}, {pipeline_mode = #tpu.pipeline_mode<synchronous>, transform_indices = @transform_3, window_bounds = array<i64: 1, 32, 288>}, {pipeline_mode = #tpu.pipeline_mode<synchronous>, transform_indices = @transform_4, window_bounds = array<i64: 1, 128, 32>}, {pipeline_mode = #tpu.pipeline_mode<synchronous>, transform_indices = @transform_5, window_bounds = array<i64: 1, 4, 128>}, {pipeline_mode = #tpu.pipeline_mode<synchronous>, transform_indices = @transform_6, window_bounds = array<i64: 2, 32, 288>}, {pipeline_mode = #tpu.pipeline_mode<synchronous>, transform_indices = @transform_7, window_bounds = array<i64: 2, 128, 32>}, {pipeline_mode = #tpu.pipeline_mode<synchronous>, transform_indices = @transform_8, window_bounds = array<i64: 2, 4, 128>}, {pipeline_mode = #tpu.pipeline_mode<synchronous>, transform_indices = @transform_9, window_bounds = array<i64: 2, 2, 32>}, {pipeline_mode = #tpu.pipeline_mode<synchronous>, transform_indices = @transform_10, window_bounds = array<i64: 2, 32, 1>}, {pipeline_mode = #tpu.pipeline_mode<synchronous>, transform_indices = @transform_11, window_bounds = array<i64: 2, 1, 1>}, {transform_indices = @transform_12, window_bounds = array<i64: 1, 2, 1>}]} {
    %c0 = arith.constant 0 : index
    %c0_0 = arith.constant 0 : index
    %0 = vector.load %arg1[%c0, %c0_0] : memref<18x8xf32, #tpu.memory_space<vmem>>, vector<18x8xf32>
    %1 = arith.truncf %0 : vector<18x8xf32> to vector<18x8xbf16>
    %c0_1 = arith.constant 0 : index
    %c0_2 = arith.constant 0 : index
    %2 = vector.load %arg2[%c0_1, %c0_2] : memref<8x32xbf16, #tpu.memory_space<vmem>>, vector<8x32xbf16>
    %cst = arith.constant dense<0.000000e+00> : vector<18x32xf32>
    %3 = tpu.matmul %1, %2, %cst {dimension_numbers = #tpu.dot_dimension_numbers<[1], [0], [0], [1], [0, 0, 1, 1], [], []>} : vector<18x8xbf16>, vector<8x32xbf16>, vector<18x32xf32> -> vector<18x32xf32>
    %c0_3 = arith.constant 0 : index
    %c0_4 = arith.constant 0 : index
    %4 = vector.load %arg3[%c0_3, %c0_4] : memref<18x32xf32, #tpu.memory_space<vmem>>, vector<18x32xf32>
    %5 = arith.addf %3, %4 : vector<18x32xf32>
    %c0_i32 = arith.constant 0 : i32
    %6 = arith.cmpi eq, %arg0, %c0_i32 : i32
    %7 = arith.extui %6 : i1 to i32
    %c0_i32_5 = arith.constant 0 : i32
    %8 = arith.cmpi ne, %7, %c0_i32_5 : i32
    scf.if %8 {
      %c0_7 = arith.constant 0 : index
      %c0_8 = arith.constant 0 : index
      %c0_9 = arith.constant 0 : index
      %12 = vector.load %arg4[%c0_7, %c0_8, %c0_9] : memref<1x32x288xbf16, #tpu.memory_space<vmem>>, vector<1x32x288xbf16>
      %13 = vector.shape_cast %12 : vector<1x32x288xbf16> to vector<32x288xbf16>
      %c0_10 = arith.constant 0 : index
      %c0_11 = arith.constant 0 : index
      %c0_12 = arith.constant 0 : index
      %14 = vector.load %arg5[%c0_10, %c0_11, %c0_12] : memref<1x128x32xbf16, #tpu.memory_space<vmem>>, vector<1x128x32xbf16>
      %15 = vector.shape_cast %14 : vector<1x128x32xbf16> to vector<128x32xbf16>
      %c0_13 = arith.constant 0 : index
      %c0_14 = arith.constant 0 : index
      %c0_15 = arith.constant 0 : index
      %16 = vector.load %arg6[%c0_13, %c0_14, %c0_15] : memref<1x4x128xf32, #tpu.memory_space<vmem>>, vector<1x4x128xf32>
      %17 = vector.shape_cast %16 : vector<1x4x128xf32> to vector<4x128xf32>
      %18 = vector.extract_strided_slice %13 {offsets = [0, 0], sizes = [32, 96], strides = [1, 1]} : vector<32x288xbf16> to vector<32x96xbf16>
      %19 = vector.extract_strided_slice %13 {offsets = [0, 128], sizes = [32, 128], strides = [1, 1]} : vector<32x288xbf16> to vector<32x128xbf16>
      %20 = vector.extract_strided_slice %13 {offsets = [0, 256], sizes = [32, 32], strides = [1, 1]} : vector<32x288xbf16> to vector<32x32xbf16>
      %21 = vector.extract_strided_slice %17 {offsets = [0, 0], sizes = [1, 32], strides = [1, 1]} : vector<4x128xf32> to vector<1x32xf32>
      %22 = vector.extract_strided_slice %17 {offsets = [0, 32], sizes = [1, 32], strides = [1, 1]} : vector<4x128xf32> to vector<1x32xf32>
      %23 = vector.extract_strided_slice %17 {offsets = [0, 64], sizes = [1, 32], strides = [1, 1]} : vector<4x128xf32> to vector<1x32xf32>
      %24 = vector.extract_strided_slice %17 {offsets = [0, 96], sizes = [1, 32], strides = [1, 1]} : vector<4x128xf32> to vector<1x32xf32>
      %25 = vector.extract_strided_slice %17 {offsets = [1, 0], sizes = [1, 96], strides = [1, 1]} : vector<4x128xf32> to vector<1x96xf32>
      %26 = vector.extract_strided_slice %17 {offsets = [1, 96], sizes = [1, 32], strides = [1, 1]} : vector<4x128xf32> to vector<1x32xf32>
      %27 = vector.extract_strided_slice %17 {offsets = [2, 0], sizes = [1, 128], strides = [1, 1]} : vector<4x128xf32> to vector<1x128xf32>
      %28 = vector.extract_strided_slice %17 {offsets = [3, 0], sizes = [1, 32], strides = [1, 1]} : vector<4x128xf32> to vector<1x32xf32>
      %cst_16 = arith.constant dense<0.000000e+00> : vector<18xf32>
      %29 = vector.multi_reduction <add>, %5, %cst_16 [1] : vector<18x32xf32> to vector<18xf32>
      %30 = vector.shape_cast %29 : vector<18xf32> to vector<18x1xf32>
      %cst_17 = arith.constant 3.200000e+01 : f32
      %31 = vector.broadcast %cst_17 : f32 to vector<18x1xf32>
      %32 = arith.divf %30, %31 : vector<18x1xf32>
      %33 = vector.broadcast %32 : vector<18x1xf32> to vector<18x32xf32>
      %34 = arith.subf %5, %33 : vector<18x32xf32>
      %35 = arith.mulf %34, %34 : vector<18x32xf32>
      %cst_18 = arith.constant dense<0.000000e+00> : vector<18xf32>
      %36 = vector.multi_reduction <add>, %35, %cst_18 [1] : vector<18x32xf32> to vector<18xf32>
      %37 = vector.shape_cast %36 : vector<18xf32> to vector<18x1xf32>
      %cst_19 = arith.constant 3.200000e+01 : f32
      %38 = vector.broadcast %cst_19 : f32 to vector<18x1xf32>
      %39 = arith.divf %37, %38 : vector<18x1xf32>
      %40 = vector.broadcast %32 : vector<18x1xf32> to vector<18x32xf32>
      %41 = arith.subf %5, %40 : vector<18x32xf32>
      %cst_20 = arith.constant 9.99999974E-6 : f32
      %42 = vector.broadcast %cst_20 : f32 to vector<18x1xf32>
      %43 = arith.addf %39, %42 : vector<18x1xf32>
      %44 = math.rsqrt %43 : vector<18x1xf32>
      %45 = vector.broadcast %44 : vector<18x1xf32> to vector<18x32xf32>
      %46 = arith.mulf %41, %45 : vector<18x32xf32>
      %47 = vector.broadcast %21 : vector<1x32xf32> to vector<18x32xf32>
      %48 = arith.mulf %46, %47 : vector<18x32xf32>
      %49 = vector.broadcast %22 : vector<1x32xf32> to vector<18x32xf32>
      %50 = arith.addf %48, %49 : vector<18x32xf32>
      %51 = arith.truncf %50 : vector<18x32xf32> to vector<18x32xbf16>
      %cst_21 = arith.constant dense<0.000000e+00> : vector<18x96xf32>
      %52 = tpu.matmul %51, %18, %cst_21 {dimension_numbers = #tpu.dot_dimension_numbers<[1], [0], [0], [1], [0, 0, 1, 1], [], []>} : vector<18x32xbf16>, vector<32x96xbf16>, vector<18x96xf32> -> vector<18x96xf32>
      %53 = vector.broadcast %25 : vector<1x96xf32> to vector<18x96xf32>
      %54 = arith.addf %52, %53 : vector<18x96xf32>
      %55 = vector.shape_cast %54 : vector<18x96xf32> to vector<2x9x96xf32>
      %56 = arith.truncf %55 : vector<2x9x96xf32> to vector<2x9x96xbf16>
      %57 = vector.extract_strided_slice %56 {offsets = [0, 0, 0], sizes = [2, 9, 8], strides = [1, 1, 1]} : vector<2x9x96xbf16> to vector<2x9x8xbf16>
      %58 = vector.extract_strided_slice %56 {offsets = [0, 0, 32], sizes = [2, 9, 8], strides = [1, 1, 1]} : vector<2x9x96xbf16> to vector<2x9x8xbf16>
      %59 = vector.extract_strided_slice %56 {offsets = [0, 0, 64], sizes = [2, 9, 8], strides = [1, 1, 1]} : vector<2x9x96xbf16> to vector<2x9x8xbf16>
      "tpu.trace_start"() <{level = 10 : i32, message = "bqd,bkd->bqk"}> : () -> ()
      %cst_22 = arith.constant dense<0.000000e+00> : vector<2x9x9xf32>
      %60 = tpu.matmul %57, %58, %cst_22 {dimension_numbers = #tpu.dot_dimension_numbers<[2], [2], [1], [1], [0, 0, 0, 1, 1, 1], [0], [0]>} : vector<2x9x8xbf16>, vector<2x9x8xbf16>, vector<2x9x9xf32> -> vector<2x9x9xf32>
      "tpu.trace_stop"() : () -> ()
      %cst_23 = arith.constant dense<0xFF800000> : vector<2x9xf32>
      %61 = vector.multi_reduction <maximumf>, %60, %cst_23 [2] : vector<2x9x9xf32> to vector<2x9xf32>
      %62 = vector.shape_cast %61 : vector<2x9xf32> to vector<2x9x1xf32>
      %63 = vector.broadcast %62 : vector<2x9x1xf32> to vector<2x9x9xf32>
      %64 = arith.subf %60, %63 : vector<2x9x9xf32>
      %65 = math.exp %64 : vector<2x9x9xf32>
      %cst_24 = arith.constant dense<0.000000e+00> : vector<2x9xf32>
      %66 = vector.multi_reduction <add>, %65, %cst_24 [2] : vector<2x9x9xf32> to vector<2x9xf32>
      %67 = vector.shape_cast %66 : vector<2x9xf32> to vector<2x9x1xf32>
      %68 = vector.broadcast %67 : vector<2x9x1xf32> to vector<2x9x9xf32>
      %69 = arith.divf %65, %68 : vector<2x9x9xf32>
      %70 = arith.truncf %69 : vector<2x9x9xf32> to vector<2x9x9xbf16>
      "tpu.trace_start"() <{level = 10 : i32, message = "bqk,bkd->bqd"}> : () -> ()
      %cst_25 = arith.constant dense<0.000000e+00> : vector<2x9x8xf32>
      %71 = tpu.matmul %70, %59, %cst_25 {dimension_numbers = #tpu.dot_dimension_numbers<[2], [1], [1], [2], [0, 0, 0, 1, 1, 2], [0], [0]>} : vector<2x9x9xbf16>, vector<2x9x8xbf16>, vector<2x9x8xf32> -> vector<2x9x8xf32>
      "tpu.trace_stop"() : () -> ()
      %72 = vector.extract_strided_slice %56 {offsets = [0, 0, 8], sizes = [2, 9, 8], strides = [1, 1, 1]} : vector<2x9x96xbf16> to vector<2x9x8xbf16>
      %73 = vector.extract_strided_slice %56 {offsets = [0, 0, 40], sizes = [2, 9, 8], strides = [1, 1, 1]} : vector<2x9x96xbf16> to vector<2x9x8xbf16>
      %74 = vector.extract_strided_slice %56 {offsets = [0, 0, 72], sizes = [2, 9, 8], strides = [1, 1, 1]} : vector<2x9x96xbf16> to vector<2x9x8xbf16>
      "tpu.trace_start"() <{level = 10 : i32, message = "bqd,bkd->bqk"}> : () -> ()
      %cst_26 = arith.constant dense<0.000000e+00> : vector<2x9x9xf32>
      %75 = tpu.matmul %72, %73, %cst_26 {dimension_numbers = #tpu.dot_dimension_numbers<[2], [2], [1], [1], [0, 0, 0, 1, 1, 1], [0], [0]>} : vector<2x9x8xbf16>, vector<2x9x8xbf16>, vector<2x9x9xf32> -> vector<2x9x9xf32>
      "tpu.trace_stop"() : () -> ()
      %cst_27 = arith.constant dense<0xFF800000> : vector<2x9xf32>
      %76 = vector.multi_reduction <maximumf>, %75, %cst_27 [2] : vector<2x9x9xf32> to vector<2x9xf32>
      %77 = vector.shape_cast %76 : vector<2x9xf32> to vector<2x9x1xf32>
      %78 = vector.broadcast %77 : vector<2x9x1xf32> to vector<2x9x9xf32>
      %79 = arith.subf %75, %78 : vector<2x9x9xf32>
      %80 = math.exp %79 : vector<2x9x9xf32>
      %cst_28 = arith.constant dense<0.000000e+00> : vector<2x9xf32>
      %81 = vector.multi_reduction <add>, %80, %cst_28 [2] : vector<2x9x9xf32> to vector<2x9xf32>
      %82 = vector.shape_cast %81 : vector<2x9xf32> to vector<2x9x1xf32>
      %83 = vector.broadcast %82 : vector<2x9x1xf32> to vector<2x9x9xf32>
      %84 = arith.divf %80, %83 : vector<2x9x9xf32>
      %85 = arith.truncf %84 : vector<2x9x9xf32> to vector<2x9x9xbf16>
      "tpu.trace_start"() <{level = 10 : i32, message = "bqk,bkd->bqd"}> : () -> ()
      %cst_29 = arith.constant dense<0.000000e+00> : vector<2x9x8xf32>
      %86 = tpu.matmul %85, %74, %cst_29 {dimension_numbers = #tpu.dot_dimension_numbers<[2], [1], [1], [2], [0, 0, 0, 1, 1, 2], [0], [0]>} : vector<2x9x9xbf16>, vector<2x9x8xbf16>, vector<2x9x8xf32> -> vector<2x9x8xf32>
      "tpu.trace_stop"() : () -> ()
      %87 = vector.extract_strided_slice %56 {offsets = [0, 0, 16], sizes = [2, 9, 8], strides = [1, 1, 1]} : vector<2x9x96xbf16> to vector<2x9x8xbf16>
      %88 = vector.extract_strided_slice %56 {offsets = [0, 0, 48], sizes = [2, 9, 8], strides = [1, 1, 1]} : vector<2x9x96xbf16> to vector<2x9x8xbf16>
      %89 = vector.extract_strided_slice %56 {offsets = [0, 0, 80], sizes = [2, 9, 8], strides = [1, 1, 1]} : vector<2x9x96xbf16> to vector<2x9x8xbf16>
      "tpu.trace_start"() <{level = 10 : i32, message = "bqd,bkd->bqk"}> : () -> ()
      %cst_30 = arith.constant dense<0.000000e+00> : vector<2x9x9xf32>
      %90 = tpu.matmul %87, %88, %cst_30 {dimension_numbers = #tpu.dot_dimension_numbers<[2], [2], [1], [1], [0, 0, 0, 1, 1, 1], [0], [0]>} : vector<2x9x8xbf16>, vector<2x9x8xbf16>, vector<2x9x9xf32> -> vector<2x9x9xf32>
      "tpu.trace_stop"() : () -> ()
      %cst_31 = arith.constant dense<0xFF800000> : vector<2x9xf32>
      %91 = vector.multi_reduction <maximumf>, %90, %cst_31 [2] : vector<2x9x9xf32> to vector<2x9xf32>
      %92 = vector.shape_cast %91 : vector<2x9xf32> to vector<2x9x1xf32>
      %93 = vector.broadcast %92 : vector<2x9x1xf32> to vector<2x9x9xf32>
      %94 = arith.subf %90, %93 : vector<2x9x9xf32>
      %95 = math.exp %94 : vector<2x9x9xf32>
      %cst_32 = arith.constant dense<0.000000e+00> : vector<2x9xf32>
      %96 = vector.multi_reduction <add>, %95, %cst_32 [2] : vector<2x9x9xf32> to vector<2x9xf32>
      %97 = vector.shape_cast %96 : vector<2x9xf32> to vector<2x9x1xf32>
      %98 = vector.broadcast %97 : vector<2x9x1xf32> to vector<2x9x9xf32>
      %99 = arith.divf %95, %98 : vector<2x9x9xf32>
      %100 = arith.truncf %99 : vector<2x9x9xf32> to vector<2x9x9xbf16>
      "tpu.trace_start"() <{level = 10 : i32, message = "bqk,bkd->bqd"}> : () -> ()
      %cst_33 = arith.constant dense<0.000000e+00> : vector<2x9x8xf32>
      %101 = tpu.matmul %100, %89, %cst_33 {dimension_numbers = #tpu.dot_dimension_numbers<[2], [1], [1], [2], [0, 0, 0, 1, 1, 2], [0], [0]>} : vector<2x9x9xbf16>, vector<2x9x8xbf16>, vector<2x9x8xf32> -> vector<2x9x8xf32>
      "tpu.trace_stop"() : () -> ()
      %102 = vector.extract_strided_slice %56 {offsets = [0, 0, 24], sizes = [2, 9, 8], strides = [1, 1, 1]} : vector<2x9x96xbf16> to vector<2x9x8xbf16>
      %103 = vector.extract_strided_slice %56 {offsets = [0, 0, 56], sizes = [2, 9, 8], strides = [1, 1, 1]} : vector<2x9x96xbf16> to vector<2x9x8xbf16>
      %104 = vector.extract_strided_slice %56 {offsets = [0, 0, 88], sizes = [2, 9, 8], strides = [1, 1, 1]} : vector<2x9x96xbf16> to vector<2x9x8xbf16>
      "tpu.trace_start"() <{level = 10 : i32, message = "bqd,bkd->bqk"}> : () -> ()
      %cst_34 = arith.constant dense<0.000000e+00> : vector<2x9x9xf32>
      %105 = tpu.matmul %102, %103, %cst_34 {dimension_numbers = #tpu.dot_dimension_numbers<[2], [2], [1], [1], [0, 0, 0, 1, 1, 1], [0], [0]>} : vector<2x9x8xbf16>, vector<2x9x8xbf16>, vector<2x9x9xf32> -> vector<2x9x9xf32>
      "tpu.trace_stop"() : () -> ()
      %cst_35 = arith.constant dense<0xFF800000> : vector<2x9xf32>
      %106 = vector.multi_reduction <maximumf>, %105, %cst_35 [2] : vector<2x9x9xf32> to vector<2x9xf32>
      %107 = vector.shape_cast %106 : vector<2x9xf32> to vector<2x9x1xf32>
      %108 = vector.broadcast %107 : vector<2x9x1xf32> to vector<2x9x9xf32>
      %109 = arith.subf %105, %108 : vector<2x9x9xf32>
      %110 = math.exp %109 : vector<2x9x9xf32>
      %cst_36 = arith.constant dense<0.000000e+00> : vector<2x9xf32>
      %111 = vector.multi_reduction <add>, %110, %cst_36 [2] : vector<2x9x9xf32> to vector<2x9xf32>
      %112 = vector.shape_cast %111 : vector<2x9xf32> to vector<2x9x1xf32>
      %113 = vector.broadcast %112 : vector<2x9x1xf32> to vector<2x9x9xf32>
      %114 = arith.divf %110, %113 : vector<2x9x9xf32>
      %115 = arith.truncf %114 : vector<2x9x9xf32> to vector<2x9x9xbf16>
      "tpu.trace_start"() <{level = 10 : i32, message = "bqk,bkd->bqd"}> : () -> ()
      %cst_37 = arith.constant dense<0.000000e+00> : vector<2x9x8xf32>
      %116 = tpu.matmul %115, %104, %cst_37 {dimension_numbers = #tpu.dot_dimension_numbers<[2], [1], [1], [2], [0, 0, 0, 1, 1, 2], [0], [0]>} : vector<2x9x9xbf16>, vector<2x9x8xbf16>, vector<2x9x8xf32> -> vector<2x9x8xf32>
      "tpu.trace_stop"() : () -> ()
      %117 = tpu.concatenate %71, %86, %101, %116 in 2 : vector<2x9x8xf32>, vector<2x9x8xf32>, vector<2x9x8xf32>, vector<2x9x8xf32> -> vector<2x9x32xf32>
      %118 = vector.shape_cast %117 : vector<2x9x32xf32> to vector<18x32xf32>
      %119 = arith.truncf %118 : vector<18x32xf32> to vector<18x32xbf16>
      %cst_38 = arith.constant dense<0.000000e+00> : vector<18x32xf32>
      %120 = tpu.matmul %119, %20, %cst_38 {dimension_numbers = #tpu.dot_dimension_numbers<[1], [0], [0], [1], [0, 0, 1, 1], [], []>} : vector<18x32xbf16>, vector<32x32xbf16>, vector<18x32xf32> -> vector<18x32xf32>
      %121 = arith.addf %5, %120 : vector<18x32xf32>
      %122 = vector.broadcast %26 : vector<1x32xf32> to vector<18x32xf32>
      %123 = arith.addf %121, %122 : vector<18x32xf32>
      %cst_39 = arith.constant dense<0.000000e+00> : vector<18xf32>
      %124 = vector.multi_reduction <add>, %123, %cst_39 [1] : vector<18x32xf32> to vector<18xf32>
      %125 = vector.shape_cast %124 : vector<18xf32> to vector<18x1xf32>
      %cst_40 = arith.constant 3.200000e+01 : f32
      %126 = vector.broadcast %cst_40 : f32 to vector<18x1xf32>
      %127 = arith.divf %125, %126 : vector<18x1xf32>
      %128 = vector.broadcast %127 : vector<18x1xf32> to vector<18x32xf32>
      %129 = arith.subf %123, %128 : vector<18x32xf32>
      %130 = arith.mulf %129, %129 : vector<18x32xf32>
      %cst_41 = arith.constant dense<0.000000e+00> : vector<18xf32>
      %131 = vector.multi_reduction <add>, %130, %cst_41 [1] : vector<18x32xf32> to vector<18xf32>
      %132 = vector.shape_cast %131 : vector<18xf32> to vector<18x1xf32>
      %cst_42 = arith.constant 3.200000e+01 : f32
      %133 = vector.broadcast %cst_42 : f32 to vector<18x1xf32>
      %134 = arith.divf %132, %133 : vector<18x1xf32>
      %135 = vector.broadcast %127 : vector<18x1xf32> to vector<18x32xf32>
      %136 = arith.subf %123, %135 : vector<18x32xf32>
      %cst_43 = arith.constant 9.99999974E-6 : f32
      %137 = vector.broadcast %cst_43 : f32 to vector<18x1xf32>
      %138 = arith.addf %134, %137 : vector<18x1xf32>
      %139 = math.rsqrt %138 : vector<18x1xf32>
      %140 = vector.broadcast %139 : vector<18x1xf32> to vector<18x32xf32>
      %141 = arith.mulf %136, %140 : vector<18x32xf32>
      %142 = vector.broadcast %23 : vector<1x32xf32> to vector<18x32xf32>
      %143 = arith.mulf %141, %142 : vector<18x32xf32>
      %144 = vector.broadcast %24 : vector<1x32xf32> to vector<18x32xf32>
      %145 = arith.addf %143, %144 : vector<18x32xf32>
      %146 = arith.truncf %145 : vector<18x32xf32> to vector<18x32xbf16>
      %cst_44 = arith.constant dense<0.000000e+00> : vector<18x128xf32>
      %147 = tpu.matmul %146, %19, %cst_44 {dimension_numbers = #tpu.dot_dimension_numbers<[1], [0], [0], [1], [0, 0, 1, 1], [], []>} : vector<18x32xbf16>, vector<32x128xbf16>, vector<18x128xf32> -> vector<18x128xf32>
      %148 = vector.broadcast %27 : vector<1x128xf32> to vector<18x128xf32>
      %149 = arith.addf %147, %148 : vector<18x128xf32>
      %cst_45 = arith.constant 5.000000e-01 : f32
      %150 = vector.broadcast %cst_45 : f32 to vector<18x128xf32>
      %151 = arith.mulf %150, %149 : vector<18x128xf32>
      %cst_46 = arith.constant 1.41421354 : f32
      %152 = vector.broadcast %cst_46 : f32 to vector<18x128xf32>
      %153 = arith.divf %149, %152 : vector<18x128xf32>
      %cst_47 = arith.constant 0.000000e+00 : f32
      %154 = vector.broadcast %cst_47 : f32 to vector<18x128xf32>
      %155 = arith.cmpf oge, %153, %154 : vector<18x128xf32>
      %cst_48 = arith.constant 1.000000e+00 : f32
      %cst_49 = arith.constant -1.000000e+00 : f32
      %156 = vector.broadcast %cst_48 : f32 to vector<18x128xf32>
      %157 = vector.broadcast %cst_49 : f32 to vector<18x128xf32>
      %158 = arith.select %155, %156, %157 : vector<18x128xi1>, vector<18x128xf32>
      %159 = math.absf %153 : vector<18x128xf32>
      %cst_50 = arith.constant 0.327591091 : f32
      %160 = vector.broadcast %cst_50 : f32 to vector<18x128xf32>
      %161 = arith.mulf %160, %159 : vector<18x128xf32>
      %cst_51 = arith.constant 1.000000e+00 : f32
      %162 = vector.broadcast %cst_51 : f32 to vector<18x128xf32>
      %163 = arith.addf %162, %161 : vector<18x128xf32>
      %cst_52 = arith.constant 1.000000e+00 : f32
      %164 = vector.broadcast %cst_52 : f32 to vector<18x128xf32>
      %165 = arith.divf %164, %163 : vector<18x128xf32>
      %cst_53 = arith.constant 1.06140542 : f32
      %166 = vector.broadcast %cst_53 : f32 to vector<18x128xf32>
      %167 = arith.mulf %166, %165 : vector<18x128xf32>
      %cst_54 = arith.constant -1.45315206 : f32
      %168 = vector.broadcast %cst_54 : f32 to vector<18x128xf32>
      %169 = arith.addf %167, %168 : vector<18x128xf32>
      %170 = arith.mulf %169, %165 : vector<18x128xf32>
      %cst_55 = arith.constant 1.42141378 : f32
      %171 = vector.broadcast %cst_55 : f32 to vector<18x128xf32>
      %172 = arith.addf %170, %171 : vector<18x128xf32>
      %173 = arith.mulf %172, %165 : vector<18x128xf32>
      %cst_56 = arith.constant -0.284496725 : f32
      %174 = vector.broadcast %cst_56 : f32 to vector<18x128xf32>
      %175 = arith.addf %173, %174 : vector<18x128xf32>
      %176 = arith.mulf %175, %165 : vector<18x128xf32>
      %cst_57 = arith.constant 0.254829586 : f32
      %177 = vector.broadcast %cst_57 : f32 to vector<18x128xf32>
      %178 = arith.addf %176, %177 : vector<18x128xf32>
      %179 = arith.mulf %178, %165 : vector<18x128xf32>
      %cst_58 = arith.constant 0.000000e+00 : f32
      %180 = vector.broadcast %cst_58 : f32 to vector<18x128xf32>
      %181 = arith.subf %180, %159 : vector<18x128xf32>
      %182 = arith.mulf %181, %159 : vector<18x128xf32>
      %183 = math.exp %182 : vector<18x128xf32>
      %184 = arith.mulf %179, %183 : vector<18x128xf32>
      %cst_59 = arith.constant 1.000000e+00 : f32
      %185 = vector.broadcast %cst_59 : f32 to vector<18x128xf32>
      %186 = arith.subf %185, %184 : vector<18x128xf32>
      %187 = arith.mulf %158, %186 : vector<18x128xf32>
      %cst_60 = arith.constant 1.000000e+00 : f32
      %188 = vector.broadcast %cst_60 : f32 to vector<18x128xf32>
      %189 = arith.addf %188, %187 : vector<18x128xf32>
      %190 = arith.mulf %151, %189 : vector<18x128xf32>
      %191 = arith.truncf %190 : vector<18x128xf32> to vector<18x128xbf16>
      %cst_61 = arith.constant dense<0.000000e+00> : vector<18x32xf32>
      %192 = tpu.matmul %191, %15, %cst_61 {dimension_numbers = #tpu.dot_dimension_numbers<[1], [0], [0], [1], [0, 0, 1, 1], [], []>} : vector<18x128xbf16>, vector<128x32xbf16>, vector<18x32xf32> -> vector<18x32xf32>
      %193 = arith.addf %123, %192 : vector<18x32xf32>
      %194 = vector.broadcast %28 : vector<1x32xf32> to vector<18x32xf32>
      %195 = arith.addf %193, %194 : vector<18x32xf32>
      %196 = vector.shape_cast %195 : vector<18x32xf32> to vector<2x9x32xf32>
      %cst_62 = arith.constant dense<0.000000e+00> : vector<2x32xf32>
      %197 = vector.multi_reduction <add>, %196, %cst_62 [1] : vector<2x9x32xf32> to vector<2x32xf32>
      %cst_63 = arith.constant 9.000000e+00 : f32
      %198 = vector.broadcast %cst_63 : f32 to vector<2x32xf32>
      %199 = arith.divf %197, %198 : vector<2x32xf32>
      %c0_64 = arith.constant 0 : index
      %c0_65 = arith.constant 0 : index
      %c0_66 = arith.constant 0 : index
      %200 = vector.load %arg10[%c0_64, %c0_65, %c0_66] : memref<2x2x32xf32, #tpu.memory_space<vmem>>, vector<1x2x32xf32>
      %201 = vector.shape_cast %200 : vector<1x2x32xf32> to vector<2x32xf32>
      %202 = vector.extract_strided_slice %201 {offsets = [0, 0], sizes = [1, 32], strides = [1, 1]} : vector<2x32xf32> to vector<1x32xf32>
      %203 = vector.extract_strided_slice %201 {offsets = [1, 0], sizes = [1, 32], strides = [1, 1]} : vector<2x32xf32> to vector<1x32xf32>
      %cst_67 = arith.constant dense<0.000000e+00> : vector<2xf32>
      %204 = vector.multi_reduction <add>, %199, %cst_67 [1] : vector<2x32xf32> to vector<2xf32>
      %205 = vector.shape_cast %204 : vector<2xf32> to vector<2x1xf32>
      %cst_68 = arith.constant 3.200000e+01 : f32
      %206 = vector.broadcast %cst_68 : f32 to vector<2x1xf32>
      %207 = arith.divf %205, %206 : vector<2x1xf32>
      %208 = vector.broadcast %207 : vector<2x1xf32> to vector<2x32xf32>
      %209 = arith.subf %199, %208 : vector<2x32xf32>
      %210 = arith.mulf %209, %209 : vector<2x32xf32>
      %cst_69 = arith.constant dense<0.000000e+00> : vector<2xf32>
      %211 = vector.multi_reduction <add>, %210, %cst_69 [1] : vector<2x32xf32> to vector<2xf32>
      %212 = vector.shape_cast %211 : vector<2xf32> to vector<2x1xf32>
      %cst_70 = arith.constant 3.200000e+01 : f32
      %213 = vector.broadcast %cst_70 : f32 to vector<2x1xf32>
      %214 = arith.divf %212, %213 : vector<2x1xf32>
      %215 = vector.broadcast %207 : vector<2x1xf32> to vector<2x32xf32>
      %216 = arith.subf %199, %215 : vector<2x32xf32>
      %cst_71 = arith.constant 9.99999974E-6 : f32
      %217 = vector.broadcast %cst_71 : f32 to vector<2x1xf32>
      %218 = arith.addf %214, %217 : vector<2x1xf32>
      %219 = math.rsqrt %218 : vector<2x1xf32>
      %220 = vector.broadcast %219 : vector<2x1xf32> to vector<2x32xf32>
      %221 = arith.mulf %216, %220 : vector<2x32xf32>
      %222 = vector.broadcast %202 : vector<1x32xf32> to vector<2x32xf32>
      %223 = arith.mulf %221, %222 : vector<2x32xf32>
      %224 = vector.broadcast %203 : vector<1x32xf32> to vector<2x32xf32>
      %225 = arith.addf %223, %224 : vector<2x32xf32>
      %c0_72 = arith.constant 0 : index
      %c0_73 = arith.constant 0 : index
      %c0_74 = arith.constant 0 : index
      %226 = vector.load %arg11[%c0_72, %c0_73, %c0_74] : memref<2x32x1xf32, #tpu.memory_space<vmem>>, vector<1x32x1xf32>
      %227 = vector.shape_cast %226 : vector<1x32x1xf32> to vector<32x1xf32>
      %cst_75 = arith.constant dense<0.000000e+00> : vector<2x1xf32>
      %228 = tpu.matmul %225, %227, %cst_75 {dimension_numbers = #tpu.dot_dimension_numbers<[1], [0], [0], [1], [0, 0, 1, 1], [], []>} : vector<2x32xf32>, vector<32x1xf32>, vector<2x1xf32> -> vector<2x1xf32>
      %c0_76 = arith.constant 0 : index
      %c0_77 = arith.constant 0 : index
      %c0_78 = arith.constant 0 : index
      %229 = vector.load %arg12[%c0_76, %c0_77, %c0_78] : memref<2x1x1xf32, #tpu.memory_space<vmem>>, vector<1x1x1xf32>
      %230 = vector.shape_cast %229 : vector<1x1x1xf32> to vector<1x1xf32>
      %231 = vector.broadcast %230 : vector<1x1xf32> to vector<2x1xf32>
      %232 = arith.addf %228, %231 : vector<2x1xf32>
      %233 = vector.shape_cast %232 : vector<2x1xf32> to vector<1x2x1xf32>
      %c0_79 = arith.constant 0 : index
      %c0_80 = arith.constant 0 : index
      %c0_81 = arith.constant 0 : index
      %234 = vector.load %arg13[%c0_79, %c0_80, %c0_81] : memref<1x2x1xf32, #tpu.memory_space<vmem>>, vector<1x2x1xf32>
      tpu.vector_store %arg13[%c0_79, %c0_80, %c0_81], %233 {strides = array<i32>} : memref<1x2x1xf32, #tpu.memory_space<vmem>>, vector<1x2x1xf32>,
    } else {
    }
    %c1_i32 = arith.constant 1 : i32
    %9 = arith.cmpi eq, %arg0, %c1_i32 : i32
    %10 = arith.extui %9 : i1 to i32
    %c0_i32_6 = arith.constant 0 : i32
    %11 = arith.cmpi ne, %10, %c0_i32_6 : i32
    scf.if %11 {
      %c0_7 = arith.constant 0 : index
      %c0_8 = arith.constant 0 : index
      %c0_9 = arith.constant 0 : index
      %12 = vector.load %arg7[%c0_7, %c0_8, %c0_9] : memref<2x32x288xbf16, #tpu.memory_space<vmem>>, vector<1x32x288xbf16>
      %13 = vector.shape_cast %12 : vector<1x32x288xbf16> to vector<32x288xbf16>
      %c0_10 = arith.constant 0 : index
      %c0_11 = arith.constant 0 : index
      %c0_12 = arith.constant 0 : index
      %14 = vector.load %arg8[%c0_10, %c0_11, %c0_12] : memref<2x128x32xbf16, #tpu.memory_space<vmem>>, vector<1x128x32xbf16>
      %15 = vector.shape_cast %14 : vector<1x128x32xbf16> to vector<128x32xbf16>
      %c0_13 = arith.constant 0 : index
      %c0_14 = arith.constant 0 : index
      %c0_15 = arith.constant 0 : index
      %16 = vector.load %arg9[%c0_13, %c0_14, %c0_15] : memref<2x4x128xf32, #tpu.memory_space<vmem>>, vector<1x4x128xf32>
      %17 = vector.shape_cast %16 : vector<1x4x128xf32> to vector<4x128xf32>
      %18 = vector.extract_strided_slice %13 {offsets = [0, 0], sizes = [32, 96], strides = [1, 1]} : vector<32x288xbf16> to vector<32x96xbf16>
      %19 = vector.extract_strided_slice %13 {offsets = [0, 128], sizes = [32, 128], strides = [1, 1]} : vector<32x288xbf16> to vector<32x128xbf16>
      %20 = vector.extract_strided_slice %13 {offsets = [0, 256], sizes = [32, 32], strides = [1, 1]} : vector<32x288xbf16> to vector<32x32xbf16>
      %21 = vector.extract_strided_slice %17 {offsets = [0, 0], sizes = [1, 32], strides = [1, 1]} : vector<4x128xf32> to vector<1x32xf32>
      %22 = vector.extract_strided_slice %17 {offsets = [0, 32], sizes = [1, 32], strides = [1, 1]} : vector<4x128xf32> to vector<1x32xf32>
      %23 = vector.extract_strided_slice %17 {offsets = [0, 64], sizes = [1, 32], strides = [1, 1]} : vector<4x128xf32> to vector<1x32xf32>
      %24 = vector.extract_strided_slice %17 {offsets = [0, 96], sizes = [1, 32], strides = [1, 1]} : vector<4x128xf32> to vector<1x32xf32>
      %25 = vector.extract_strided_slice %17 {offsets = [1, 0], sizes = [1, 96], strides = [1, 1]} : vector<4x128xf32> to vector<1x96xf32>
      %26 = vector.extract_strided_slice %17 {offsets = [1, 96], sizes = [1, 32], strides = [1, 1]} : vector<4x128xf32> to vector<1x32xf32>
      %27 = vector.extract_strided_slice %17 {offsets = [2, 0], sizes = [1, 128], strides = [1, 1]} : vector<4x128xf32> to vector<1x128xf32>
      %28 = vector.extract_strided_slice %17 {offsets = [3, 0], sizes = [1, 32], strides = [1, 1]} : vector<4x128xf32> to vector<1x32xf32>
      %cst_16 = arith.constant dense<0.000000e+00> : vector<18xf32>
      %29 = vector.multi_reduction <add>, %5, %cst_16 [1] : vector<18x32xf32> to vector<18xf32>
      %30 = vector.shape_cast %29 : vector<18xf32> to vector<18x1xf32>
      %cst_17 = arith.constant 3.200000e+01 : f32
      %31 = vector.broadcast %cst_17 : f32 to vector<18x1xf32>
      %32 = arith.divf %30, %31 : vector<18x1xf32>
      %33 = vector.broadcast %32 : vector<18x1xf32> to vector<18x32xf32>
      %34 = arith.subf %5, %33 : vector<18x32xf32>
      %35 = arith.mulf %34, %34 : vector<18x32xf32>
      %cst_18 = arith.constant dense<0.000000e+00> : vector<18xf32>
      %36 = vector.multi_reduction <add>, %35, %cst_18 [1] : vector<18x32xf32> to vector<18xf32>
      %37 = vector.shape_cast %36 : vector<18xf32> to vector<18x1xf32>
      %cst_19 = arith.constant 3.200000e+01 : f32
      %38 = vector.broadcast %cst_19 : f32 to vector<18x1xf32>
      %39 = arith.divf %37, %38 : vector<18x1xf32>
      %40 = vector.broadcast %32 : vector<18x1xf32> to vector<18x32xf32>
      %41 = arith.subf %5, %40 : vector<18x32xf32>
      %cst_20 = arith.constant 9.99999974E-6 : f32
      %42 = vector.broadcast %cst_20 : f32 to vector<18x1xf32>
      %43 = arith.addf %39, %42 : vector<18x1xf32>
      %44 = math.rsqrt %43 : vector<18x1xf32>
      %45 = vector.broadcast %44 : vector<18x1xf32> to vector<18x32xf32>
      %46 = arith.mulf %41, %45 : vector<18x32xf32>
      %47 = vector.broadcast %21 : vector<1x32xf32> to vector<18x32xf32>
      %48 = arith.mulf %46, %47 : vector<18x32xf32>
      %49 = vector.broadcast %22 : vector<1x32xf32> to vector<18x32xf32>
      %50 = arith.addf %48, %49 : vector<18x32xf32>
      %51 = arith.truncf %50 : vector<18x32xf32> to vector<18x32xbf16>
      %cst_21 = arith.constant dense<0.000000e+00> : vector<18x96xf32>
      %52 = tpu.matmul %51, %18, %cst_21 {dimension_numbers = #tpu.dot_dimension_numbers<[1], [0], [0], [1], [0, 0, 1, 1], [], []>} : vector<18x32xbf16>, vector<32x96xbf16>, vector<18x96xf32> -> vector<18x96xf32>
      %53 = vector.broadcast %25 : vector<1x96xf32> to vector<18x96xf32>
      %54 = arith.addf %52, %53 : vector<18x96xf32>
      %55 = vector.shape_cast %54 : vector<18x96xf32> to vector<2x9x96xf32>
      %56 = arith.truncf %55 : vector<2x9x96xf32> to vector<2x9x96xbf16>
      %57 = vector.extract_strided_slice %56 {offsets = [0, 0, 0], sizes = [2, 9, 8], strides = [1, 1, 1]} : vector<2x9x96xbf16> to vector<2x9x8xbf16>
      %58 = vector.extract_strided_slice %56 {offsets = [0, 0, 32], sizes = [2, 9, 8], strides = [1, 1, 1]} : vector<2x9x96xbf16> to vector<2x9x8xbf16>
      %59 = vector.extract_strided_slice %56 {offsets = [0, 0, 64], sizes = [2, 9, 8], strides = [1, 1, 1]} : vector<2x9x96xbf16> to vector<2x9x8xbf16>
      "tpu.trace_start"() <{level = 10 : i32, message = "bqd,bkd->bqk"}> : () -> ()
      %cst_22 = arith.constant dense<0.000000e+00> : vector<2x9x9xf32>
      %60 = tpu.matmul %57, %58, %cst_22 {dimension_numbers = #tpu.dot_dimension_numbers<[2], [2], [1], [1], [0, 0, 0, 1, 1, 1], [0], [0]>} : vector<2x9x8xbf16>, vector<2x9x8xbf16>, vector<2x9x9xf32> -> vector<2x9x9xf32>
      "tpu.trace_stop"() : () -> ()
      %cst_23 = arith.constant dense<0xFF800000> : vector<2x9xf32>
      %61 = vector.multi_reduction <maximumf>, %60, %cst_23 [2] : vector<2x9x9xf32> to vector<2x9xf32>
      %62 = vector.shape_cast %61 : vector<2x9xf32> to vector<2x9x1xf32>
      %63 = vector.broadcast %62 : vector<2x9x1xf32> to vector<2x9x9xf32>
      %64 = arith.subf %60, %63 : vector<2x9x9xf32>
      %65 = math.exp %64 : vector<2x9x9xf32>
      %cst_24 = arith.constant dense<0.000000e+00> : vector<2x9xf32>
      %66 = vector.multi_reduction <add>, %65, %cst_24 [2] : vector<2x9x9xf32> to vector<2x9xf32>
      %67 = vector.shape_cast %66 : vector<2x9xf32> to vector<2x9x1xf32>
      %68 = vector.broadcast %67 : vector<2x9x1xf32> to vector<2x9x9xf32>
      %69 = arith.divf %65, %68 : vector<2x9x9xf32>
      %70 = arith.truncf %69 : vector<2x9x9xf32> to vector<2x9x9xbf16>
      "tpu.trace_start"() <{level = 10 : i32, message = "bqk,bkd->bqd"}> : () -> ()
      %cst_25 = arith.constant dense<0.000000e+00> : vector<2x9x8xf32>
      %71 = tpu.matmul %70, %59, %cst_25 {dimension_numbers = #tpu.dot_dimension_numbers<[2], [1], [1], [2], [0, 0, 0, 1, 1, 2], [0], [0]>} : vector<2x9x9xbf16>, vector<2x9x8xbf16>, vector<2x9x8xf32> -> vector<2x9x8xf32>
      "tpu.trace_stop"() : () -> ()
      %72 = vector.extract_strided_slice %56 {offsets = [0, 0, 8], sizes = [2, 9, 8], strides = [1, 1, 1]} : vector<2x9x96xbf16> to vector<2x9x8xbf16>
      %73 = vector.extract_strided_slice %56 {offsets = [0, 0, 40], sizes = [2, 9, 8], strides = [1, 1, 1]} : vector<2x9x96xbf16> to vector<2x9x8xbf16>
      %74 = vector.extract_strided_slice %56 {offsets = [0, 0, 72], sizes = [2, 9, 8], strides = [1, 1, 1]} : vector<2x9x96xbf16> to vector<2x9x8xbf16>
      "tpu.trace_start"() <{level = 10 : i32, message = "bqd,bkd->bqk"}> : () -> ()
      %cst_26 = arith.constant dense<0.000000e+00> : vector<2x9x9xf32>
      %75 = tpu.matmul %72, %73, %cst_26 {dimension_numbers = #tpu.dot_dimension_numbers<[2], [2], [1], [1], [0, 0, 0, 1, 1, 1], [0], [0]>} : vector<2x9x8xbf16>, vector<2x9x8xbf16>, vector<2x9x9xf32> -> vector<2x9x9xf32>
      "tpu.trace_stop"() : () -> ()
      %cst_27 = arith.constant dense<0xFF800000> : vector<2x9xf32>
      %76 = vector.multi_reduction <maximumf>, %75, %cst_27 [2] : vector<2x9x9xf32> to vector<2x9xf32>
      %77 = vector.shape_cast %76 : vector<2x9xf32> to vector<2x9x1xf32>
      %78 = vector.broadcast %77 : vector<2x9x1xf32> to vector<2x9x9xf32>
      %79 = arith.subf %75, %78 : vector<2x9x9xf32>
      %80 = math.exp %79 : vector<2x9x9xf32>
      %cst_28 = arith.constant dense<0.000000e+00> : vector<2x9xf32>
      %81 = vector.multi_reduction <add>, %80, %cst_28 [2] : vector<2x9x9xf32> to vector<2x9xf32>
      %82 = vector.shape_cast %81 : vector<2x9xf32> to vector<2x9x1xf32>
      %83 = vector.broadcast %82 : vector<2x9x1xf32> to vector<2x9x9xf32>
      %84 = arith.divf %80, %83 : vector<2x9x9xf32>
      %85 = arith.truncf %84 : vector<2x9x9xf32> to vector<2x9x9xbf16>
      "tpu.trace_start"() <{level = 10 : i32, message = "bqk,bkd->bqd"}> : () -> ()
      %cst_29 = arith.constant dense<0.000000e+00> : vector<2x9x8xf32>
      %86 = tpu.matmul %85, %74, %cst_29 {dimension_numbers = #tpu.dot_dimension_numbers<[2], [1], [1], [2], [0, 0, 0, 1, 1, 2], [0], [0]>} : vector<2x9x9xbf16>, vector<2x9x8xbf16>, vector<2x9x8xf32> -> vector<2x9x8xf32>
      "tpu.trace_stop"() : () -> ()
      %87 = vector.extract_strided_slice %56 {offsets = [0, 0, 16], sizes = [2, 9, 8], strides = [1, 1, 1]} : vector<2x9x96xbf16> to vector<2x9x8xbf16>
      %88 = vector.extract_strided_slice %56 {offsets = [0, 0, 48], sizes = [2, 9, 8], strides = [1, 1, 1]} : vector<2x9x96xbf16> to vector<2x9x8xbf16>
      %89 = vector.extract_strided_slice %56 {offsets = [0, 0, 80], sizes = [2, 9, 8], strides = [1, 1, 1]} : vector<2x9x96xbf16> to vector<2x9x8xbf16>
      "tpu.trace_start"() <{level = 10 : i32, message = "bqd,bkd->bqk"}> : () -> ()
      %cst_30 = arith.constant dense<0.000000e+00> : vector<2x9x9xf32>
      %90 = tpu.matmul %87, %88, %cst_30 {dimension_numbers = #tpu.dot_dimension_numbers<[2], [2], [1], [1], [0, 0, 0, 1, 1, 1], [0], [0]>} : vector<2x9x8xbf16>, vector<2x9x8xbf16>, vector<2x9x9xf32> -> vector<2x9x9xf32>
      "tpu.trace_stop"() : () -> ()
      %cst_31 = arith.constant dense<0xFF800000> : vector<2x9xf32>
      %91 = vector.multi_reduction <maximumf>, %90, %cst_31 [2] : vector<2x9x9xf32> to vector<2x9xf32>
      %92 = vector.shape_cast %91 : vector<2x9xf32> to vector<2x9x1xf32>
      %93 = vector.broadcast %92 : vector<2x9x1xf32> to vector<2x9x9xf32>
      %94 = arith.subf %90, %93 : vector<2x9x9xf32>
      %95 = math.exp %94 : vector<2x9x9xf32>
      %cst_32 = arith.constant dense<0.000000e+00> : vector<2x9xf32>
      %96 = vector.multi_reduction <add>, %95, %cst_32 [2] : vector<2x9x9xf32> to vector<2x9xf32>
      %97 = vector.shape_cast %96 : vector<2x9xf32> to vector<2x9x1xf32>
      %98 = vector.broadcast %97 : vector<2x9x1xf32> to vector<2x9x9xf32>
      %99 = arith.divf %95, %98 : vector<2x9x9xf32>
      %100 = arith.truncf %99 : vector<2x9x9xf32> to vector<2x9x9xbf16>
      "tpu.trace_start"() <{level = 10 : i32, message = "bqk,bkd->bqd"}> : () -> ()
      %cst_33 = arith.constant dense<0.000000e+00> : vector<2x9x8xf32>
      %101 = tpu.matmul %100, %89, %cst_33 {dimension_numbers = #tpu.dot_dimension_numbers<[2], [1], [1], [2], [0, 0, 0, 1, 1, 2], [0], [0]>} : vector<2x9x9xbf16>, vector<2x9x8xbf16>, vector<2x9x8xf32> -> vector<2x9x8xf32>
      "tpu.trace_stop"() : () -> ()
      %102 = vector.extract_strided_slice %56 {offsets = [0, 0, 24], sizes = [2, 9, 8], strides = [1, 1, 1]} : vector<2x9x96xbf16> to vector<2x9x8xbf16>
      %103 = vector.extract_strided_slice %56 {offsets = [0, 0, 56], sizes = [2, 9, 8], strides = [1, 1, 1]} : vector<2x9x96xbf16> to vector<2x9x8xbf16>
      %104 = vector.extract_strided_slice %56 {offsets = [0, 0, 88], sizes = [2, 9, 8], strides = [1, 1, 1]} : vector<2x9x96xbf16> to vector<2x9x8xbf16>
      "tpu.trace_start"() <{level = 10 : i32, message = "bqd,bkd->bqk"}> : () -> ()
      %cst_34 = arith.constant dense<0.000000e+00> : vector<2x9x9xf32>
      %105 = tpu.matmul %102, %103, %cst_34 {dimension_numbers = #tpu.dot_dimension_numbers<[2], [2], [1], [1], [0, 0, 0, 1, 1, 1], [0], [0]>} : vector<2x9x8xbf16>, vector<2x9x8xbf16>, vector<2x9x9xf32> -> vector<2x9x9xf32>
      "tpu.trace_stop"() : () -> ()
      %cst_35 = arith.constant dense<0xFF800000> : vector<2x9xf32>
      %106 = vector.multi_reduction <maximumf>, %105, %cst_35 [2] : vector<2x9x9xf32> to vector<2x9xf32>
      %107 = vector.shape_cast %106 : vector<2x9xf32> to vector<2x9x1xf32>
      %108 = vector.broadcast %107 : vector<2x9x1xf32> to vector<2x9x9xf32>
      %109 = arith.subf %105, %108 : vector<2x9x9xf32>
      %110 = math.exp %109 : vector<2x9x9xf32>
      %cst_36 = arith.constant dense<0.000000e+00> : vector<2x9xf32>
      %111 = vector.multi_reduction <add>, %110, %cst_36 [2] : vector<2x9x9xf32> to vector<2x9xf32>
      %112 = vector.shape_cast %111 : vector<2x9xf32> to vector<2x9x1xf32>
      %113 = vector.broadcast %112 : vector<2x9x1xf32> to vector<2x9x9xf32>
      %114 = arith.divf %110, %113 : vector<2x9x9xf32>
      %115 = arith.truncf %114 : vector<2x9x9xf32> to vector<2x9x9xbf16>
      "tpu.trace_start"() <{level = 10 : i32, message = "bqk,bkd->bqd"}> : () -> ()
      %cst_37 = arith.constant dense<0.000000e+00> : vector<2x9x8xf32>
      %116 = tpu.matmul %115, %104, %cst_37 {dimension_numbers = #tpu.dot_dimension_numbers<[2], [1], [1], [2], [0, 0, 0, 1, 1, 2], [0], [0]>} : vector<2x9x9xbf16>, vector<2x9x8xbf16>, vector<2x9x8xf32> -> vector<2x9x8xf32>
      "tpu.trace_stop"() : () -> ()
      %117 = tpu.concatenate %71, %86, %101, %116 in 2 : vector<2x9x8xf32>, vector<2x9x8xf32>, vector<2x9x8xf32>, vector<2x9x8xf32> -> vector<2x9x32xf32>
      %118 = vector.shape_cast %117 : vector<2x9x32xf32> to vector<18x32xf32>
      %119 = arith.truncf %118 : vector<18x32xf32> to vector<18x32xbf16>
      %cst_38 = arith.constant dense<0.000000e+00> : vector<18x32xf32>
      %120 = tpu.matmul %119, %20, %cst_38 {dimension_numbers = #tpu.dot_dimension_numbers<[1], [0], [0], [1], [0, 0, 1, 1], [], []>} : vector<18x32xbf16>, vector<32x32xbf16>, vector<18x32xf32> -> vector<18x32xf32>
      %121 = arith.addf %5, %120 : vector<18x32xf32>
      %122 = vector.broadcast %26 : vector<1x32xf32> to vector<18x32xf32>
      %123 = arith.addf %121, %122 : vector<18x32xf32>
      %cst_39 = arith.constant dense<0.000000e+00> : vector<18xf32>
      %124 = vector.multi_reduction <add>, %123, %cst_39 [1] : vector<18x32xf32> to vector<18xf32>
      %125 = vector.shape_cast %124 : vector<18xf32> to vector<18x1xf32>
      %cst_40 = arith.constant 3.200000e+01 : f32
      %126 = vector.broadcast %cst_40 : f32 to vector<18x1xf32>
      %127 = arith.divf %125, %126 : vector<18x1xf32>
      %128 = vector.broadcast %127 : vector<18x1xf32> to vector<18x32xf32>
      %129 = arith.subf %123, %128 : vector<18x32xf32>
      %130 = arith.mulf %129, %129 : vector<18x32xf32>
      %cst_41 = arith.constant dense<0.000000e+00> : vector<18xf32>
      %131 = vector.multi_reduction <add>, %130, %cst_41 [1] : vector<18x32xf32> to vector<18xf32>
      %132 = vector.shape_cast %131 : vector<18xf32> to vector<18x1xf32>
      %cst_42 = arith.constant 3.200000e+01 : f32
      %133 = vector.broadcast %cst_42 : f32 to vector<18x1xf32>
      %134 = arith.divf %132, %133 : vector<18x1xf32>
      %135 = vector.broadcast %127 : vector<18x1xf32> to vector<18x32xf32>
      %136 = arith.subf %123, %135 : vector<18x32xf32>
      %cst_43 = arith.constant 9.99999974E-6 : f32
      %137 = vector.broadcast %cst_43 : f32 to vector<18x1xf32>
      %138 = arith.addf %134, %137 : vector<18x1xf32>
      %139 = math.rsqrt %138 : vector<18x1xf32>
      %140 = vector.broadcast %139 : vector<18x1xf32> to vector<18x32xf32>
      %141 = arith.mulf %136, %140 : vector<18x32xf32>
      %142 = vector.broadcast %23 : vector<1x32xf32> to vector<18x32xf32>
      %143 = arith.mulf %141, %142 : vector<18x32xf32>
      %144 = vector.broadcast %24 : vector<1x32xf32> to vector<18x32xf32>
      %145 = arith.addf %143, %144 : vector<18x32xf32>
      %146 = arith.truncf %145 : vector<18x32xf32> to vector<18x32xbf16>
      %cst_44 = arith.constant dense<0.000000e+00> : vector<18x128xf32>
      %147 = tpu.matmul %146, %19, %cst_44 {dimension_numbers = #tpu.dot_dimension_numbers<[1], [0], [0], [1], [0, 0, 1, 1], [], []>} : vector<18x32xbf16>, vector<32x128xbf16>, vector<18x128xf32> -> vector<18x128xf32>
      %148 = vector.broadcast %27 : vector<1x128xf32> to vector<18x128xf32>
      %149 = arith.addf %147, %148 : vector<18x128xf32>
      %cst_45 = arith.constant 5.000000e-01 : f32
      %150 = vector.broadcast %cst_45 : f32 to vector<18x128xf32>
      %151 = arith.mulf %150, %149 : vector<18x128xf32>
      %cst_46 = arith.constant 1.41421354 : f32
      %152 = vector.broadcast %cst_46 : f32 to vector<18x128xf32>
      %153 = arith.divf %149, %152 : vector<18x128xf32>
      %cst_47 = arith.constant 0.000000e+00 : f32
      %154 = vector.broadcast %cst_47 : f32 to vector<18x128xf32>
      %155 = arith.cmpf oge, %153, %154 : vector<18x128xf32>
      %cst_48 = arith.constant 1.000000e+00 : f32
      %cst_49 = arith.constant -1.000000e+00 : f32
      %156 = vector.broadcast %cst_48 : f32 to vector<18x128xf32>
      %157 = vector.broadcast %cst_49 : f32 to vector<18x128xf32>
      %158 = arith.select %155, %156, %157 : vector<18x128xi1>, vector<18x128xf32>
      %159 = math.absf %153 : vector<18x128xf32>
      %cst_50 = arith.constant 0.327591091 : f32
      %160 = vector.broadcast %cst_50 : f32 to vector<18x128xf32>
      %161 = arith.mulf %160, %159 : vector<18x128xf32>
      %cst_51 = arith.constant 1.000000e+00 : f32
      %162 = vector.broadcast %cst_51 : f32 to vector<18x128xf32>
      %163 = arith.addf %162, %161 : vector<18x128xf32>
      %cst_52 = arith.constant 1.000000e+00 : f32
      %164 = vector.broadcast %cst_52 : f32 to vector<18x128xf32>
      %165 = arith.divf %164, %163 : vector<18x128xf32>
      %cst_53 = arith.constant 1.06140542 : f32
      %166 = vector.broadcast %cst_53 : f32 to vector<18x128xf32>
      %167 = arith.mulf %166, %165 : vector<18x128xf32>
      %cst_54 = arith.constant -1.45315206 : f32
      %168 = vector.broadcast %cst_54 : f32 to vector<18x128xf32>
      %169 = arith.addf %167, %168 : vector<18x128xf32>
      %170 = arith.mulf %169, %165 : vector<18x128xf32>
      %cst_55 = arith.constant 1.42141378 : f32
      %171 = vector.broadcast %cst_55 : f32 to vector<18x128xf32>
      %172 = arith.addf %170, %171 : vector<18x128xf32>
      %173 = arith.mulf %172, %165 : vector<18x128xf32>
      %cst_56 = arith.constant -0.284496725 : f32
      %174 = vector.broadcast %cst_56 : f32 to vector<18x128xf32>
      %175 = arith.addf %173, %174 : vector<18x128xf32>
      %176 = arith.mulf %175, %165 : vector<18x128xf32>
      %cst_57 = arith.constant 0.254829586 : f32
      %177 = vector.broadcast %cst_57 : f32 to vector<18x128xf32>
      %178 = arith.addf %176, %177 : vector<18x128xf32>
      %179 = arith.mulf %178, %165 : vector<18x128xf32>
      %cst_58 = arith.constant 0.000000e+00 : f32
      %180 = vector.broadcast %cst_58 : f32 to vector<18x128xf32>
      %181 = arith.subf %180, %159 : vector<18x128xf32>
      %182 = arith.mulf %181, %159 : vector<18x128xf32>
      %183 = math.exp %182 : vector<18x128xf32>
      %184 = arith.mulf %179, %183 : vector<18x128xf32>
      %cst_59 = arith.constant 1.000000e+00 : f32
      %185 = vector.broadcast %cst_59 : f32 to vector<18x128xf32>
      %186 = arith.subf %185, %184 : vector<18x128xf32>
      %187 = arith.mulf %158, %186 : vector<18x128xf32>
      %cst_60 = arith.constant 1.000000e+00 : f32
      %188 = vector.broadcast %cst_60 : f32 to vector<18x128xf32>
      %189 = arith.addf %188, %187 : vector<18x128xf32>
      %190 = arith.mulf %151, %189 : vector<18x128xf32>
      %191 = arith.truncf %190 : vector<18x128xf32> to vector<18x128xbf16>
      %cst_61 = arith.constant dense<0.000000e+00> : vector<18x32xf32>
      %192 = tpu.matmul %191, %15, %cst_61 {dimension_numbers = #tpu.dot_dimension_numbers<[1], [0], [0], [1], [0, 0, 1, 1], [], []>} : vector<18x128xbf16>, vector<128x32xbf16>, vector<18x32xf32> -> vector<18x32xf32>
      %193 = arith.addf %123, %192 : vector<18x32xf32>
      %194 = vector.broadcast %28 : vector<1x32xf32> to vector<18x32xf32>
      %195 = arith.addf %193, %194 : vector<18x32xf32>
      %c1 = arith.constant 1 : index
      %c0_62 = arith.constant 0 : index
      %c0_63 = arith.constant 0 : index
      %196 = vector.load %arg7[%c1, %c0_62, %c0_63] : memref<2x32x288xbf16, #tpu.memory_space<vmem>>, vector<1x32x288xbf16>
      %197 = vector.shape_cast %196 : vector<1x32x288xbf16> to vector<32x288xbf16>
      %c1_64 = arith.constant 1 : index
      %c0_65 = arith.constant 0 : index
      %c0_66 = arith.constant 0 : index
      %198 = vector.load %arg8[%c1_64, %c0_65, %c0_66] : memref<2x128x32xbf16, #tpu.memory_space<vmem>>, vector<1x128x32xbf16>
      %199 = vector.shape_cast %198 : vector<1x128x32xbf16> to vector<128x32xbf16>
      %c1_67 = arith.constant 1 : index
      %c0_68 = arith.constant 0 : index
      %c0_69 = arith.constant 0 : index
      %200 = vector.load %arg9[%c1_67, %c0_68, %c0_69] : memref<2x4x128xf32, #tpu.memory_space<vmem>>, vector<1x4x128xf32>
      %201 = vector.shape_cast %200 : vector<1x4x128xf32> to vector<4x128xf32>
      %202 = vector.extract_strided_slice %197 {offsets = [0, 0], sizes = [32, 96], strides = [1, 1]} : vector<32x288xbf16> to vector<32x96xbf16>
      %203 = vector.extract_strided_slice %197 {offsets = [0, 128], sizes = [32, 128], strides = [1, 1]} : vector<32x288xbf16> to vector<32x128xbf16>
      %204 = vector.extract_strided_slice %197 {offsets = [0, 256], sizes = [32, 32], strides = [1, 1]} : vector<32x288xbf16> to vector<32x32xbf16>
      %205 = vector.extract_strided_slice %201 {offsets = [0, 0], sizes = [1, 32], strides = [1, 1]} : vector<4x128xf32> to vector<1x32xf32>
      %206 = vector.extract_strided_slice %201 {offsets = [0, 32], sizes = [1, 32], strides = [1, 1]} : vector<4x128xf32> to vector<1x32xf32>
      %207 = vector.extract_strided_slice %201 {offsets = [0, 64], sizes = [1, 32], strides = [1, 1]} : vector<4x128xf32> to vector<1x32xf32>
      %208 = vector.extract_strided_slice %201 {offsets = [0, 96], sizes = [1, 32], strides = [1, 1]} : vector<4x128xf32> to vector<1x32xf32>
      %209 = vector.extract_strided_slice %201 {offsets = [1, 0], sizes = [1, 96], strides = [1, 1]} : vector<4x128xf32> to vector<1x96xf32>
      %210 = vector.extract_strided_slice %201 {offsets = [1, 96], sizes = [1, 32], strides = [1, 1]} : vector<4x128xf32> to vector<1x32xf32>
      %211 = vector.extract_strided_slice %201 {offsets = [2, 0], sizes = [1, 128], strides = [1, 1]} : vector<4x128xf32> to vector<1x128xf32>
      %212 = vector.extract_strided_slice %201 {offsets = [3, 0], sizes = [1, 32], strides = [1, 1]} : vector<4x128xf32> to vector<1x32xf32>
      %cst_70 = arith.constant dense<0.000000e+00> : vector<18xf32>
      %213 = vector.multi_reduction <add>, %195, %cst_70 [1] : vector<18x32xf32> to vector<18xf32>
      %214 = vector.shape_cast %213 : vector<18xf32> to vector<18x1xf32>
      %cst_71 = arith.constant 3.200000e+01 : f32
      %215 = vector.broadcast %cst_71 : f32 to vector<18x1xf32>
      %216 = arith.divf %214, %215 : vector<18x1xf32>
      %217 = vector.broadcast %216 : vector<18x1xf32> to vector<18x32xf32>
      %218 = arith.subf %195, %217 : vector<18x32xf32>
      %219 = arith.mulf %218, %218 : vector<18x32xf32>
      %cst_72 = arith.constant dense<0.000000e+00> : vector<18xf32>
      %220 = vector.multi_reduction <add>, %219, %cst_72 [1] : vector<18x32xf32> to vector<18xf32>
      %221 = vector.shape_cast %220 : vector<18xf32> to vector<18x1xf32>
      %cst_73 = arith.constant 3.200000e+01 : f32
      %222 = vector.broadcast %cst_73 : f32 to vector<18x1xf32>
      %223 = arith.divf %221, %222 : vector<18x1xf32>
      %224 = vector.broadcast %216 : vector<18x1xf32> to vector<18x32xf32>
      %225 = arith.subf %195, %224 : vector<18x32xf32>
      %cst_74 = arith.constant 9.99999974E-6 : f32
      %226 = vector.broadcast %cst_74 : f32 to vector<18x1xf32>
      %227 = arith.addf %223, %226 : vector<18x1xf32>
      %228 = math.rsqrt %227 : vector<18x1xf32>
      %229 = vector.broadcast %228 : vector<18x1xf32> to vector<18x32xf32>
      %230 = arith.mulf %225, %229 : vector<18x32xf32>
      %231 = vector.broadcast %205 : vector<1x32xf32> to vector<18x32xf32>
      %232 = arith.mulf %230, %231 : vector<18x32xf32>
      %233 = vector.broadcast %206 : vector<1x32xf32> to vector<18x32xf32>
      %234 = arith.addf %232, %233 : vector<18x32xf32>
      %235 = arith.truncf %234 : vector<18x32xf32> to vector<18x32xbf16>
      %cst_75 = arith.constant dense<0.000000e+00> : vector<18x96xf32>
      %236 = tpu.matmul %235, %202, %cst_75 {dimension_numbers = #tpu.dot_dimension_numbers<[1], [0], [0], [1], [0, 0, 1, 1], [], []>} : vector<18x32xbf16>, vector<32x96xbf16>, vector<18x96xf32> -> vector<18x96xf32>
      %237 = vector.broadcast %209 : vector<1x96xf32> to vector<18x96xf32>
      %238 = arith.addf %236, %237 : vector<18x96xf32>
      %239 = vector.shape_cast %238 : vector<18x96xf32> to vector<2x9x96xf32>
      %240 = arith.truncf %239 : vector<2x9x96xf32> to vector<2x9x96xbf16>
      %241 = vector.extract_strided_slice %240 {offsets = [0, 0, 0], sizes = [2, 9, 8], strides = [1, 1, 1]} : vector<2x9x96xbf16> to vector<2x9x8xbf16>
      %242 = vector.extract_strided_slice %240 {offsets = [0, 0, 32], sizes = [2, 9, 8], strides = [1, 1, 1]} : vector<2x9x96xbf16> to vector<2x9x8xbf16>
      %243 = vector.extract_strided_slice %240 {offsets = [0, 0, 64], sizes = [2, 9, 8], strides = [1, 1, 1]} : vector<2x9x96xbf16> to vector<2x9x8xbf16>
      "tpu.trace_start"() <{level = 10 : i32, message = "bqd,bkd->bqk"}> : () -> ()
      %cst_76 = arith.constant dense<0.000000e+00> : vector<2x9x9xf32>
      %244 = tpu.matmul %241, %242, %cst_76 {dimension_numbers = #tpu.dot_dimension_numbers<[2], [2], [1], [1], [0, 0, 0, 1, 1, 1], [0], [0]>} : vector<2x9x8xbf16>, vector<2x9x8xbf16>, vector<2x9x9xf32> -> vector<2x9x9xf32>
      "tpu.trace_stop"() : () -> ()
      %cst_77 = arith.constant dense<0xFF800000> : vector<2x9xf32>
      %245 = vector.multi_reduction <maximumf>, %244, %cst_77 [2] : vector<2x9x9xf32> to vector<2x9xf32>
      %246 = vector.shape_cast %245 : vector<2x9xf32> to vector<2x9x1xf32>
      %247 = vector.broadcast %246 : vector<2x9x1xf32> to vector<2x9x9xf32>
      %248 = arith.subf %244, %247 : vector<2x9x9xf32>
      %249 = math.exp %248 : vector<2x9x9xf32>
      %cst_78 = arith.constant dense<0.000000e+00> : vector<2x9xf32>
      %250 = vector.multi_reduction <add>, %249, %cst_78 [2] : vector<2x9x9xf32> to vector<2x9xf32>
      %251 = vector.shape_cast %250 : vector<2x9xf32> to vector<2x9x1xf32>
      %252 = vector.broadcast %251 : vector<2x9x1xf32> to vector<2x9x9xf32>
      %253 = arith.divf %249, %252 : vector<2x9x9xf32>
      %254 = arith.truncf %253 : vector<2x9x9xf32> to vector<2x9x9xbf16>
      "tpu.trace_start"() <{level = 10 : i32, message = "bqk,bkd->bqd"}> : () -> ()
      %cst_79 = arith.constant dense<0.000000e+00> : vector<2x9x8xf32>
      %255 = tpu.matmul %254, %243, %cst_79 {dimension_numbers = #tpu.dot_dimension_numbers<[2], [1], [1], [2], [0, 0, 0, 1, 1, 2], [0], [0]>} : vector<2x9x9xbf16>, vector<2x9x8xbf16>, vector<2x9x8xf32> -> vector<2x9x8xf32>
      "tpu.trace_stop"() : () -> ()
      %256 = vector.extract_strided_slice %240 {offsets = [0, 0, 8], sizes = [2, 9, 8], strides = [1, 1, 1]} : vector<2x9x96xbf16> to vector<2x9x8xbf16>
      %257 = vector.extract_strided_slice %240 {offsets = [0, 0, 40], sizes = [2, 9, 8], strides = [1, 1, 1]} : vector<2x9x96xbf16> to vector<2x9x8xbf16>
      %258 = vector.extract_strided_slice %240 {offsets = [0, 0, 72], sizes = [2, 9, 8], strides = [1, 1, 1]} : vector<2x9x96xbf16> to vector<2x9x8xbf16>
      "tpu.trace_start"() <{level = 10 : i32, message = "bqd,bkd->bqk"}> : () -> ()
      %cst_80 = arith.constant dense<0.000000e+00> : vector<2x9x9xf32>
      %259 = tpu.matmul %256, %257, %cst_80 {dimension_numbers = #tpu.dot_dimension_numbers<[2], [2], [1], [1], [0, 0, 0, 1, 1, 1], [0], [0]>} : vector<2x9x8xbf16>, vector<2x9x8xbf16>, vector<2x9x9xf32> -> vector<2x9x9xf32>
      "tpu.trace_stop"() : () -> ()
      %cst_81 = arith.constant dense<0xFF800000> : vector<2x9xf32>
      %260 = vector.multi_reduction <maximumf>, %259, %cst_81 [2] : vector<2x9x9xf32> to vector<2x9xf32>
      %261 = vector.shape_cast %260 : vector<2x9xf32> to vector<2x9x1xf32>
      %262 = vector.broadcast %261 : vector<2x9x1xf32> to vector<2x9x9xf32>
      %263 = arith.subf %259, %262 : vector<2x9x9xf32>
      %264 = math.exp %263 : vector<2x9x9xf32>
      %cst_82 = arith.constant dense<0.000000e+00> : vector<2x9xf32>
      %265 = vector.multi_reduction <add>, %264, %cst_82 [2] : vector<2x9x9xf32> to vector<2x9xf32>
      %266 = vector.shape_cast %265 : vector<2x9xf32> to vector<2x9x1xf32>
      %267 = vector.broadcast %266 : vector<2x9x1xf32> to vector<2x9x9xf32>
      %268 = arith.divf %264, %267 : vector<2x9x9xf32>
      %269 = arith.truncf %268 : vector<2x9x9xf32> to vector<2x9x9xbf16>
      "tpu.trace_start"() <{level = 10 : i32, message = "bqk,bkd->bqd"}> : () -> ()
      %cst_83 = arith.constant dense<0.000000e+00> : vector<2x9x8xf32>
      %270 = tpu.matmul %269, %258, %cst_83 {dimension_numbers = #tpu.dot_dimension_numbers<[2], [1], [1], [2], [0, 0, 0, 1, 1, 2], [0], [0]>} : vector<2x9x9xbf16>, vector<2x9x8xbf16>, vector<2x9x8xf32> -> vector<2x9x8xf32>
      "tpu.trace_stop"() : () -> ()
      %271 = vector.extract_strided_slice %240 {offsets = [0, 0, 16], sizes = [2, 9, 8], strides = [1, 1, 1]} : vector<2x9x96xbf16> to vector<2x9x8xbf16>
      %272 = vector.extract_strided_slice %240 {offsets = [0, 0, 48], sizes = [2, 9, 8], strides = [1, 1, 1]} : vector<2x9x96xbf16> to vector<2x9x8xbf16>
      %273 = vector.extract_strided_slice %240 {offsets = [0, 0, 80], sizes = [2, 9, 8], strides = [1, 1, 1]} : vector<2x9x96xbf16> to vector<2x9x8xbf16>
      "tpu.trace_start"() <{level = 10 : i32, message = "bqd,bkd->bqk"}> : () -> ()
      %cst_84 = arith.constant dense<0.000000e+00> : vector<2x9x9xf32>
      %274 = tpu.matmul %271, %272, %cst_84 {dimension_numbers = #tpu.dot_dimension_numbers<[2], [2], [1], [1], [0, 0, 0, 1, 1, 1], [0], [0]>} : vector<2x9x8xbf16>, vector<2x9x8xbf16>, vector<2x9x9xf32> -> vector<2x9x9xf32>
      "tpu.trace_stop"() : () -> ()
      %cst_85 = arith.constant dense<0xFF800000> : vector<2x9xf32>
      %275 = vector.multi_reduction <maximumf>, %274, %cst_85 [2] : vector<2x9x9xf32> to vector<2x9xf32>
      %276 = vector.shape_cast %275 : vector<2x9xf32> to vector<2x9x1xf32>
      %277 = vector.broadcast %276 : vector<2x9x1xf32> to vector<2x9x9xf32>
      %278 = arith.subf %274, %277 : vector<2x9x9xf32>
      %279 = math.exp %278 : vector<2x9x9xf32>
      %cst_86 = arith.constant dense<0.000000e+00> : vector<2x9xf32>
      %280 = vector.multi_reduction <add>, %279, %cst_86 [2] : vector<2x9x9xf32> to vector<2x9xf32>
      %281 = vector.shape_cast %280 : vector<2x9xf32> to vector<2x9x1xf32>
      %282 = vector.broadcast %281 : vector<2x9x1xf32> to vector<2x9x9xf32>
      %283 = arith.divf %279, %282 : vector<2x9x9xf32>
      %284 = arith.truncf %283 : vector<2x9x9xf32> to vector<2x9x9xbf16>
      "tpu.trace_start"() <{level = 10 : i32, message = "bqk,bkd->bqd"}> : () -> ()
      %cst_87 = arith.constant dense<0.000000e+00> : vector<2x9x8xf32>
      %285 = tpu.matmul %284, %273, %cst_87 {dimension_numbers = #tpu.dot_dimension_numbers<[2], [1], [1], [2], [0, 0, 0, 1, 1, 2], [0], [0]>} : vector<2x9x9xbf16>, vector<2x9x8xbf16>, vector<2x9x8xf32> -> vector<2x9x8xf32>
      "tpu.trace_stop"() : () -> ()
      %286 = vector.extract_strided_slice %240 {offsets = [0, 0, 24], sizes = [2, 9, 8], strides = [1, 1, 1]} : vector<2x9x96xbf16> to vector<2x9x8xbf16>
      %287 = vector.extract_strided_slice %240 {offsets = [0, 0, 56], sizes = [2, 9, 8], strides = [1, 1, 1]} : vector<2x9x96xbf16> to vector<2x9x8xbf16>
      %288 = vector.extract_strided_slice %240 {offsets = [0, 0, 88], sizes = [2, 9, 8], strides = [1, 1, 1]} : vector<2x9x96xbf16> to vector<2x9x8xbf16>
      "tpu.trace_start"() <{level = 10 : i32, message = "bqd,bkd->bqk"}> : () -> ()
      %cst_88 = arith.constant dense<0.000000e+00> : vector<2x9x9xf32>
      %289 = tpu.matmul %286, %287, %cst_88 {dimension_numbers = #tpu.dot_dimension_numbers<[2], [2], [1], [1], [0, 0, 0, 1, 1, 1], [0], [0]>} : vector<2x9x8xbf16>, vector<2x9x8xbf16>, vector<2x9x9xf32> -> vector<2x9x9xf32>
      "tpu.trace_stop"() : () -> ()
      %cst_89 = arith.constant dense<0xFF800000> : vector<2x9xf32>
      %290 = vector.multi_reduction <maximumf>, %289, %cst_89 [2] : vector<2x9x9xf32> to vector<2x9xf32>
      %291 = vector.shape_cast %290 : vector<2x9xf32> to vector<2x9x1xf32>
      %292 = vector.broadcast %291 : vector<2x9x1xf32> to vector<2x9x9xf32>
      %293 = arith.subf %289, %292 : vector<2x9x9xf32>
      %294 = math.exp %293 : vector<2x9x9xf32>
      %cst_90 = arith.constant dense<0.000000e+00> : vector<2x9xf32>
      %295 = vector.multi_reduction <add>, %294, %cst_90 [2] : vector<2x9x9xf32> to vector<2x9xf32>
      %296 = vector.shape_cast %295 : vector<2x9xf32> to vector<2x9x1xf32>
      %297 = vector.broadcast %296 : vector<2x9x1xf32> to vector<2x9x9xf32>
      %298 = arith.divf %294, %297 : vector<2x9x9xf32>
      %299 = arith.truncf %298 : vector<2x9x9xf32> to vector<2x9x9xbf16>
      "tpu.trace_start"() <{level = 10 : i32, message = "bqk,bkd->bqd"}> : () -> ()
      %cst_91 = arith.constant dense<0.000000e+00> : vector<2x9x8xf32>
      %300 = tpu.matmul %299, %288, %cst_91 {dimension_numbers = #tpu.dot_dimension_numbers<[2], [1], [1], [2], [0, 0, 0, 1, 1, 2], [0], [0]>} : vector<2x9x9xbf16>, vector<2x9x8xbf16>, vector<2x9x8xf32> -> vector<2x9x8xf32>
      "tpu.trace_stop"() : () -> ()
      %301 = tpu.concatenate %255, %270, %285, %300 in 2 : vector<2x9x8xf32>, vector<2x9x8xf32>, vector<2x9x8xf32>, vector<2x9x8xf32> -> vector<2x9x32xf32>
      %302 = vector.shape_cast %301 : vector<2x9x32xf32> to vector<18x32xf32>
      %303 = arith.truncf %302 : vector<18x32xf32> to vector<18x32xbf16>
      %cst_92 = arith.constant dense<0.000000e+00> : vector<18x32xf32>
      %304 = tpu.matmul %303, %204, %cst_92 {dimension_numbers = #tpu.dot_dimension_numbers<[1], [0], [0], [1], [0, 0, 1, 1], [], []>} : vector<18x32xbf16>, vector<32x32xbf16>, vector<18x32xf32> -> vector<18x32xf32>
      %305 = arith.addf %195, %304 : vector<18x32xf32>
      %306 = vector.broadcast %210 : vector<1x32xf32> to vector<18x32xf32>
      %307 = arith.addf %305, %306 : vector<18x32xf32>
      %cst_93 = arith.constant dense<0.000000e+00> : vector<18xf32>
      %308 = vector.multi_reduction <add>, %307, %cst_93 [1] : vector<18x32xf32> to vector<18xf32>
      %309 = vector.shape_cast %308 : vector<18xf32> to vector<18x1xf32>
      %cst_94 = arith.constant 3.200000e+01 : f32
      %310 = vector.broadcast %cst_94 : f32 to vector<18x1xf32>
      %311 = arith.divf %309, %310 : vector<18x1xf32>
      %312 = vector.broadcast %311 : vector<18x1xf32> to vector<18x32xf32>
      %313 = arith.subf %307, %312 : vector<18x32xf32>
      %314 = arith.mulf %313, %313 : vector<18x32xf32>
      %cst_95 = arith.constant dense<0.000000e+00> : vector<18xf32>
      %315 = vector.multi_reduction <add>, %314, %cst_95 [1] : vector<18x32xf32> to vector<18xf32>
      %316 = vector.shape_cast %315 : vector<18xf32> to vector<18x1xf32>
      %cst_96 = arith.constant 3.200000e+01 : f32
      %317 = vector.broadcast %cst_96 : f32 to vector<18x1xf32>
      %318 = arith.divf %316, %317 : vector<18x1xf32>
      %319 = vector.broadcast %311 : vector<18x1xf32> to vector<18x32xf32>
      %320 = arith.subf %307, %319 : vector<18x32xf32>
      %cst_97 = arith.constant 9.99999974E-6 : f32
      %321 = vector.broadcast %cst_97 : f32 to vector<18x1xf32>
      %322 = arith.addf %318, %321 : vector<18x1xf32>
      %323 = math.rsqrt %322 : vector<18x1xf32>
      %324 = vector.broadcast %323 : vector<18x1xf32> to vector<18x32xf32>
      %325 = arith.mulf %320, %324 : vector<18x32xf32>
      %326 = vector.broadcast %207 : vector<1x32xf32> to vector<18x32xf32>
      %327 = arith.mulf %325, %326 : vector<18x32xf32>
      %328 = vector.broadcast %208 : vector<1x32xf32> to vector<18x32xf32>
      %329 = arith.addf %327, %328 : vector<18x32xf32>
      %330 = arith.truncf %329 : vector<18x32xf32> to vector<18x32xbf16>
      %cst_98 = arith.constant dense<0.000000e+00> : vector<18x128xf32>
      %331 = tpu.matmul %330, %203, %cst_98 {dimension_numbers = #tpu.dot_dimension_numbers<[1], [0], [0], [1], [0, 0, 1, 1], [], []>} : vector<18x32xbf16>, vector<32x128xbf16>, vector<18x128xf32> -> vector<18x128xf32>
      %332 = vector.broadcast %211 : vector<1x128xf32> to vector<18x128xf32>
      %333 = arith.addf %331, %332 : vector<18x128xf32>
      %cst_99 = arith.constant 5.000000e-01 : f32
      %334 = vector.broadcast %cst_99 : f32 to vector<18x128xf32>
      %335 = arith.mulf %334, %333 : vector<18x128xf32>
      %cst_100 = arith.constant 1.41421354 : f32
      %336 = vector.broadcast %cst_100 : f32 to vector<18x128xf32>
      %337 = arith.divf %333, %336 : vector<18x128xf32>
      %cst_101 = arith.constant 0.000000e+00 : f32
      %338 = vector.broadcast %cst_101 : f32 to vector<18x128xf32>
      %339 = arith.cmpf oge, %337, %338 : vector<18x128xf32>
      %cst_102 = arith.constant 1.000000e+00 : f32
      %cst_103 = arith.constant -1.000000e+00 : f32
      %340 = vector.broadcast %cst_102 : f32 to vector<18x128xf32>
      %341 = vector.broadcast %cst_103 : f32 to vector<18x128xf32>
      %342 = arith.select %339, %340, %341 : vector<18x128xi1>, vector<18x128xf32>
      %343 = math.absf %337 : vector<18x128xf32>
      %cst_104 = arith.constant 0.327591091 : f32
      %344 = vector.broadcast %cst_104 : f32 to vector<18x128xf32>
      %345 = arith.mulf %344, %343 : vector<18x128xf32>
      %cst_105 = arith.constant 1.000000e+00 : f32
      %346 = vector.broadcast %cst_105 : f32 to vector<18x128xf32>
      %347 = arith.addf %346, %345 : vector<18x128xf32>
      %cst_106 = arith.constant 1.000000e+00 : f32
      %348 = vector.broadcast %cst_106 : f32 to vector<18x128xf32>
      %349 = arith.divf %348, %347 : vector<18x128xf32>
      %cst_107 = arith.constant 1.06140542 : f32
      %350 = vector.broadcast %cst_107 : f32 to vector<18x128xf32>
      %351 = arith.mulf %350, %349 : vector<18x128xf32>
      %cst_108 = arith.constant -1.45315206 : f32
      %352 = vector.broadcast %cst_108 : f32 to vector<18x128xf32>
      %353 = arith.addf %351, %352 : vector<18x128xf32>
      %354 = arith.mulf %353, %349 : vector<18x128xf32>
      %cst_109 = arith.constant 1.42141378 : f32
      %355 = vector.broadcast %cst_109 : f32 to vector<18x128xf32>
      %356 = arith.addf %354, %355 : vector<18x128xf32>
      %357 = arith.mulf %356, %349 : vector<18x128xf32>
      %cst_110 = arith.constant -0.284496725 : f32
      %358 = vector.broadcast %cst_110 : f32 to vector<18x128xf32>
      %359 = arith.addf %357, %358 : vector<18x128xf32>
      %360 = arith.mulf %359, %349 : vector<18x128xf32>
      %cst_111 = arith.constant 0.254829586 : f32
      %361 = vector.broadcast %cst_111 : f32 to vector<18x128xf32>
      %362 = arith.addf %360, %361 : vector<18x128xf32>
      %363 = arith.mulf %362, %349 : vector<18x128xf32>
      %cst_112 = arith.constant 0.000000e+00 : f32
      %364 = vector.broadcast %cst_112 : f32 to vector<18x128xf32>
      %365 = arith.subf %364, %343 : vector<18x128xf32>
      %366 = arith.mulf %365, %343 : vector<18x128xf32>
      %367 = math.exp %366 : vector<18x128xf32>
      %368 = arith.mulf %363, %367 : vector<18x128xf32>
      %cst_113 = arith.constant 1.000000e+00 : f32
      %369 = vector.broadcast %cst_113 : f32 to vector<18x128xf32>
      %370 = arith.subf %369, %368 : vector<18x128xf32>
      %371 = arith.mulf %342, %370 : vector<18x128xf32>
      %cst_114 = arith.constant 1.000000e+00 : f32
      %372 = vector.broadcast %cst_114 : f32 to vector<18x128xf32>
      %373 = arith.addf %372, %371 : vector<18x128xf32>
      %374 = arith.mulf %335, %373 : vector<18x128xf32>
      %375 = arith.truncf %374 : vector<18x128xf32> to vector<18x128xbf16>
      %cst_115 = arith.constant dense<0.000000e+00> : vector<18x32xf32>
      %376 = tpu.matmul %375, %199, %cst_115 {dimension_numbers = #tpu.dot_dimension_numbers<[1], [0], [0], [1], [0, 0, 1, 1], [], []>} : vector<18x128xbf16>, vector<128x32xbf16>, vector<18x32xf32> -> vector<18x32xf32>
      %377 = arith.addf %307, %376 : vector<18x32xf32>
      %378 = vector.broadcast %212 : vector<1x32xf32> to vector<18x32xf32>
      %379 = arith.addf %377, %378 : vector<18x32xf32>
      %380 = vector.shape_cast %379 : vector<18x32xf32> to vector<2x9x32xf32>
      %cst_116 = arith.constant dense<0.000000e+00> : vector<2x32xf32>
      %381 = vector.multi_reduction <add>, %380, %cst_116 [1] : vector<2x9x32xf32> to vector<2x32xf32>
      %cst_117 = arith.constant 9.000000e+00 : f32
      %382 = vector.broadcast %cst_117 : f32 to vector<2x32xf32>
      %383 = arith.divf %381, %382 : vector<2x32xf32>
      %c1_118 = arith.constant 1 : index
      %c0_119 = arith.constant 0 : index
      %c0_120 = arith.constant 0 : index
      %384 = vector.load %arg10[%c1_118, %c0_119, %c0_120] : memref<2x2x32xf32, #tpu.memory_space<vmem>>, vector<1x2x32xf32>
      %385 = vector.shape_cast %384 : vector<1x2x32xf32> to vector<2x32xf32>
      %386 = vector.extract_strided_slice %385 {offsets = [0, 0], sizes = [1, 32], strides = [1, 1]} : vector<2x32xf32> to vector<1x32xf32>
      %387 = vector.extract_strided_slice %385 {offsets = [1, 0], sizes = [1, 32], strides = [1, 1]} : vector<2x32xf32> to vector<1x32xf32>
      %cst_121 = arith.constant dense<0.000000e+00> : vector<2xf32>
      %388 = vector.multi_reduction <add>, %383, %cst_121 [1] : vector<2x32xf32> to vector<2xf32>
      %389 = vector.shape_cast %388 : vector<2xf32> to vector<2x1xf32>
      %cst_122 = arith.constant 3.200000e+01 : f32
      %390 = vector.broadcast %cst_122 : f32 to vector<2x1xf32>
      %391 = arith.divf %389, %390 : vector<2x1xf32>
      %392 = vector.broadcast %391 : vector<2x1xf32> to vector<2x32xf32>
      %393 = arith.subf %383, %392 : vector<2x32xf32>
      %394 = arith.mulf %393, %393 : vector<2x32xf32>
      %cst_123 = arith.constant dense<0.000000e+00> : vector<2xf32>
      %395 = vector.multi_reduction <add>, %394, %cst_123 [1] : vector<2x32xf32> to vector<2xf32>
      %396 = vector.shape_cast %395 : vector<2xf32> to vector<2x1xf32>
      %cst_124 = arith.constant 3.200000e+01 : f32
      %397 = vector.broadcast %cst_124 : f32 to vector<2x1xf32>
      %398 = arith.divf %396, %397 : vector<2x1xf32>
      %399 = vector.broadcast %391 : vector<2x1xf32> to vector<2x32xf32>
      %400 = arith.subf %383, %399 : vector<2x32xf32>
      %cst_125 = arith.constant 9.99999974E-6 : f32
      %401 = vector.broadcast %cst_125 : f32 to vector<2x1xf32>
      %402 = arith.addf %398, %401 : vector<2x1xf32>
      %403 = math.rsqrt %402 : vector<2x1xf32>
      %404 = vector.broadcast %403 : vector<2x1xf32> to vector<2x32xf32>
      %405 = arith.mulf %400, %404 : vector<2x32xf32>
      %406 = vector.broadcast %386 : vector<1x32xf32> to vector<2x32xf32>
      %407 = arith.mulf %405, %406 : vector<2x32xf32>
      %408 = vector.broadcast %387 : vector<1x32xf32> to vector<2x32xf32>
      %409 = arith.addf %407, %408 : vector<2x32xf32>
      %c1_126 = arith.constant 1 : index
      %c0_127 = arith.constant 0 : index
      %c0_128 = arith.constant 0 : index
      %410 = vector.load %arg11[%c1_126, %c0_127, %c0_128] : memref<2x32x1xf32, #tpu.memory_space<vmem>>, vector<1x32x1xf32>
      %411 = vector.shape_cast %410 : vector<1x32x1xf32> to vector<32x1xf32>
      %cst_129 = arith.constant dense<0.000000e+00> : vector<2x1xf32>
      %412 = tpu.matmul %409, %411, %cst_129 {dimension_numbers = #tpu.dot_dimension_numbers<[1], [0], [0], [1], [0, 0, 1, 1], [], []>} : vector<2x32xf32>, vector<32x1xf32>, vector<2x1xf32> -> vector<2x1xf32>
      %c1_130 = arith.constant 1 : index
      %c0_131 = arith.constant 0 : index
      %c0_132 = arith.constant 0 : index
      %413 = vector.load %arg12[%c1_130, %c0_131, %c0_132] : memref<2x1x1xf32, #tpu.memory_space<vmem>>, vector<1x1x1xf32>
      %414 = vector.shape_cast %413 : vector<1x1x1xf32> to vector<1x1xf32>
      %415 = vector.broadcast %414 : vector<1x1xf32> to vector<2x1xf32>
      %416 = arith.addf %412, %415 : vector<2x1xf32>
      %417 = vector.shape_cast %416 : vector<2x1xf32> to vector<1x2x1xf32>
      %c0_133 = arith.constant 0 : index
      %c0_134 = arith.constant 0 : index
      %c0_135 = arith.constant 0 : index
      %418 = vector.load %arg13[%c0_133, %c0_134, %c0_135] : memref<1x2x1xf32, #tpu.memory_space<vmem>>, vector<1x2x1xf32>
      tpu.vector_store %arg13[%c0_133, %c0_134, %c0_135], %417 {strides = array<i32>} : memref<1x2x1xf32, #tpu.memory_space<vmem>>, vector<1x2x1xf32>,
    } else {
    }
    return
  }
  func.func @transform_0(%arg0: i32) -> (i32, i32) {
    %c0_i32 = arith.constant 0 : i32
    %c0_i32_0 = arith.constant 0 : i32
    %c0_i32_1 = arith.constant 0 : i32
    return %c0_i32, %c0_i32_0 : i32, i32
  }
  func.func @transform_1(%arg0: i32) -> (i32, i32) {
    %c0_i32 = arith.constant 0 : i32
    %c0_i32_0 = arith.constant 0 : i32
    %c0_i32_1 = arith.constant 0 : i32
    return %c0_i32, %c0_i32_0 : i32, i32
  }
  func.func @transform_2(%arg0: i32) -> (i32, i32) {
    %c0_i32 = arith.constant 0 : i32
    %c0_i32_0 = arith.constant 0 : i32
    %c0_i32_1 = arith.constant 0 : i32
    return %c0_i32, %c0_i32_0 : i32, i32
  }
  func.func @transform_3(%arg0: i32) -> (i32, i32, i32) {
    %c0_i32 = arith.constant 0 : i32
    %c0_i32_0 = arith.constant 0 : i32
    %c0_i32_1 = arith.constant 0 : i32
    %c0_i32_2 = arith.constant 0 : i32
    return %c0_i32, %c0_i32_0, %c0_i32_1 : i32, i32, i32
  }
  func.func @transform_4(%arg0: i32) -> (i32, i32, i32) {
    %c0_i32 = arith.constant 0 : i32
    %c0_i32_0 = arith.constant 0 : i32
    %c0_i32_1 = arith.constant 0 : i32
    %c0_i32_2 = arith.constant 0 : i32
    return %c0_i32, %c0_i32_0, %c0_i32_1 : i32, i32, i32
  }
  func.func @transform_5(%arg0: i32) -> (i32, i32, i32) {
    %c0_i32 = arith.constant 0 : i32
    %c0_i32_0 = arith.constant 0 : i32
    %c0_i32_1 = arith.constant 0 : i32
    %c0_i32_2 = arith.constant 0 : i32
    return %c0_i32, %c0_i32_0, %c0_i32_1 : i32, i32, i32
  }
  func.func @transform_6(%arg0: i32) -> (i32, i32, i32) {
    %c0_i32 = arith.constant 0 : i32
    %c0_i32_0 = arith.constant 0 : i32
    %c0_i32_1 = arith.constant 0 : i32
    %c0_i32_2 = arith.constant 0 : i32
    return %c0_i32, %c0_i32_0, %c0_i32_1 : i32, i32, i32
  }
  func.func @transform_7(%arg0: i32) -> (i32, i32, i32) {
    %c0_i32 = arith.constant 0 : i32
    %c0_i32_0 = arith.constant 0 : i32
    %c0_i32_1 = arith.constant 0 : i32
    %c0_i32_2 = arith.constant 0 : i32
    return %c0_i32, %c0_i32_0, %c0_i32_1 : i32, i32, i32
  }
  func.func @transform_8(%arg0: i32) -> (i32, i32, i32) {
    %c0_i32 = arith.constant 0 : i32
    %c0_i32_0 = arith.constant 0 : i32
    %c0_i32_1 = arith.constant 0 : i32
    %c0_i32_2 = arith.constant 0 : i32
    return %c0_i32, %c0_i32_0, %c0_i32_1 : i32, i32, i32
  }
  func.func @transform_9(%arg0: i32) -> (i32, i32, i32) {
    %c0_i32 = arith.constant 0 : i32
    %c0_i32_0 = arith.constant 0 : i32
    %c0_i32_1 = arith.constant 0 : i32
    %c0_i32_2 = arith.constant 0 : i32
    return %c0_i32, %c0_i32_0, %c0_i32_1 : i32, i32, i32
  }
  func.func @transform_10(%arg0: i32) -> (i32, i32, i32) {
    %c0_i32 = arith.constant 0 : i32
    %c0_i32_0 = arith.constant 0 : i32
    %c0_i32_1 = arith.constant 0 : i32
    %c0_i32_2 = arith.constant 0 : i32
    return %c0_i32, %c0_i32_0, %c0_i32_1 : i32, i32, i32
  }
  func.func @transform_11(%arg0: i32) -> (i32, i32, i32) {
    %c0_i32 = arith.constant 0 : i32
    %c0_i32_0 = arith.constant 0 : i32
    %c0_i32_1 = arith.constant 0 : i32
    %c0_i32_2 = arith.constant 0 : i32
    return %c0_i32, %c0_i32_0, %c0_i32_1 : i32, i32, i32
  }
  func.func @transform_12(%arg0: i32) -> (i32, i32, i32) {
    %c0_i32 = arith.constant 0 : i32
    %c0_i32_0 = arith.constant 0 : i32
    %c0_i32_1 = arith.constant 0 : i32
    return %arg0, %c0_i32, %c0_i32_0 : i32, i32, i32
  }
}

</mosaic_0001>

<llo_original>
// kernel: tpu_custom_call.1
$region0: #{tpu_custom_call.1}
  #allocation0 [shape = 'u32[]', space=smem, size = 0x4, offset = 0x4, fixed_abs, tag = 'smem constant byte address 0x4 - core index']
  #allocation1 [shape = 'u32[144,128]{1,0:T(1,128)}', space=vmem, size = 0x12000, scoped, tag = 'internal scratch']
  %s0 = inlined_call_operand.vmem [shape: f32[18,8], index: 0, kind: input, shape index: {}]
  %s1 = inlined_call_operand.vmem [shape: bf16[8,32], index: 1, kind: input, shape index: {}]
  %s2 = inlined_call_operand.vmem [shape: f32[18,32], index: 2, kind: input, shape index: {}]
  %s3 = inlined_call_operand.vmem [shape: bf16[1,32,288], index: 3, kind: input, shape index: {}]
  %s4 = inlined_call_operand.vmem [shape: bf16[1,128,32], index: 4, kind: input, shape index: {}]
  %s5 = inlined_call_operand.vmem [shape: f32[1,4,128], index: 5, kind: input, shape index: {}]
  %s6 = inlined_call_operand.vmem [shape: bf16[2,32,288], index: 6, kind: input, shape index: {}]
  %s7 = inlined_call_operand.vmem [shape: bf16[2,128,32], index: 7, kind: input, shape index: {}]
  %s8 = inlined_call_operand.vmem [shape: f32[2,4,128], index: 8, kind: input, shape index: {}]
  %s9 = inlined_call_operand.vmem [shape: f32[2,2,32], index: 9, kind: input, shape index: {}]
  %s10 = inlined_call_operand.vmem [shape: f32[2,32,1], index: 10, kind: input, shape index: {}]
  %s11 = inlined_call_operand.vmem [shape: f32[2,1,1], index: 11, kind: input, shape index: {}]
  %s12 = inlined_call_operand.vmem [shape: f32[2,2,1], index: 12, kind: output, shape index: {}]
  %s13 = sld [smem:[#allocation0]]
  $region89: #{tpu_custom_call.1} parent=0
    _
  %s15 = ssub.s32 1, %s13
  %s16 = scalar_select 0, %s15, %s13
  loop: start=0, step=1, limit=4
  $region2: #{tpu_custom_call.1} parent=0 // loop_pre_header
    _
  $region3: #{tpu_custom_call.1} parent=0 // loop_header
    %s18 = sphi 0, %s22
    %p19 = scmp.ge.s32.totalorder %s18, 4
    %s26 = sphi 0, %s26
    %s28 = sphi 0, %s26
    %s29 = sphi 0, %s28
    %s43 = sphi 0, %s29
    %s47 = sphi 0, %s47
    %s49 = sphi 0, %s47
    %s50 = sphi 0, %s49
    %s64 = sphi 0, %s50
    %s68 = sphi 0, %s68
    %s70 = sphi 0, %s68
    %s71 = sphi 0, %s70
    %s85 = sphi 0, %s71
    %s89 = sphi 0, %s89
    %s91 = sphi 0, %s89
    %s92 = sphi 0, %s91
    %s106 = sphi 0, %s92
    %s110 = sphi 0, %s110
    %s112 = sphi 0, %s110
    %s113 = sphi 0, %s112
    %s127 = sphi 0, %s113
    %s131 = sphi 0, %s131
    %s133 = sphi 0, %s131
    %s134 = sphi 0, %s133
    %s148 = sphi 0, %s134
    %s152 = sphi 0, %s152
    %s154 = sphi 0, %s152
    %s155 = sphi 0, %s154
    %s169 = sphi 0, %s155
    %s173 = sphi 0, %s173
    %s175 = sphi 0, %s173
    %s176 = sphi 0, %s175
    %s190 = sphi 0, %s176
    %s194 = sphi 0, %s194
    %s196 = sphi 0, %s194
    %s197 = sphi 0, %s196
    %s211 = sphi 0, %s197
    %s215 = sphi 0, %s215
    %s217 = sphi 0, %s215
    %s218 = sphi 0, %s217
    %s232 = sphi 0, %s218
    %s236 = sphi 0, %s236
    %s238 = sphi 0, %s236
    %s239 = sphi 0, %s238
    %s253 = sphi 0, %s239
    %s257 = sphi 0, %s257
    %s259 = sphi 0, %s257
    %s260 = sphi 0, %s259
    %s274 = sphi 0, %s260
    %s280 = sphi 0, %s282
    %s283 = sphi 0, %s280
    %s284 = sphi 0, %s283
    %s300 = sphi 0, %s284
  $region4: #{tpu_custom_call.1} parent=0 // loop_header_branch
    %21 = sbr.rel (%p19) target = $region8
  $region5: #{tpu_custom_call.1} parent=0 // loop_body
    %s23 = ssub.s32 %s18, 1
    %s24 = ssub.s32 %s18, 2
    %s25 = sadd.s32 %s18, 1
    %s27 = sadd.s32 %s26, 1
    %p30 = scmp.eq.s32.totalorder %s18, 1
    %p31 = scmp.ne.s32.totalorder %s26, %s28
    %p32 = scmp.eq.s32.totalorder %s18, 0
    %p33 = por %p31, %p32
    %p34 = scmp.ne.s32.totalorder %s26, %s28
    %p35 = scmp.eq.s32.totalorder %s23, 1
    %p36 = por %p34, %p35
    %p37 = scmp.ne.s32.totalorder %s28, %s29
    %p38 = scmp.eq.s32.totalorder %s23, 0
    %p39 = por %p37, %p38
    %p40 = scmp.ne.s32.totalorder %s28, %s29
    %p41 = scmp.eq.s32.totalorder %s24, 1
    %p42 = por %p40, %p41
    %p44 = scmp.ne.s32.totalorder %s29, %s43
    %p45 = scmp.eq.s32.totalorder %s24, 0
    %p46 = por %p44, %p45
    %s48 = sadd.s32 %s47, 1
    %p51 = scmp.eq.s32.totalorder %s18, 1
    %p52 = scmp.ne.s32.totalorder %s47, %s49
    %p53 = scmp.eq.s32.totalorder %s18, 0
    %p54 = por %p52, %p53
    %p55 = scmp.ne.s32.totalorder %s47, %s49
    %p56 = scmp.eq.s32.totalorder %s23, 1
    %p57 = por %p55, %p56
    %p58 = scmp.ne.s32.totalorder %s49, %s50
    %p59 = scmp.eq.s32.totalorder %s23, 0
    %p60 = por %p58, %p59
    %p61 = scmp.ne.s32.totalorder %s49, %s50
    %p62 = scmp.eq.s32.totalorder %s24, 1
    %p63 = por %p61, %p62
    %p65 = scmp.ne.s32.totalorder %s50, %s64
    %p66 = scmp.eq.s32.totalorder %s24, 0
    %p67 = por %p65, %p66
    %s69 = sadd.s32 %s68, 1
    %p72 = scmp.eq.s32.totalorder %s18, 1
    %p73 = scmp.ne.s32.totalorder %s68, %s70
    %p74 = scmp.eq.s32.totalorder %s18, 0
    %p75 = por %p73, %p74
    %p76 = scmp.ne.s32.totalorder %s68, %s70
    %p77 = scmp.eq.s32.totalorder %s23, 1
    %p78 = por %p76, %p77
    %p79 = scmp.ne.s32.totalorder %s70, %s71
    %p80 = scmp.eq.s32.totalorder %s23, 0
    %p81 = por %p79, %p80
    %p82 = scmp.ne.s32.totalorder %s70, %s71
    %p83 = scmp.eq.s32.totalorder %s24, 1
    %p84 = por %p82, %p83
    %p86 = scmp.ne.s32.totalorder %s71, %s85
    %p87 = scmp.eq.s32.totalorder %s24, 0
    %p88 = por %p86, %p87
    %s90 = sadd.s32 %s89, 1
    %p93 = scmp.eq.s32.totalorder %s18, 1
    %p94 = scmp.ne.s32.totalorder %s89, %s91
    %p95 = scmp.eq.s32.totalorder %s18, 0
    %p96 = por %p94, %p95
    %p97 = scmp.ne.s32.totalorder %s89, %s91
    %p98 = scmp.eq.s32.totalorder %s23, 1
    %p99 = por %p97, %p98
    %p100 = scmp.ne.s32.totalorder %s91, %s92
    %p101 = scmp.eq.s32.totalorder %s23, 0
    %p102 = por %p100, %p101
    %p103 = scmp.ne.s32.totalorder %s91, %s92
    %p104 = scmp.eq.s32.totalorder %s24, 1
    %p105 = por %p103, %p104
    %p107 = scmp.ne.s32.totalorder %s92, %s106
    %p108 = scmp.eq.s32.totalorder %s24, 0
    %p109 = por %p107, %p108
    %s111 = sadd.s32 %s110, 1
    %p114 = scmp.eq.s32.totalorder %s18, 1
    %p115 = scmp.ne.s32.totalorder %s110, %s112
    %p116 = scmp.eq.s32.totalorder %s18, 0
    %p117 = por %p115, %p116
    %p118 = scmp.ne.s32.totalorder %s110, %s112
    %p119 = scmp.eq.s32.totalorder %s23, 1
    %p120 = por %p118, %p119
    %p121 = scmp.ne.s32.totalorder %s112, %s113
    %p122 = scmp.eq.s32.totalorder %s23, 0
    %p123 = por %p121, %p122
    %p124 = scmp.ne.s32.totalorder %s112, %s113
    %p125 = scmp.eq.s32.totalorder %s24, 1
    %p126 = por %p124, %p125
    %p128 = scmp.ne.s32.totalorder %s113, %s127
    %p129 = scmp.eq.s32.totalorder %s24, 0
    %p130 = por %p128, %p129
    %s132 = sadd.s32 %s131, 1
    %p135 = scmp.eq.s32.totalorder %s18, 1
    %p136 = scmp.ne.s32.totalorder %s131, %s133
    %p137 = scmp.eq.s32.totalorder %s18, 0
    %p138 = por %p136, %p137
    %p139 = scmp.ne.s32.totalorder %s131, %s133
    %p140 = scmp.eq.s32.totalorder %s23, 1
    %p141 = por %p139, %p140
    %p142 = scmp.ne.s32.totalorder %s133, %s134
    %p143 = scmp.eq.s32.totalorder %s23, 0
    %p144 = por %p142, %p143
    %p145 = scmp.ne.s32.totalorder %s133, %s134
    %p146 = scmp.eq.s32.totalorder %s24, 1
    %p147 = por %p145, %p146
    %p149 = scmp.ne.s32.totalorder %s134, %s148
    %p150 = scmp.eq.s32.totalorder %s24, 0
    %p151 = por %p149, %p150
    %s153 = sadd.s32 %s152, 1
    %p156 = scmp.eq.s32.totalorder %s18, 1
    %p157 = scmp.ne.s32.totalorder %s152, %s154
    %p158 = scmp.eq.s32.totalorder %s18, 0
    %p159 = por %p157, %p158
    %p160 = scmp.ne.s32.totalorder %s152, %s154
    %p161 = scmp.eq.s32.totalorder %s23, 1
    %p162 = por %p160, %p161
    %p163 = scmp.ne.s32.totalorder %s154, %s155
    %p164 = scmp.eq.s32.totalorder %s23, 0
    %p165 = por %p163, %p164
    %p166 = scmp.ne.s32.totalorder %s154, %s155
    %p167 = scmp.eq.s32.totalorder %s24, 1
    %p168 = por %p166, %p167
    %p170 = scmp.ne.s32.totalorder %s155, %s169
    %p171 = scmp.eq.s32.totalorder %s24, 0
    %p172 = por %p170, %p171
    %s174 = sadd.s32 %s173, 1
    %p177 = scmp.eq.s32.totalorder %s18, 1
    %p178 = scmp.ne.s32.totalorder %s173, %s175
    %p179 = scmp.eq.s32.totalorder %s18, 0
    %p180 = por %p178, %p179
    %p181 = scmp.ne.s32.totalorder %s173, %s175
    %p182 = scmp.eq.s32.totalorder %s23, 1
    %p183 = por %p181, %p182
    %p184 = scmp.ne.s32.totalorder %s175, %s176
    %p185 = scmp.eq.s32.totalorder %s23, 0
    %p186 = por %p184, %p185
    %p187 = scmp.ne.s32.totalorder %s175, %s176
    %p188 = scmp.eq.s32.totalorder %s24, 1
    %p189 = por %p187, %p188
    %p191 = scmp.ne.s32.totalorder %s176, %s190
    %p192 = scmp.eq.s32.totalorder %s24, 0
    %p193 = por %p191, %p192
    %s195 = sadd.s32 %s194, 1
    %p198 = scmp.eq.s32.totalorder %s18, 1
    %p199 = scmp.ne.s32.totalorder %s194, %s196
    %p200 = scmp.eq.s32.totalorder %s18, 0
    %p201 = por %p199, %p200
    %p202 = scmp.ne.s32.totalorder %s194, %s196
    %p203 = scmp.eq.s32.totalorder %s23, 1
    %p204 = por %p202, %p203
    %p205 = scmp.ne.s32.totalorder %s196, %s197
    %p206 = scmp.eq.s32.totalorder %s23, 0
    %p207 = por %p205, %p206
    %p208 = scmp.ne.s32.totalorder %s196, %s197
    %p209 = scmp.eq.s32.totalorder %s24, 1
    %p210 = por %p208, %p209
    %p212 = scmp.ne.s32.totalorder %s197, %s211
    %p213 = scmp.eq.s32.totalorder %s24, 0
    %p214 = por %p212, %p213
    %s216 = sadd.s32 %s215, 1
    %p219 = scmp.eq.s32.totalorder %s18, 1
    %p220 = scmp.ne.s32.totalorder %s215, %s217
    %p221 = scmp.eq.s32.totalorder %s18, 0
    %p222 = por %p220, %p221
    %p223 = scmp.ne.s32.totalorder %s215, %s217
    %p224 = scmp.eq.s32.totalorder %s23, 1
    %p225 = por %p223, %p224
    %p226 = scmp.ne.s32.totalorder %s217, %s218
    %p227 = scmp.eq.s32.totalorder %s23, 0
    %p228 = por %p226, %p227
    %p229 = scmp.ne.s32.totalorder %s217, %s218
    %p230 = scmp.eq.s32.totalorder %s24, 1
    %p231 = por %p229, %p230
    %p233 = scmp.ne.s32.totalorder %s218, %s232
    %p234 = scmp.eq.s32.totalorder %s24, 0
    %p235 = por %p233, %p234
    %s237 = sadd.s32 %s236, 1
    %p240 = scmp.eq.s32.totalorder %s18, 1
    %p241 = scmp.ne.s32.totalorder %s236, %s238
    %p242 = scmp.eq.s32.totalorder %s18, 0
    %p243 = por %p241, %p242
    %p244 = scmp.ne.s32.totalorder %s236, %s238
    %p245 = scmp.eq.s32.totalorder %s23, 1
    %p246 = por %p244, %p245
    %p247 = scmp.ne.s32.totalorder %s238, %s239
    %p248 = scmp.eq.s32.totalorder %s23, 0
    %p249 = por %p247, %p248
    %p250 = scmp.ne.s32.totalorder %s238, %s239
    %p251 = scmp.eq.s32.totalorder %s24, 1
    %p252 = por %p250, %p251
    %p254 = scmp.ne.s32.totalorder %s239, %s253
    %p255 = scmp.eq.s32.totalorder %s24, 0
    %p256 = por %p254, %p255
    %s258 = sadd.s32 %s257, 1
    %p261 = scmp.eq.s32.totalorder %s18, 1
    %p262 = scmp.ne.s32.totalorder %s257, %s259
    %p263 = scmp.eq.s32.totalorder %s18, 0
    %p264 = por %p262, %p263
    %p265 = scmp.ne.s32.totalorder %s257, %s259
    %p266 = scmp.eq.s32.totalorder %s23, 1
    %p267 = por %p265, %p266
    %p268 = scmp.ne.s32.totalorder %s259, %s260
    %p269 = scmp.eq.s32.totalorder %s23, 0
    %p270 = por %p268, %p269
    %p271 = scmp.ne.s32.totalorder %s259, %s260
    %p272 = scmp.eq.s32.totalorder %s24, 1
    %p273 = por %p271, %p272
    %p275 = scmp.ne.s32.totalorder %s260, %s274
    %p276 = scmp.eq.s32.totalorder %s24, 0
    %p277 = por %p275, %p276
    %s278 = ssub.s32 %s18, %s25
    %p279 = scmp.eq.s32.totalorder %s278, 0
    %s281 = sadd.s32 %s280, 1
    %s282 = scalar_select %p279, %s280, %s281
    %p285 = pneg %p279
    %p286 = scmp.eq.s32.totalorder %s18, 1
    %p287 = por %p285, %p286
    %p288 = scmp.ne.s32.totalorder %s280, %s283
    %p289 = scmp.eq.s32.totalorder %s18, 0
    %p290 = por %p288, %p289
    %p291 = scmp.ne.s32.totalorder %s280, %s283
    %p292 = scmp.eq.s32.totalorder %s23, 1
    %p293 = por %p291, %p292
    %p294 = scmp.ne.s32.totalorder %s283, %s284
    %p295 = scmp.eq.s32.totalorder %s23, 0
    %p296 = por %p294, %p295
    %p297 = scmp.ne.s32.totalorder %s283, %s284
    %p298 = scmp.eq.s32.totalorder %s24, 1
    %p299 = por %p297, %p298
    %p301 = scmp.ne.s32.totalorder %s284, %s300
    %p302 = scmp.eq.s32.totalorder %s24, 0
    %p303 = por %p301, %p302
    %p304 = scmp.le.s32.totalorder 1, %s18
    %p305 = scmp.lt.s32.totalorder %s18, 3
    %p306 = pnand %p304, %p305
    %p307 = pneg %p306
    // Predicated region
    $region9: #{tpu_custom_call.1} parent=5 // pred_check
      _
    $region10: #{tpu_custom_call.1} parent=5 // pred_check_branch
      %309 = sbr.rel (%p306) target = $region12
    $region11: #{tpu_custom_call.1} parent=5 // pred_region
      %s310 = ssub.s32 %s18, 1
      // Predicated region
      $region13: #{tpu_custom_call.1} parent=11 // pred_check
        %p311 = pneg %p39
      $region14: #{tpu_custom_call.1} parent=11 // pred_check_branch
        %313 = sbr.rel (%p311) target = $region16
      $region15: #{tpu_custom_call.1} parent=11 // pred_region
        _
      $region16: #{tpu_custom_call.1} parent=11 // pred_fallthru
        _
      // Predicated region
      $region17: #{tpu_custom_call.1} parent=11 // pred_check
        %p314 = pneg %p60
      $region18: #{tpu_custom_call.1} parent=11 // pred_check_branch
        %316 = sbr.rel (%p314) target = $region20
      $region19: #{tpu_custom_call.1} parent=11 // pred_region
        _
      $region20: #{tpu_custom_call.1} parent=11 // pred_fallthru
        _
      // Predicated region
      $region21: #{tpu_custom_call.1} parent=11 // pred_check
        %p317 = pneg %p81
      $region22: #{tpu_custom_call.1} parent=11 // pred_check_branch
        %319 = sbr.rel (%p317) target = $region24
      $region23: #{tpu_custom_call.1} parent=11 // pred_region
        _
      $region24: #{tpu_custom_call.1} parent=11 // pred_fallthru
        _
      // Predicated region
      $region25: #{tpu_custom_call.1} parent=11 // pred_check
        %p320 = pneg %p102
      $region26: #{tpu_custom_call.1} parent=11 // pred_check_branch
        %322 = sbr.rel (%p320) target = $region28
      $region27: #{tpu_custom_call.1} parent=11 // pred_region
        _
      $region28: #{tpu_custom_call.1} parent=11 // pred_fallthru
        _
      // Predicated region
      $region29: #{tpu_custom_call.1} parent=11 // pred_check
        %p323 = pneg %p123
      $region30: #{tpu_custom_call.1} parent=11 // pred_check_branch
        %325 = sbr.rel (%p323) target = $region32
      $region31: #{tpu_custom_call.1} parent=11 // pred_region
        _
      $region32: #{tpu_custom_call.1} parent=11 // pred_fallthru
        _
      // Predicated region
      $region33: #{tpu_custom_call.1} parent=11 // pred_check
        %p326 = pneg %p144
      $region34: #{tpu_custom_call.1} parent=11 // pred_check_branch
        %328 = sbr.rel (%p326) target = $region36
      $region35: #{tpu_custom_call.1} parent=11 // pred_region
        _
      $region36: #{tpu_custom_call.1} parent=11 // pred_fallthru
        _
      // Predicated region
      $region37: #{tpu_custom_call.1} parent=11 // pred_check
        %p329 = pneg %p165
      $region38: #{tpu_custom_call.1} parent=11 // pred_check_branch
        %331 = sbr.rel (%p329) target = $region40
      $region39: #{tpu_custom_call.1} parent=11 // pred_region
        _
      $region40: #{tpu_custom_call.1} parent=11 // pred_fallthru
        _
      // Predicated region
      $region41: #{tpu_custom_call.1} parent=11 // pred_check
        %p332 = pneg %p186
      $region42: #{tpu_custom_call.1} parent=11 // pred_check_branch
        %334 = sbr.rel (%p332) target = $region44
      $region43: #{tpu_custom_call.1} parent=11 // pred_region
        _
      $region44: #{tpu_custom_call.1} parent=11 // pred_fallthru
        _
      // Predicated region
      $region45: #{tpu_custom_call.1} parent=11 // pred_check
        %p335 = pneg %p207
      $region46: #{tpu_custom_call.1} parent=11 // pred_check_branch
        %337 = sbr.rel (%p335) target = $region48
      $region47: #{tpu_custom_call.1} parent=11 // pred_region
        _
      $region48: #{tpu_custom_call.1} parent=11 // pred_fallthru
        _
      // Predicated region
      $region49: #{tpu_custom_call.1} parent=11 // pred_check
        %p338 = pneg %p228
      $region50: #{tpu_custom_call.1} parent=11 // pred_check_branch
        %340 = sbr.rel (%p338) target = $region52
      $region51: #{tpu_custom_call.1} parent=11 // pred_region
        _
      $region52: #{tpu_custom_call.1} parent=11 // pred_fallthru
        _
      // Predicated region
      $region53: #{tpu_custom_call.1} parent=11 // pred_check
        %p341 = pneg %p249
      $region54: #{tpu_custom_call.1} parent=11 // pred_check_branch
        %343 = sbr.rel (%p341) target = $region56
      $region55: #{tpu_custom_call.1} parent=11 // pred_region
        _
      $region56: #{tpu_custom_call.1} parent=11 // pred_fallthru
        _
      // Predicated region
      $region57: #{tpu_custom_call.1} parent=11 // pred_check
        %p344 = pneg %p270
      $region58: #{tpu_custom_call.1} parent=11 // pred_check_branch
        %346 = sbr.rel (%p344) target = $region60
      $region59: #{tpu_custom_call.1} parent=11 // pred_region
        _
      $region60: #{tpu_custom_call.1} parent=11 // pred_fallthru
        _
    $region12: #{tpu_custom_call.1} parent=5 // pred_fallthru
      _
    %p347 = scmp.lt.s32.totalorder %s18, 2
    // Predicated region
    $region61: #{tpu_custom_call.1} parent=5 // pred_check
      %p348 = pneg %p347
    $region62: #{tpu_custom_call.1} parent=5 // pred_check_branch
      %350 = sbr.rel (%p348) target = $region64
    $region63: #{tpu_custom_call.1} parent=5 // pred_region
      _
    $region64: #{tpu_custom_call.1} parent=5 // pred_fallthru
      _
    %p351 = scmp.le.s32.totalorder 1, %s18
    %p352 = scmp.lt.s32.totalorder %s18, 3
    %p353 = pnand %p351, %p352
    %p354 = pneg %p353
    // Predicated region
    $region65: #{tpu_custom_call.1} parent=5 // pred_check
      _
    $region66: #{tpu_custom_call.1} parent=5 // pred_check_branch
      %356 = sbr.rel (%p353) target = $region68
    $region67: #{tpu_custom_call.1} parent=5 // pred_region
      %s357 = ssub.s32 %s18, 1
      %p358 = pneg %p39
      %p359 = pneg %p36
      %p360 = pneg %p60
      %p361 = pneg %p57
      %p362 = pneg %p81
      %p363 = pneg %p78
      %p364 = pneg %p102
      %p365 = pneg %p99
      %p366 = pneg %p123
      %p367 = pneg %p120
      %p368 = pneg %p144
      %p369 = pneg %p141
      %p370 = pneg %p165
      %p371 = pneg %p162
      %p372 = pneg %p186
      %p373 = pneg %p183
      %p374 = pneg %p207
      %p375 = pneg %p204
      %p376 = pneg %p228
      %p377 = pneg %p225
      %p378 = pneg %p249
      %p379 = pneg %p246
      %p380 = pneg %p270
      %p381 = pneg %p267
      %p382 = pneg %p296
      %p383 = pneg %p293
      %p384 = scmp.lt.s32.totalorder %s23, 1
      %s385 = scalar_select %p384, %s23, 1
      %s386 = smul.addr %s385, 2
      %s387 = scalar_lea.vmem %s12, %s386
      %p388 = scmp.lt.s32.totalorder %s23, 1
      %s389 = scalar_select %p388, %s23, 1
      %s390 = smul.addr %s389, 2
      %s391 = scalar_lea.vmem %s12, %s390
      %v393 = vld [vmem:[%s0] sm:$0xff]
      %v394 = vld [vmem:[%s0 + $0x8] sm:$0xff]
      %v395 = vld [vmem:[%s0 + $0x10] sm:$0x3]
      %v396 = vpack.c.bf16 %v394, %v393
      %v397 = vpack.c.bf16 %v395, %v395
      %v398 = vld [vmem:[%s1] sm:$0xf]
      %v399 = vld [vmem:[%s2] sm:$0xff]
      %v400 = vld [vmem:[%s2 + $0x8] sm:$0xff]
      %v401 = vld [vmem:[%s2 + $0x10] sm:$0x3]
      %vm402 = vcmask 64512
      %v404 = vsel %vm402, %v396, 0
      %v407 = vsel %vm402, %v397, 0
      %vm409 = vcmask 1043456
      %v411 = vsel %vm409, %v398, 0
      %413 = vmatprep.subr.bf16.mxu0 0
      %414 = vmatpush1.bf16.msra.mxu0 0
      %415 = vmatprep.subr.bf16.mxu0 0
      %416 = vmatpush1.bf16.msra.mxu0 0
      %417 = vmatprep.subr.bf16.mxu0 0
      %418 = vmatpush1.bf16.msra.mxu0 0
      %419 = vmatprep.subr.bf16.mxu0 0
      %420 = vmatpush1.bf16.msra.mxu0 0
      %421 = vmatprep.subr.bf16.mxu0 0
      %422 = vmatpush1.bf16.msra.mxu0 0
      %423 = vmatprep.subr.bf16.mxu0 0
      %424 = vmatpush1.bf16.msra.mxu0 0
      %425 = vmatprep.subr.bf16.mxu0 0
      %426 = vmatpush1.bf16.msra.mxu0 0
      %427 = vmatprep.subr.bf16.mxu0 0
      %428 = vmatpush1.bf16.msra.mxu0 %v411
      %429 = vmatprep.subr.bf16.mxu0 0
      %430 = vmatpush2.bf16.msra.mxu0 0
      %431 = vmatprep.subr.bf16.mxu0 0
      %432 = vmatpush2.bf16.msra.mxu0 0
      %433 = vmatprep.subr.bf16.mxu0 0
      %434 = vmatpush2.bf16.msra.mxu0 0
      %435 = vmatprep.subr.bf16.mxu0 0
      %436 = vmatpush2.bf16.msra.mxu0 0
      %437 = vmatprep.subr.bf16.mxu0 0
      %438 = vmatpush2.bf16.msra.mxu0 0
      %439 = vmatprep.subr.bf16.mxu0 0
      %440 = vmatpush2.bf16.msra.mxu0 0
      %441 = vmatprep.subr.bf16.mxu0 0
      %442 = vmatpush2.bf16.msra.mxu0 0
      %443 = vmatprep.subr.bf16.mxu0 0
      %444 = vmatpush2.bf16.msra.mxu0 0
      %445 = vmatprep.mubr.bf16.mxu0 0
      %446 = vmatmul.mubr.bf16.gmra.mxu0 %v404
      %v447 = vpop.f32.mrf.mxu0
      %v448 = vadd.f32 %v399, %v447
      %v449 = vpop.f32.mrf.mxu0
      %v450 = vpop.f32.mrf.mxu0
      %v451 = vadd.f32 %v400, %v450
      %v452 = vpop.f32.mrf.mxu0
      %453 = vmatprep.mubr.bf16.mxu0 0
      %454 = vmatmul.mubr.bf16.gmra.mxu0 %v407
      %v455 = vpop.f32.mrf.mxu0
      %v456 = vadd.f32 %v401, %v455
      %v457 = vpop.f32.mrf.mxu0
      %v458 = vpop.f32.mrf.mxu0
      %v459 = vpop.f32.mrf.mxu0
      %460 = vdwg.mxu0
      %p461 = scmp.eq.s32.totalorder %s23, 0
      // Predicated region
      $region69: #{tpu_custom_call.1} parent=67 // pred_check
        %p462 = pneg %p461
      $region70: #{tpu_custom_call.1} parent=67 // pred_check_branch
        %464 = sbr.rel (%p462) target = $region72
      $region71: #{tpu_custom_call.1} parent=67 // pred_region
        %v465 = vld [vmem:[%s3] sm:$0xff]
        %v466 = vld [vmem:[%s3 + $0x8] sm:$0xf]
        %v467 = vld [vmem:[%s3 + $0xc] sm:$0xff]
        %v468 = vld [vmem:[%s3 + $0x14] sm:$0xf]
        %v469 = vld [vmem:[%s3 + $0x18] sm:$0xff]
        %v470 = vld [vmem:[%s3 + $0x20] sm:$0xf]
        %v471 = vld [vmem:[%s3 + $0x24] sm:$0xff]
        %v472 = vld [vmem:[%s3 + $0x2c] sm:$0xf]
        %v473 = vld [vmem:[%s4] sm:$0xf]
        %v474 = vld [vmem:[%s4 + $0x4] sm:$0xf]
        %v475 = vld [vmem:[%s4 + $0x8] sm:$0xf]
        %v476 = vld [vmem:[%s4 + $0xc] sm:$0xf]
        %v477 = vld [vmem:[%s4 + $0x10] sm:$0xf]
        %v478 = vld [vmem:[%s4 + $0x14] sm:$0xf]
        %v479 = vld [vmem:[%s4 + $0x18] sm:$0xf]
        %v480 = vld [vmem:[%s4 + $0x1c] sm:$0xf]
        %v481 = vld [vmem:[%s4 + $0x20] sm:$0xf]
        %v482 = vld [vmem:[%s4 + $0x24] sm:$0xf]
        %v483 = vld [vmem:[%s4 + $0x28] sm:$0xf]
        %v484 = vld [vmem:[%s4 + $0x2c] sm:$0xf]
        %v485 = vld [vmem:[%s4 + $0x30] sm:$0xf]
        %v486 = vld [vmem:[%s4 + $0x34] sm:$0xf]
        %v487 = vld [vmem:[%s4 + $0x38] sm:$0xf]
        %v488 = vld [vmem:[%s4 + $0x3c] sm:$0xf]
        %v489 = vld [vmem:[%s5] sm:$0xf]
        %vm490 = vcmask 261120
        %v491 = vsel %vm490, %v448, 0.0
        %492 = vadd.xlane.f32.xlu0 %v491
        %v493 = vpop.xlane.xlu0 %492
        %v494 = vsel %vm490, %v451, 0.0
        %495 = vadd.xlane.f32.xlu0 %v494
        %v496 = vpop.xlane.xlu0 %495
        %vm497 = vcmask 254976
        %v498 = vsel %vm497, %v456, 0.0
        %499 = vadd.xlane.f32.xlu0 %v498
        %v500 = vpop.xlane.xlu0 %499
        %v501 = vrcp.pop 32.0
        %v502 = vmul.f32 %v493, %v501
        %v503 = vmul.f32 %v496, %v501
        %v504 = vmul.f32 %v500, %v501
        %v505 = vsub.f32 %v448, %v502
        %v506 = vsub.f32 %v451, %v503
        %v507 = vsub.f32 %v456, %v504
        %v508 = vmul.f32 %v505, %v505
        %v509 = vmul.f32 %v506, %v506
        %v510 = vmul.f32 %v507, %v507
        %v511 = vsel %vm490, %v508, 0.0
        %512 = vadd.xlane.f32.xlu0 %v511
        %v513 = vpop.xlane.xlu0 %512
        %v514 = vsel %vm490, %v509, 0.0
        %515 = vadd.xlane.f32.xlu0 %v514
        %v516 = vpop.xlane.xlu0 %515
        %v517 = vsel %vm497, %v510, 0.0
        %518 = vadd.xlane.f32.xlu0 %v517
        %v519 = vpop.xlane.xlu0 %518
        %v520 = vmul.f32 %v513, %v501
        %v521 = vmul.f32 %v516, %v501
        %v522 = vmul.f32 %v519, %v501
        %v523 = vadd.f32 %v520, 1e-05
        %v524 = vadd.f32 %v521, 1e-05
        %v525 = vadd.f32 %v522, 1e-05
        %v526 = vrsqrt.pop %v523
        %v527 = vrsqrt.pop %v524
        %v528 = vrsqrt.pop %v525
        %v529 = vmul.f32 %v505, %v526
        %v530 = vmul.f32 %v506, %v527
        %v531 = vmul.f32 %v507, %v528
        %v532 = vlaneseq
        %v533 = vshrl.u32 %v532, 7
        %v534 = vsub.s32 0, %v533
        %v535 = vrot.slane %v489, %v534
        %v536 = vmul.f32 %v529, %v535
        %v537 = vmul.f32 %v530, %v535
        %v538 = vmul.f32 %v531, %v535
        %540 = vrot.lane.b32.xlu0 %v535, 96
        %v541 = vpop.permute.xlu0 %540
        %v543 = vadd.f32 %v536, %v541
        %v544 = vadd.f32 %v537, %v541
        %v545 = vadd.f32 %v538, %v541
        %v546 = vpack.c.bf16 %v544, %v543
        %v547 = vpack.c.bf16 %v545, %v545
        %v548 = vlaneseq
        %v549 = vshrl.u32 %v548, 7
        %v550 = vsub.s32 1, %v549
        %v551 = vrot.slane %v489, %v550
        %v556 = vunpack.c.l.b16 %v465
        %v557 = vunpack.c.l.b16 %v467
        %v558 = vunpack.c.l.b16 %v469
        %v559 = vunpack.c.l.b16 %v471
        %v560 = vpack.c.b16 %v557, %v556
        %v561 = vpack.c.b16 %v559, %v558
        %v565 = vsel %vm490, %v546, 0
        %v568 = vsel %vm490, %v547, 0
        %570 = vmatprep.subr.bf16.mxu0 0
        %571 = vmatpush1.bf16.msra.mxu0 0
        %572 = vmatprep.subr.bf16.mxu0 0
        %573 = vmatpush1.bf16.msra.mxu0 0
        %574 = vmatprep.subr.bf16.mxu0 0
        %575 = vmatpush1.bf16.msra.mxu0 0
        %576 = vmatprep.subr.bf16.mxu0 0
        %577 = vmatpush1.bf16.msra.mxu0 0
        %578 = vmatprep.subr.bf16.mxu0 0
        %579 = vmatpush1.bf16.msra.mxu0 0
        %580 = vmatprep.subr.bf16.mxu0 0
        %581 = vmatpush1.bf16.msra.mxu0 0
        %582 = vmatprep.subr.bf16.mxu0 0
        %583 = vmatpush1.bf16.msra.mxu0 %v561
        %584 = vmatprep.subr.bf16.mxu0 0
        %585 = vmatpush1.bf16.msra.mxu0 %v560
        %586 = vmatprep.subr.bf16.mxu0 0
        %587 = vmatpush2.bf16.msra.mxu0 0
        %588 = vmatprep.subr.bf16.mxu0 0
        %589 = vmatpush2.bf16.msra.mxu0 0
        %590 = vmatprep.subr.bf16.mxu0 0
        %591 = vmatpush2.bf16.msra.mxu0 0
        %592 = vmatprep.subr.bf16.mxu0 0
        %593 = vmatpush2.bf16.msra.mxu0 0
        %594 = vmatprep.subr.bf16.mxu0 0
        %595 = vmatpush2.bf16.msra.mxu0 0
        %596 = vmatprep.subr.bf16.mxu0 0
        %597 = vmatpush2.bf16.msra.mxu0 0
        %598 = vmatprep.subr.bf16.mxu0 0
        %599 = vmatpush2.bf16.msra.mxu0 0
        %600 = vmatprep.subr.bf16.mxu0 0
        %601 = vmatpush2.bf16.msra.mxu0 0
        %602 = vmatprep.mubr.bf16.mxu0 0
        %603 = vmatmul.mubr.bf16.gmra.mxu0 %v565
        %v604 = vpop.f32.mrf.mxu0
        %v605 = vadd.f32 %v551, %v604
        %v606 = vpop.f32.mrf.mxu0
        %v607 = vpop.f32.mrf.mxu0
        %v608 = vadd.f32 %v551, %v607
        %v609 = vpop.f32.mrf.mxu0
        %610 = vmatprep.mubr.bf16.mxu0 0
        %611 = vmatmul.mubr.bf16.gmra.mxu0 %v568
        %v612 = vpop.f32.mrf.mxu0
        %v613 = vadd.f32 %v551, %v612
        %v614 = vpop.f32.mrf.mxu0
        %v615 = vpop.f32.mrf.mxu0
        %v616 = vpop.f32.mrf.mxu0
        %617 = vdwg.mxu0
        %v621 = vcombine.high %v605, %v605
        %v623 = vunpack.c.l.s4 1966171168
        %v624 = vunpack.c.0.s8 %v623
        %v625 = vlaneseq
        %v626 = vshrl.u32 %v625, 7
        %v627 = vsub.s32 %v624, %v626
        %v628 = vrot.slane %v605, %v627
        %v630 = vunpack.c.l.s4 1966171168
        %v631 = vunpack.c.0.s8 %v630
        %v632 = vlaneseq
        %v633 = vshrl.u32 %v632, 7
        %v634 = vsub.s32 %v631, %v633
        %v635 = vrot.slane %v621, %v634
        %v636 = vcombine.high %v628, %v628
        %v637 = vcombine.high %v635, %v635
        %v639 = vunpack.c.l.s4 1966171168
        %v640 = vunpack.c.0.s8 %v639
        %v641 = vlaneseq
        %v642 = vshrl.u32 %v641, 7
        %v643 = vsub.s32 %v640, %v642
        %v644 = vrot.slane %v628, %v643
        %v646 = vunpack.c.l.s4 1966171168
        %v647 = vunpack.c.0.s8 %v646
        %v648 = vlaneseq
        %v649 = vshrl.u32 %v648, 7
        %v650 = vsub.s32 %v647, %v649
        %v651 = vrot.slane %v635, %v650
        %v653 = vunpack.c.l.s4 1966171168
        %v654 = vunpack.c.0.s8 %v653
        %v655 = vlaneseq
        %v656 = vshrl.u32 %v655, 7
        %v657 = vsub.s32 %v654, %v656
        %v658 = vrot.slane %v636, %v657
        %v660 = vunpack.c.l.s4 1966171168
        %v661 = vunpack.c.0.s8 %v660
        %v662 = vlaneseq
        %v663 = vshrl.u32 %v662, 7
        %v664 = vsub.s32 %v661, %v663
        %v665 = vrot.slane %v637, %v664
        %v666 = vcombine.high %v644, %v644
        %v667 = vcombine.high %v651, %v651
        %v668 = vcombine.high %v658, %v658
        %v669 = vcombine.high %v665, %v665
        %v670 = vcombine.high %v608, %v608
        %v672 = vunpack.c.l.s4 1966171168
        %v673 = vunpack.c.0.s8 %v672
        %v674 = vlaneseq
        %v675 = vshrl.u32 %v674, 7
        %v676 = vsub.s32 %v673, %v675
        %v677 = vrot.slane %v608, %v676
        %v679 = vunpack.c.l.s4 1966171168
        %v680 = vunpack.c.0.s8 %v679
        %v681 = vlaneseq
        %v682 = vshrl.u32 %v681, 7
        %v683 = vsub.s32 %v680, %v682
        %v684 = vrot.slane %v670, %v683
        %v685 = vcombine.high %v677, %v677
        %v686 = vcombine.high %v684, %v684
        %v688 = vunpack.c.l.s4 1966171168
        %v689 = vunpack.c.0.s8 %v688
        %v690 = vlaneseq
        %v691 = vshrl.u32 %v690, 7
        %v692 = vsub.s32 %v689, %v691
        %v693 = vrot.slane %v677, %v692
        %v695 = vunpack.c.l.s4 1966171168
        %v696 = vunpack.c.0.s8 %v695
        %v697 = vlaneseq
        %v698 = vshrl.u32 %v697, 7
        %v699 = vsub.s32 %v696, %v698
        %v700 = vrot.slane %v684, %v699
        %v702 = vunpack.c.l.s4 1966171168
        %v703 = vunpack.c.0.s8 %v702
        %v704 = vlaneseq
        %v705 = vshrl.u32 %v704, 7
        %v706 = vsub.s32 %v703, %v705
        %v707 = vrot.slane %v685, %v706
        %v709 = vunpack.c.l.s4 1966171168
        %v710 = vunpack.c.0.s8 %v709
        %v711 = vlaneseq
        %v712 = vshrl.u32 %v711, 7
        %v713 = vsub.s32 %v710, %v712
        %v714 = vrot.slane %v686, %v713
        %v715 = vcombine.high %v693, %v693
        %v716 = vcombine.high %v700, %v700
        %v717 = vcombine.high %v707, %v707
        %v718 = vcombine.high %v714, %v714
        %v720 = vunpack.c.l.s4 1966171168
        %v721 = vunpack.c.0.s8 %v720
        %v722 = vlaneseq
        %v723 = vshrl.u32 %v722, 7
        %v724 = vsub.s32 %v721, %v723
        %v725 = vrot.slane %v613, %v724
        %v726 = vcombine.high %v725, %v725
        %v728 = vunpack.c.l.s4 1966171168
        %v729 = vunpack.c.0.s8 %v728
        %v730 = vlaneseq
        %v731 = vshrl.u32 %v730, 7
        %v732 = vsub.s32 %v729, %v731
        %v733 = vrot.slane %v725, %v732
        %v735 = vunpack.c.l.s4 1966171168
        %v736 = vunpack.c.0.s8 %v735
        %v737 = vlaneseq
        %v738 = vshrl.u32 %v737, 7
        %v739 = vsub.s32 %v736, %v738
        %v740 = vrot.slane %v726, %v739
        %v741 = vcombine.low %v644, %v658
        %v742 = vcombine.low %v666, %v668
        %v743 = vcombine.low %v651, %v665
        %v744 = vcombine.low %v667, %v669
        %v746 = vunpack.c.l.s4 1966171168
        %v747 = vunpack.c.0.s8 %v746
        %v748 = vlaneseq
        %v749 = vshrl.u32 %v748, 7
        %v750 = vsub.s32 %v747, %v749
        %v751 = vrot.slane %v741, %v750
        %v753 = vunpack.c.l.s4 1966171168
        %v754 = vunpack.c.0.s8 %v753
        %v755 = vlaneseq
        %v756 = vshrl.u32 %v755, 7
        %v757 = vsub.s32 %v754, %v756
        %v758 = vrot.slane %v742, %v757
        %v760 = vunpack.c.l.s4 1966171168
        %v761 = vunpack.c.0.s8 %v760
        %v762 = vlaneseq
        %v763 = vshrl.u32 %v762, 7
        %v764 = vsub.s32 %v761, %v763
        %v765 = vrot.slane %v743, %v764
        %v767 = vunpack.c.l.s4 1966171168
        %v768 = vunpack.c.0.s8 %v767
        %v769 = vlaneseq
        %v770 = vshrl.u32 %v769, 7
        %v771 = vsub.s32 %v768, %v770
        %v772 = vrot.slane %v744, %v771
        %v773 = vcombine.low %v751, %v758
        %v774 = vcombine.low %v765, %v772
        %v776 = vunpack.c.l.s4 1966171168
        %v777 = vunpack.c.0.s8 %v776
        %v778 = vlaneseq
        %v779 = vshrl.u32 %v778, 7
        %v780 = vsub.s32 %v777, %v779
        %v781 = vrot.slane %v773, %v780
        %v783 = vunpack.c.l.s4 1966171168
        %v784 = vunpack.c.0.s8 %v783
        %v785 = vlaneseq
        %v786 = vshrl.u32 %v785, 7
        %v787 = vsub.s32 %v784, %v786
        %v788 = vrot.slane %v774, %v787
        %v789 = vcombine.low %v781, %v788
        %v791 = vunpack.c.l.s4 1966171168
        %v792 = vunpack.c.0.s8 %v791
        %v793 = vlaneseq
        %v794 = vshrl.u32 %v793, 7
        %v795 = vsub.s32 %v792, %v794
        %v796 = vrot.slane %v693, %v795
        %v798 = vunpack.c.l.s4 1966171168
        %v799 = vunpack.c.0.s8 %v798
        %v800 = vlaneseq
        %v801 = vshrl.u32 %v800, 7
        %v802 = vsub.s32 %v799, %v801
        %v803 = vrot.slane %v796, %v802
        %v804 = vcombine.low %v707, %v715
        %v805 = vcombine.low %v717, %v700
        %v806 = vcombine.low %v714, %v716
        %v807 = vcombine.low %v718, %v733
        %v809 = vunpack.c.l.s4 1966171168
        %v810 = vunpack.c.0.s8 %v809
        %v811 = vlaneseq
        %v812 = vshrl.u32 %v811, 7
        %v813 = vsub.s32 %v810, %v812
        %v814 = vrot.slane %v804, %v813
        %v816 = vunpack.c.l.s4 1966171168
        %v817 = vunpack.c.0.s8 %v816
        %v818 = vlaneseq
        %v819 = vshrl.u32 %v818, 7
        %v820 = vsub.s32 %v817, %v819
        %v821 = vrot.slane %v805, %v820
        %v823 = vunpack.c.l.s4 1966171168
        %v824 = vunpack.c.0.s8 %v823
        %v825 = vlaneseq
        %v826 = vshrl.u32 %v825, 7
        %v827 = vsub.s32 %v824, %v826
        %v828 = vrot.slane %v806, %v827
        %v830 = vunpack.c.l.s4 1966171168
        %v831 = vunpack.c.0.s8 %v830
        %v832 = vlaneseq
        %v833 = vshrl.u32 %v832, 7
        %v834 = vsub.s32 %v831, %v833
        %v835 = vrot.slane %v807, %v834
        %v836 = vcombine.low %v814, %v821
        %v837 = vcombine.low %v828, %v835
        %v839 = vunpack.c.l.s4 1966171168
        %v840 = vunpack.c.0.s8 %v839
        %v841 = vlaneseq
        %v842 = vshrl.u32 %v841, 7
        %v843 = vsub.s32 %v840, %v842
        %v844 = vrot.slane %v836, %v843
        %v846 = vunpack.c.l.s4 1966171168
        %v847 = vunpack.c.0.s8 %v846
        %v848 = vlaneseq
        %v849 = vshrl.u32 %v848, 7
        %v850 = vsub.s32 %v847, %v849
        %v851 = vrot.slane %v837, %v850
        %v852 = vcombine.low %v844, %v851
        %v854 = vunpack.c.l.s4 1966171168
        %v855 = vunpack.c.0.s8 %v854
        %v856 = vlaneseq
        %v857 = vshrl.u32 %v856, 7
        %v858 = vsub.s32 %v855, %v857
        %v859 = vrot.slane %v740, %v858
        %v861 = vunpack.c.l.s4 1966171168
        %v862 = vunpack.c.0.s8 %v861
        %v863 = vlaneseq
        %v864 = vshrl.u32 %v863, 7
        %v865 = vsub.s32 %v862, %v864
        %v866 = vrot.slane %v859, %v865
        %v871 = vpack.c.bf16 %v803, %v789
        %v872 = vpack.c.bf16 %v866, %v852
        %874 = vrot.lane.b32.xlu0 %v871, 96
        %v875 = vpop.permute.xlu0 %874
        %v877 = vsel %vm402, %v871, 0
        %v880 = vsel %vm402, %v875, 0
        %882 = vmatprep.subr.bf16.mxu0 0
        %883 = vmatpush1.bf16.xpose.msra.mxu0 0
        %884 = vmatprep.subr.bf16.mxu0 0
        %885 = vmatpush1.bf16.xpose.msra.mxu0 0
        %886 = vmatprep.subr.bf16.mxu0 0
        %887 = vmatpush1.bf16.xpose.msra.mxu0 0
        %888 = vmatprep.subr.bf16.mxu0 0
        %889 = vmatpush1.bf16.xpose.msra.mxu0 0
        %890 = vmatprep.subr.bf16.mxu0 0
        %891 = vmatpush1.bf16.xpose.msra.mxu0 0
        %892 = vmatprep.subr.bf16.mxu0 0
        %893 = vmatpush1.bf16.xpose.msra.mxu0 0
        %894 = vmatprep.subr.bf16.mxu0 0
        %895 = vmatpush1.bf16.xpose.msra.mxu0 0
        %896 = vmatprep.subr.bf16.mxu0 0
        %897 = vmatpush1.bf16.xpose.msra.mxu0 %v880
        %898 = vmatprep.subr.bf16.mxu0 0
        %899 = vmatpush2.bf16.xpose.msra.mxu0 0
        %900 = vmatprep.subr.bf16.mxu0 0
        %901 = vmatpush2.bf16.xpose.msra.mxu0 0
        %902 = vmatprep.subr.bf16.mxu0 0
        %903 = vmatpush2.bf16.xpose.msra.mxu0 0
        %904 = vmatprep.subr.bf16.mxu0 0
        %905 = vmatpush2.bf16.xpose.msra.mxu0 0
        %906 = vmatprep.subr.bf16.mxu0 0
        %907 = vmatpush2.bf16.xpose.msra.mxu0 0
        %908 = vmatprep.subr.bf16.mxu0 0
        %909 = vmatpush2.bf16.xpose.msra.mxu0 0
        %910 = vmatprep.subr.bf16.mxu0 0
        %911 = vmatpush2.bf16.xpose.msra.mxu0 0
        %912 = vmatprep.subr.bf16.mxu0 0
        %913 = vmatpush2.bf16.xpose.msra.mxu0 0
        %914 = vmatprep.mubr.bf16.mxu0 0
        %915 = vmatmul.mubr.bf16.gmra.mxu0 %v877
        %v916 = vpop.f32.mrf.mxu0
        %v917 = vadd.f32 0.0, %v916
        %v918 = vpop.f32.mrf.mxu0
        %v919 = vpop.f32.mrf.mxu0
        %v920 = vadd.f32 0.0, %v919
        %v921 = vpop.f32.mrf.mxu0
        %922 = vdwg.mxu0
        %924 = vrot.lane.b32.xlu0 %v872, 96
        %v925 = vpop.permute.xlu0 %924
        %v927 = vsel %vm402, %v872, 0
        %v930 = vsel %vm402, %v925, 0
        %932 = vmatprep.subr.bf16.mxu0 0
        %933 = vmatpush1.bf16.xpose.msra.mxu0 0
        %934 = vmatprep.subr.bf16.mxu0 0
        %935 = vmatpush1.bf16.xpose.msra.mxu0 0
        %936 = vmatprep.subr.bf16.mxu0 0
        %937 = vmatpush1.bf16.xpose.msra.mxu0 0
        %938 = vmatprep.subr.bf16.mxu0 0
        %939 = vmatpush1.bf16.xpose.msra.mxu0 0
        %940 = vmatprep.subr.bf16.mxu0 0
        %941 = vmatpush1.bf16.xpose.msra.mxu0 0
        %942 = vmatprep.subr.bf16.mxu0 0
        %943 = vmatpush1.bf16.xpose.msra.mxu0 0
        %944 = vmatprep.subr.bf16.mxu0 0
        %945 = vmatpush1.bf16.xpose.msra.mxu0 0
        %946 = vmatprep.subr.bf16.mxu0 0
        %947 = vmatpush1.bf16.xpose.msra.mxu0 %v930
        %948 = vmatprep.subr.bf16.mxu0 0
        %949 = vmatpush2.bf16.xpose.msra.mxu0 0
        %950 = vmatprep.subr.bf16.mxu0 0
        %951 = vmatpush2.bf16.xpose.msra.mxu0 0
        %952 = vmatprep.subr.bf16.mxu0 0
        %953 = vmatpush2.bf16.xpose.msra.mxu0 0
        %954 = vmatprep.subr.bf16.mxu0 0
        %955 = vmatpush2.bf16.xpose.msra.mxu0 0
        %956 = vmatprep.subr.bf16.mxu0 0
        %957 = vmatpush2.bf16.xpose.msra.mxu0 0
        %958 = vmatprep.subr.bf16.mxu0 0
        %959 = vmatpush2.bf16.xpose.msra.mxu0 0
        %960 = vmatprep.subr.bf16.mxu0 0
        %961 = vmatpush2.bf16.xpose.msra.mxu0 0
        %962 = vmatprep.subr.bf16.mxu0 0
        %963 = vmatpush2.bf16.xpose.msra.mxu0 0
        %964 = vmatprep.mubr.bf16.mxu0 0
        %965 = vmatmul.mubr.bf16.gmra.mxu0 %v927
        %v966 = vpop.f32.mrf.mxu0
        %v967 = vadd.f32 0.0, %v966
        %v968 = vpop.f32.mrf.mxu0
        %v969 = vpop.f32.mrf.mxu0
        %v970 = vadd.f32 0.0, %v969
        %v971 = vpop.f32.mrf.mxu0
        %972 = vdwg.mxu0
        %vm973 = vcmask 72704
        %v974 = vsel %vm973, %v917, -inf
        %975 = vmax.xlane.f32.xlu0 %v974
        %v976 = vpop.xlane.xlu0 %975
        %vm977 = vcmask 65536
        %v978 = vsel %vm977, %v920, -inf
        %979 = vmax.xlane.f32.xlu0 %v978
        %v980 = vpop.xlane.xlu0 %979
        %v981 = vsel %vm973, %v967, -inf
        %982 = vmax.xlane.f32.xlu0 %v981
        %v983 = vpop.xlane.xlu0 %982
        %v984 = vsel %vm977, %v970, -inf
        %985 = vmax.xlane.f32.xlu0 %v984
        %v986 = vpop.xlane.xlu0 %985
        %v987 = vsub.f32 %v917, %v976
        %v988 = vsub.f32 %v920, %v980
        %v989 = vsub.f32 %v967, %v983
        %v990 = vsub.f32 %v970, %v986
        %v991 = vmul.f32 %v987, 1.442695
        %v992 = vpow.pop %v991
        %v993 = vmul.f32 %v988, 1.442695
        %v994 = vpow.pop %v993
        %v995 = vmul.f32 %v989, 1.442695
        %v996 = vpow.pop %v995
        %v997 = vmul.f32 %v990, 1.442695
        %v998 = vpow.pop %v997
        %v999 = vsel %vm973, %v992, 0.0
        %1000 = vadd.xlane.f32.xlu0 %v999
        %v1001 = vpop.xlane.xlu0 %1000
        %v1002 = vsel %vm977, %v994, 0.0
        %1003 = vadd.xlane.f32.xlu0 %v1002
        %v1004 = vpop.xlane.xlu0 %1003
        %v1005 = vsel %vm973, %v996, 0.0
        %1006 = vadd.xlane.f32.xlu0 %v1005
        %v1007 = vpop.xlane.xlu0 %1006
        %v1008 = vsel %vm977, %v998, 0.0
        %1009 = vadd.xlane.f32.xlu0 %v1008
        %v1010 = vpop.xlane.xlu0 %1009
        %v1011 = vrcp.pop %v1001
        %v1012 = vmul.f32 %v992, %v1011
        %v1013 = vrcp.pop %v1004
        %v1014 = vmul.f32 %v994, %v1013
        %v1015 = vrcp.pop %v1007
        %v1016 = vmul.f32 %v996, %v1015
        %v1017 = vrcp.pop %v1010
        %v1018 = vmul.f32 %v998, %v1017
        %v1019 = vpack.c.bf16 %v1014, %v1012
        %v1020 = vpack.c.bf16 %v1018, %v1016
        %1021 = vrot.lane.b32.xlu0 %v871, 64
        %v1022 = vpop.permute.xlu0 %1021
        %v1024 = vsel %vm973, %v1019, 0
        %vm1026 = vcmask 1044480
        %v1027 = vsel %vm409, 4294967295, 65535
        %v1028 = vsel %vm1026, %v1027, 0
        %v1030 = vand.u32 %v1022, %v1028
        %1032 = vmatprep.subr.bf16.mxu0 0
        %1033 = vmatpush1.bf16.msra.mxu0 0
        %1034 = vmatprep.subr.bf16.mxu0 0
        %1035 = vmatpush1.bf16.msra.mxu0 0
        %1036 = vmatprep.subr.bf16.mxu0 0
        %1037 = vmatpush1.bf16.msra.mxu0 0
        %1038 = vmatprep.subr.bf16.mxu0 0
        %1039 = vmatpush1.bf16.msra.mxu0 0
        %1040 = vmatprep.subr.bf16.mxu0 0
        %1041 = vmatpush1.bf16.msra.mxu0 0
        %1042 = vmatprep.subr.bf16.mxu0 0
        %1043 = vmatpush1.bf16.msra.mxu0 0
        %1044 = vmatprep.subr.bf16.mxu0 0
        %1045 = vmatpush1.bf16.msra.mxu0 0
        %1046 = vmatprep.subr.bf16.mxu0 0
        %1047 = vmatpush1.bf16.msra.mxu0 %v1030
        %1048 = vmatprep.subr.bf16.mxu0 0
        %1049 = vmatpush2.bf16.msra.mxu0 0
        %1050 = vmatprep.subr.bf16.mxu0 0
        %1051 = vmatpush2.bf16.msra.mxu0 0
        %1052 = vmatprep.subr.bf16.mxu0 0
        %1053 = vmatpush2.bf16.msra.mxu0 0
        %1054 = vmatprep.subr.bf16.mxu0 0
        %1055 = vmatpush2.bf16.msra.mxu0 0
        %1056 = vmatprep.subr.bf16.mxu0 0
        %1057 = vmatpush2.bf16.msra.mxu0 0
        %1058 = vmatprep.subr.bf16.mxu0 0
        %1059 = vmatpush2.bf16.msra.mxu0 0
        %1060 = vmatprep.subr.bf16.mxu0 0
        %1061 = vmatpush2.bf16.msra.mxu0 0
        %1062 = vmatprep.subr.bf16.mxu0 0
        %1063 = vmatpush2.bf16.msra.mxu0 0
        %1064 = vmatprep.mubr.bf16.mxu0 0
        %1065 = vmatmul.mubr.bf16.gmra.mxu0 %v1024
        %v1066 = vpop.f32.mrf.mxu0
        %v1067 = vadd.f32 0.0, %v1066
        %v1068 = vpop.f32.mrf.mxu0
        %v1069 = vpop.f32.mrf.mxu0
        %v1070 = vadd.f32 0.0, %v1069
        %v1071 = vpop.f32.mrf.mxu0
        %1072 = vdwg.mxu0
        %1073 = vrot.lane.b32.xlu0 %v872, 64
        %v1074 = vpop.permute.xlu0 %1073
        %v1076 = vsel %vm973, %v1020, 0
        %v1079 = vand.u32 %v1074, %v1028
        %1081 = vmatprep.subr.bf16.mxu0 0
        %1082 = vmatpush1.bf16.msra.mxu0 0
        %1083 = vmatprep.subr.bf16.mxu0 0
        %1084 = vmatpush1.bf16.msra.mxu0 0
        %1085 = vmatprep.subr.bf16.mxu0 0
        %1086 = vmatpush1.bf16.msra.mxu0 0
        %1087 = vmatprep.subr.bf16.mxu0 0
        %1088 = vmatpush1.bf16.msra.mxu0 0
        %1089 = vmatprep.subr.bf16.mxu0 0
        %1090 = vmatpush1.bf16.msra.mxu0 0
        %1091 = vmatprep.subr.bf16.mxu0 0
        %1092 = vmatpush1.bf16.msra.mxu0 0
        %1093 = vmatprep.subr.bf16.mxu0 0
        %1094 = vmatpush1.bf16.msra.mxu0 0
        %1095 = vmatprep.subr.bf16.mxu0 0
        %1096 = vmatpush1.bf16.msra.mxu0 %v1079
        %1097 = vmatprep.subr.bf16.mxu0 0
        %1098 = vmatpush2.bf16.msra.mxu0 0
        %1099 = vmatprep.subr.bf16.mxu0 0
        %1100 = vmatpush2.bf16.msra.mxu0 0
        %1101 = vmatprep.subr.bf16.mxu0 0
        %1102 = vmatpush2.bf16.msra.mxu0 0
        %1103 = vmatprep.subr.bf16.mxu0 0
        %1104 = vmatpush2.bf16.msra.mxu0 0
        %1105 = vmatprep.subr.bf16.mxu0 0
        %1106 = vmatpush2.bf16.msra.mxu0 0
        %1107 = vmatprep.subr.bf16.mxu0 0
        %1108 = vmatpush2.bf16.msra.mxu0 0
        %1109 = vmatprep.subr.bf16.mxu0 0
        %1110 = vmatpush2.bf16.msra.mxu0 0
        %1111 = vmatprep.subr.bf16.mxu0 0
        %1112 = vmatpush2.bf16.msra.mxu0 0
        %1113 = vmatprep.mubr.bf16.mxu0 0
        %1114 = vmatmul.mubr.bf16.gmra.mxu0 %v1076
        %v1115 = vpop.f32.mrf.mxu0
        %v1116 = vadd.f32 0.0, %v1115
        %v1117 = vpop.f32.mrf.mxu0
        %v1118 = vpop.f32.mrf.mxu0
        %v1119 = vadd.f32 0.0, %v1118
        %v1120 = vpop.f32.mrf.mxu0
        %1121 = vdwg.mxu0
        %1122 = vrot.lane.b32.xlu0 %v871, 120
        %v1123 = vpop.permute.xlu0 %1122
        %1124 = vrot.lane.b32.xlu0 %v871, 88
        %v1125 = vpop.permute.xlu0 %1124
        %v1127 = vsel %vm402, %v1123, 0
        %v1130 = vsel %vm402, %v1125, 0
        %1132 = vmatprep.subr.bf16.mxu0 0
        %1133 = vmatpush1.bf16.xpose.msra.mxu0 0
        %1134 = vmatprep.subr.bf16.mxu0 0
        %1135 = vmatpush1.bf16.xpose.msra.mxu0 0
        %1136 = vmatprep.subr.bf16.mxu0 0
        %1137 = vmatpush1.bf16.xpose.msra.mxu0 0
        %1138 = vmatprep.subr.bf16.mxu0 0
        %1139 = vmatpush1.bf16.xpose.msra.mxu0 0
        %1140 = vmatprep.subr.bf16.mxu0 0
        %1141 = vmatpush1.bf16.xpose.msra.mxu0 0
        %1142 = vmatprep.subr.bf16.mxu0 0
        %1143 = vmatpush1.bf16.xpose.msra.mxu0 0
        %1144 = vmatprep.subr.bf16.mxu0 0
        %1145 = vmatpush1.bf16.xpose.msra.mxu0 0
        %1146 = vmatprep.subr.bf16.mxu0 0
        %1147 = vmatpush1.bf16.xpose.msra.mxu0 %v1130
        %1148 = vmatprep.subr.bf16.mxu0 0
        %1149 = vmatpush2.bf16.xpose.msra.mxu0 0
        %1150 = vmatprep.subr.bf16.mxu0 0
        %1151 = vmatpush2.bf16.xpose.msra.mxu0 0
        %1152 = vmatprep.subr.bf16.mxu0 0
        %1153 = vmatpush2.bf16.xpose.msra.mxu0 0
        %1154 = vmatprep.subr.bf16.mxu0 0
        %1155 = vmatpush2.bf16.xpose.msra.mxu0 0
        %1156 = vmatprep.subr.bf16.mxu0 0
        %1157 = vmatpush2.bf16.xpose.msra.mxu0 0
        %1158 = vmatprep.subr.bf16.mxu0 0
        %1159 = vmatpush2.bf16.xpose.msra.mxu0 0
        %1160 = vmatprep.subr.bf16.mxu0 0
        %1161 = vmatpush2.bf16.xpose.msra.mxu0 0
        %1162 = vmatprep.subr.bf16.mxu0 0
        %1163 = vmatpush2.bf16.xpose.msra.mxu0 0
        %1164 = vmatprep.mubr.bf16.mxu0 0
        %1165 = vmatmul.mubr.bf16.gmra.mxu0 %v1127
        %v1166 = vpop.f32.mrf.mxu0
        %v1167 = vadd.f32 0.0, %v1166
        %v1168 = vpop.f32.mrf.mxu0
        %v1169 = vpop.f32.mrf.mxu0
        %v1170 = vadd.f32 0.0, %v1169
        %v1171 = vpop.f32.mrf.mxu0
        %1172 = vdwg.mxu0
        %1173 = vrot.lane.b32.xlu0 %v872, 120
        %v1174 = vpop.permute.xlu0 %1173
        %1175 = vrot.lane.b32.xlu0 %v872, 88
        %v1176 = vpop.permute.xlu0 %1175
        %v1178 = vsel %vm402, %v1174, 0
        %v1181 = vsel %vm402, %v1176, 0
        %1183 = vmatprep.subr.bf16.mxu0 0
        %1184 = vmatpush1.bf16.xpose.msra.mxu0 0
        %1185 = vmatprep.subr.bf16.mxu0 0
        %1186 = vmatpush1.bf16.xpose.msra.mxu0 0
        %1187 = vmatprep.subr.bf16.mxu0 0
        %1188 = vmatpush1.bf16.xpose.msra.mxu0 0
        %1189 = vmatprep.subr.bf16.mxu0 0
        %1190 = vmatpush1.bf16.xpose.msra.mxu0 0
        %1191 = vmatprep.subr.bf16.mxu0 0
        %1192 = vmatpush1.bf16.xpose.msra.mxu0 0
        %1193 = vmatprep.subr.bf16.mxu0 0
        %1194 = vmatpush1.bf16.xpose.msra.mxu0 0
        %1195 = vmatprep.subr.bf16.mxu0 0
        %1196 = vmatpush1.bf16.xpose.msra.mxu0 0
        %1197 = vmatprep.subr.bf16.mxu0 0
        %1198 = vmatpush1.bf16.xpose.msra.mxu0 %v1181
        %1199 = vmatprep.subr.bf16.mxu0 0
        %1200 = vmatpush2.bf16.xpose.msra.mxu0 0
        %1201 = vmatprep.subr.bf16.mxu0 0
        %1202 = vmatpush2.bf16.xpose.msra.mxu0 0
        %1203 = vmatprep.subr.bf16.mxu0 0
        %1204 = vmatpush2.bf16.xpose.msra.mxu0 0
        %1205 = vmatprep.subr.bf16.mxu0 0
        %1206 = vmatpush2.bf16.xpose.msra.mxu0 0
        %1207 = vmatprep.subr.bf16.mxu0 0
        %1208 = vmatpush2.bf16.xpose.msra.mxu0 0
        %1209 = vmatprep.subr.bf16.mxu0 0
        %1210 = vmatpush2.bf16.xpose.msra.mxu0 0
        %1211 = vmatprep.subr.bf16.mxu0 0
        %1212 = vmatpush2.bf16.xpose.msra.mxu0 0
        %1213 = vmatprep.subr.bf16.mxu0 0
        %1214 = vmatpush2.bf16.xpose.msra.mxu0 0
        %1215 = vmatprep.mubr.bf16.mxu0 0
        %1216 = vmatmul.mubr.bf16.gmra.mxu0 %v1178
        %v1217 = vpop.f32.mrf.mxu0
        %v1218 = vadd.f32 0.0, %v1217
        %v1219 = vpop.f32.mrf.mxu0
        %v1220 = vpop.f32.mrf.mxu0
        %v1221 = vadd.f32 0.0, %v1220
        %v1222 = vpop.f32.mrf.mxu0
        %1223 = vdwg.mxu0
        %v1224 = vsel %vm973, %v1167, -inf
        %1225 = vmax.xlane.f32.xlu0 %v1224
        %v1226 = vpop.xlane.xlu0 %1225
        %v1227 = vsel %vm977, %v1170, -inf
        %1228 = vmax.xlane.f32.xlu0 %v1227
        %v1229 = vpop.xlane.xlu0 %1228
        %v1230 = vsel %vm973, %v1218, -inf
        %1231 = vmax.xlane.f32.xlu0 %v1230
        %v1232 = vpop.xlane.xlu0 %1231
        %v1233 = vsel %vm977, %v1221, -inf
        %1234 = vmax.xlane.f32.xlu0 %v1233
        %v1235 = vpop.xlane.xlu0 %1234
        %v1236 = vsub.f32 %v1167, %v1226
        %v1237 = vsub.f32 %v1170, %v1229
        %v1238 = vsub.f32 %v1218, %v1232
        %v1239 = vsub.f32 %v1221, %v1235
        %v1240 = vmul.f32 %v1236, 1.442695
        %v1241 = vpow.pop %v1240
        %v1242 = vmul.f32 %v1237, 1.442695
        %v1243 = vpow.pop %v1242
        %v1244 = vmul.f32 %v1238, 1.442695
        %v1245 = vpow.pop %v1244
        %v1246 = vmul.f32 %v1239, 1.442695
        %v1247 = vpow.pop %v1246
        %v1248 = vsel %vm973, %v1241, 0.0
        %1249 = vadd.xlane.f32.xlu0 %v1248
        %v1250 = vpop.xlane.xlu0 %1249
        %v1251 = vsel %vm977, %v1243, 0.0
        %1252 = vadd.xlane.f32.xlu0 %v1251
        %v1253 = vpop.xlane.xlu0 %1252
        %v1254 = vsel %vm973, %v1245, 0.0
        %1255 = vadd.xlane.f32.xlu0 %v1254
        %v1256 = vpop.xlane.xlu0 %1255
        %v1257 = vsel %vm977, %v1247, 0.0
        %1258 = vadd.xlane.f32.xlu0 %v1257
        %v1259 = vpop.xlane.xlu0 %1258
        %v1260 = vrcp.pop %v1250
        %v1261 = vmul.f32 %v1241, %v1260
        %v1262 = vrcp.pop %v1253
        %v1263 = vmul.f32 %v1243, %v1262
        %v1264 = vrcp.pop %v1256
        %v1265 = vmul.f32 %v1245, %v1264
        %v1266 = vrcp.pop %v1259
        %v1267 = vmul.f32 %v1247, %v1266
        %v1268 = vpack.c.bf16 %v1263, %v1261
        %v1269 = vpack.c.bf16 %v1267, %v1265
        %1270 = vrot.lane.b32.xlu0 %v871, 56
        %v1271 = vpop.permute.xlu0 %1270
        %v1273 = vsel %vm973, %v1268, 0
        %v1276 = vand.u32 %v1271, %v1028
        %1278 = vmatprep.subr.bf16.mxu0 0
        %1279 = vmatpush1.bf16.msra.mxu0 0
        %1280 = vmatprep.subr.bf16.mxu0 0
        %1281 = vmatpush1.bf16.msra.mxu0 0
        %1282 = vmatprep.subr.bf16.mxu0 0
        %1283 = vmatpush1.bf16.msra.mxu0 0
        %1284 = vmatprep.subr.bf16.mxu0 0
        %1285 = vmatpush1.bf16.msra.mxu0 0
        %1286 = vmatprep.subr.bf16.mxu0 0
        %1287 = vmatpush1.bf16.msra.mxu0 0
        %1288 = vmatprep.subr.bf16.mxu0 0
        %1289 = vmatpush1.bf16.msra.mxu0 0
        %1290 = vmatprep.subr.bf16.mxu0 0
        %1291 = vmatpush1.bf16.msra.mxu0 0
        %1292 = vmatprep.subr.bf16.mxu0 0
        %1293 = vmatpush1.bf16.msra.mxu0 %v1276
        %1294 = vmatprep.subr.bf16.mxu0 0
        %1295 = vmatpush2.bf16.msra.mxu0 0
        %1296 = vmatprep.subr.bf16.mxu0 0
        %1297 = vmatpush2.bf16.msra.mxu0 0
        %1298 = vmatprep.subr.bf16.mxu0 0
        %1299 = vmatpush2.bf16.msra.mxu0 0
        %1300 = vmatprep.subr.bf16.mxu0 0
        %1301 = vmatpush2.bf16.msra.mxu0 0
        %1302 = vmatprep.subr.bf16.mxu0 0
        %1303 = vmatpush2.bf16.msra.mxu0 0
        %1304 = vmatprep.subr.bf16.mxu0 0
        %1305 = vmatpush2.bf16.msra.mxu0 0
        %1306 = vmatprep.subr.bf16.mxu0 0
        %1307 = vmatpush2.bf16.msra.mxu0 0
        %1308 = vmatprep.subr.bf16.mxu0 0
        %1309 = vmatpush2.bf16.msra.mxu0 0
        %1310 = vmatprep.mubr.bf16.mxu0 0
        %1311 = vmatmul.mubr.bf16.gmra.mxu0 %v1273
        %v1312 = vpop.f32.mrf.mxu0
        %v1313 = vadd.f32 0.0, %v1312
        %v1314 = vpop.f32.mrf.mxu0
        %v1315 = vpop.f32.mrf.mxu0
        %v1316 = vadd.f32 0.0, %v1315
        %v1317 = vpop.f32.mrf.mxu0
        %1318 = vdwg.mxu0
        %1319 = vrot.lane.b32.xlu0 %v872, 56
        %v1320 = vpop.permute.xlu0 %1319
        %v1322 = vsel %vm973, %v1269, 0
        %v1325 = vand.u32 %v1320, %v1028
        %1327 = vmatprep.subr.bf16.mxu0 0
        %1328 = vmatpush1.bf16.msra.mxu0 0
        %1329 = vmatprep.subr.bf16.mxu0 0
        %1330 = vmatpush1.bf16.msra.mxu0 0
        %1331 = vmatprep.subr.bf16.mxu0 0
        %1332 = vmatpush1.bf16.msra.mxu0 0
        %1333 = vmatprep.subr.bf16.mxu0 0
        %1334 = vmatpush1.bf16.msra.mxu0 0
        %1335 = vmatprep.subr.bf16.mxu0 0
        %1336 = vmatpush1.bf16.msra.mxu0 0
        %1337 = vmatprep.subr.bf16.mxu0 0
        %1338 = vmatpush1.bf16.msra.mxu0 0
        %1339 = vmatprep.subr.bf16.mxu0 0
        %1340 = vmatpush1.bf16.msra.mxu0 0
        %1341 = vmatprep.subr.bf16.mxu0 0
        %1342 = vmatpush1.bf16.msra.mxu0 %v1325
        %1343 = vmatprep.subr.bf16.mxu0 0
        %1344 = vmatpush2.bf16.msra.mxu0 0
        %1345 = vmatprep.subr.bf16.mxu0 0
        %1346 = vmatpush2.bf16.msra.mxu0 0
        %1347 = vmatprep.subr.bf16.mxu0 0
        %1348 = vmatpush2.bf16.msra.mxu0 0
        %1349 = vmatprep.subr.bf16.mxu0 0
        %1350 = vmatpush2.bf16.msra.mxu0 0
        %1351 = vmatprep.subr.bf16.mxu0 0
        %1352 = vmatpush2.bf16.msra.mxu0 0
        %1353 = vmatprep.subr.bf16.mxu0 0
        %1354 = vmatpush2.bf16.msra.mxu0 0
        %1355 = vmatprep.subr.bf16.mxu0 0
        %1356 = vmatpush2.bf16.msra.mxu0 0
        %1357 = vmatprep.subr.bf16.mxu0 0
        %1358 = vmatpush2.bf16.msra.mxu0 0
        %1359 = vmatprep.mubr.bf16.mxu0 0
        %1360 = vmatmul.mubr.bf16.gmra.mxu0 %v1322
        %v1361 = vpop.f32.mrf.mxu0
        %v1362 = vadd.f32 0.0, %v1361
        %v1363 = vpop.f32.mrf.mxu0
        %v1364 = vpop.f32.mrf.mxu0
        %v1365 = vadd.f32 0.0, %v1364
        %v1366 = vpop.f32.mrf.mxu0
        %1367 = vdwg.mxu0
        %1368 = vrot.lane.b32.xlu0 %v871, 112
        %v1369 = vpop.permute.xlu0 %1368
        %1370 = vrot.lane.b32.xlu0 %v871, 80
        %v1371 = vpop.permute.xlu0 %1370
        %v1373 = vsel %vm402, %v1369, 0
        %v1376 = vsel %vm402, %v1371, 0
        %1378 = vmatprep.subr.bf16.mxu0 0
        %1379 = vmatpush1.bf16.xpose.msra.mxu0 0
        %1380 = vmatprep.subr.bf16.mxu0 0
        %1381 = vmatpush1.bf16.xpose.msra.mxu0 0
        %1382 = vmatprep.subr.bf16.mxu0 0
        %1383 = vmatpush1.bf16.xpose.msra.mxu0 0
        %1384 = vmatprep.subr.bf16.mxu0 0
        %1385 = vmatpush1.bf16.xpose.msra.mxu0 0
        %1386 = vmatprep.subr.bf16.mxu0 0
        %1387 = vmatpush1.bf16.xpose.msra.mxu0 0
        %1388 = vmatprep.subr.bf16.mxu0 0
        %1389 = vmatpush1.bf16.xpose.msra.mxu0 0
        %1390 = vmatprep.subr.bf16.mxu0 0
        %1391 = vmatpush1.bf16.xpose.msra.mxu0 0
        %1392 = vmatprep.subr.bf16.mxu0 0
        %1393 = vmatpush1.bf16.xpose.msra.mxu0 %v1376
        %1394 = vmatprep.subr.bf16.mxu0 0
        %1395 = vmatpush2.bf16.xpose.msra.mxu0 0
        %1396 = vmatprep.subr.bf16.mxu0 0
        %1397 = vmatpush2.bf16.xpose.msra.mxu0 0
        %1398 = vmatprep.subr.bf16.mxu0 0
        %1399 = vmatpush2.bf16.xpose.msra.mxu0 0
        %1400 = vmatprep.subr.bf16.mxu0 0
        %1401 = vmatpush2.bf16.xpose.msra.mxu0 0
        %1402 = vmatprep.subr.bf16.mxu0 0
        %1403 = vmatpush2.bf16.xpose.msra.mxu0 0
        %1404 = vmatprep.subr.bf16.mxu0 0
        %1405 = vmatpush2.bf16.xpose.msra.mxu0 0
        %1406 = vmatprep.subr.bf16.mxu0 0
        %1407 = vmatpush2.bf16.xpose.msra.mxu0 0
        %1408 = vmatprep.subr.bf16.mxu0 0
        %1409 = vmatpush2.bf16.xpose.msra.mxu0 0
        %1410 = vmatprep.mubr.bf16.mxu0 0
        %1411 = vmatmul.mubr.bf16.gmra.mxu0 %v1373
        %v1412 = vpop.f32.mrf.mxu0
        %v1413 = vadd.f32 0.0, %v1412
        %v1414 = vpop.f32.mrf.mxu0
        %v1415 = vpop.f32.mrf.mxu0
        %v1416 = vadd.f32 0.0, %v1415
        %v1417 = vpop.f32.mrf.mxu0
        %1418 = vdwg.mxu0
        %1419 = vrot.lane.b32.xlu0 %v872, 112
        %v1420 = vpop.permute.xlu0 %1419
        %1421 = vrot.lane.b32.xlu0 %v872, 80
        %v1422 = vpop.permute.xlu0 %1421
        %v1424 = vsel %vm402, %v1420, 0
        %v1427 = vsel %vm402, %v1422, 0
        %1429 = vmatprep.subr.bf16.mxu0 0
        %1430 = vmatpush1.bf16.xpose.msra.mxu0 0
        %1431 = vmatprep.subr.bf16.mxu0 0
        %1432 = vmatpush1.bf16.xpose.msra.mxu0 0
        %1433 = vmatprep.subr.bf16.mxu0 0
        %1434 = vmatpush1.bf16.xpose.msra.mxu0 0
        %1435 = vmatprep.subr.bf16.mxu0 0
        %1436 = vmatpush1.bf16.xpose.msra.mxu0 0
        %1437 = vmatprep.subr.bf16.mxu0 0
        %1438 = vmatpush1.bf16.xpose.msra.mxu0 0
        %1439 = vmatprep.subr.bf16.mxu0 0
        %1440 = vmatpush1.bf16.xpose.msra.mxu0 0
        %1441 = vmatprep.subr.bf16.mxu0 0
        %1442 = vmatpush1.bf16.xpose.msra.mxu0 0
        %1443 = vmatprep.subr.bf16.mxu0 0
        %1444 = vmatpush1.bf16.xpose.msra.mxu0 %v1427
        %1445 = vmatprep.subr.bf16.mxu0 0
        %1446 = vmatpush2.bf16.xpose.msra.mxu0 0
        %1447 = vmatprep.subr.bf16.mxu0 0
        %1448 = vmatpush2.bf16.xpose.msra.mxu0 0
        %1449 = vmatprep.subr.bf16.mxu0 0
        %1450 = vmatpush2.bf16.xpose.msra.mxu0 0
        %1451 = vmatprep.subr.bf16.mxu0 0
        %1452 = vmatpush2.bf16.xpose.msra.mxu0 0
        %1453 = vmatprep.subr.bf16.mxu0 0
        %1454 = vmatpush2.bf16.xpose.msra.mxu0 0
        %1455 = vmatprep.subr.bf16.mxu0 0
        %1456 = vmatpush2.bf16.xpose.msra.mxu0 0
        %1457 = vmatprep.subr.bf16.mxu0 0
        %1458 = vmatpush2.bf16.xpose.msra.mxu0 0
        %1459 = vmatprep.subr.bf16.mxu0 0
        %1460 = vmatpush2.bf16.xpose.msra.mxu0 0
        %1461 = vmatprep.mubr.bf16.mxu0 0
        %1462 = vmatmul.mubr.bf16.gmra.mxu0 %v1424
        %v1463 = vpop.f32.mrf.mxu0
        %v1464 = vadd.f32 0.0, %v1463
        %v1465 = vpop.f32.mrf.mxu0
        %v1466 = vpop.f32.mrf.mxu0
        %v1467 = vadd.f32 0.0, %v1466
        %v1468 = vpop.f32.mrf.mxu0
        %1469 = vdwg.mxu0
        %v1470 = vsel %vm973, %v1413, -inf
        %1471 = vmax.xlane.f32.xlu0 %v1470
        %v1472 = vpop.xlane.xlu0 %1471
        %v1473 = vsel %vm977, %v1416, -inf
        %1474 = vmax.xlane.f32.xlu0 %v1473
        %v1475 = vpop.xlane.xlu0 %1474
        %v1476 = vsel %vm973, %v1464, -inf
        %1477 = vmax.xlane.f32.xlu0 %v1476
        %v1478 = vpop.xlane.xlu0 %1477
        %v1479 = vsel %vm977, %v1467, -inf
        %1480 = vmax.xlane.f32.xlu0 %v1479
        %v1481 = vpop.xlane.xlu0 %1480
        %v1482 = vsub.f32 %v1413, %v1472
        %v1483 = vsub.f32 %v1416, %v1475
        %v1484 = vsub.f32 %v1464, %v1478
        %v1485 = vsub.f32 %v1467, %v1481
        %v1486 = vmul.f32 %v1482, 1.442695
        %v1487 = vpow.pop %v1486
        %v1488 = vmul.f32 %v1483, 1.442695
        %v1489 = vpow.pop %v1488
        %v1490 = vmul.f32 %v1484, 1.442695
        %v1491 = vpow.pop %v1490
        %v1492 = vmul.f32 %v1485, 1.442695
        %v1493 = vpow.pop %v1492
        %v1494 = vsel %vm973, %v1487, 0.0
        %1495 = vadd.xlane.f32.xlu0 %v1494
        %v1496 = vpop.xlane.xlu0 %1495
        %v1497 = vsel %vm977, %v1489, 0.0
        %1498 = vadd.xlane.f32.xlu0 %v1497
        %v1499 = vpop.xlane.xlu0 %1498
        %v1500 = vsel %vm973, %v1491, 0.0
        %1501 = vadd.xlane.f32.xlu0 %v1500
        %v1502 = vpop.xlane.xlu0 %1501
        %v1503 = vsel %vm977, %v1493, 0.0
        %1504 = vadd.xlane.f32.xlu0 %v1503
        %v1505 = vpop.xlane.xlu0 %1504
        %v1506 = vrcp.pop %v1496
        %v1507 = vmul.f32 %v1487, %v1506
        %v1508 = vrcp.pop %v1499
        %v1509 = vmul.f32 %v1489, %v1508
        %v1510 = vrcp.pop %v1502
        %v1511 = vmul.f32 %v1491, %v1510
        %v1512 = vrcp.pop %v1505
        %v1513 = vmul.f32 %v1493, %v1512
        %v1514 = vpack.c.bf16 %v1509, %v1507
        %v1515 = vpack.c.bf16 %v1513, %v1511
        %1516 = vrot.lane.b32.xlu0 %v871, 48
        %v1517 = vpop.permute.xlu0 %1516
        %v1519 = vsel %vm973, %v1514, 0
        %v1522 = vand.u32 %v1517, %v1028
        %1524 = vmatprep.subr.bf16.mxu0 0
        %1525 = vmatpush1.bf16.msra.mxu0 0
        %1526 = vmatprep.subr.bf16.mxu0 0
        %1527 = vmatpush1.bf16.msra.mxu0 0
        %1528 = vmatprep.subr.bf16.mxu0 0
        %1529 = vmatpush1.bf16.msra.mxu0 0
        %1530 = vmatprep.subr.bf16.mxu0 0
        %1531 = vmatpush1.bf16.msra.mxu0 0
        %1532 = vmatprep.subr.bf16.mxu0 0
        %1533 = vmatpush1.bf16.msra.mxu0 0
        %1534 = vmatprep.subr.bf16.mxu0 0
        %1535 = vmatpush1.bf16.msra.mxu0 0
        %1536 = vmatprep.subr.bf16.mxu0 0
        %1537 = vmatpush1.bf16.msra.mxu0 0
        %1538 = vmatprep.subr.bf16.mxu0 0
        %1539 = vmatpush1.bf16.msra.mxu0 %v1522
        %1540 = vmatprep.subr.bf16.mxu0 0
        %1541 = vmatpush2.bf16.msra.mxu0 0
        %1542 = vmatprep.subr.bf16.mxu0 0
        %1543 = vmatpush2.bf16.msra.mxu0 0
        %1544 = vmatprep.subr.bf16.mxu0 0
        %1545 = vmatpush2.bf16.msra.mxu0 0
        %1546 = vmatprep.subr.bf16.mxu0 0
        %1547 = vmatpush2.bf16.msra.mxu0 0
        %1548 = vmatprep.subr.bf16.mxu0 0
        %1549 = vmatpush2.bf16.msra.mxu0 0
        %1550 = vmatprep.subr.bf16.mxu0 0
        %1551 = vmatpush2.bf16.msra.mxu0 0
        %1552 = vmatprep.subr.bf16.mxu0 0
        %1553 = vmatpush2.bf16.msra.mxu0 0
        %1554 = vmatprep.subr.bf16.mxu0 0
        %1555 = vmatpush2.bf16.msra.mxu0 0
        %1556 = vmatprep.mubr.bf16.mxu0 0
        %1557 = vmatmul.mubr.bf16.gmra.mxu0 %v1519
        %v1558 = vpop.f32.mrf.mxu0
        %v1559 = vadd.f32 0.0, %v1558
        %v1560 = vpop.f32.mrf.mxu0
        %v1561 = vpop.f32.mrf.mxu0
        %v1562 = vadd.f32 0.0, %v1561
        %v1563 = vpop.f32.mrf.mxu0
        %1564 = vdwg.mxu0
        %1565 = vrot.lane.b32.xlu0 %v872, 48
        %v1566 = vpop.permute.xlu0 %1565
        %v1568 = vsel %vm973, %v1515, 0
        %v1571 = vand.u32 %v1566, %v1028
        %1573 = vmatprep.subr.bf16.mxu0 0
        %1574 = vmatpush1.bf16.msra.mxu0 0
        %1575 = vmatprep.subr.bf16.mxu0 0
        %1576 = vmatpush1.bf16.msra.mxu0 0
        %1577 = vmatprep.subr.bf16.mxu0 0
        %1578 = vmatpush1.bf16.msra.mxu0 0
        %1579 = vmatprep.subr.bf16.mxu0 0
        %1580 = vmatpush1.bf16.msra.mxu0 0
        %1581 = vmatprep.subr.bf16.mxu0 0
        %1582 = vmatpush1.bf16.msra.mxu0 0
        %1583 = vmatprep.subr.bf16.mxu0 0
        %1584 = vmatpush1.bf16.msra.mxu0 0
        %1585 = vmatprep.subr.bf16.mxu0 0
        %1586 = vmatpush1.bf16.msra.mxu0 0
        %1587 = vmatprep.subr.bf16.mxu0 0
        %1588 = vmatpush1.bf16.msra.mxu0 %v1571
        %1589 = vmatprep.subr.bf16.mxu0 0
        %1590 = vmatpush2.bf16.msra.mxu0 0
        %1591 = vmatprep.subr.bf16.mxu0 0
        %1592 = vmatpush2.bf16.msra.mxu0 0
        %1593 = vmatprep.subr.bf16.mxu0 0
        %1594 = vmatpush2.bf16.msra.mxu0 0
        %1595 = vmatprep.subr.bf16.mxu0 0
        %1596 = vmatpush2.bf16.msra.mxu0 0
        %1597 = vmatprep.subr.bf16.mxu0 0
        %1598 = vmatpush2.bf16.msra.mxu0 0
        %1599 = vmatprep.subr.bf16.mxu0 0
        %1600 = vmatpush2.bf16.msra.mxu0 0
        %1601 = vmatprep.subr.bf16.mxu0 0
        %1602 = vmatpush2.bf16.msra.mxu0 0
        %1603 = vmatprep.subr.bf16.mxu0 0
        %1604 = vmatpush2.bf16.msra.mxu0 0
        %1605 = vmatprep.mubr.bf16.mxu0 0
        %1606 = vmatmul.mubr.bf16.gmra.mxu0 %v1568
        %v1607 = vpop.f32.mrf.mxu0
        %v1608 = vadd.f32 0.0, %v1607
        %v1609 = vpop.f32.mrf.mxu0
        %v1610 = vpop.f32.mrf.mxu0
        %v1611 = vadd.f32 0.0, %v1610
        %v1612 = vpop.f32.mrf.mxu0
        %1613 = vdwg.mxu0
        %1614 = vrot.lane.b32.xlu0 %v871, 104
        %v1615 = vpop.permute.xlu0 %1614
        %1616 = vrot.lane.b32.xlu0 %v871, 72
        %v1617 = vpop.permute.xlu0 %1616
        %v1619 = vsel %vm402, %v1615, 0
        %v1622 = vsel %vm402, %v1617, 0
        %1624 = vmatprep.subr.bf16.mxu0 0
        %1625 = vmatpush1.bf16.xpose.msra.mxu0 0
        %1626 = vmatprep.subr.bf16.mxu0 0
        %1627 = vmatpush1.bf16.xpose.msra.mxu0 0
        %1628 = vmatprep.subr.bf16.mxu0 0
        %1629 = vmatpush1.bf16.xpose.msra.mxu0 0
        %1630 = vmatprep.subr.bf16.mxu0 0
        %1631 = vmatpush1.bf16.xpose.msra.mxu0 0
        %1632 = vmatprep.subr.bf16.mxu0 0
        %1633 = vmatpush1.bf16.xpose.msra.mxu0 0
        %1634 = vmatprep.subr.bf16.mxu0 0
        %1635 = vmatpush1.bf16.xpose.msra.mxu0 0
        %1636 = vmatprep.subr.bf16.mxu0 0
        %1637 = vmatpush1.bf16.xpose.msra.mxu0 0
        %1638 = vmatprep.subr.bf16.mxu0 0
        %1639 = vmatpush1.bf16.xpose.msra.mxu0 %v1622
        %1640 = vmatprep.subr.bf16.mxu0 0
        %1641 = vmatpush2.bf16.xpose.msra.mxu0 0
        %1642 = vmatprep.subr.bf16.mxu0 0
        %1643 = vmatpush2.bf16.xpose.msra.mxu0 0
        %1644 = vmatprep.subr.bf16.mxu0 0
        %1645 = vmatpush2.bf16.xpose.msra.mxu0 0
        %1646 = vmatprep.subr.bf16.mxu0 0
        %1647 = vmatpush2.bf16.xpose.msra.mxu0 0
        %1648 = vmatprep.subr.bf16.mxu0 0
        %1649 = vmatpush2.bf16.xpose.msra.mxu0 0
        %1650 = vmatprep.subr.bf16.mxu0 0
        %1651 = vmatpush2.bf16.xpose.msra.mxu0 0
        %1652 = vmatprep.subr.bf16.mxu0 0
        %1653 = vmatpush2.bf16.xpose.msra.mxu0 0
        %1654 = vmatprep.subr.bf16.mxu0 0
        %1655 = vmatpush2.bf16.xpose.msra.mxu0 0
        %1656 = vmatprep.mubr.bf16.mxu0 0
        %1657 = vmatmul.mubr.bf16.gmra.mxu0 %v1619
        %v1658 = vpop.f32.mrf.mxu0
        %v1659 = vadd.f32 0.0, %v1658
        %v1660 = vpop.f32.mrf.mxu0
        %v1661 = vpop.f32.mrf.mxu0
        %v1662 = vadd.f32 0.0, %v1661
        %v1663 = vpop.f32.mrf.mxu0
        %1664 = vdwg.mxu0
        %1665 = vrot.lane.b32.xlu0 %v872, 104
        %v1666 = vpop.permute.xlu0 %1665
        %1667 = vrot.lane.b32.xlu0 %v872, 72
        %v1668 = vpop.permute.xlu0 %1667
        %v1670 = vsel %vm402, %v1666, 0
        %v1673 = vsel %vm402, %v1668, 0
        %1675 = vmatprep.subr.bf16.mxu0 0
        %1676 = vmatpush1.bf16.xpose.msra.mxu0 0
        %1677 = vmatprep.subr.bf16.mxu0 0
        %1678 = vmatpush1.bf16.xpose.msra.mxu0 0
        %1679 = vmatprep.subr.bf16.mxu0 0
        %1680 = vmatpush1.bf16.xpose.msra.mxu0 0
        %1681 = vmatprep.subr.bf16.mxu0 0
        %1682 = vmatpush1.bf16.xpose.msra.mxu0 0
        %1683 = vmatprep.subr.bf16.mxu0 0
        %1684 = vmatpush1.bf16.xpose.msra.mxu0 0
        %1685 = vmatprep.subr.bf16.mxu0 0
        %1686 = vmatpush1.bf16.xpose.msra.mxu0 0
        %1687 = vmatprep.subr.bf16.mxu0 0
        %1688 = vmatpush1.bf16.xpose.msra.mxu0 0
        %1689 = vmatprep.subr.bf16.mxu0 0
        %1690 = vmatpush1.bf16.xpose.msra.mxu0 %v1673
        %1691 = vmatprep.subr.bf16.mxu0 0
        %1692 = vmatpush2.bf16.xpose.msra.mxu0 0
        %1693 = vmatprep.subr.bf16.mxu0 0
        %1694 = vmatpush2.bf16.xpose.msra.mxu0 0
        %1695 = vmatprep.subr.bf16.mxu0 0
        %1696 = vmatpush2.bf16.xpose.msra.mxu0 0
        %1697 = vmatprep.subr.bf16.mxu0 0
        %1698 = vmatpush2.bf16.xpose.msra.mxu0 0
        %1699 = vmatprep.subr.bf16.mxu0 0
        %1700 = vmatpush2.bf16.xpose.msra.mxu0 0
        %1701 = vmatprep.subr.bf16.mxu0 0
        %1702 = vmatpush2.bf16.xpose.msra.mxu0 0
        %1703 = vmatprep.subr.bf16.mxu0 0
        %1704 = vmatpush2.bf16.xpose.msra.mxu0 0
        %1705 = vmatprep.subr.bf16.mxu0 0
        %1706 = vmatpush2.bf16.xpose.msra.mxu0 0
        %1707 = vmatprep.mubr.bf16.mxu0 0
        %1708 = vmatmul.mubr.bf16.gmra.mxu0 %v1670
        %v1709 = vpop.f32.mrf.mxu0
        %v1710 = vadd.f32 0.0, %v1709
        %v1711 = vpop.f32.mrf.mxu0
        %v1712 = vpop.f32.mrf.mxu0
        %v1713 = vadd.f32 0.0, %v1712
        %v1714 = vpop.f32.mrf.mxu0
        %1715 = vdwg.mxu0
        %v1716 = vsel %vm973, %v1659, -inf
        %1717 = vmax.xlane.f32.xlu0 %v1716
        %v1718 = vpop.xlane.xlu0 %1717
        %v1719 = vsel %vm977, %v1662, -inf
        %1720 = vmax.xlane.f32.xlu0 %v1719
        %v1721 = vpop.xlane.xlu0 %1720
        %v1722 = vsel %vm973, %v1710, -inf
        %1723 = vmax.xlane.f32.xlu0 %v1722
        %v1724 = vpop.xlane.xlu0 %1723
        %v1725 = vsel %vm977, %v1713, -inf
        %1726 = vmax.xlane.f32.xlu0 %v1725
        %v1727 = vpop.xlane.xlu0 %1726
        %v1728 = vsub.f32 %v1659, %v1718
        %v1729 = vsub.f32 %v1662, %v1721
        %v1730 = vsub.f32 %v1710, %v1724
        %v1731 = vsub.f32 %v1713, %v1727
        %v1732 = vmul.f32 %v1728, 1.442695
        %v1733 = vpow.pop %v1732
        %v1734 = vmul.f32 %v1729, 1.442695
        %v1735 = vpow.pop %v1734
        %v1736 = vmul.f32 %v1730, 1.442695
        %v1737 = vpow.pop %v1736
        %v1738 = vmul.f32 %v1731, 1.442695
        %v1739 = vpow.pop %v1738
        %v1740 = vsel %vm973, %v1733, 0.0
        %1741 = vadd.xlane.f32.xlu0 %v1740
        %v1742 = vpop.xlane.xlu0 %1741
        %v1743 = vsel %vm977, %v1735, 0.0
        %1744 = vadd.xlane.f32.xlu0 %v1743
        %v1745 = vpop.xlane.xlu0 %1744
        %v1746 = vsel %vm973, %v1737, 0.0
        %1747 = vadd.xlane.f32.xlu0 %v1746
        %v1748 = vpop.xlane.xlu0 %1747
        %v1749 = vsel %vm977, %v1739, 0.0
        %1750 = vadd.xlane.f32.xlu0 %v1749
        %v1751 = vpop.xlane.xlu0 %1750
        %v1752 = vrcp.pop %v1742
        %v1753 = vmul.f32 %v1733, %v1752
        %v1754 = vrcp.pop %v1745
        %v1755 = vmul.f32 %v1735, %v1754
        %v1756 = vrcp.pop %v1748
        %v1757 = vmul.f32 %v1737, %v1756
        %v1758 = vrcp.pop %v1751
        %v1759 = vmul.f32 %v1739, %v1758
        %v1760 = vpack.c.bf16 %v1755, %v1753
        %v1761 = vpack.c.bf16 %v1759, %v1757
        %1762 = vrot.lane.b32.xlu0 %v871, 40
        %v1763 = vpop.permute.xlu0 %1762
        %v1765 = vsel %vm973, %v1760, 0
        %v1768 = vand.u32 %v1763, %v1028
        %1770 = vmatprep.subr.bf16.mxu0 0
        %1771 = vmatpush1.bf16.msra.mxu0 0
        %1772 = vmatprep.subr.bf16.mxu0 0
        %1773 = vmatpush1.bf16.msra.mxu0 0
        %1774 = vmatprep.subr.bf16.mxu0 0
        %1775 = vmatpush1.bf16.msra.mxu0 0
        %1776 = vmatprep.subr.bf16.mxu0 0
        %1777 = vmatpush1.bf16.msra.mxu0 0
        %1778 = vmatprep.subr.bf16.mxu0 0
        %1779 = vmatpush1.bf16.msra.mxu0 0
        %1780 = vmatprep.subr.bf16.mxu0 0
        %1781 = vmatpush1.bf16.msra.mxu0 0
        %1782 = vmatprep.subr.bf16.mxu0 0
        %1783 = vmatpush1.bf16.msra.mxu0 0
        %1784 = vmatprep.subr.bf16.mxu0 0
        %1785 = vmatpush1.bf16.msra.mxu0 %v1768
        %1786 = vmatprep.subr.bf16.mxu0 0
        %1787 = vmatpush2.bf16.msra.mxu0 0
        %1788 = vmatprep.subr.bf16.mxu0 0
        %1789 = vmatpush2.bf16.msra.mxu0 0
        %1790 = vmatprep.subr.bf16.mxu0 0
        %1791 = vmatpush2.bf16.msra.mxu0 0
        %1792 = vmatprep.subr.bf16.mxu0 0
        %1793 = vmatpush2.bf16.msra.mxu0 0
        %1794 = vmatprep.subr.bf16.mxu0 0
        %1795 = vmatpush2.bf16.msra.mxu0 0
        %1796 = vmatprep.subr.bf16.mxu0 0
        %1797 = vmatpush2.bf16.msra.mxu0 0
        %1798 = vmatprep.subr.bf16.mxu0 0
        %1799 = vmatpush2.bf16.msra.mxu0 0
        %1800 = vmatprep.subr.bf16.mxu0 0
        %1801 = vmatpush2.bf16.msra.mxu0 0
        %1802 = vmatprep.mubr.bf16.mxu0 0
        %1803 = vmatmul.mubr.bf16.gmra.mxu0 %v1765
        %v1804 = vpop.f32.mrf.mxu0
        %v1805 = vadd.f32 0.0, %v1804
        %v1806 = vpop.f32.mrf.mxu0
        %v1807 = vpop.f32.mrf.mxu0
        %v1808 = vadd.f32 0.0, %v1807
        %v1809 = vpop.f32.mrf.mxu0
        %1810 = vdwg.mxu0
        %1811 = vrot.lane.b32.xlu0 %v872, 40
        %v1812 = vpop.permute.xlu0 %1811
        %v1814 = vsel %vm973, %v1761, 0
        %v1817 = vand.u32 %v1812, %v1028
        %1819 = vmatprep.subr.bf16.mxu0 0
        %1820 = vmatpush1.bf16.msra.mxu0 0
        %1821 = vmatprep.subr.bf16.mxu0 0
        %1822 = vmatpush1.bf16.msra.mxu0 0
        %1823 = vmatprep.subr.bf16.mxu0 0
        %1824 = vmatpush1.bf16.msra.mxu0 0
        %1825 = vmatprep.subr.bf16.mxu0 0
        %1826 = vmatpush1.bf16.msra.mxu0 0
        %1827 = vmatprep.subr.bf16.mxu0 0
        %1828 = vmatpush1.bf16.msra.mxu0 0
        %1829 = vmatprep.subr.bf16.mxu0 0
        %1830 = vmatpush1.bf16.msra.mxu0 0
        %1831 = vmatprep.subr.bf16.mxu0 0
        %1832 = vmatpush1.bf16.msra.mxu0 0
        %1833 = vmatprep.subr.bf16.mxu0 0
        %1834 = vmatpush1.bf16.msra.mxu0 %v1817
        %1835 = vmatprep.subr.bf16.mxu0 0
        %1836 = vmatpush2.bf16.msra.mxu0 0
        %1837 = vmatprep.subr.bf16.mxu0 0
        %1838 = vmatpush2.bf16.msra.mxu0 0
        %1839 = vmatprep.subr.bf16.mxu0 0
        %1840 = vmatpush2.bf16.msra.mxu0 0
        %1841 = vmatprep.subr.bf16.mxu0 0
        %1842 = vmatpush2.bf16.msra.mxu0 0
        %1843 = vmatprep.subr.bf16.mxu0 0
        %1844 = vmatpush2.bf16.msra.mxu0 0
        %1845 = vmatprep.subr.bf16.mxu0 0
        %1846 = vmatpush2.bf16.msra.mxu0 0
        %1847 = vmatprep.subr.bf16.mxu0 0
        %1848 = vmatpush2.bf16.msra.mxu0 0
        %1849 = vmatprep.subr.bf16.mxu0 0
        %1850 = vmatpush2.bf16.msra.mxu0 0
        %1851 = vmatprep.mubr.bf16.mxu0 0
        %1852 = vmatmul.mubr.bf16.gmra.mxu0 %v1814
        %v1853 = vpop.f32.mrf.mxu0
        %v1854 = vadd.f32 0.0, %v1853
        %v1855 = vpop.f32.mrf.mxu0
        %v1856 = vpop.f32.mrf.mxu0
        %v1857 = vadd.f32 0.0, %v1856
        %v1858 = vpop.f32.mrf.mxu0
        %1859 = vdwg.mxu0
        %1864 = vrot.lane.b32.xlu0 %v1313, 8
        %v1865 = vpop.permute.xlu0 %1864
        %1866 = vrot.lane.b32.xlu0 %v1316, 8
        %v1867 = vpop.permute.xlu0 %1866
        %1868 = vrot.lane.b32.xlu0 %v1362, 8
        %v1869 = vpop.permute.xlu0 %1868
        %1870 = vrot.lane.b32.xlu0 %v1365, 8
        %v1871 = vpop.permute.xlu0 %1870
        %1880 = vrot.lane.b32.xlu0 %v1559, 16
        %v1881 = vpop.permute.xlu0 %1880
        %1882 = vrot.lane.b32.xlu0 %v1562, 16
        %v1883 = vpop.permute.xlu0 %1882
        %1884 = vrot.lane.b32.xlu0 %v1608, 16
        %v1885 = vpop.permute.xlu0 %1884
        %1886 = vrot.lane.b32.xlu0 %v1611, 16
        %v1887 = vpop.permute.xlu0 %1886
        %1896 = vrot.lane.b32.xlu0 %v1805, 24
        %v1897 = vpop.permute.xlu0 %1896
        %1898 = vrot.lane.b32.xlu0 %v1808, 24
        %v1899 = vpop.permute.xlu0 %1898
        %1900 = vrot.lane.b32.xlu0 %v1854, 24
        %v1901 = vpop.permute.xlu0 %1900
        %1902 = vrot.lane.b32.xlu0 %v1857, 24
        %v1903 = vpop.permute.xlu0 %1902
        %v1908 = vsel %vm402, %v1067, %v1865
        %v1909 = vsel %vm402, %v1070, %v1867
        %v1910 = vsel %vm402, %v1116, %v1869
        %v1911 = vsel %vm402, %v1119, %v1871
        %vm1912 = vcmask 130048
        %v1913 = vsel %vm1912, %v1908, %v1881
        %v1914 = vsel %vm1912, %v1909, %v1883
        %v1915 = vsel %vm1912, %v1910, %v1885
        %v1916 = vsel %vm1912, %v1911, %v1887
        %vm1917 = vcmask 195584
        %v1918 = vsel %vm1917, %v1913, %v1897
        %v1919 = vsel %vm1917, %v1914, %v1899
        %v1920 = vsel %vm1917, %v1915, %v1901
        %v1921 = vsel %vm1917, %v1916, %v1903
        %v1926 = vcombine.high %v1918, %v1918
        %v1928 = vunpack.c.l.s4 1966171168
        %v1929 = vunpack.c.0.s8 %v1928
        %v1930 = vlaneseq
        %v1931 = vshrl.u32 %v1930, 7
        %v1932 = vsub.s32 %v1929, %v1931
        %v1933 = vrot.slane %v1918, %v1932
        %v1935 = vunpack.c.l.s4 1966171168
        %v1936 = vunpack.c.0.s8 %v1935
        %v1937 = vlaneseq
        %v1938 = vshrl.u32 %v1937, 7
        %v1939 = vsub.s32 %v1936, %v1938
        %v1940 = vrot.slane %v1926, %v1939
        %v1941 = vcombine.high %v1933, %v1933
        %v1942 = vcombine.high %v1940, %v1940
        %v1944 = vunpack.c.l.s4 1966171168
        %v1945 = vunpack.c.0.s8 %v1944
        %v1946 = vlaneseq
        %v1947 = vshrl.u32 %v1946, 7
        %v1948 = vsub.s32 %v1945, %v1947
        %v1949 = vrot.slane %v1933, %v1948
        %v1951 = vunpack.c.l.s4 1966171168
        %v1952 = vunpack.c.0.s8 %v1951
        %v1953 = vlaneseq
        %v1954 = vshrl.u32 %v1953, 7
        %v1955 = vsub.s32 %v1952, %v1954
        %v1956 = vrot.slane %v1940, %v1955
        %v1958 = vunpack.c.l.s4 1966171168
        %v1959 = vunpack.c.0.s8 %v1958
        %v1960 = vlaneseq
        %v1961 = vshrl.u32 %v1960, 7
        %v1962 = vsub.s32 %v1959, %v1961
        %v1963 = vrot.slane %v1941, %v1962
        %v1965 = vunpack.c.l.s4 1966171168
        %v1966 = vunpack.c.0.s8 %v1965
        %v1967 = vlaneseq
        %v1968 = vshrl.u32 %v1967, 7
        %v1969 = vsub.s32 %v1966, %v1968
        %v1970 = vrot.slane %v1942, %v1969
        %v1971 = vcombine.high %v1949, %v1949
        %v1972 = vcombine.high %v1956, %v1956
        %v1973 = vcombine.high %v1963, %v1963
        %v1974 = vcombine.high %v1970, %v1970
        %v1976 = vunpack.c.l.s4 1966171168
        %v1977 = vunpack.c.0.s8 %v1976
        %v1978 = vlaneseq
        %v1979 = vshrl.u32 %v1978, 7
        %v1980 = vsub.s32 %v1977, %v1979
        %v1981 = vrot.slane %v1919, %v1980
        %v1983 = vunpack.c.l.s4 1966171168
        %v1984 = vunpack.c.0.s8 %v1983
        %v1985 = vlaneseq
        %v1986 = vshrl.u32 %v1985, 7
        %v1987 = vsub.s32 %v1984, %v1986
        %v1988 = vrot.slane %v1981, %v1987
        %v1989 = vcombine.high %v1920, %v1920
        %v1991 = vunpack.c.l.s4 1966171168
        %v1992 = vunpack.c.0.s8 %v1991
        %v1993 = vlaneseq
        %v1994 = vshrl.u32 %v1993, 7
        %v1995 = vsub.s32 %v1992, %v1994
        %v1996 = vrot.slane %v1920, %v1995
        %v1998 = vunpack.c.l.s4 1966171168
        %v1999 = vunpack.c.0.s8 %v1998
        %v2000 = vlaneseq
        %v2001 = vshrl.u32 %v2000, 7
        %v2002 = vsub.s32 %v1999, %v2001
        %v2003 = vrot.slane %v1989, %v2002
        %v2004 = vcombine.high %v1996, %v1996
        %v2005 = vcombine.high %v2003, %v2003
        %v2007 = vunpack.c.l.s4 1966171168
        %v2008 = vunpack.c.0.s8 %v2007
        %v2009 = vlaneseq
        %v2010 = vshrl.u32 %v2009, 7
        %v2011 = vsub.s32 %v2008, %v2010
        %v2012 = vrot.slane %v1996, %v2011
        %v2014 = vunpack.c.l.s4 1966171168
        %v2015 = vunpack.c.0.s8 %v2014
        %v2016 = vlaneseq
        %v2017 = vshrl.u32 %v2016, 7
        %v2018 = vsub.s32 %v2015, %v2017
        %v2019 = vrot.slane %v2003, %v2018
        %v2021 = vunpack.c.l.s4 1966171168
        %v2022 = vunpack.c.0.s8 %v2021
        %v2023 = vlaneseq
        %v2024 = vshrl.u32 %v2023, 7
        %v2025 = vsub.s32 %v2022, %v2024
        %v2026 = vrot.slane %v2004, %v2025
        %v2028 = vunpack.c.l.s4 1966171168
        %v2029 = vunpack.c.0.s8 %v2028
        %v2030 = vlaneseq
        %v2031 = vshrl.u32 %v2030, 7
        %v2032 = vsub.s32 %v2029, %v2031
        %v2033 = vrot.slane %v2005, %v2032
        %v2034 = vcombine.high %v2012, %v2012
        %v2035 = vcombine.high %v2019, %v2019
        %v2036 = vcombine.high %v2026, %v2026
        %v2037 = vcombine.high %v2033, %v2033
        %v2039 = vunpack.c.l.s4 1966171168
        %v2040 = vunpack.c.0.s8 %v2039
        %v2041 = vlaneseq
        %v2042 = vshrl.u32 %v2041, 7
        %v2043 = vsub.s32 %v2040, %v2042
        %v2044 = vrot.slane %v1921, %v2043
        %v2046 = vunpack.c.l.s4 1966171168
        %v2047 = vunpack.c.0.s8 %v2046
        %v2048 = vlaneseq
        %v2049 = vshrl.u32 %v2048, 7
        %v2050 = vsub.s32 %v2047, %v2049
        %v2051 = vrot.slane %v2044, %v2050
        %v2052 = vcombine.low %v1949, %v1963
        %v2053 = vcombine.low %v1971, %v1973
        %v2054 = vcombine.low %v1956, %v1970
        %v2055 = vcombine.low %v1972, %v1974
        %v2057 = vunpack.c.l.s4 1966171168
        %v2058 = vunpack.c.0.s8 %v2057
        %v2059 = vlaneseq
        %v2060 = vshrl.u32 %v2059, 7
        %v2061 = vsub.s32 %v2058, %v2060
        %v2062 = vrot.slane %v2052, %v2061
        %v2064 = vunpack.c.l.s4 1966171168
        %v2065 = vunpack.c.0.s8 %v2064
        %v2066 = vlaneseq
        %v2067 = vshrl.u32 %v2066, 7
        %v2068 = vsub.s32 %v2065, %v2067
        %v2069 = vrot.slane %v2053, %v2068
        %v2071 = vunpack.c.l.s4 1966171168
        %v2072 = vunpack.c.0.s8 %v2071
        %v2073 = vlaneseq
        %v2074 = vshrl.u32 %v2073, 7
        %v2075 = vsub.s32 %v2072, %v2074
        %v2076 = vrot.slane %v2054, %v2075
        %v2078 = vunpack.c.l.s4 1966171168
        %v2079 = vunpack.c.0.s8 %v2078
        %v2080 = vlaneseq
        %v2081 = vshrl.u32 %v2080, 7
        %v2082 = vsub.s32 %v2079, %v2081
        %v2083 = vrot.slane %v2055, %v2082
        %v2084 = vcombine.low %v2062, %v2069
        %v2085 = vcombine.low %v2076, %v2083
        %v2087 = vunpack.c.l.s4 1966171168
        %v2088 = vunpack.c.0.s8 %v2087
        %v2089 = vlaneseq
        %v2090 = vshrl.u32 %v2089, 7
        %v2091 = vsub.s32 %v2088, %v2090
        %v2092 = vrot.slane %v2084, %v2091
        %v2094 = vunpack.c.l.s4 1966171168
        %v2095 = vunpack.c.0.s8 %v2094
        %v2096 = vlaneseq
        %v2097 = vshrl.u32 %v2096, 7
        %v2098 = vsub.s32 %v2095, %v2097
        %v2099 = vrot.slane %v2085, %v2098
        %v2100 = vcombine.low %v2092, %v2099
        %v2101 = vcombine.low %v1988, %v2012
        %v2102 = vcombine.low %v2026, %v2034
        %v2103 = vcombine.low %v2036, %v2019
        %v2104 = vcombine.low %v2033, %v2035
        %v2106 = vunpack.c.l.s4 1966171168
        %v2107 = vunpack.c.0.s8 %v2106
        %v2108 = vlaneseq
        %v2109 = vshrl.u32 %v2108, 7
        %v2110 = vsub.s32 %v2107, %v2109
        %v2111 = vrot.slane %v2101, %v2110
        %v2113 = vunpack.c.l.s4 1966171168
        %v2114 = vunpack.c.0.s8 %v2113
        %v2115 = vlaneseq
        %v2116 = vshrl.u32 %v2115, 7
        %v2117 = vsub.s32 %v2114, %v2116
        %v2118 = vrot.slane %v2102, %v2117
        %v2120 = vunpack.c.l.s4 1966171168
        %v2121 = vunpack.c.0.s8 %v2120
        %v2122 = vlaneseq
        %v2123 = vshrl.u32 %v2122, 7
        %v2124 = vsub.s32 %v2121, %v2123
        %v2125 = vrot.slane %v2103, %v2124
        %v2127 = vunpack.c.l.s4 1966171168
        %v2128 = vunpack.c.0.s8 %v2127
        %v2129 = vlaneseq
        %v2130 = vshrl.u32 %v2129, 7
        %v2131 = vsub.s32 %v2128, %v2130
        %v2132 = vrot.slane %v2104, %v2131
        %v2133 = vcombine.low %v2111, %v2118
        %v2134 = vcombine.low %v2125, %v2132
        %v2136 = vunpack.c.l.s4 1966171168
        %v2137 = vunpack.c.0.s8 %v2136
        %v2138 = vlaneseq
        %v2139 = vshrl.u32 %v2138, 7
        %v2140 = vsub.s32 %v2137, %v2139
        %v2141 = vrot.slane %v2133, %v2140
        %v2143 = vunpack.c.l.s4 1966171168
        %v2144 = vunpack.c.0.s8 %v2143
        %v2145 = vlaneseq
        %v2146 = vshrl.u32 %v2145, 7
        %v2147 = vsub.s32 %v2144, %v2146
        %v2148 = vrot.slane %v2134, %v2147
        %v2149 = vcombine.low %v2141, %v2148
        %v2150 = vcombine.low %v2037, %v2051
        %v2152 = vunpack.c.l.s4 1966171168
        %v2153 = vunpack.c.0.s8 %v2152
        %v2154 = vlaneseq
        %v2155 = vshrl.u32 %v2154, 7
        %v2156 = vsub.s32 %v2153, %v2155
        %v2157 = vrot.slane %v2150, %v2156
        %v2159 = vunpack.c.l.s4 1966171168
        %v2160 = vunpack.c.0.s8 %v2159
        %v2161 = vlaneseq
        %v2162 = vshrl.u32 %v2161, 7
        %v2163 = vsub.s32 %v2160, %v2162
        %v2164 = vrot.slane %v2157, %v2163
        %v2168 = vpack.c.bf16 %v2149, %v2100
        %v2169 = vpack.c.bf16 %v2164, %v2164
        %v2174 = vunpack.c.l.b16 %v466
        %v2175 = vunpack.c.l.b16 %v468
        %v2176 = vunpack.c.l.b16 %v470
        %v2177 = vunpack.c.l.b16 %v472
        %v2178 = vpack.c.b16 %v2175, %v2174
        %v2179 = vpack.c.b16 %v2177, %v2176
        %v2183 = vsel %vm490, %v2168, 0
        %v2186 = vsel %vm490, %v2169, 0
        %2188 = vmatprep.subr.bf16.mxu0 0
        %2189 = vmatpush1.bf16.msra.mxu0 0
        %2190 = vmatprep.subr.bf16.mxu0 0
        %2191 = vmatpush1.bf16.msra.mxu0 0
        %2192 = vmatprep.subr.bf16.mxu0 0
        %2193 = vmatpush1.bf16.msra.mxu0 0
        %2194 = vmatprep.subr.bf16.mxu0 0
        %2195 = vmatpush1.bf16.msra.mxu0 0
        %2196 = vmatprep.subr.bf16.mxu0 0
        %2197 = vmatpush1.bf16.msra.mxu0 0
        %2198 = vmatprep.subr.bf16.mxu0 0
        %2199 = vmatpush1.bf16.msra.mxu0 0
        %2200 = vmatprep.subr.bf16.mxu0 0
        %2201 = vmatpush1.bf16.msra.mxu0 %v2179
        %2202 = vmatprep.subr.bf16.mxu0 0
        %2203 = vmatpush1.bf16.msra.mxu0 %v2178
        %2204 = vmatprep.subr.bf16.mxu0 0
        %2205 = vmatpush2.bf16.msra.mxu0 0
        %2206 = vmatprep.subr.bf16.mxu0 0
        %2207 = vmatpush2.bf16.msra.mxu0 0
        %2208 = vmatprep.subr.bf16.mxu0 0
        %2209 = vmatpush2.bf16.msra.mxu0 0
        %2210 = vmatprep.subr.bf16.mxu0 0
        %2211 = vmatpush2.bf16.msra.mxu0 0
        %2212 = vmatprep.subr.bf16.mxu0 0
        %2213 = vmatpush2.bf16.msra.mxu0 0
        %2214 = vmatprep.subr.bf16.mxu0 0
        %2215 = vmatpush2.bf16.msra.mxu0 0
        %2216 = vmatprep.subr.bf16.mxu0 0
        %2217 = vmatpush2.bf16.msra.mxu0 0
        %2218 = vmatprep.subr.bf16.mxu0 0
        %2219 = vmatpush2.bf16.msra.mxu0 0
        %2220 = vmatprep.mubr.bf16.mxu0 0
        %2221 = vmatmul.mubr.bf16.gmra.mxu0 %v2183
        %v2222 = vpop.f32.mrf.mxu0
        %v2223 = vadd.f32 0.0, %v2222
        %v2224 = vpop.f32.mrf.mxu0
        %v2225 = vpop.f32.mrf.mxu0
        %v2226 = vadd.f32 0.0, %v2225
        %v2227 = vpop.f32.mrf.mxu0
        %2228 = vmatprep.mubr.bf16.mxu0 0
        %2229 = vmatmul.mubr.bf16.gmra.mxu0 %v2186
        %v2230 = vpop.f32.mrf.mxu0
        %v2231 = vadd.f32 0.0, %v2230
        %v2232 = vpop.f32.mrf.mxu0
        %v2233 = vpop.f32.mrf.mxu0
        %v2234 = vpop.f32.mrf.mxu0
        %2235 = vdwg.mxu0
        %v2236 = vadd.f32 %v448, %v2223
        %v2237 = vadd.f32 %v451, %v2226
        %v2238 = vadd.f32 %v456, %v2231
        %2240 = vrot.lane.b32.xlu0 %v551, 32
        %v2241 = vpop.permute.xlu0 %2240
        %v2243 = vadd.f32 %v2236, %v2241
        %v2244 = vadd.f32 %v2237, %v2241
        %v2245 = vadd.f32 %v2238, %v2241
        %v2246 = vsel %vm490, %v2243, 0.0
        %2247 = vadd.xlane.f32.xlu0 %v2246
        %v2248 = vpop.xlane.xlu0 %2247
        %v2249 = vsel %vm490, %v2244, 0.0
        %2250 = vadd.xlane.f32.xlu0 %v2249
        %v2251 = vpop.xlane.xlu0 %2250
        %v2252 = vsel %vm497, %v2245, 0.0
        %2253 = vadd.xlane.f32.xlu0 %v2252
        %v2254 = vpop.xlane.xlu0 %2253
        %v2255 = vmul.f32 %v2248, %v501
        %v2256 = vmul.f32 %v2251, %v501
        %v2257 = vmul.f32 %v2254, %v501
        %v2258 = vsub.f32 %v2243, %v2255
        %v2259 = vsub.f32 %v2244, %v2256
        %v2260 = vsub.f32 %v2245, %v2257
        %v2261 = vmul.f32 %v2258, %v2258
        %v2262 = vmul.f32 %v2259, %v2259
        %v2263 = vmul.f32 %v2260, %v2260
        %v2264 = vsel %vm490, %v2261, 0.0
        %2265 = vadd.xlane.f32.xlu0 %v2264
        %v2266 = vpop.xlane.xlu0 %2265
        %v2267 = vsel %vm490, %v2262, 0.0
        %2268 = vadd.xlane.f32.xlu0 %v2267
        %v2269 = vpop.xlane.xlu0 %2268
        %v2270 = vsel %vm497, %v2263, 0.0
        %2271 = vadd.xlane.f32.xlu0 %v2270
        %v2272 = vpop.xlane.xlu0 %2271
        %v2273 = vmul.f32 %v2266, %v501
        %v2274 = vmul.f32 %v2269, %v501
        %v2275 = vmul.f32 %v2272, %v501
        %v2276 = vadd.f32 %v2273, 1e-05
        %v2277 = vadd.f32 %v2274, 1e-05
        %v2278 = vadd.f32 %v2275, 1e-05
        %v2279 = vrsqrt.pop %v2276
        %v2280 = vrsqrt.pop %v2277
        %v2281 = vrsqrt.pop %v2278
        %v2282 = vmul.f32 %v2258, %v2279
        %v2283 = vmul.f32 %v2259, %v2280
        %v2284 = vmul.f32 %v2260, %v2281
        %2285 = vrot.lane.b32.xlu0 %v535, 64
        %v2286 = vpop.permute.xlu0 %2285
        %v2288 = vmul.f32 %v2282, %v2286
        %v2289 = vmul.f32 %v2283, %v2286
        %v2290 = vmul.f32 %v2284, %v2286
        %2291 = vrot.lane.b32.xlu0 %v535, 32
        %v2292 = vpop.permute.xlu0 %2291
        %v2294 = vadd.f32 %v2288, %v2292
        %v2295 = vadd.f32 %v2289, %v2292
        %v2296 = vadd.f32 %v2290, %v2292
        %v2297 = vpack.c.bf16 %v2295, %v2294
        %v2298 = vpack.c.bf16 %v2296, %v2296
        %v2299 = vlaneseq
        %v2300 = vshrl.u32 %v2299, 7
        %v2301 = vsub.s32 2, %v2300
        %v2302 = vrot.slane %v489, %v2301
        %v2303 = vunpack.c.h.b16 %v465
        %v2304 = vunpack.c.h.b16 %v467
        %v2305 = vunpack.c.h.b16 %v469
        %v2306 = vunpack.c.h.b16 %v471
        %v2307 = vpack.c.b16 %v2304, %v2303
        %v2308 = vpack.c.b16 %v2306, %v2305
        %v2312 = vsel %vm490, %v2297, 0
        %v2315 = vsel %vm490, %v2298, 0
        %2317 = vmatprep.subr.bf16.mxu0 0
        %2318 = vmatpush1.bf16.msra.mxu0 0
        %2319 = vmatprep.subr.bf16.mxu0 0
        %2320 = vmatpush1.bf16.msra.mxu0 0
        %2321 = vmatprep.subr.bf16.mxu0 0
        %2322 = vmatpush1.bf16.msra.mxu0 0
        %2323 = vmatprep.subr.bf16.mxu0 0
        %2324 = vmatpush1.bf16.msra.mxu0 0
        %2325 = vmatprep.subr.bf16.mxu0 0
        %2326 = vmatpush1.bf16.msra.mxu0 0
        %2327 = vmatprep.subr.bf16.mxu0 0
        %2328 = vmatpush1.bf16.msra.mxu0 0
        %2329 = vmatprep.subr.bf16.mxu0 0
        %2330 = vmatpush1.bf16.msra.mxu0 %v2308
        %2331 = vmatprep.subr.bf16.mxu0 0
        %2332 = vmatpush1.bf16.msra.mxu0 %v2307
        %2333 = vmatprep.subr.bf16.mxu0 0
        %2334 = vmatpush2.bf16.msra.mxu0 0
        %2335 = vmatprep.subr.bf16.mxu0 0
        %2336 = vmatpush2.bf16.msra.mxu0 0
        %2337 = vmatprep.subr.bf16.mxu0 0
        %2338 = vmatpush2.bf16.msra.mxu0 0
        %2339 = vmatprep.subr.bf16.mxu0 0
        %2340 = vmatpush2.bf16.msra.mxu0 0
        %2341 = vmatprep.subr.bf16.mxu0 0
        %2342 = vmatpush2.bf16.msra.mxu0 0
        %2343 = vmatprep.subr.bf16.mxu0 0
        %2344 = vmatpush2.bf16.msra.mxu0 0
        %2345 = vmatprep.subr.bf16.mxu0 0
        %2346 = vmatpush2.bf16.msra.mxu0 0
        %2347 = vmatprep.subr.bf16.mxu0 0
        %2348 = vmatpush2.bf16.msra.mxu0 0
        %2349 = vmatprep.mubr.bf16.mxu0 0
        %2350 = vmatmul.mubr.bf16.gmra.mxu0 %v2312
        %v2351 = vpop.f32.mrf.mxu0
        %v2352 = vadd.f32 %v2302, %v2351
        %v2353 = vpop.f32.mrf.mxu0
        %v2354 = vpop.f32.mrf.mxu0
        %v2355 = vadd.f32 %v2302, %v2354
        %v2356 = vpop.f32.mrf.mxu0
        %2357 = vmatprep.mubr.bf16.mxu0 0
        %2358 = vmatmul.mubr.bf16.gmra.mxu0 %v2315
        %v2359 = vpop.f32.mrf.mxu0
        %v2360 = vadd.f32 %v2302, %v2359
        %v2361 = vpop.f32.mrf.mxu0
        %v2362 = vpop.f32.mrf.mxu0
        %v2363 = vpop.f32.mrf.mxu0
        %2364 = vdwg.mxu0
        %v2365 = vmul.f32 %v2352, 0.5
        %v2366 = vmul.f32 %v2355, 0.5
        %v2367 = vmul.f32 %v2360, 0.5
        %v2368 = vrcp.pop 1.4142135
        %v2369 = vmul.f32 %v2352, %v2368
        %v2370 = vmul.f32 %v2355, %v2368
        %v2371 = vmul.f32 %v2360, %v2368
        %vm2372 = vcmp.ge.f32.partialorder %v2369, 0.0
        %vm2373 = vcmp.ge.f32.partialorder %v2370, 0.0
        %vm2374 = vcmp.ge.f32.partialorder %v2371, 0.0
        %v2375 = vsel %vm2372, 1.0, -1.0
        %v2376 = vsel %vm2373, 1.0, -1.0
        %v2377 = vsel %vm2374, 1.0, -1.0
        %v2378 = vand.u32 2147483647, %v2369
        %v2379 = vand.u32 2147483647, %v2370
        %v2380 = vand.u32 2147483647, %v2371
        %v2381 = vmul.f32 %v2378, 0.3275911
        %v2382 = vmul.f32 %v2379, 0.3275911
        %v2383 = vmul.f32 %v2380, 0.3275911
        %v2384 = vadd.f32 %v2381, 1.0
        %v2385 = vadd.f32 %v2382, 1.0
        %v2386 = vadd.f32 %v2383, 1.0
        %v2387 = vrcp.pop %v2384
        %v2388 = vmul.f32 1.0, %v2387
        %v2389 = vrcp.pop %v2385
        %v2390 = vmul.f32 1.0, %v2389
        %v2391 = vrcp.pop %v2386
        %v2392 = vmul.f32 1.0, %v2391
        %v2393 = vmul.f32 %v2388, 1.0614054
        %v2394 = vmul.f32 %v2390, 1.0614054
        %v2395 = vmul.f32 %v2392, 1.0614054
        %v2396 = vadd.f32 %v2393, -1.4531521
        %v2397 = vadd.f32 %v2394, -1.4531521
        %v2398 = vadd.f32 %v2395, -1.4531521
        %v2399 = vmul.f32 %v2396, %v2388
        %v2400 = vmul.f32 %v2397, %v2390
        %v2401 = vmul.f32 %v2398, %v2392
        %v2402 = vadd.f32 %v2399, 1.4214138
        %v2403 = vadd.f32 %v2400, 1.4214138
        %v2404 = vadd.f32 %v2401, 1.4214138
        %v2405 = vmul.f32 %v2402, %v2388
        %v2406 = vmul.f32 %v2403, %v2390
        %v2407 = vmul.f32 %v2404, %v2392
        %v2408 = vadd.f32 %v2405, -0.28449672
        %v2409 = vadd.f32 %v2406, -0.28449672
        %v2410 = vadd.f32 %v2407, -0.28449672
        %v2411 = vmul.f32 %v2408, %v2388
        %v2412 = vmul.f32 %v2409, %v2390
        %v2413 = vmul.f32 %v2410, %v2392
        %v2414 = vadd.f32 %v2411, 0.2548296
        %v2415 = vadd.f32 %v2412, 0.2548296
        %v2416 = vadd.f32 %v2413, 0.2548296
        %v2417 = vmul.f32 %v2414, %v2388
        %v2418 = vmul.f32 %v2415, %v2390
        %v2419 = vmul.f32 %v2416, %v2392
        %v2420 = vsub.f32 0.0, %v2378
        %v2421 = vsub.f32 0.0, %v2379
        %v2422 = vsub.f32 0.0, %v2380
        %v2423 = vmul.f32 %v2420, %v2378
        %v2424 = vmul.f32 %v2421, %v2379
        %v2425 = vmul.f32 %v2422, %v2380
        %v2426 = vmul.f32 %v2423, 1.442695
        %v2427 = vpow.pop %v2426
        %v2428 = vmul.f32 %v2424, 1.442695
        %v2429 = vpow.pop %v2428
        %v2430 = vmul.f32 %v2425, 1.442695
        %v2431 = vpow.pop %v2430
        %v2432 = vmul.f32 %v2417, %v2427
        %v2433 = vmul.f32 %v2418, %v2429
        %v2434 = vmul.f32 %v2419, %v2431
        %v2435 = vsub.f32 1.0, %v2432
        %v2436 = vsub.f32 1.0, %v2433
        %v2437 = vsub.f32 1.0, %v2434
        %v2438 = vmul.f32 %v2375, %v2435
        %v2439 = vmul.f32 %v2376, %v2436
        %v2440 = vmul.f32 %v2377, %v2437
        %v2441 = vadd.f32 %v2438, 1.0
        %v2442 = vadd.f32 %v2439, 1.0
        %v2443 = vadd.f32 %v2440, 1.0
        %v2444 = vmul.f32 %v2365, %v2441
        %v2445 = vmul.f32 %v2366, %v2442
        %v2446 = vmul.f32 %v2367, %v2443
        %v2447 = vpack.c.bf16 %v2445, %v2444
        %v2448 = vpack.c.bf16 %v2446, %v2446
        %v2465 = vunpack.c.l.b16 %v473
        %v2466 = vunpack.c.l.b16 %v474
        %v2467 = vunpack.c.l.b16 %v475
        %v2468 = vunpack.c.l.b16 %v476
        %v2469 = vunpack.c.l.b16 %v477
        %v2470 = vunpack.c.l.b16 %v478
        %v2471 = vunpack.c.l.b16 %v479
        %v2472 = vunpack.c.l.b16 %v480
        %v2473 = vunpack.c.l.b16 %v481
        %v2474 = vunpack.c.l.b16 %v482
        %v2475 = vunpack.c.l.b16 %v483
        %v2476 = vunpack.c.l.b16 %v484
        %v2477 = vunpack.c.l.b16 %v485
        %v2478 = vunpack.c.l.b16 %v486
        %v2479 = vunpack.c.l.b16 %v487
        %v2480 = vunpack.c.l.b16 %v488
        %v2481 = vpack.c.b16 %v2466, %v2465
        %v2482 = vpack.c.b16 %v2468, %v2467
        %v2483 = vpack.c.b16 %v2470, %v2469
        %v2484 = vpack.c.b16 %v2472, %v2471
        %v2485 = vpack.c.b16 %v2474, %v2473
        %v2486 = vpack.c.b16 %v2476, %v2475
        %v2487 = vpack.c.b16 %v2478, %v2477
        %v2488 = vpack.c.b16 %v2480, %v2479
        %2497 = vmatprep.subr.bf16.mxu0 0
        %2498 = vmatpush1.bf16.msra.mxu0 %v2488
        %2499 = vmatprep.subr.bf16.mxu0 0
        %2500 = vmatpush1.bf16.msra.mxu0 %v2487
        %2501 = vmatprep.subr.bf16.mxu0 0
        %2502 = vmatpush1.bf16.msra.mxu0 %v2486
        %2503 = vmatprep.subr.bf16.mxu0 0
        %2504 = vmatpush1.bf16.msra.mxu0 %v2485
        %2505 = vmatprep.subr.bf16.mxu0 0
        %2506 = vmatpush1.bf16.msra.mxu0 %v2484
        %2507 = vmatprep.subr.bf16.mxu0 0
        %2508 = vmatpush1.bf16.msra.mxu0 %v2483
        %2509 = vmatprep.subr.bf16.mxu0 0
        %2510 = vmatpush1.bf16.msra.mxu0 %v2482
        %2511 = vmatprep.subr.bf16.mxu0 0
        %2512 = vmatpush1.bf16.msra.mxu0 %v2481
        %2513 = vmatprep.subr.bf16.mxu0 0
        %2514 = vmatpush2.bf16.msra.mxu0 0
        %2515 = vmatprep.subr.bf16.mxu0 0
        %2516 = vmatpush2.bf16.msra.mxu0 0
        %2517 = vmatprep.subr.bf16.mxu0 0
        %2518 = vmatpush2.bf16.msra.mxu0 0
        %2519 = vmatprep.subr.bf16.mxu0 0
        %2520 = vmatpush2.bf16.msra.mxu0 0
        %2521 = vmatprep.subr.bf16.mxu0 0
        %2522 = vmatpush2.bf16.msra.mxu0 0
        %2523 = vmatprep.subr.bf16.mxu0 0
        %2524 = vmatpush2.bf16.msra.mxu0 0
        %2525 = vmatprep.subr.bf16.mxu0 0
        %2526 = vmatpush2.bf16.msra.mxu0 0
        %2527 = vmatprep.subr.bf16.mxu0 0
        %2528 = vmatpush2.bf16.msra.mxu0 0
        %2529 = vmatprep.mubr.bf16.mxu0 0
        %2530 = vmatmul.mubr.bf16.gmra.mxu0 %v2447
        %v2531 = vpop.f32.mrf.mxu0
        %v2532 = vadd.f32 0.0, %v2531
        %v2533 = vpop.f32.mrf.mxu0
        %v2534 = vpop.f32.mrf.mxu0
        %v2535 = vadd.f32 0.0, %v2534
        %v2536 = vpop.f32.mrf.mxu0
        %2537 = vmatprep.mubr.bf16.mxu0 0
        %2538 = vmatmul.mubr.bf16.gmra.mxu0 %v2448
        %v2539 = vpop.f32.mrf.mxu0
        %v2540 = vadd.f32 0.0, %v2539
        %v2541 = vpop.f32.mrf.mxu0
        %v2542 = vpop.f32.mrf.mxu0
        %v2543 = vpop.f32.mrf.mxu0
        %2544 = vdwg.mxu0
        %v2545 = vadd.f32 %v2243, %v2532
        %v2546 = vadd.f32 %v2244, %v2535
        %v2547 = vadd.f32 %v2245, %v2540
        %v2548 = vlaneseq
        %v2549 = vshrl.u32 %v2548, 7
        %v2550 = vsub.s32 3, %v2549
        %v2551 = vrot.slane %v489, %v2550
        %v2552 = vadd.f32 %v2545, %v2551
        %v2553 = vadd.f32 %v2546, %v2551
        %v2554 = vadd.f32 %v2547, %v2551
        %v2558 = vcombine.high %v2552, %v2552
        %v2560 = vunpack.c.l.s4 1966171168
        %v2561 = vunpack.c.0.s8 %v2560
        %v2562 = vlaneseq
        %v2563 = vshrl.u32 %v2562, 7
        %v2564 = vsub.s32 %v2561, %v2563
        %v2565 = vrot.slane %v2552, %v2564
        %v2567 = vunpack.c.l.s4 1966171168
        %v2568 = vunpack.c.0.s8 %v2567
        %v2569 = vlaneseq
        %v2570 = vshrl.u32 %v2569, 7
        %v2571 = vsub.s32 %v2568, %v2570
        %v2572 = vrot.slane %v2558, %v2571
        %v2573 = vcombine.high %v2565, %v2565
        %v2574 = vcombine.high %v2572, %v2572
        %v2576 = vunpack.c.l.s4 1966171168
        %v2577 = vunpack.c.0.s8 %v2576
        %v2578 = vlaneseq
        %v2579 = vshrl.u32 %v2578, 7
        %v2580 = vsub.s32 %v2577, %v2579
        %v2581 = vrot.slane %v2565, %v2580
        %v2583 = vunpack.c.l.s4 1966171168
        %v2584 = vunpack.c.0.s8 %v2583
        %v2585 = vlaneseq
        %v2586 = vshrl.u32 %v2585, 7
        %v2587 = vsub.s32 %v2584, %v2586
        %v2588 = vrot.slane %v2572, %v2587
        %v2590 = vunpack.c.l.s4 1966171168
        %v2591 = vunpack.c.0.s8 %v2590
        %v2592 = vlaneseq
        %v2593 = vshrl.u32 %v2592, 7
        %v2594 = vsub.s32 %v2591, %v2593
        %v2595 = vrot.slane %v2573, %v2594
        %v2597 = vunpack.c.l.s4 1966171168
        %v2598 = vunpack.c.0.s8 %v2597
        %v2599 = vlaneseq
        %v2600 = vshrl.u32 %v2599, 7
        %v2601 = vsub.s32 %v2598, %v2600
        %v2602 = vrot.slane %v2574, %v2601
        %v2603 = vcombine.high %v2581, %v2581
        %v2604 = vcombine.high %v2588, %v2588
        %v2605 = vcombine.high %v2595, %v2595
        %v2606 = vcombine.high %v2602, %v2602
        %v2607 = vcombine.high %v2553, %v2553
        %v2609 = vunpack.c.l.s4 1966171168
        %v2610 = vunpack.c.0.s8 %v2609
        %v2611 = vlaneseq
        %v2612 = vshrl.u32 %v2611, 7
        %v2613 = vsub.s32 %v2610, %v2612
        %v2614 = vrot.slane %v2553, %v2613
        %v2616 = vunpack.c.l.s4 1966171168
        %v2617 = vunpack.c.0.s8 %v2616
        %v2618 = vlaneseq
        %v2619 = vshrl.u32 %v2618, 7
        %v2620 = vsub.s32 %v2617, %v2619
        %v2621 = vrot.slane %v2607, %v2620
        %v2622 = vcombine.high %v2614, %v2614
        %v2623 = vcombine.high %v2621, %v2621
        %v2625 = vunpack.c.l.s4 1966171168
        %v2626 = vunpack.c.0.s8 %v2625
        %v2627 = vlaneseq
        %v2628 = vshrl.u32 %v2627, 7
        %v2629 = vsub.s32 %v2626, %v2628
        %v2630 = vrot.slane %v2614, %v2629
        %v2632 = vunpack.c.l.s4 1966171168
        %v2633 = vunpack.c.0.s8 %v2632
        %v2634 = vlaneseq
        %v2635 = vshrl.u32 %v2634, 7
        %v2636 = vsub.s32 %v2633, %v2635
        %v2637 = vrot.slane %v2621, %v2636
        %v2639 = vunpack.c.l.s4 1966171168
        %v2640 = vunpack.c.0.s8 %v2639
        %v2641 = vlaneseq
        %v2642 = vshrl.u32 %v2641, 7
        %v2643 = vsub.s32 %v2640, %v2642
        %v2644 = vrot.slane %v2622, %v2643
        %v2646 = vunpack.c.l.s4 1966171168
        %v2647 = vunpack.c.0.s8 %v2646
        %v2648 = vlaneseq
        %v2649 = vshrl.u32 %v2648, 7
        %v2650 = vsub.s32 %v2647, %v2649
        %v2651 = vrot.slane %v2623, %v2650
        %v2652 = vcombine.high %v2630, %v2630
        %v2653 = vcombine.high %v2637, %v2637
        %v2654 = vcombine.high %v2644, %v2644
        %v2655 = vcombine.high %v2651, %v2651
        %v2657 = vunpack.c.l.s4 1966171168
        %v2658 = vunpack.c.0.s8 %v2657
        %v2659 = vlaneseq
        %v2660 = vshrl.u32 %v2659, 7
        %v2661 = vsub.s32 %v2658, %v2660
        %v2662 = vrot.slane %v2554, %v2661
        %v2663 = vcombine.high %v2662, %v2662
        %v2665 = vunpack.c.l.s4 1966171168
        %v2666 = vunpack.c.0.s8 %v2665
        %v2667 = vlaneseq
        %v2668 = vshrl.u32 %v2667, 7
        %v2669 = vsub.s32 %v2666, %v2668
        %v2670 = vrot.slane %v2662, %v2669
        %v2672 = vunpack.c.l.s4 1966171168
        %v2673 = vunpack.c.0.s8 %v2672
        %v2674 = vlaneseq
        %v2675 = vshrl.u32 %v2674, 7
        %v2676 = vsub.s32 %v2673, %v2675
        %v2677 = vrot.slane %v2663, %v2676
        %v2678 = vcombine.low %v2581, %v2595
        %v2679 = vcombine.low %v2603, %v2605
        %v2680 = vcombine.low %v2588, %v2602
        %v2681 = vcombine.low %v2604, %v2606
        %v2683 = vunpack.c.l.s4 1966171168
        %v2684 = vunpack.c.0.s8 %v2683
        %v2685 = vlaneseq
        %v2686 = vshrl.u32 %v2685, 7
        %v2687 = vsub.s32 %v2684, %v2686
        %v2688 = vrot.slane %v2678, %v2687
        %v2690 = vunpack.c.l.s4 1966171168
        %v2691 = vunpack.c.0.s8 %v2690
        %v2692 = vlaneseq
        %v2693 = vshrl.u32 %v2692, 7
        %v2694 = vsub.s32 %v2691, %v2693
        %v2695 = vrot.slane %v2679, %v2694
        %v2697 = vunpack.c.l.s4 1966171168
        %v2698 = vunpack.c.0.s8 %v2697
        %v2699 = vlaneseq
        %v2700 = vshrl.u32 %v2699, 7
        %v2701 = vsub.s32 %v2698, %v2700
        %v2702 = vrot.slane %v2680, %v2701
        %v2704 = vunpack.c.l.s4 1966171168
        %v2705 = vunpack.c.0.s8 %v2704
        %v2706 = vlaneseq
        %v2707 = vshrl.u32 %v2706, 7
        %v2708 = vsub.s32 %v2705, %v2707
        %v2709 = vrot.slane %v2681, %v2708
        %v2710 = vcombine.low %v2688, %v2695
        %v2711 = vcombine.low %v2702, %v2709
        %v2713 = vunpack.c.l.s4 1966171168
        %v2714 = vunpack.c.0.s8 %v2713
        %v2715 = vlaneseq
        %v2716 = vshrl.u32 %v2715, 7
        %v2717 = vsub.s32 %v2714, %v2716
        %v2718 = vrot.slane %v2710, %v2717
        %v2720 = vunpack.c.l.s4 1966171168
        %v2721 = vunpack.c.0.s8 %v2720
        %v2722 = vlaneseq
        %v2723 = vshrl.u32 %v2722, 7
        %v2724 = vsub.s32 %v2721, %v2723
        %v2725 = vrot.slane %v2711, %v2724
        %v2726 = vcombine.low %v2718, %v2725
        %v2728 = vunpack.c.l.s4 1966171168
        %v2729 = vunpack.c.0.s8 %v2728
        %v2730 = vlaneseq
        %v2731 = vshrl.u32 %v2730, 7
        %v2732 = vsub.s32 %v2729, %v2731
        %v2733 = vrot.slane %v2630, %v2732
        %v2735 = vunpack.c.l.s4 1966171168
        %v2736 = vunpack.c.0.s8 %v2735
        %v2737 = vlaneseq
        %v2738 = vshrl.u32 %v2737, 7
        %v2739 = vsub.s32 %v2736, %v2738
        %v2740 = vrot.slane %v2733, %v2739
        %v2741 = vcombine.low %v2644, %v2652
        %v2742 = vcombine.low %v2654, %v2637
        %v2743 = vcombine.low %v2651, %v2653
        %v2744 = vcombine.low %v2655, %v2670
        %v2746 = vunpack.c.l.s4 1966171168
        %v2747 = vunpack.c.0.s8 %v2746
        %v2748 = vlaneseq
        %v2749 = vshrl.u32 %v2748, 7
        %v2750 = vsub.s32 %v2747, %v2749
        %v2751 = vrot.slane %v2741, %v2750
        %v2753 = vunpack.c.l.s4 1966171168
        %v2754 = vunpack.c.0.s8 %v2753
        %v2755 = vlaneseq
        %v2756 = vshrl.u32 %v2755, 7
        %v2757 = vsub.s32 %v2754, %v2756
        %v2758 = vrot.slane %v2742, %v2757
        %v2760 = vunpack.c.l.s4 1966171168
        %v2761 = vunpack.c.0.s8 %v2760
        %v2762 = vlaneseq
        %v2763 = vshrl.u32 %v2762, 7
        %v2764 = vsub.s32 %v2761, %v2763
        %v2765 = vrot.slane %v2743, %v2764
        %v2767 = vunpack.c.l.s4 1966171168
        %v2768 = vunpack.c.0.s8 %v2767
        %v2769 = vlaneseq
        %v2770 = vshrl.u32 %v2769, 7
        %v2771 = vsub.s32 %v2768, %v2770
        %v2772 = vrot.slane %v2744, %v2771
        %v2773 = vcombine.low %v2751, %v2758
        %v2774 = vcombine.low %v2765, %v2772
        %v2776 = vunpack.c.l.s4 1966171168
        %v2777 = vunpack.c.0.s8 %v2776
        %v2778 = vlaneseq
        %v2779 = vshrl.u32 %v2778, 7
        %v2780 = vsub.s32 %v2777, %v2779
        %v2781 = vrot.slane %v2773, %v2780
        %v2783 = vunpack.c.l.s4 1966171168
        %v2784 = vunpack.c.0.s8 %v2783
        %v2785 = vlaneseq
        %v2786 = vshrl.u32 %v2785, 7
        %v2787 = vsub.s32 %v2784, %v2786
        %v2788 = vrot.slane %v2774, %v2787
        %v2789 = vcombine.low %v2781, %v2788
        %v2791 = vunpack.c.l.s4 1966171168
        %v2792 = vunpack.c.0.s8 %v2791
        %v2793 = vlaneseq
        %v2794 = vshrl.u32 %v2793, 7
        %v2795 = vsub.s32 %v2792, %v2794
        %v2796 = vrot.slane %v2677, %v2795
        %v2798 = vunpack.c.l.s4 1966171168
        %v2799 = vunpack.c.0.s8 %v2798
        %v2800 = vlaneseq
        %v2801 = vshrl.u32 %v2800, 7
        %v2802 = vsub.s32 %v2799, %v2801
        %v2803 = vrot.slane %v2796, %v2802
        %v2808 = vsel %vm490, %v2726, 0.0
        %vm2809 = vcmask 253952
        %v2810 = vsel %vm2809, %v2740, 0.0
        %v2811 = vadd.f32 %v2808, %v2810
        %v2812 = vrot.slane %v2811, 4
        %v2813 = vadd.f32 %v2811, %v2812
        %v2814 = vrot.slane %v2813, 2
        %v2815 = vadd.f32 %v2813, %v2814
        %v2816 = vrot.slane %v2815, 1
        %v2817 = vadd.f32 %v2815, %v2816
        %v2818 = vsel %vm490, %v2789, 0.0
        %v2819 = vsel %vm2809, %v2803, 0.0
        %v2820 = vadd.f32 %v2818, %v2819
        %v2821 = vrot.slane %v2820, 4
        %v2822 = vadd.f32 %v2820, %v2821
        %v2823 = vrot.slane %v2822, 2
        %v2824 = vadd.f32 %v2822, %v2823
        %v2825 = vrot.slane %v2824, 1
        %v2826 = vadd.f32 %v2824, %v2825
        %v2827 = vrcp.pop 9.0
        %v2828 = vmul.f32 %v2817, %v2827
        %v2829 = vmul.f32 %v2826, %v2827
        %v2830 = vld [vmem:[%s9] sm:$0x3]
        %vm2833 = vcmask 1041409
        %v2834 = vsel %vm2833, %v2829, %v2828
        %v2836 = vsel %vm497, %v2834, 0.0
        %2837 = vadd.xlane.f32.xlu0 %v2836
        %v2838 = vpop.xlane.xlu0 %2837
        %v2839 = vmul.f32 %v2838, %v501
        %v2841 = vrot.slane %v2839, 1
        %v2844 = vsub.f32 %v2828, %v2839
        %v2845 = vsub.f32 %v2829, %v2841
        %v2846 = vmul.f32 %v2844, %v2844
        %v2847 = vmul.f32 %v2845, %v2845
        %v2850 = vrot.slane %v2847, 7
        %v2851 = vsel %vm2833, %v2850, %v2846
        %v2853 = vsel %vm497, %v2851, 0.0
        %2854 = vadd.xlane.f32.xlu0 %v2853
        %v2855 = vpop.xlane.xlu0 %2854
        %v2856 = vmul.f32 %v2855, %v501
        %v2857 = vadd.f32 %v2856, 1e-05
        %v2858 = vrsqrt.pop %v2857
        %v2860 = vrot.slane %v2858, 1
        %v2863 = vmul.f32 %v2844, %v2858
        %v2864 = vmul.f32 %v2845, %v2860
        %v2865 = vlaneseq
        %v2866 = vshrl.u32 %v2865, 7
        %v2867 = vsub.s32 0, %v2866
        %v2868 = vrot.slane %v2830, %v2867
        %v2869 = vmul.f32 %v2863, %v2868
        %v2870 = vmul.f32 %v2864, %v2868
        %v2871 = vlaneseq
        %v2872 = vshrl.u32 %v2871, 7
        %v2873 = vsub.s32 1, %v2872
        %v2874 = vrot.slane %v2830, %v2873
        %v2875 = vadd.f32 %v2869, %v2874
        %v2876 = vadd.f32 %v2870, %v2874
        %v2877 = vld [vmem:[%s10] sm:$0xff]
        %v2878 = vld [vmem:[%s10 + $0x8] sm:$0xff]
        %v2879 = vld [vmem:[%s10 + $0x10] sm:$0xff]
        %v2880 = vld [vmem:[%s10 + $0x18] sm:$0xff]
        %v2881 = vld [vmem:[%s11] sm:$0x1]
        %v2883 = vlaneseq
        %v2884 = vshrl.u32 %v2883, 7
        %v2885 = vsub.s32 0, %v2884
        %v2886 = vrot.slane %v2881, %v2885
        %v2890 = vrot.slane %v2876, 7
        %v2891 = vsel %vm2833, %v2890, %v2875
        %v2892 = vsel %vm490, %v2891, 0
        %2894 = vmatprep.subr.mxu0 0.0
        %2895 = vmatpush1.msra.mxu0 0.0
        %2896 = vmatprep.subr.mxu0 0.0
        %2897 = vmatpush1.msra.mxu0 0.0
        %2898 = vmatprep.subr.mxu0 0.0
        %2899 = vmatpush1.msra.mxu0 0.0
        %2900 = vmatprep.subr.mxu0 0.0
        %2901 = vmatpush1.msra.mxu0 0.0
        %2902 = vmatprep.subr.mxu0 0.0
        %2903 = vmatpush1.msra.mxu0 0.0
        %2904 = vmatprep.subr.mxu0 0.0
        %2905 = vmatpush1.msra.mxu0 0.0
        %2906 = vmatprep.subr.mxu0 0.0
        %2907 = vmatpush1.msra.mxu0 0.0
        %2908 = vmatprep.subr.mxu0 0.0
        %2909 = vmatpush1.msra.mxu0 0.0
        %2910 = vmatprep.subr.mxu0 0.0
        %2911 = vmatpush1.msra.mxu0 0.0
        %2912 = vmatprep.subr.mxu0 0.0
        %2913 = vmatpush1.msra.mxu0 0.0
        %2914 = vmatprep.subr.mxu0 0.0
        %2915 = vmatpush1.msra.mxu0 0.0
        %2916 = vmatprep.subr.mxu0 0.0
        %2917 = vmatpush1.msra.mxu0 0.0
        %2918 = vmatprep.subr.mxu0 0.0
        %2919 = vmatpush1.msra.mxu0 %v2880
        %2920 = vmatprep.subr.mxu0 0.0
        %2921 = vmatpush1.msra.mxu0 %v2879
        %2922 = vmatprep.subr.mxu0 0.0
        %2923 = vmatpush1.msra.mxu0 %v2878
        %2924 = vmatprep.subr.mxu0 0.0
        %2925 = vmatpush1.msra.mxu0 %v2877
        %2926 = vmatprep.subr.mxu0 0.0
        %2927 = vmatpush2.msra.mxu0 0.0
        %2928 = vmatprep.subr.mxu0 0.0
        %2929 = vmatpush2.msra.mxu0 0.0
        %2930 = vmatprep.subr.mxu0 0.0
        %2931 = vmatpush2.msra.mxu0 0.0
        %2932 = vmatprep.subr.mxu0 0.0
        %2933 = vmatpush2.msra.mxu0 0.0
        %2934 = vmatprep.subr.mxu0 0.0
        %2935 = vmatpush2.msra.mxu0 0.0
        %2936 = vmatprep.subr.mxu0 0.0
        %2937 = vmatpush2.msra.mxu0 0.0
        %2938 = vmatprep.subr.mxu0 0.0
        %2939 = vmatpush2.msra.mxu0 0.0
        %2940 = vmatprep.subr.mxu0 0.0
        %2941 = vmatpush2.msra.mxu0 0.0
        %2942 = vmatprep.subr.mxu0 0.0
        %2943 = vmatpush2.msra.mxu0 0.0
        %2944 = vmatprep.subr.mxu0 0.0
        %2945 = vmatpush2.msra.mxu0 0.0
        %2946 = vmatprep.subr.mxu0 0.0
        %2947 = vmatpush2.msra.mxu0 0.0
        %2948 = vmatprep.subr.mxu0 0.0
        %2949 = vmatpush2.msra.mxu0 0.0
        %2950 = vmatprep.subr.mxu0 0.0
        %2951 = vmatpush2.msra.mxu0 0.0
        %2952 = vmatprep.subr.mxu0 0.0
        %2953 = vmatpush2.msra.mxu0 0.0
        %2954 = vmatprep.subr.mxu0 0.0
        %2955 = vmatpush2.msra.mxu0 0.0
        %2956 = vmatprep.subr.mxu0 0.0
        %2957 = vmatpush2.msra.mxu0 0.0
        %2958 = vmatprep.mubr.f32.mxu0 0.0
        %2959 = vmatmul.mubr.f32.gmra.mxu0 %v2892
        %v2960 = vpop.f32.mrf.mxu0
        %v2961 = vadd.f32 %v2886, %v2960
        %v2962 = vpop.f32.mrf.mxu0
        %2963 = vdwg.mxu0
        %vm2964 = vcmask 1024
        %2965 = vst.msk [vmem:[%s391] sm:$0x3] %vm2964, %v2961
      $region72: #{tpu_custom_call.1} parent=67 // pred_fallthru
        _
      %p2966 = scmp.eq.s32.totalorder %s23, 1
      // Predicated region
      $region73: #{tpu_custom_call.1} parent=67 // pred_check
        %p2967 = pneg %p2966
      $region74: #{tpu_custom_call.1} parent=67 // pred_check_branch
        %2969 = sbr.rel (%p2967) target = $region76
      $region75: #{tpu_custom_call.1} parent=67 // pred_region
        %v2970 = vld [vmem:[%s6] sm:$0xff]
        %v2971 = vld [vmem:[%s6 + $0x8] sm:$0xf]
        %v2972 = vld [vmem:[%s6 + $0xc] sm:$0xff]
        %v2973 = vld [vmem:[%s6 + $0x14] sm:$0xf]
        %v2974 = vld [vmem:[%s6 + $0x18] sm:$0xff]
        %v2975 = vld [vmem:[%s6 + $0x20] sm:$0xf]
        %v2976 = vld [vmem:[%s6 + $0x24] sm:$0xff]
        %v2977 = vld [vmem:[%s6 + $0x2c] sm:$0xf]
        %v2978 = vld [vmem:[%s7] sm:$0xf]
        %v2979 = vld [vmem:[%s7 + $0x4] sm:$0xf]
        %v2980 = vld [vmem:[%s7 + $0x8] sm:$0xf]
        %v2981 = vld [vmem:[%s7 + $0xc] sm:$0xf]
        %v2982 = vld [vmem:[%s7 + $0x10] sm:$0xf]
        %v2983 = vld [vmem:[%s7 + $0x14] sm:$0xf]
        %v2984 = vld [vmem:[%s7 + $0x18] sm:$0xf]
        %v2985 = vld [vmem:[%s7 + $0x1c] sm:$0xf]
        %v2986 = vld [vmem:[%s7 + $0x20] sm:$0xf]
        %v2987 = vld [vmem:[%s7 + $0x24] sm:$0xf]
        %v2988 = vld [vmem:[%s7 + $0x28] sm:$0xf]
        %v2989 = vld [vmem:[%s7 + $0x2c] sm:$0xf]
        %v2990 = vld [vmem:[%s7 + $0x30] sm:$0xf]
        %v2991 = vld [vmem:[%s7 + $0x34] sm:$0xf]
        %v2992 = vld [vmem:[%s7 + $0x38] sm:$0xf]
        %v2993 = vld [vmem:[%s7 + $0x3c] sm:$0xf]
        %v2994 = vld [vmem:[%s8] sm:$0xf]
        %vm2995 = vcmask 261120
        %v2996 = vsel %vm2995, %v448, 0.0
        %2997 = vadd.xlane.f32.xlu0 %v2996
        %v2998 = vpop.xlane.xlu0 %2997
        %v2999 = vsel %vm2995, %v451, 0.0
        %3000 = vadd.xlane.f32.xlu0 %v2999
        %v3001 = vpop.xlane.xlu0 %3000
        %vm3002 = vcmask 254976
        %v3003 = vsel %vm3002, %v456, 0.0
        %3004 = vadd.xlane.f32.xlu0 %v3003
        %v3005 = vpop.xlane.xlu0 %3004
        %v3006 = vrcp.pop 32.0
        %v3007 = vmul.f32 %v2998, %v3006
        %v3008 = vmul.f32 %v3001, %v3006
        %v3009 = vmul.f32 %v3005, %v3006
        %v3010 = vsub.f32 %v448, %v3007
        %v3011 = vsub.f32 %v451, %v3008
        %v3012 = vsub.f32 %v456, %v3009
        %v3013 = vmul.f32 %v3010, %v3010
        %v3014 = vmul.f32 %v3011, %v3011
        %v3015 = vmul.f32 %v3012, %v3012
        %v3016 = vsel %vm2995, %v3013, 0.0
        %3017 = vadd.xlane.f32.xlu0 %v3016
        %v3018 = vpop.xlane.xlu0 %3017
        %v3019 = vsel %vm2995, %v3014, 0.0
        %3020 = vadd.xlane.f32.xlu0 %v3019
        %v3021 = vpop.xlane.xlu0 %3020
        %v3022 = vsel %vm3002, %v3015, 0.0
        %3023 = vadd.xlane.f32.xlu0 %v3022
        %v3024 = vpop.xlane.xlu0 %3023
        %v3025 = vmul.f32 %v3018, %v3006
        %v3026 = vmul.f32 %v3021, %v3006
        %v3027 = vmul.f32 %v3024, %v3006
        %v3028 = vadd.f32 %v3025, 1e-05
        %v3029 = vadd.f32 %v3026, 1e-05
        %v3030 = vadd.f32 %v3027, 1e-05
        %v3031 = vrsqrt.pop %v3028
        %v3032 = vrsqrt.pop %v3029
        %v3033 = vrsqrt.pop %v3030
        %v3034 = vmul.f32 %v3010, %v3031
        %v3035 = vmul.f32 %v3011, %v3032
        %v3036 = vmul.f32 %v3012, %v3033
        %v3037 = vlaneseq
        %v3038 = vshrl.u32 %v3037, 7
        %v3039 = vsub.s32 0, %v3038
        %v3040 = vrot.slane %v2994, %v3039
        %v3041 = vmul.f32 %v3034, %v3040
        %v3042 = vmul.f32 %v3035, %v3040
        %v3043 = vmul.f32 %v3036, %v3040
        %3045 = vrot.lane.b32.xlu0 %v3040, 96
        %v3046 = vpop.permute.xlu0 %3045
        %v3048 = vadd.f32 %v3041, %v3046
        %v3049 = vadd.f32 %v3042, %v3046
        %v3050 = vadd.f32 %v3043, %v3046
        %v3051 = vpack.c.bf16 %v3049, %v3048
        %v3052 = vpack.c.bf16 %v3050, %v3050
        %v3053 = vlaneseq
        %v3054 = vshrl.u32 %v3053, 7
        %v3055 = vsub.s32 1, %v3054
        %v3056 = vrot.slane %v2994, %v3055
        %v3061 = vunpack.c.l.b16 %v2970
        %v3062 = vunpack.c.l.b16 %v2972
        %v3063 = vunpack.c.l.b16 %v2974
        %v3064 = vunpack.c.l.b16 %v2976
        %v3065 = vpack.c.b16 %v3062, %v3061
        %v3066 = vpack.c.b16 %v3064, %v3063
        %v3070 = vsel %vm2995, %v3051, 0
        %v3073 = vsel %vm2995, %v3052, 0
        %3075 = vmatprep.subr.bf16.mxu0 0
        %3076 = vmatpush1.bf16.msra.mxu0 0
        %3077 = vmatprep.subr.bf16.mxu0 0
        %3078 = vmatpush1.bf16.msra.mxu0 0
        %3079 = vmatprep.subr.bf16.mxu0 0
        %3080 = vmatpush1.bf16.msra.mxu0 0
        %3081 = vmatprep.subr.bf16.mxu0 0
        %3082 = vmatpush1.bf16.msra.mxu0 0
        %3083 = vmatprep.subr.bf16.mxu0 0
        %3084 = vmatpush1.bf16.msra.mxu0 0
        %3085 = vmatprep.subr.bf16.mxu0 0
        %3086 = vmatpush1.bf16.msra.mxu0 0
        %3087 = vmatprep.subr.bf16.mxu0 0
        %3088 = vmatpush1.bf16.msra.mxu0 %v3066
        %3089 = vmatprep.subr.bf16.mxu0 0
        %3090 = vmatpush1.bf16.msra.mxu0 %v3065
        %3091 = vmatprep.subr.bf16.mxu0 0
        %3092 = vmatpush2.bf16.msra.mxu0 0
        %3093 = vmatprep.subr.bf16.mxu0 0
        %3094 = vmatpush2.bf16.msra.mxu0 0
        %3095 = vmatprep.subr.bf16.mxu0 0
        %3096 = vmatpush2.bf16.msra.mxu0 0
        %3097 = vmatprep.subr.bf16.mxu0 0
        %3098 = vmatpush2.bf16.msra.mxu0 0
        %3099 = vmatprep.subr.bf16.mxu0 0
        %3100 = vmatpush2.bf16.msra.mxu0 0
        %3101 = vmatprep.subr.bf16.mxu0 0
        %3102 = vmatpush2.bf16.msra.mxu0 0
        %3103 = vmatprep.subr.bf16.mxu0 0
        %3104 = vmatpush2.bf16.msra.mxu0 0
        %3105 = vmatprep.subr.bf16.mxu0 0
        %3106 = vmatpush2.bf16.msra.mxu0 0
        %3107 = vmatprep.mubr.bf16.mxu0 0
        %3108 = vmatmul.mubr.bf16.gmra.mxu0 %v3070
        %v3109 = vpop.f32.mrf.mxu0
        %v3110 = vadd.f32 %v3056, %v3109
        %v3111 = vpop.f32.mrf.mxu0
        %v3112 = vpop.f32.mrf.mxu0
        %v3113 = vadd.f32 %v3056, %v3112
        %v3114 = vpop.f32.mrf.mxu0
        %3115 = vmatprep.mubr.bf16.mxu0 0
        %3116 = vmatmul.mubr.bf16.gmra.mxu0 %v3073
        %v3117 = vpop.f32.mrf.mxu0
        %v3118 = vadd.f32 %v3056, %v3117
        %v3119 = vpop.f32.mrf.mxu0
        %v3120 = vpop.f32.mrf.mxu0
        %v3121 = vpop.f32.mrf.mxu0
        %3122 = vdwg.mxu0
        %v3126 = vcombine.high %v3110, %v3110
        %v3128 = vunpack.c.l.s4 1966171168
        %v3129 = vunpack.c.0.s8 %v3128
        %v3130 = vlaneseq
        %v3131 = vshrl.u32 %v3130, 7
        %v3132 = vsub.s32 %v3129, %v3131
        %v3133 = vrot.slane %v3110, %v3132
        %v3135 = vunpack.c.l.s4 1966171168
        %v3136 = vunpack.c.0.s8 %v3135
        %v3137 = vlaneseq
        %v3138 = vshrl.u32 %v3137, 7
        %v3139 = vsub.s32 %v3136, %v3138
        %v3140 = vrot.slane %v3126, %v3139
        %v3141 = vcombine.high %v3133, %v3133
        %v3142 = vcombine.high %v3140, %v3140
        %v3144 = vunpack.c.l.s4 1966171168
        %v3145 = vunpack.c.0.s8 %v3144
        %v3146 = vlaneseq
        %v3147 = vshrl.u32 %v3146, 7
        %v3148 = vsub.s32 %v3145, %v3147
        %v3149 = vrot.slane %v3133, %v3148
        %v3151 = vunpack.c.l.s4 1966171168
        %v3152 = vunpack.c.0.s8 %v3151
        %v3153 = vlaneseq
        %v3154 = vshrl.u32 %v3153, 7
        %v3155 = vsub.s32 %v3152, %v3154
        %v3156 = vrot.slane %v3140, %v3155
        %v3158 = vunpack.c.l.s4 1966171168
        %v3159 = vunpack.c.0.s8 %v3158
        %v3160 = vlaneseq
        %v3161 = vshrl.u32 %v3160, 7
        %v3162 = vsub.s32 %v3159, %v3161
        %v3163 = vrot.slane %v3141, %v3162
        %v3165 = vunpack.c.l.s4 1966171168
        %v3166 = vunpack.c.0.s8 %v3165
        %v3167 = vlaneseq
        %v3168 = vshrl.u32 %v3167, 7
        %v3169 = vsub.s32 %v3166, %v3168
        %v3170 = vrot.slane %v3142, %v3169
        %v3171 = vcombine.high %v3149, %v3149
        %v3172 = vcombine.high %v3156, %v3156
        %v3173 = vcombine.high %v3163, %v3163
        %v3174 = vcombine.high %v3170, %v3170
        %v3175 = vcombine.high %v3113, %v3113
        %v3177 = vunpack.c.l.s4 1966171168
        %v3178 = vunpack.c.0.s8 %v3177
        %v3179 = vlaneseq
        %v3180 = vshrl.u32 %v3179, 7
        %v3181 = vsub.s32 %v3178, %v3180
        %v3182 = vrot.slane %v3113, %v3181
        %v3184 = vunpack.c.l.s4 1966171168
        %v3185 = vunpack.c.0.s8 %v3184
        %v3186 = vlaneseq
        %v3187 = vshrl.u32 %v3186, 7
        %v3188 = vsub.s32 %v3185, %v3187
        %v3189 = vrot.slane %v3175, %v3188
        %v3190 = vcombine.high %v3182, %v3182
        %v3191 = vcombine.high %v3189, %v3189
        %v3193 = vunpack.c.l.s4 1966171168
        %v3194 = vunpack.c.0.s8 %v3193
        %v3195 = vlaneseq
        %v3196 = vshrl.u32 %v3195, 7
        %v3197 = vsub.s32 %v3194, %v3196
        %v3198 = vrot.slane %v3182, %v3197
        %v3200 = vunpack.c.l.s4 1966171168
        %v3201 = vunpack.c.0.s8 %v3200
        %v3202 = vlaneseq
        %v3203 = vshrl.u32 %v3202, 7
        %v3204 = vsub.s32 %v3201, %v3203
        %v3205 = vrot.slane %v3189, %v3204
        %v3207 = vunpack.c.l.s4 1966171168
        %v3208 = vunpack.c.0.s8 %v3207
        %v3209 = vlaneseq
        %v3210 = vshrl.u32 %v3209, 7
        %v3211 = vsub.s32 %v3208, %v3210
        %v3212 = vrot.slane %v3190, %v3211
        %v3214 = vunpack.c.l.s4 1966171168
        %v3215 = vunpack.c.0.s8 %v3214
        %v3216 = vlaneseq
        %v3217 = vshrl.u32 %v3216, 7
        %v3218 = vsub.s32 %v3215, %v3217
        %v3219 = vrot.slane %v3191, %v3218
        %v3220 = vcombine.high %v3198, %v3198
        %v3221 = vcombine.high %v3205, %v3205
        %v3222 = vcombine.high %v3212, %v3212
        %v3223 = vcombine.high %v3219, %v3219
        %v3225 = vunpack.c.l.s4 1966171168
        %v3226 = vunpack.c.0.s8 %v3225
        %v3227 = vlaneseq
        %v3228 = vshrl.u32 %v3227, 7
        %v3229 = vsub.s32 %v3226, %v3228
        %v3230 = vrot.slane %v3118, %v3229
        %v3231 = vcombine.high %v3230, %v3230
        %v3233 = vunpack.c.l.s4 1966171168
        %v3234 = vunpack.c.0.s8 %v3233
        %v3235 = vlaneseq
        %v3236 = vshrl.u32 %v3235, 7
        %v3237 = vsub.s32 %v3234, %v3236
        %v3238 = vrot.slane %v3230, %v3237
        %v3240 = vunpack.c.l.s4 1966171168
        %v3241 = vunpack.c.0.s8 %v3240
        %v3242 = vlaneseq
        %v3243 = vshrl.u32 %v3242, 7
        %v3244 = vsub.s32 %v3241, %v3243
        %v3245 = vrot.slane %v3231, %v3244
        %v3246 = vcombine.low %v3149, %v3163
        %v3247 = vcombine.low %v3171, %v3173
        %v3248 = vcombine.low %v3156, %v3170
        %v3249 = vcombine.low %v3172, %v3174
        %v3251 = vunpack.c.l.s4 1966171168
        %v3252 = vunpack.c.0.s8 %v3251
        %v3253 = vlaneseq
        %v3254 = vshrl.u32 %v3253, 7
        %v3255 = vsub.s32 %v3252, %v3254
        %v3256 = vrot.slane %v3246, %v3255
        %v3258 = vunpack.c.l.s4 1966171168
        %v3259 = vunpack.c.0.s8 %v3258
        %v3260 = vlaneseq
        %v3261 = vshrl.u32 %v3260, 7
        %v3262 = vsub.s32 %v3259, %v3261
        %v3263 = vrot.slane %v3247, %v3262
        %v3265 = vunpack.c.l.s4 1966171168
        %v3266 = vunpack.c.0.s8 %v3265
        %v3267 = vlaneseq
        %v3268 = vshrl.u32 %v3267, 7
        %v3269 = vsub.s32 %v3266, %v3268
        %v3270 = vrot.slane %v3248, %v3269
        %v3272 = vunpack.c.l.s4 1966171168
        %v3273 = vunpack.c.0.s8 %v3272
        %v3274 = vlaneseq
        %v3275 = vshrl.u32 %v3274, 7
        %v3276 = vsub.s32 %v3273, %v3275
        %v3277 = vrot.slane %v3249, %v3276
        %v3278 = vcombine.low %v3256, %v3263
        %v3279 = vcombine.low %v3270, %v3277
        %v3281 = vunpack.c.l.s4 1966171168
        %v3282 = vunpack.c.0.s8 %v3281
        %v3283 = vlaneseq
        %v3284 = vshrl.u32 %v3283, 7
        %v3285 = vsub.s32 %v3282, %v3284
        %v3286 = vrot.slane %v3278, %v3285
        %v3288 = vunpack.c.l.s4 1966171168
        %v3289 = vunpack.c.0.s8 %v3288
        %v3290 = vlaneseq
        %v3291 = vshrl.u32 %v3290, 7
        %v3292 = vsub.s32 %v3289, %v3291
        %v3293 = vrot.slane %v3279, %v3292
        %v3294 = vcombine.low %v3286, %v3293
        %v3296 = vunpack.c.l.s4 1966171168
        %v3297 = vunpack.c.0.s8 %v3296
        %v3298 = vlaneseq
        %v3299 = vshrl.u32 %v3298, 7
        %v3300 = vsub.s32 %v3297, %v3299
        %v3301 = vrot.slane %v3198, %v3300
        %v3303 = vunpack.c.l.s4 1966171168
        %v3304 = vunpack.c.0.s8 %v3303
        %v3305 = vlaneseq
        %v3306 = vshrl.u32 %v3305, 7
        %v3307 = vsub.s32 %v3304, %v3306
        %v3308 = vrot.slane %v3301, %v3307
        %v3309 = vcombine.low %v3212, %v3220
        %v3310 = vcombine.low %v3222, %v3205
        %v3311 = vcombine.low %v3219, %v3221
        %v3312 = vcombine.low %v3223, %v3238
        %v3314 = vunpack.c.l.s4 1966171168
        %v3315 = vunpack.c.0.s8 %v3314
        %v3316 = vlaneseq
        %v3317 = vshrl.u32 %v3316, 7
        %v3318 = vsub.s32 %v3315, %v3317
        %v3319 = vrot.slane %v3309, %v3318
        %v3321 = vunpack.c.l.s4 1966171168
        %v3322 = vunpack.c.0.s8 %v3321
        %v3323 = vlaneseq
        %v3324 = vshrl.u32 %v3323, 7
        %v3325 = vsub.s32 %v3322, %v3324
        %v3326 = vrot.slane %v3310, %v3325
        %v3328 = vunpack.c.l.s4 1966171168
        %v3329 = vunpack.c.0.s8 %v3328
        %v3330 = vlaneseq
        %v3331 = vshrl.u32 %v3330, 7
        %v3332 = vsub.s32 %v3329, %v3331
        %v3333 = vrot.slane %v3311, %v3332
        %v3335 = vunpack.c.l.s4 1966171168
        %v3336 = vunpack.c.0.s8 %v3335
        %v3337 = vlaneseq
        %v3338 = vshrl.u32 %v3337, 7
        %v3339 = vsub.s32 %v3336, %v3338
        %v3340 = vrot.slane %v3312, %v3339
        %v3341 = vcombine.low %v3319, %v3326
        %v3342 = vcombine.low %v3333, %v3340
        %v3344 = vunpack.c.l.s4 1966171168
        %v3345 = vunpack.c.0.s8 %v3344
        %v3346 = vlaneseq
        %v3347 = vshrl.u32 %v3346, 7
        %v3348 = vsub.s32 %v3345, %v3347
        %v3349 = vrot.slane %v3341, %v3348
        %v3351 = vunpack.c.l.s4 1966171168
        %v3352 = vunpack.c.0.s8 %v3351
        %v3353 = vlaneseq
        %v3354 = vshrl.u32 %v3353, 7
        %v3355 = vsub.s32 %v3352, %v3354
        %v3356 = vrot.slane %v3342, %v3355
        %v3357 = vcombine.low %v3349, %v3356
        %v3359 = vunpack.c.l.s4 1966171168
        %v3360 = vunpack.c.0.s8 %v3359
        %v3361 = vlaneseq
        %v3362 = vshrl.u32 %v3361, 7
        %v3363 = vsub.s32 %v3360, %v3362
        %v3364 = vrot.slane %v3245, %v3363
        %v3366 = vunpack.c.l.s4 1966171168
        %v3367 = vunpack.c.0.s8 %v3366
        %v3368 = vlaneseq
        %v3369 = vshrl.u32 %v3368, 7
        %v3370 = vsub.s32 %v3367, %v3369
        %v3371 = vrot.slane %v3364, %v3370
        %v3376 = vpack.c.bf16 %v3308, %v3294
        %v3377 = vpack.c.bf16 %v3371, %v3357
        %3379 = vrot.lane.b32.xlu0 %v3376, 96
        %v3380 = vpop.permute.xlu0 %3379
        %v3382 = vsel %vm402, %v3376, 0
        %v3385 = vsel %vm402, %v3380, 0
        %3387 = vmatprep.subr.bf16.mxu0 0
        %3388 = vmatpush1.bf16.xpose.msra.mxu0 0
        %3389 = vmatprep.subr.bf16.mxu0 0
        %3390 = vmatpush1.bf16.xpose.msra.mxu0 0
        %3391 = vmatprep.subr.bf16.mxu0 0
        %3392 = vmatpush1.bf16.xpose.msra.mxu0 0
        %3393 = vmatprep.subr.bf16.mxu0 0
        %3394 = vmatpush1.bf16.xpose.msra.mxu0 0
        %3395 = vmatprep.subr.bf16.mxu0 0
        %3396 = vmatpush1.bf16.xpose.msra.mxu0 0
        %3397 = vmatprep.subr.bf16.mxu0 0
        %3398 = vmatpush1.bf16.xpose.msra.mxu0 0
        %3399 = vmatprep.subr.bf16.mxu0 0
        %3400 = vmatpush1.bf16.xpose.msra.mxu0 0
        %3401 = vmatprep.subr.bf16.mxu0 0
        %3402 = vmatpush1.bf16.xpose.msra.mxu0 %v3385
        %3403 = vmatprep.subr.bf16.mxu0 0
        %3404 = vmatpush2.bf16.xpose.msra.mxu0 0
        %3405 = vmatprep.subr.bf16.mxu0 0
        %3406 = vmatpush2.bf16.xpose.msra.mxu0 0
        %3407 = vmatprep.subr.bf16.mxu0 0
        %3408 = vmatpush2.bf16.xpose.msra.mxu0 0
        %3409 = vmatprep.subr.bf16.mxu0 0
        %3410 = vmatpush2.bf16.xpose.msra.mxu0 0
        %3411 = vmatprep.subr.bf16.mxu0 0
        %3412 = vmatpush2.bf16.xpose.msra.mxu0 0
        %3413 = vmatprep.subr.bf16.mxu0 0
        %3414 = vmatpush2.bf16.xpose.msra.mxu0 0
        %3415 = vmatprep.subr.bf16.mxu0 0
        %3416 = vmatpush2.bf16.xpose.msra.mxu0 0
        %3417 = vmatprep.subr.bf16.mxu0 0
        %3418 = vmatpush2.bf16.xpose.msra.mxu0 0
        %3419 = vmatprep.mubr.bf16.mxu0 0
        %3420 = vmatmul.mubr.bf16.gmra.mxu0 %v3382
        %v3421 = vpop.f32.mrf.mxu0
        %v3422 = vadd.f32 0.0, %v3421
        %v3423 = vpop.f32.mrf.mxu0
        %v3424 = vpop.f32.mrf.mxu0
        %v3425 = vadd.f32 0.0, %v3424
        %v3426 = vpop.f32.mrf.mxu0
        %3427 = vdwg.mxu0
        %3429 = vrot.lane.b32.xlu0 %v3377, 96
        %v3430 = vpop.permute.xlu0 %3429
        %v3432 = vsel %vm402, %v3377, 0
        %v3435 = vsel %vm402, %v3430, 0
        %3437 = vmatprep.subr.bf16.mxu0 0
        %3438 = vmatpush1.bf16.xpose.msra.mxu0 0
        %3439 = vmatprep.subr.bf16.mxu0 0
        %3440 = vmatpush1.bf16.xpose.msra.mxu0 0
        %3441 = vmatprep.subr.bf16.mxu0 0
        %3442 = vmatpush1.bf16.xpose.msra.mxu0 0
        %3443 = vmatprep.subr.bf16.mxu0 0
        %3444 = vmatpush1.bf16.xpose.msra.mxu0 0
        %3445 = vmatprep.subr.bf16.mxu0 0
        %3446 = vmatpush1.bf16.xpose.msra.mxu0 0
        %3447 = vmatprep.subr.bf16.mxu0 0
        %3448 = vmatpush1.bf16.xpose.msra.mxu0 0
        %3449 = vmatprep.subr.bf16.mxu0 0
        %3450 = vmatpush1.bf16.xpose.msra.mxu0 0
        %3451 = vmatprep.subr.bf16.mxu0 0
        %3452 = vmatpush1.bf16.xpose.msra.mxu0 %v3435
        %3453 = vmatprep.subr.bf16.mxu0 0
        %3454 = vmatpush2.bf16.xpose.msra.mxu0 0
        %3455 = vmatprep.subr.bf16.mxu0 0
        %3456 = vmatpush2.bf16.xpose.msra.mxu0 0
        %3457 = vmatprep.subr.bf16.mxu0 0
        %3458 = vmatpush2.bf16.xpose.msra.mxu0 0
        %3459 = vmatprep.subr.bf16.mxu0 0
        %3460 = vmatpush2.bf16.xpose.msra.mxu0 0
        %3461 = vmatprep.subr.bf16.mxu0 0
        %3462 = vmatpush2.bf16.xpose.msra.mxu0 0
        %3463 = vmatprep.subr.bf16.mxu0 0
        %3464 = vmatpush2.bf16.xpose.msra.mxu0 0
        %3465 = vmatprep.subr.bf16.mxu0 0
        %3466 = vmatpush2.bf16.xpose.msra.mxu0 0
        %3467 = vmatprep.subr.bf16.mxu0 0
        %3468 = vmatpush2.bf16.xpose.msra.mxu0 0
        %3469 = vmatprep.mubr.bf16.mxu0 0
        %3470 = vmatmul.mubr.bf16.gmra.mxu0 %v3432
        %v3471 = vpop.f32.mrf.mxu0
        %v3472 = vadd.f32 0.0, %v3471
        %v3473 = vpop.f32.mrf.mxu0
        %v3474 = vpop.f32.mrf.mxu0
        %v3475 = vadd.f32 0.0, %v3474
        %v3476 = vpop.f32.mrf.mxu0
        %3477 = vdwg.mxu0
        %vm3478 = vcmask 72704
        %v3479 = vsel %vm3478, %v3422, -inf
        %3480 = vmax.xlane.f32.xlu0 %v3479
        %v3481 = vpop.xlane.xlu0 %3480
        %vm3482 = vcmask 65536
        %v3483 = vsel %vm3482, %v3425, -inf
        %3484 = vmax.xlane.f32.xlu0 %v3483
        %v3485 = vpop.xlane.xlu0 %3484
        %v3486 = vsel %vm3478, %v3472, -inf
        %3487 = vmax.xlane.f32.xlu0 %v3486
        %v3488 = vpop.xlane.xlu0 %3487
        %v3489 = vsel %vm3482, %v3475, -inf
        %3490 = vmax.xlane.f32.xlu0 %v3489
        %v3491 = vpop.xlane.xlu0 %3490
        %v3492 = vsub.f32 %v3422, %v3481
        %v3493 = vsub.f32 %v3425, %v3485
        %v3494 = vsub.f32 %v3472, %v3488
        %v3495 = vsub.f32 %v3475, %v3491
        %v3496 = vmul.f32 %v3492, 1.442695
        %v3497 = vpow.pop %v3496
        %v3498 = vmul.f32 %v3493, 1.442695
        %v3499 = vpow.pop %v3498
        %v3500 = vmul.f32 %v3494, 1.442695
        %v3501 = vpow.pop %v3500
        %v3502 = vmul.f32 %v3495, 1.442695
        %v3503 = vpow.pop %v3502
        %v3504 = vsel %vm3478, %v3497, 0.0
        %3505 = vadd.xlane.f32.xlu0 %v3504
        %v3506 = vpop.xlane.xlu0 %3505
        %v3507 = vsel %vm3482, %v3499, 0.0
        %3508 = vadd.xlane.f32.xlu0 %v3507
        %v3509 = vpop.xlane.xlu0 %3508
        %v3510 = vsel %vm3478, %v3501, 0.0
        %3511 = vadd.xlane.f32.xlu0 %v3510
        %v3512 = vpop.xlane.xlu0 %3511
        %v3513 = vsel %vm3482, %v3503, 0.0
        %3514 = vadd.xlane.f32.xlu0 %v3513
        %v3515 = vpop.xlane.xlu0 %3514
        %v3516 = vrcp.pop %v3506
        %v3517 = vmul.f32 %v3497, %v3516
        %v3518 = vrcp.pop %v3509
        %v3519 = vmul.f32 %v3499, %v3518
        %v3520 = vrcp.pop %v3512
        %v3521 = vmul.f32 %v3501, %v3520
        %v3522 = vrcp.pop %v3515
        %v3523 = vmul.f32 %v3503, %v3522
        %v3524 = vpack.c.bf16 %v3519, %v3517
        %v3525 = vpack.c.bf16 %v3523, %v3521
        %3526 = vrot.lane.b32.xlu0 %v3376, 64
        %v3527 = vpop.permute.xlu0 %3526
        %v3529 = vsel %vm3478, %v3524, 0
        %vm3531 = vcmask 1044480
        %v3532 = vsel %vm409, 4294967295, 65535
        %v3533 = vsel %vm3531, %v3532, 0
        %v3535 = vand.u32 %v3527, %v3533
        %3537 = vmatprep.subr.bf16.mxu0 0
        %3538 = vmatpush1.bf16.msra.mxu0 0
        %3539 = vmatprep.subr.bf16.mxu0 0
        %3540 = vmatpush1.bf16.msra.mxu0 0
        %3541 = vmatprep.subr.bf16.mxu0 0
        %3542 = vmatpush1.bf16.msra.mxu0 0
        %3543 = vmatprep.subr.bf16.mxu0 0
        %3544 = vmatpush1.bf16.msra.mxu0 0
        %3545 = vmatprep.subr.bf16.mxu0 0
        %3546 = vmatpush1.bf16.msra.mxu0 0
        %3547 = vmatprep.subr.bf16.mxu0 0
        %3548 = vmatpush1.bf16.msra.mxu0 0
        %3549 = vmatprep.subr.bf16.mxu0 0
        %3550 = vmatpush1.bf16.msra.mxu0 0
        %3551 = vmatprep.subr.bf16.mxu0 0
        %3552 = vmatpush1.bf16.msra.mxu0 %v3535
        %3553 = vmatprep.subr.bf16.mxu0 0
        %3554 = vmatpush2.bf16.msra.mxu0 0
        %3555 = vmatprep.subr.bf16.mxu0 0
        %3556 = vmatpush2.bf16.msra.mxu0 0
        %3557 = vmatprep.subr.bf16.mxu0 0
        %3558 = vmatpush2.bf16.msra.mxu0 0
        %3559 = vmatprep.subr.bf16.mxu0 0
        %3560 = vmatpush2.bf16.msra.mxu0 0
        %3561 = vmatprep.subr.bf16.mxu0 0
        %3562 = vmatpush2.bf16.msra.mxu0 0
        %3563 = vmatprep.subr.bf16.mxu0 0
        %3564 = vmatpush2.bf16.msra.mxu0 0
        %3565 = vmatprep.subr.bf16.mxu0 0
        %3566 = vmatpush2.bf16.msra.mxu0 0
        %3567 = vmatprep.subr.bf16.mxu0 0
        %3568 = vmatpush2.bf16.msra.mxu0 0
        %3569 = vmatprep.mubr.bf16.mxu0 0
        %3570 = vmatmul.mubr.bf16.gmra.mxu0 %v3529
        %v3571 = vpop.f32.mrf.mxu0
        %v3572 = vadd.f32 0.0, %v3571
        %v3573 = vpop.f32.mrf.mxu0
        %v3574 = vpop.f32.mrf.mxu0
        %v3575 = vadd.f32 0.0, %v3574
        %v3576 = vpop.f32.mrf.mxu0
        %3577 = vdwg.mxu0
        %3578 = vrot.lane.b32.xlu0 %v3377, 64
        %v3579 = vpop.permute.xlu0 %3578
        %v3581 = vsel %vm3478, %v3525, 0
        %v3584 = vand.u32 %v3579, %v3533
        %3586 = vmatprep.subr.bf16.mxu0 0
        %3587 = vmatpush1.bf16.msra.mxu0 0
        %3588 = vmatprep.subr.bf16.mxu0 0
        %3589 = vmatpush1.bf16.msra.mxu0 0
        %3590 = vmatprep.subr.bf16.mxu0 0
        %3591 = vmatpush1.bf16.msra.mxu0 0
        %3592 = vmatprep.subr.bf16.mxu0 0
        %3593 = vmatpush1.bf16.msra.mxu0 0
        %3594 = vmatprep.subr.bf16.mxu0 0
        %3595 = vmatpush1.bf16.msra.mxu0 0
        %3596 = vmatprep.subr.bf16.mxu0 0
        %3597 = vmatpush1.bf16.msra.mxu0 0
        %3598 = vmatprep.subr.bf16.mxu0 0
        %3599 = vmatpush1.bf16.msra.mxu0 0
        %3600 = vmatprep.subr.bf16.mxu0 0
        %3601 = vmatpush1.bf16.msra.mxu0 %v3584
        %3602 = vmatprep.subr.bf16.mxu0 0
        %3603 = vmatpush2.bf16.msra.mxu0 0
        %3604 = vmatprep.subr.bf16.mxu0 0
        %3605 = vmatpush2.bf16.msra.mxu0 0
        %3606 = vmatprep.subr.bf16.mxu0 0
        %3607 = vmatpush2.bf16.msra.mxu0 0
        %3608 = vmatprep.subr.bf16.mxu0 0
        %3609 = vmatpush2.bf16.msra.mxu0 0
        %3610 = vmatprep.subr.bf16.mxu0 0
        %3611 = vmatpush2.bf16.msra.mxu0 0
        %3612 = vmatprep.subr.bf16.mxu0 0
        %3613 = vmatpush2.bf16.msra.mxu0 0
        %3614 = vmatprep.subr.bf16.mxu0 0
        %3615 = vmatpush2.bf16.msra.mxu0 0
        %3616 = vmatprep.subr.bf16.mxu0 0
        %3617 = vmatpush2.bf16.msra.mxu0 0
        %3618 = vmatprep.mubr.bf16.mxu0 0
        %3619 = vmatmul.mubr.bf16.gmra.mxu0 %v3581
        %v3620 = vpop.f32.mrf.mxu0
        %v3621 = vadd.f32 0.0, %v3620
        %v3622 = vpop.f32.mrf.mxu0
        %v3623 = vpop.f32.mrf.mxu0
        %v3624 = vadd.f32 0.0, %v3623
        %v3625 = vpop.f32.mrf.mxu0
        %3626 = vdwg.mxu0
        %3627 = vrot.lane.b32.xlu0 %v3376, 120
        %v3628 = vpop.permute.xlu0 %3627
        %3629 = vrot.lane.b32.xlu0 %v3376, 88
        %v3630 = vpop.permute.xlu0 %3629
        %v3632 = vsel %vm402, %v3628, 0
        %v3635 = vsel %vm402, %v3630, 0
        %3637 = vmatprep.subr.bf16.mxu0 0
        %3638 = vmatpush1.bf16.xpose.msra.mxu0 0
        %3639 = vmatprep.subr.bf16.mxu0 0
        %3640 = vmatpush1.bf16.xpose.msra.mxu0 0
        %3641 = vmatprep.subr.bf16.mxu0 0
        %3642 = vmatpush1.bf16.xpose.msra.mxu0 0
        %3643 = vmatprep.subr.bf16.mxu0 0
        %3644 = vmatpush1.bf16.xpose.msra.mxu0 0
        %3645 = vmatprep.subr.bf16.mxu0 0
        %3646 = vmatpush1.bf16.xpose.msra.mxu0 0
        %3647 = vmatprep.subr.bf16.mxu0 0
        %3648 = vmatpush1.bf16.xpose.msra.mxu0 0
        %3649 = vmatprep.subr.bf16.mxu0 0
        %3650 = vmatpush1.bf16.xpose.msra.mxu0 0
        %3651 = vmatprep.subr.bf16.mxu0 0
        %3652 = vmatpush1.bf16.xpose.msra.mxu0 %v3635
        %3653 = vmatprep.subr.bf16.mxu0 0
        %3654 = vmatpush2.bf16.xpose.msra.mxu0 0
        %3655 = vmatprep.subr.bf16.mxu0 0
        %3656 = vmatpush2.bf16.xpose.msra.mxu0 0
        %3657 = vmatprep.subr.bf16.mxu0 0
        %3658 = vmatpush2.bf16.xpose.msra.mxu0 0
        %3659 = vmatprep.subr.bf16.mxu0 0
        %3660 = vmatpush2.bf16.xpose.msra.mxu0 0
        %3661 = vmatprep.subr.bf16.mxu0 0
        %3662 = vmatpush2.bf16.xpose.msra.mxu0 0
        %3663 = vmatprep.subr.bf16.mxu0 0
        %3664 = vmatpush2.bf16.xpose.msra.mxu0 0
        %3665 = vmatprep.subr.bf16.mxu0 0
        %3666 = vmatpush2.bf16.xpose.msra.mxu0 0
        %3667 = vmatprep.subr.bf16.mxu0 0
        %3668 = vmatpush2.bf16.xpose.msra.mxu0 0
        %3669 = vmatprep.mubr.bf16.mxu0 0
        %3670 = vmatmul.mubr.bf16.gmra.mxu0 %v3632
        %v3671 = vpop.f32.mrf.mxu0
        %v3672 = vadd.f32 0.0, %v3671
        %v3673 = vpop.f32.mrf.mxu0
        %v3674 = vpop.f32.mrf.mxu0
        %v3675 = vadd.f32 0.0, %v3674
        %v3676 = vpop.f32.mrf.mxu0
        %3677 = vdwg.mxu0
        %3678 = vrot.lane.b32.xlu0 %v3377, 120
        %v3679 = vpop.permute.xlu0 %3678
        %3680 = vrot.lane.b32.xlu0 %v3377, 88
        %v3681 = vpop.permute.xlu0 %3680
        %v3683 = vsel %vm402, %v3679, 0
        %v3686 = vsel %vm402, %v3681, 0
        %3688 = vmatprep.subr.bf16.mxu0 0
        %3689 = vmatpush1.bf16.xpose.msra.mxu0 0
        %3690 = vmatprep.subr.bf16.mxu0 0
        %3691 = vmatpush1.bf16.xpose.msra.mxu0 0
        %3692 = vmatprep.subr.bf16.mxu0 0
        %3693 = vmatpush1.bf16.xpose.msra.mxu0 0
        %3694 = vmatprep.subr.bf16.mxu0 0
        %3695 = vmatpush1.bf16.xpose.msra.mxu0 0
        %3696 = vmatprep.subr.bf16.mxu0 0
        %3697 = vmatpush1.bf16.xpose.msra.mxu0 0
        %3698 = vmatprep.subr.bf16.mxu0 0
        %3699 = vmatpush1.bf16.xpose.msra.mxu0 0
        %3700 = vmatprep.subr.bf16.mxu0 0
        %3701 = vmatpush1.bf16.xpose.msra.mxu0 0
        %3702 = vmatprep.subr.bf16.mxu0 0
        %3703 = vmatpush1.bf16.xpose.msra.mxu0 %v3686
        %3704 = vmatprep.subr.bf16.mxu0 0
        %3705 = vmatpush2.bf16.xpose.msra.mxu0 0
        %3706 = vmatprep.subr.bf16.mxu0 0
        %3707 = vmatpush2.bf16.xpose.msra.mxu0 0
        %3708 = vmatprep.subr.bf16.mxu0 0
        %3709 = vmatpush2.bf16.xpose.msra.mxu0 0
        %3710 = vmatprep.subr.bf16.mxu0 0
        %3711 = vmatpush2.bf16.xpose.msra.mxu0 0
        %3712 = vmatprep.subr.bf16.mxu0 0
        %3713 = vmatpush2.bf16.xpose.msra.mxu0 0
        %3714 = vmatprep.subr.bf16.mxu0 0
        %3715 = vmatpush2.bf16.xpose.msra.mxu0 0
        %3716 = vmatprep.subr.bf16.mxu0 0
        %3717 = vmatpush2.bf16.xpose.msra.mxu0 0
        %3718 = vmatprep.subr.bf16.mxu0 0
        %3719 = vmatpush2.bf16.xpose.msra.mxu0 0
        %3720 = vmatprep.mubr.bf16.mxu0 0
        %3721 = vmatmul.mubr.bf16.gmra.mxu0 %v3683
        %v3722 = vpop.f32.mrf.mxu0
        %v3723 = vadd.f32 0.0, %v3722
        %v3724 = vpop.f32.mrf.mxu0
        %v3725 = vpop.f32.mrf.mxu0
        %v3726 = vadd.f32 0.0, %v3725
        %v3727 = vpop.f32.mrf.mxu0
        %3728 = vdwg.mxu0
        %v3729 = vsel %vm3478, %v3672, -inf
        %3730 = vmax.xlane.f32.xlu0 %v3729
        %v3731 = vpop.xlane.xlu0 %3730
        %v3732 = vsel %vm3482, %v3675, -inf
        %3733 = vmax.xlane.f32.xlu0 %v3732
        %v3734 = vpop.xlane.xlu0 %3733
        %v3735 = vsel %vm3478, %v3723, -inf
        %3736 = vmax.xlane.f32.xlu0 %v3735
        %v3737 = vpop.xlane.xlu0 %3736
        %v3738 = vsel %vm3482, %v3726, -inf
        %3739 = vmax.xlane.f32.xlu0 %v3738
        %v3740 = vpop.xlane.xlu0 %3739
        %v3741 = vsub.f32 %v3672, %v3731
        %v3742 = vsub.f32 %v3675, %v3734
        %v3743 = vsub.f32 %v3723, %v3737
        %v3744 = vsub.f32 %v3726, %v3740
        %v3745 = vmul.f32 %v3741, 1.442695
        %v3746 = vpow.pop %v3745
        %v3747 = vmul.f32 %v3742, 1.442695
        %v3748 = vpow.pop %v3747
        %v3749 = vmul.f32 %v3743, 1.442695
        %v3750 = vpow.pop %v3749
        %v3751 = vmul.f32 %v3744, 1.442695
        %v3752 = vpow.pop %v3751
        %v3753 = vsel %vm3478, %v3746, 0.0
        %3754 = vadd.xlane.f32.xlu0 %v3753
        %v3755 = vpop.xlane.xlu0 %3754
        %v3756 = vsel %vm3482, %v3748, 0.0
        %3757 = vadd.xlane.f32.xlu0 %v3756
        %v3758 = vpop.xlane.xlu0 %3757
        %v3759 = vsel %vm3478, %v3750, 0.0
        %3760 = vadd.xlane.f32.xlu0 %v3759
        %v3761 = vpop.xlane.xlu0 %3760
        %v3762 = vsel %vm3482, %v3752, 0.0
        %3763 = vadd.xlane.f32.xlu0 %v3762
        %v3764 = vpop.xlane.xlu0 %3763
        %v3765 = vrcp.pop %v3755
        %v3766 = vmul.f32 %v3746, %v3765
        %v3767 = vrcp.pop %v3758
        %v3768 = vmul.f32 %v3748, %v3767
        %v3769 = vrcp.pop %v3761
        %v3770 = vmul.f32 %v3750, %v3769
        %v3771 = vrcp.pop %v3764
        %v3772 = vmul.f32 %v3752, %v3771
        %v3773 = vpack.c.bf16 %v3768, %v3766
        %v3774 = vpack.c.bf16 %v3772, %v3770
        %3775 = vrot.lane.b32.xlu0 %v3376, 56
        %v3776 = vpop.permute.xlu0 %3775
        %v3778 = vsel %vm3478, %v3773, 0
        %v3781 = vand.u32 %v3776, %v3533
        %3783 = vmatprep.subr.bf16.mxu0 0
        %3784 = vmatpush1.bf16.msra.mxu0 0
        %3785 = vmatprep.subr.bf16.mxu0 0
        %3786 = vmatpush1.bf16.msra.mxu0 0
        %3787 = vmatprep.subr.bf16.mxu0 0
        %3788 = vmatpush1.bf16.msra.mxu0 0
        %3789 = vmatprep.subr.bf16.mxu0 0
        %3790 = vmatpush1.bf16.msra.mxu0 0
        %3791 = vmatprep.subr.bf16.mxu0 0
        %3792 = vmatpush1.bf16.msra.mxu0 0
        %3793 = vmatprep.subr.bf16.mxu0 0
        %3794 = vmatpush1.bf16.msra.mxu0 0
        %3795 = vmatprep.subr.bf16.mxu0 0
        %3796 = vmatpush1.bf16.msra.mxu0 0
        %3797 = vmatprep.subr.bf16.mxu0 0
        %3798 = vmatpush1.bf16.msra.mxu0 %v3781
        %3799 = vmatprep.subr.bf16.mxu0 0
        %3800 = vmatpush2.bf16.msra.mxu0 0
        %3801 = vmatprep.subr.bf16.mxu0 0
        %3802 = vmatpush2.bf16.msra.mxu0 0
        %3803 = vmatprep.subr.bf16.mxu0 0
        %3804 = vmatpush2.bf16.msra.mxu0 0
        %3805 = vmatprep.subr.bf16.mxu0 0
        %3806 = vmatpush2.bf16.msra.mxu0 0
        %3807 = vmatprep.subr.bf16.mxu0 0
        %3808 = vmatpush2.bf16.msra.mxu0 0
        %3809 = vmatprep.subr.bf16.mxu0 0
        %3810 = vmatpush2.bf16.msra.mxu0 0
        %3811 = vmatprep.subr.bf16.mxu0 0
        %3812 = vmatpush2.bf16.msra.mxu0 0
        %3813 = vmatprep.subr.bf16.mxu0 0
        %3814 = vmatpush2.bf16.msra.mxu0 0
        %3815 = vmatprep.mubr.bf16.mxu0 0
        %3816 = vmatmul.mubr.bf16.gmra.mxu0 %v3778
        %v3817 = vpop.f32.mrf.mxu0
        %v3818 = vadd.f32 0.0, %v3817
        %v3819 = vpop.f32.mrf.mxu0
        %v3820 = vpop.f32.mrf.mxu0
        %v3821 = vadd.f32 0.0, %v3820
        %v3822 = vpop.f32.mrf.mxu0
        %3823 = vdwg.mxu0
        %3824 = vrot.lane.b32.xlu0 %v3377, 56
        %v3825 = vpop.permute.xlu0 %3824
        %v3827 = vsel %vm3478, %v3774, 0
        %v3830 = vand.u32 %v3825, %v3533
        %3832 = vmatprep.subr.bf16.mxu0 0
        %3833 = vmatpush1.bf16.msra.mxu0 0
        %3834 = vmatprep.subr.bf16.mxu0 0
        %3835 = vmatpush1.bf16.msra.mxu0 0
        %3836 = vmatprep.subr.bf16.mxu0 0
        %3837 = vmatpush1.bf16.msra.mxu0 0
        %3838 = vmatprep.subr.bf16.mxu0 0
        %3839 = vmatpush1.bf16.msra.mxu0 0
        %3840 = vmatprep.subr.bf16.mxu0 0
        %3841 = vmatpush1.bf16.msra.mxu0 0
        %3842 = vmatprep.subr.bf16.mxu0 0
        %3843 = vmatpush1.bf16.msra.mxu0 0
        %3844 = vmatprep.subr.bf16.mxu0 0
        %3845 = vmatpush1.bf16.msra.mxu0 0
        %3846 = vmatprep.subr.bf16.mxu0 0
        %3847 = vmatpush1.bf16.msra.mxu0 %v3830
        %3848 = vmatprep.subr.bf16.mxu0 0
        %3849 = vmatpush2.bf16.msra.mxu0 0
        %3850 = vmatprep.subr.bf16.mxu0 0
        %3851 = vmatpush2.bf16.msra.mxu0 0
        %3852 = vmatprep.subr.bf16.mxu0 0
        %3853 = vmatpush2.bf16.msra.mxu0 0
        %3854 = vmatprep.subr.bf16.mxu0 0
        %3855 = vmatpush2.bf16.msra.mxu0 0
        %3856 = vmatprep.subr.bf16.mxu0 0
        %3857 = vmatpush2.bf16.msra.mxu0 0
        %3858 = vmatprep.subr.bf16.mxu0 0
        %3859 = vmatpush2.bf16.msra.mxu0 0
        %3860 = vmatprep.subr.bf16.mxu0 0
        %3861 = vmatpush2.bf16.msra.mxu0 0
        %3862 = vmatprep.subr.bf16.mxu0 0
        %3863 = vmatpush2.bf16.msra.mxu0 0
        %3864 = vmatprep.mubr.bf16.mxu0 0
        %3865 = vmatmul.mubr.bf16.gmra.mxu0 %v3827
        %v3866 = vpop.f32.mrf.mxu0
        %v3867 = vadd.f32 0.0, %v3866
        %v3868 = vpop.f32.mrf.mxu0
        %v3869 = vpop.f32.mrf.mxu0
        %v3870 = vadd.f32 0.0, %v3869
        %v3871 = vpop.f32.mrf.mxu0
        %3872 = vdwg.mxu0
        %3873 = vrot.lane.b32.xlu0 %v3376, 112
        %v3874 = vpop.permute.xlu0 %3873
        %3875 = vrot.lane.b32.xlu0 %v3376, 80
        %v3876 = vpop.permute.xlu0 %3875
        %v3878 = vsel %vm402, %v3874, 0
        %v3881 = vsel %vm402, %v3876, 0
        %3883 = vmatprep.subr.bf16.mxu0 0
        %3884 = vmatpush1.bf16.xpose.msra.mxu0 0
        %3885 = vmatprep.subr.bf16.mxu0 0
        %3886 = vmatpush1.bf16.xpose.msra.mxu0 0
        %3887 = vmatprep.subr.bf16.mxu0 0
        %3888 = vmatpush1.bf16.xpose.msra.mxu0 0
        %3889 = vmatprep.subr.bf16.mxu0 0
        %3890 = vmatpush1.bf16.xpose.msra.mxu0 0
        %3891 = vmatprep.subr.bf16.mxu0 0
        %3892 = vmatpush1.bf16.xpose.msra.mxu0 0
        %3893 = vmatprep.subr.bf16.mxu0 0
        %3894 = vmatpush1.bf16.xpose.msra.mxu0 0
        %3895 = vmatprep.subr.bf16.mxu0 0
        %3896 = vmatpush1.bf16.xpose.msra.mxu0 0
        %3897 = vmatprep.subr.bf16.mxu0 0
        %3898 = vmatpush1.bf16.xpose.msra.mxu0 %v3881
        %3899 = vmatprep.subr.bf16.mxu0 0
        %3900 = vmatpush2.bf16.xpose.msra.mxu0 0
        %3901 = vmatprep.subr.bf16.mxu0 0
        %3902 = vmatpush2.bf16.xpose.msra.mxu0 0
        %3903 = vmatprep.subr.bf16.mxu0 0
        %3904 = vmatpush2.bf16.xpose.msra.mxu0 0
        %3905 = vmatprep.subr.bf16.mxu0 0
        %3906 = vmatpush2.bf16.xpose.msra.mxu0 0
        %3907 = vmatprep.subr.bf16.mxu0 0
        %3908 = vmatpush2.bf16.xpose.msra.mxu0 0
        %3909 = vmatprep.subr.bf16.mxu0 0
        %3910 = vmatpush2.bf16.xpose.msra.mxu0 0
        %3911 = vmatprep.subr.bf16.mxu0 0
        %3912 = vmatpush2.bf16.xpose.msra.mxu0 0
        %3913 = vmatprep.subr.bf16.mxu0 0
        %3914 = vmatpush2.bf16.xpose.msra.mxu0 0
        %3915 = vmatprep.mubr.bf16.mxu0 0
        %3916 = vmatmul.mubr.bf16.gmra.mxu0 %v3878
        %v3917 = vpop.f32.mrf.mxu0
        %v3918 = vadd.f32 0.0, %v3917
        %v3919 = vpop.f32.mrf.mxu0
        %v3920 = vpop.f32.mrf.mxu0
        %v3921 = vadd.f32 0.0, %v3920
        %v3922 = vpop.f32.mrf.mxu0
        %3923 = vdwg.mxu0
        %3924 = vrot.lane.b32.xlu0 %v3377, 112
        %v3925 = vpop.permute.xlu0 %3924
        %3926 = vrot.lane.b32.xlu0 %v3377, 80
        %v3927 = vpop.permute.xlu0 %3926
        %v3929 = vsel %vm402, %v3925, 0
        %v3932 = vsel %vm402, %v3927, 0
        %3934 = vmatprep.subr.bf16.mxu0 0
        %3935 = vmatpush1.bf16.xpose.msra.mxu0 0
        %3936 = vmatprep.subr.bf16.mxu0 0
        %3937 = vmatpush1.bf16.xpose.msra.mxu0 0
        %3938 = vmatprep.subr.bf16.mxu0 0
        %3939 = vmatpush1.bf16.xpose.msra.mxu0 0
        %3940 = vmatprep.subr.bf16.mxu0 0
        %3941 = vmatpush1.bf16.xpose.msra.mxu0 0
        %3942 = vmatprep.subr.bf16.mxu0 0
        %3943 = vmatpush1.bf16.xpose.msra.mxu0 0
        %3944 = vmatprep.subr.bf16.mxu0 0
        %3945 = vmatpush1.bf16.xpose.msra.mxu0 0
        %3946 = vmatprep.subr.bf16.mxu0 0
        %3947 = vmatpush1.bf16.xpose.msra.mxu0 0
        %3948 = vmatprep.subr.bf16.mxu0 0
        %3949 = vmatpush1.bf16.xpose.msra.mxu0 %v3932
        %3950 = vmatprep.subr.bf16.mxu0 0
        %3951 = vmatpush2.bf16.xpose.msra.mxu0 0
        %3952 = vmatprep.subr.bf16.mxu0 0
        %3953 = vmatpush2.bf16.xpose.msra.mxu0 0
        %3954 = vmatprep.subr.bf16.mxu0 0
        %3955 = vmatpush2.bf16.xpose.msra.mxu0 0
        %3956 = vmatprep.subr.bf16.mxu0 0
        %3957 = vmatpush2.bf16.xpose.msra.mxu0 0
        %3958 = vmatprep.subr.bf16.mxu0 0
        %3959 = vmatpush2.bf16.xpose.msra.mxu0 0
        %3960 = vmatprep.subr.bf16.mxu0 0
        %3961 = vmatpush2.bf16.xpose.msra.mxu0 0
        %3962 = vmatprep.subr.bf16.mxu0 0
        %3963 = vmatpush2.bf16.xpose.msra.mxu0 0
        %3964 = vmatprep.subr.bf16.mxu0 0
        %3965 = vmatpush2.bf16.xpose.msra.mxu0 0
        %3966 = vmatprep.mubr.bf16.mxu0 0
        %3967 = vmatmul.mubr.bf16.gmra.mxu0 %v3929
        %v3968 = vpop.f32.mrf.mxu0
        %v3969 = vadd.f32 0.0, %v3968
        %v3970 = vpop.f32.mrf.mxu0
        %v3971 = vpop.f32.mrf.mxu0
        %v3972 = vadd.f32 0.0, %v3971
        %v3973 = vpop.f32.mrf.mxu0
        %3974 = vdwg.mxu0
        %v3975 = vsel %vm3478, %v3918, -inf
        %3976 = vmax.xlane.f32.xlu0 %v3975
        %v3977 = vpop.xlane.xlu0 %3976
        %v3978 = vsel %vm3482, %v3921, -inf
        %3979 = vmax.xlane.f32.xlu0 %v3978
        %v3980 = vpop.xlane.xlu0 %3979
        %v3981 = vsel %vm3478, %v3969, -inf
        %3982 = vmax.xlane.f32.xlu0 %v3981
        %v3983 = vpop.xlane.xlu0 %3982
        %v3984 = vsel %vm3482, %v3972, -inf
        %3985 = vmax.xlane.f32.xlu0 %v3984
        %v3986 = vpop.xlane.xlu0 %3985
        %v3987 = vsub.f32 %v3918, %v3977
        %v3988 = vsub.f32 %v3921, %v3980
        %v3989 = vsub.f32 %v3969, %v3983
        %v3990 = vsub.f32 %v3972, %v3986
        %v3991 = vmul.f32 %v3987, 1.442695
        %v3992 = vpow.pop %v3991
        %v3993 = vmul.f32 %v3988, 1.442695
        %v3994 = vpow.pop %v3993
        %v3995 = vmul.f32 %v3989, 1.442695
        %v3996 = vpow.pop %v3995
        %v3997 = vmul.f32 %v3990, 1.442695
        %v3998 = vpow.pop %v3997
        %v3999 = vsel %vm3478, %v3992, 0.0
        %4000 = vadd.xlane.f32.xlu0 %v3999
        %v4001 = vpop.xlane.xlu0 %4000
        %v4002 = vsel %vm3482, %v3994, 0.0
        %4003 = vadd.xlane.f32.xlu0 %v4002
        %v4004 = vpop.xlane.xlu0 %4003
        %v4005 = vsel %vm3478, %v3996, 0.0
        %4006 = vadd.xlane.f32.xlu0 %v4005
        %v4007 = vpop.xlane.xlu0 %4006
        %v4008 = vsel %vm3482, %v3998, 0.0
        %4009 = vadd.xlane.f32.xlu0 %v4008
        %v4010 = vpop.xlane.xlu0 %4009
        %v4011 = vrcp.pop %v4001
        %v4012 = vmul.f32 %v3992, %v4011
        %v4013 = vrcp.pop %v4004
        %v4014 = vmul.f32 %v3994, %v4013
        %v4015 = vrcp.pop %v4007
        %v4016 = vmul.f32 %v3996, %v4015
        %v4017 = vrcp.pop %v4010
        %v4018 = vmul.f32 %v3998, %v4017
        %v4019 = vpack.c.bf16 %v4014, %v4012
        %v4020 = vpack.c.bf16 %v4018, %v4016
        %4021 = vrot.lane.b32.xlu0 %v3376, 48
        %v4022 = vpop.permute.xlu0 %4021
        %v4024 = vsel %vm3478, %v4019, 0
        %v4027 = vand.u32 %v4022, %v3533
        %4029 = vmatprep.subr.bf16.mxu0 0
        %4030 = vmatpush1.bf16.msra.mxu0 0
        %4031 = vmatprep.subr.bf16.mxu0 0
        %4032 = vmatpush1.bf16.msra.mxu0 0
        %4033 = vmatprep.subr.bf16.mxu0 0
        %4034 = vmatpush1.bf16.msra.mxu0 0
        %4035 = vmatprep.subr.bf16.mxu0 0
        %4036 = vmatpush1.bf16.msra.mxu0 0
        %4037 = vmatprep.subr.bf16.mxu0 0
        %4038 = vmatpush1.bf16.msra.mxu0 0
        %4039 = vmatprep.subr.bf16.mxu0 0
        %4040 = vmatpush1.bf16.msra.mxu0 0
        %4041 = vmatprep.subr.bf16.mxu0 0
        %4042 = vmatpush1.bf16.msra.mxu0 0
        %4043 = vmatprep.subr.bf16.mxu0 0
        %4044 = vmatpush1.bf16.msra.mxu0 %v4027
        %4045 = vmatprep.subr.bf16.mxu0 0
        %4046 = vmatpush2.bf16.msra.mxu0 0
        %4047 = vmatprep.subr.bf16.mxu0 0
        %4048 = vmatpush2.bf16.msra.mxu0 0
        %4049 = vmatprep.subr.bf16.mxu0 0
        %4050 = vmatpush2.bf16.msra.mxu0 0
        %4051 = vmatprep.subr.bf16.mxu0 0
        %4052 = vmatpush2.bf16.msra.mxu0 0
        %4053 = vmatprep.subr.bf16.mxu0 0
        %4054 = vmatpush2.bf16.msra.mxu0 0
        %4055 = vmatprep.subr.bf16.mxu0 0
        %4056 = vmatpush2.bf16.msra.mxu0 0
        %4057 = vmatprep.subr.bf16.mxu0 0
        %4058 = vmatpush2.bf16.msra.mxu0 0
        %4059 = vmatprep.subr.bf16.mxu0 0
        %4060 = vmatpush2.bf16.msra.mxu0 0
        %4061 = vmatprep.mubr.bf16.mxu0 0
        %4062 = vmatmul.mubr.bf16.gmra.mxu0 %v4024
        %v4063 = vpop.f32.mrf.mxu0
        %v4064 = vadd.f32 0.0, %v4063
        %v4065 = vpop.f32.mrf.mxu0
        %v4066 = vpop.f32.mrf.mxu0
        %v4067 = vadd.f32 0.0, %v4066
        %v4068 = vpop.f32.mrf.mxu0
        %4069 = vdwg.mxu0
        %4070 = vrot.lane.b32.xlu0 %v3377, 48
        %v4071 = vpop.permute.xlu0 %4070
        %v4073 = vsel %vm3478, %v4020, 0
        %v4076 = vand.u32 %v4071, %v3533
        %4078 = vmatprep.subr.bf16.mxu0 0
        %4079 = vmatpush1.bf16.msra.mxu0 0
        %4080 = vmatprep.subr.bf16.mxu0 0
        %4081 = vmatpush1.bf16.msra.mxu0 0
        %4082 = vmatprep.subr.bf16.mxu0 0
        %4083 = vmatpush1.bf16.msra.mxu0 0
        %4084 = vmatprep.subr.bf16.mxu0 0
        %4085 = vmatpush1.bf16.msra.mxu0 0
        %4086 = vmatprep.subr.bf16.mxu0 0
        %4087 = vmatpush1.bf16.msra.mxu0 0
        %4088 = vmatprep.subr.bf16.mxu0 0
        %4089 = vmatpush1.bf16.msra.mxu0 0
        %4090 = vmatprep.subr.bf16.mxu0 0
        %4091 = vmatpush1.bf16.msra.mxu0 0
        %4092 = vmatprep.subr.bf16.mxu0 0
        %4093 = vmatpush1.bf16.msra.mxu0 %v4076
        %4094 = vmatprep.subr.bf16.mxu0 0
        %4095 = vmatpush2.bf16.msra.mxu0 0
        %4096 = vmatprep.subr.bf16.mxu0 0
        %4097 = vmatpush2.bf16.msra.mxu0 0
        %4098 = vmatprep.subr.bf16.mxu0 0
        %4099 = vmatpush2.bf16.msra.mxu0 0
        %4100 = vmatprep.subr.bf16.mxu0 0
        %4101 = vmatpush2.bf16.msra.mxu0 0
        %4102 = vmatprep.subr.bf16.mxu0 0
        %4103 = vmatpush2.bf16.msra.mxu0 0
        %4104 = vmatprep.subr.bf16.mxu0 0
        %4105 = vmatpush2.bf16.msra.mxu0 0
        %4106 = vmatprep.subr.bf16.mxu0 0
        %4107 = vmatpush2.bf16.msra.mxu0 0
        %4108 = vmatprep.subr.bf16.mxu0 0
        %4109 = vmatpush2.bf16.msra.mxu0 0
        %4110 = vmatprep.mubr.bf16.mxu0 0
        %4111 = vmatmul.mubr.bf16.gmra.mxu0 %v4073
        %v4112 = vpop.f32.mrf.mxu0
        %v4113 = vadd.f32 0.0, %v4112
        %v4114 = vpop.f32.mrf.mxu0
        %v4115 = vpop.f32.mrf.mxu0
        %v4116 = vadd.f32 0.0, %v4115
        %v4117 = vpop.f32.mrf.mxu0
        %4118 = vdwg.mxu0
        %4119 = vrot.lane.b32.xlu0 %v3376, 104
        %v4120 = vpop.permute.xlu0 %4119
        %4121 = vrot.lane.b32.xlu0 %v3376, 72
        %v4122 = vpop.permute.xlu0 %4121
        %v4124 = vsel %vm402, %v4120, 0
        %v4127 = vsel %vm402, %v4122, 0
        %4129 = vmatprep.subr.bf16.mxu0 0
        %4130 = vmatpush1.bf16.xpose.msra.mxu0 0
        %4131 = vmatprep.subr.bf16.mxu0 0
        %4132 = vmatpush1.bf16.xpose.msra.mxu0 0
        %4133 = vmatprep.subr.bf16.mxu0 0
        %4134 = vmatpush1.bf16.xpose.msra.mxu0 0
        %4135 = vmatprep.subr.bf16.mxu0 0
        %4136 = vmatpush1.bf16.xpose.msra.mxu0 0
        %4137 = vmatprep.subr.bf16.mxu0 0
        %4138 = vmatpush1.bf16.xpose.msra.mxu0 0
        %4139 = vmatprep.subr.bf16.mxu0 0
        %4140 = vmatpush1.bf16.xpose.msra.mxu0 0
        %4141 = vmatprep.subr.bf16.mxu0 0
        %4142 = vmatpush1.bf16.xpose.msra.mxu0 0
        %4143 = vmatprep.subr.bf16.mxu0 0
        %4144 = vmatpush1.bf16.xpose.msra.mxu0 %v4127
        %4145 = vmatprep.subr.bf16.mxu0 0
        %4146 = vmatpush2.bf16.xpose.msra.mxu0 0
        %4147 = vmatprep.subr.bf16.mxu0 0
        %4148 = vmatpush2.bf16.xpose.msra.mxu0 0
        %4149 = vmatprep.subr.bf16.mxu0 0
        %4150 = vmatpush2.bf16.xpose.msra.mxu0 0
        %4151 = vmatprep.subr.bf16.mxu0 0
        %4152 = vmatpush2.bf16.xpose.msra.mxu0 0
        %4153 = vmatprep.subr.bf16.mxu0 0
        %4154 = vmatpush2.bf16.xpose.msra.mxu0 0
        %4155 = vmatprep.subr.bf16.mxu0 0
        %4156 = vmatpush2.bf16.xpose.msra.mxu0 0
        %4157 = vmatprep.subr.bf16.mxu0 0
        %4158 = vmatpush2.bf16.xpose.msra.mxu0 0
        %4159 = vmatprep.subr.bf16.mxu0 0
        %4160 = vmatpush2.bf16.xpose.msra.mxu0 0
        %4161 = vmatprep.mubr.bf16.mxu0 0
        %4162 = vmatmul.mubr.bf16.gmra.mxu0 %v4124
        %v4163 = vpop.f32.mrf.mxu0
        %v4164 = vadd.f32 0.0, %v4163
        %v4165 = vpop.f32.mrf.mxu0
        %v4166 = vpop.f32.mrf.mxu0
        %v4167 = vadd.f32 0.0, %v4166
        %v4168 = vpop.f32.mrf.mxu0
        %4169 = vdwg.mxu0
        %4170 = vrot.lane.b32.xlu0 %v3377, 104
        %v4171 = vpop.permute.xlu0 %4170
        %4172 = vrot.lane.b32.xlu0 %v3377, 72
        %v4173 = vpop.permute.xlu0 %4172
        %v4175 = vsel %vm402, %v4171, 0
        %v4178 = vsel %vm402, %v4173, 0
        %4180 = vmatprep.subr.bf16.mxu0 0
        %4181 = vmatpush1.bf16.xpose.msra.mxu0 0
        %4182 = vmatprep.subr.bf16.mxu0 0
        %4183 = vmatpush1.bf16.xpose.msra.mxu0 0
        %4184 = vmatprep.subr.bf16.mxu0 0
        %4185 = vmatpush1.bf16.xpose.msra.mxu0 0
        %4186 = vmatprep.subr.bf16.mxu0 0
        %4187 = vmatpush1.bf16.xpose.msra.mxu0 0
        %4188 = vmatprep.subr.bf16.mxu0 0
        %4189 = vmatpush1.bf16.xpose.msra.mxu0 0
        %4190 = vmatprep.subr.bf16.mxu0 0
        %4191 = vmatpush1.bf16.xpose.msra.mxu0 0
        %4192 = vmatprep.subr.bf16.mxu0 0
        %4193 = vmatpush1.bf16.xpose.msra.mxu0 0
        %4194 = vmatprep.subr.bf16.mxu0 0
        %4195 = vmatpush1.bf16.xpose.msra.mxu0 %v4178
        %4196 = vmatprep.subr.bf16.mxu0 0
        %4197 = vmatpush2.bf16.xpose.msra.mxu0 0
        %4198 = vmatprep.subr.bf16.mxu0 0
        %4199 = vmatpush2.bf16.xpose.msra.mxu0 0
        %4200 = vmatprep.subr.bf16.mxu0 0
        %4201 = vmatpush2.bf16.xpose.msra.mxu0 0
        %4202 = vmatprep.subr.bf16.mxu0 0
        %4203 = vmatpush2.bf16.xpose.msra.mxu0 0
        %4204 = vmatprep.subr.bf16.mxu0 0
        %4205 = vmatpush2.bf16.xpose.msra.mxu0 0
        %4206 = vmatprep.subr.bf16.mxu0 0
        %4207 = vmatpush2.bf16.xpose.msra.mxu0 0
        %4208 = vmatprep.subr.bf16.mxu0 0
        %4209 = vmatpush2.bf16.xpose.msra.mxu0 0
        %4210 = vmatprep.subr.bf16.mxu0 0
        %4211 = vmatpush2.bf16.xpose.msra.mxu0 0
        %4212 = vmatprep.mubr.bf16.mxu0 0
        %4213 = vmatmul.mubr.bf16.gmra.mxu0 %v4175
        %v4214 = vpop.f32.mrf.mxu0
        %v4215 = vadd.f32 0.0, %v4214
        %v4216 = vpop.f32.mrf.mxu0
        %v4217 = vpop.f32.mrf.mxu0
        %v4218 = vadd.f32 0.0, %v4217
        %v4219 = vpop.f32.mrf.mxu0
        %4220 = vdwg.mxu0
        %v4221 = vsel %vm3478, %v4164, -inf
        %4222 = vmax.xlane.f32.xlu0 %v4221
        %v4223 = vpop.xlane.xlu0 %4222
        %v4224 = vsel %vm3482, %v4167, -inf
        %4225 = vmax.xlane.f32.xlu0 %v4224
        %v4226 = vpop.xlane.xlu0 %4225
        %v4227 = vsel %vm3478, %v4215, -inf
        %4228 = vmax.xlane.f32.xlu0 %v4227
        %v4229 = vpop.xlane.xlu0 %4228
        %v4230 = vsel %vm3482, %v4218, -inf
        %4231 = vmax.xlane.f32.xlu0 %v4230
        %v4232 = vpop.xlane.xlu0 %4231
        %v4233 = vsub.f32 %v4164, %v4223
        %v4234 = vsub.f32 %v4167, %v4226
        %v4235 = vsub.f32 %v4215, %v4229
        %v4236 = vsub.f32 %v4218, %v4232
        %v4237 = vmul.f32 %v4233, 1.442695
        %v4238 = vpow.pop %v4237
        %v4239 = vmul.f32 %v4234, 1.442695
        %v4240 = vpow.pop %v4239
        %v4241 = vmul.f32 %v4235, 1.442695
        %v4242 = vpow.pop %v4241
        %v4243 = vmul.f32 %v4236, 1.442695
        %v4244 = vpow.pop %v4243
        %v4245 = vsel %vm3478, %v4238, 0.0
        %4246 = vadd.xlane.f32.xlu0 %v4245
        %v4247 = vpop.xlane.xlu0 %4246
        %v4248 = vsel %vm3482, %v4240, 0.0
        %4249 = vadd.xlane.f32.xlu0 %v4248
        %v4250 = vpop.xlane.xlu0 %4249
        %v4251 = vsel %vm3478, %v4242, 0.0
        %4252 = vadd.xlane.f32.xlu0 %v4251
        %v4253 = vpop.xlane.xlu0 %4252
        %v4254 = vsel %vm3482, %v4244, 0.0
        %4255 = vadd.xlane.f32.xlu0 %v4254
        %v4256 = vpop.xlane.xlu0 %4255
        %v4257 = vrcp.pop %v4247
        %v4258 = vmul.f32 %v4238, %v4257
        %v4259 = vrcp.pop %v4250
        %v4260 = vmul.f32 %v4240, %v4259
        %v4261 = vrcp.pop %v4253
        %v4262 = vmul.f32 %v4242, %v4261
        %v4263 = vrcp.pop %v4256
        %v4264 = vmul.f32 %v4244, %v4263
        %v4265 = vpack.c.bf16 %v4260, %v4258
        %v4266 = vpack.c.bf16 %v4264, %v4262
        %4267 = vrot.lane.b32.xlu0 %v3376, 40
        %v4268 = vpop.permute.xlu0 %4267
        %v4270 = vsel %vm3478, %v4265, 0
        %v4273 = vand.u32 %v4268, %v3533
        %4275 = vmatprep.subr.bf16.mxu0 0
        %4276 = vmatpush1.bf16.msra.mxu0 0
        %4277 = vmatprep.subr.bf16.mxu0 0
        %4278 = vmatpush1.bf16.msra.mxu0 0
        %4279 = vmatprep.subr.bf16.mxu0 0
        %4280 = vmatpush1.bf16.msra.mxu0 0
        %4281 = vmatprep.subr.bf16.mxu0 0
        %4282 = vmatpush1.bf16.msra.mxu0 0
        %4283 = vmatprep.subr.bf16.mxu0 0
        %4284 = vmatpush1.bf16.msra.mxu0 0
        %4285 = vmatprep.subr.bf16.mxu0 0
        %4286 = vmatpush1.bf16.msra.mxu0 0
        %4287 = vmatprep.subr.bf16.mxu0 0
        %4288 = vmatpush1.bf16.msra.mxu0 0
        %4289 = vmatprep.subr.bf16.mxu0 0
        %4290 = vmatpush1.bf16.msra.mxu0 %v4273
        %4291 = vmatprep.subr.bf16.mxu0 0
        %4292 = vmatpush2.bf16.msra.mxu0 0
        %4293 = vmatprep.subr.bf16.mxu0 0
        %4294 = vmatpush2.bf16.msra.mxu0 0
        %4295 = vmatprep.subr.bf16.mxu0 0
        %4296 = vmatpush2.bf16.msra.mxu0 0
        %4297 = vmatprep.subr.bf16.mxu0 0
        %4298 = vmatpush2.bf16.msra.mxu0 0
        %4299 = vmatprep.subr.bf16.mxu0 0
        %4300 = vmatpush2.bf16.msra.mxu0 0
        %4301 = vmatprep.subr.bf16.mxu0 0
        %4302 = vmatpush2.bf16.msra.mxu0 0
        %4303 = vmatprep.subr.bf16.mxu0 0
        %4304 = vmatpush2.bf16.msra.mxu0 0
        %4305 = vmatprep.subr.bf16.mxu0 0
        %4306 = vmatpush2.bf16.msra.mxu0 0
        %4307 = vmatprep.mubr.bf16.mxu0 0
        %4308 = vmatmul.mubr.bf16.gmra.mxu0 %v4270
        %v4309 = vpop.f32.mrf.mxu0
        %v4310 = vadd.f32 0.0, %v4309
        %v4311 = vpop.f32.mrf.mxu0
        %v4312 = vpop.f32.mrf.mxu0
        %v4313 = vadd.f32 0.0, %v4312
        %v4314 = vpop.f32.mrf.mxu0
        %4315 = vdwg.mxu0
        %4316 = vrot.lane.b32.xlu0 %v3377, 40
        %v4317 = vpop.permute.xlu0 %4316
        %v4319 = vsel %vm3478, %v4266, 0
        %v4322 = vand.u32 %v4317, %v3533
        %4324 = vmatprep.subr.bf16.mxu0 0
        %4325 = vmatpush1.bf16.msra.mxu0 0
        %4326 = vmatprep.subr.bf16.mxu0 0
        %4327 = vmatpush1.bf16.msra.mxu0 0
        %4328 = vmatprep.subr.bf16.mxu0 0
        %4329 = vmatpush1.bf16.msra.mxu0 0
        %4330 = vmatprep.subr.bf16.mxu0 0
        %4331 = vmatpush1.bf16.msra.mxu0 0
        %4332 = vmatprep.subr.bf16.mxu0 0
        %4333 = vmatpush1.bf16.msra.mxu0 0
        %4334 = vmatprep.subr.bf16.mxu0 0
        %4335 = vmatpush1.bf16.msra.mxu0 0
        %4336 = vmatprep.subr.bf16.mxu0 0
        %4337 = vmatpush1.bf16.msra.mxu0 0
        %4338 = vmatprep.subr.bf16.mxu0 0
        %4339 = vmatpush1.bf16.msra.mxu0 %v4322
        %4340 = vmatprep.subr.bf16.mxu0 0
        %4341 = vmatpush2.bf16.msra.mxu0 0
        %4342 = vmatprep.subr.bf16.mxu0 0
        %4343 = vmatpush2.bf16.msra.mxu0 0
        %4344 = vmatprep.subr.bf16.mxu0 0
        %4345 = vmatpush2.bf16.msra.mxu0 0
        %4346 = vmatprep.subr.bf16.mxu0 0
        %4347 = vmatpush2.bf16.msra.mxu0 0
        %4348 = vmatprep.subr.bf16.mxu0 0
        %4349 = vmatpush2.bf16.msra.mxu0 0
        %4350 = vmatprep.subr.bf16.mxu0 0
        %4351 = vmatpush2.bf16.msra.mxu0 0
        %4352 = vmatprep.subr.bf16.mxu0 0
        %4353 = vmatpush2.bf16.msra.mxu0 0
        %4354 = vmatprep.subr.bf16.mxu0 0
        %4355 = vmatpush2.bf16.msra.mxu0 0
        %4356 = vmatprep.mubr.bf16.mxu0 0
        %4357 = vmatmul.mubr.bf16.gmra.mxu0 %v4319
        %v4358 = vpop.f32.mrf.mxu0
        %v4359 = vadd.f32 0.0, %v4358
        %v4360 = vpop.f32.mrf.mxu0
        %v4361 = vpop.f32.mrf.mxu0
        %v4362 = vadd.f32 0.0, %v4361
        %v4363 = vpop.f32.mrf.mxu0
        %4364 = vdwg.mxu0
        %4369 = vrot.lane.b32.xlu0 %v3818, 8
        %v4370 = vpop.permute.xlu0 %4369
        %4371 = vrot.lane.b32.xlu0 %v3821, 8
        %v4372 = vpop.permute.xlu0 %4371
        %4373 = vrot.lane.b32.xlu0 %v3867, 8
        %v4374 = vpop.permute.xlu0 %4373
        %4375 = vrot.lane.b32.xlu0 %v3870, 8
        %v4376 = vpop.permute.xlu0 %4375
        %4385 = vrot.lane.b32.xlu0 %v4064, 16
        %v4386 = vpop.permute.xlu0 %4385
        %4387 = vrot.lane.b32.xlu0 %v4067, 16
        %v4388 = vpop.permute.xlu0 %4387
        %4389 = vrot.lane.b32.xlu0 %v4113, 16
        %v4390 = vpop.permute.xlu0 %4389
        %4391 = vrot.lane.b32.xlu0 %v4116, 16
        %v4392 = vpop.permute.xlu0 %4391
        %4401 = vrot.lane.b32.xlu0 %v4310, 24
        %v4402 = vpop.permute.xlu0 %4401
        %4403 = vrot.lane.b32.xlu0 %v4313, 24
        %v4404 = vpop.permute.xlu0 %4403
        %4405 = vrot.lane.b32.xlu0 %v4359, 24
        %v4406 = vpop.permute.xlu0 %4405
        %4407 = vrot.lane.b32.xlu0 %v4362, 24
        %v4408 = vpop.permute.xlu0 %4407
        %v4413 = vsel %vm402, %v3572, %v4370
        %v4414 = vsel %vm402, %v3575, %v4372
        %v4415 = vsel %vm402, %v3621, %v4374
        %v4416 = vsel %vm402, %v3624, %v4376
        %vm4417 = vcmask 130048
        %v4418 = vsel %vm4417, %v4413, %v4386
        %v4419 = vsel %vm4417, %v4414, %v4388
        %v4420 = vsel %vm4417, %v4415, %v4390
        %v4421 = vsel %vm4417, %v4416, %v4392
        %vm4422 = vcmask 195584
        %v4423 = vsel %vm4422, %v4418, %v4402
        %v4424 = vsel %vm4422, %v4419, %v4404
        %v4425 = vsel %vm4422, %v4420, %v4406
        %v4426 = vsel %vm4422, %v4421, %v4408
        %v4431 = vcombine.high %v4423, %v4423
        %v4433 = vunpack.c.l.s4 1966171168
        %v4434 = vunpack.c.0.s8 %v4433
        %v4435 = vlaneseq
        %v4436 = vshrl.u32 %v4435, 7
        %v4437 = vsub.s32 %v4434, %v4436
        %v4438 = vrot.slane %v4423, %v4437
        %v4440 = vunpack.c.l.s4 1966171168
        %v4441 = vunpack.c.0.s8 %v4440
        %v4442 = vlaneseq
        %v4443 = vshrl.u32 %v4442, 7
        %v4444 = vsub.s32 %v4441, %v4443
        %v4445 = vrot.slane %v4431, %v4444
        %v4446 = vcombine.high %v4438, %v4438
        %v4447 = vcombine.high %v4445, %v4445
        %v4449 = vunpack.c.l.s4 1966171168
        %v4450 = vunpack.c.0.s8 %v4449
        %v4451 = vlaneseq
        %v4452 = vshrl.u32 %v4451, 7
        %v4453 = vsub.s32 %v4450, %v4452
        %v4454 = vrot.slane %v4438, %v4453
        %v4456 = vunpack.c.l.s4 1966171168
        %v4457 = vunpack.c.0.s8 %v4456
        %v4458 = vlaneseq
        %v4459 = vshrl.u32 %v4458, 7
        %v4460 = vsub.s32 %v4457, %v4459
        %v4461 = vrot.slane %v4445, %v4460
        %v4463 = vunpack.c.l.s4 1966171168
        %v4464 = vunpack.c.0.s8 %v4463
        %v4465 = vlaneseq
        %v4466 = vshrl.u32 %v4465, 7
        %v4467 = vsub.s32 %v4464, %v4466
        %v4468 = vrot.slane %v4446, %v4467
        %v4470 = vunpack.c.l.s4 1966171168
        %v4471 = vunpack.c.0.s8 %v4470
        %v4472 = vlaneseq
        %v4473 = vshrl.u32 %v4472, 7
        %v4474 = vsub.s32 %v4471, %v4473
        %v4475 = vrot.slane %v4447, %v4474
        %v4476 = vcombine.high %v4454, %v4454
        %v4477 = vcombine.high %v4461, %v4461
        %v4478 = vcombine.high %v4468, %v4468
        %v4479 = vcombine.high %v4475, %v4475
        %v4481 = vunpack.c.l.s4 1966171168
        %v4482 = vunpack.c.0.s8 %v4481
        %v4483 = vlaneseq
        %v4484 = vshrl.u32 %v4483, 7
        %v4485 = vsub.s32 %v4482, %v4484
        %v4486 = vrot.slane %v4424, %v4485
        %v4488 = vunpack.c.l.s4 1966171168
        %v4489 = vunpack.c.0.s8 %v4488
        %v4490 = vlaneseq
        %v4491 = vshrl.u32 %v4490, 7
        %v4492 = vsub.s32 %v4489, %v4491
        %v4493 = vrot.slane %v4486, %v4492
        %v4494 = vcombine.high %v4425, %v4425
        %v4496 = vunpack.c.l.s4 1966171168
        %v4497 = vunpack.c.0.s8 %v4496
        %v4498 = vlaneseq
        %v4499 = vshrl.u32 %v4498, 7
        %v4500 = vsub.s32 %v4497, %v4499
        %v4501 = vrot.slane %v4425, %v4500
        %v4503 = vunpack.c.l.s4 1966171168
        %v4504 = vunpack.c.0.s8 %v4503
        %v4505 = vlaneseq
        %v4506 = vshrl.u32 %v4505, 7
        %v4507 = vsub.s32 %v4504, %v4506
        %v4508 = vrot.slane %v4494, %v4507
        %v4509 = vcombine.high %v4501, %v4501
        %v4510 = vcombine.high %v4508, %v4508
        %v4512 = vunpack.c.l.s4 1966171168
        %v4513 = vunpack.c.0.s8 %v4512
        %v4514 = vlaneseq
        %v4515 = vshrl.u32 %v4514, 7
        %v4516 = vsub.s32 %v4513, %v4515
        %v4517 = vrot.slane %v4501, %v4516
        %v4519 = vunpack.c.l.s4 1966171168
        %v4520 = vunpack.c.0.s8 %v4519
        %v4521 = vlaneseq
        %v4522 = vshrl.u32 %v4521, 7
        %v4523 = vsub.s32 %v4520, %v4522
        %v4524 = vrot.slane %v4508, %v4523
        %v4526 = vunpack.c.l.s4 1966171168
        %v4527 = vunpack.c.0.s8 %v4526
        %v4528 = vlaneseq
        %v4529 = vshrl.u32 %v4528, 7
        %v4530 = vsub.s32 %v4527, %v4529
        %v4531 = vrot.slane %v4509, %v4530
        %v4533 = vunpack.c.l.s4 1966171168
        %v4534 = vunpack.c.0.s8 %v4533
        %v4535 = vlaneseq
        %v4536 = vshrl.u32 %v4535, 7
        %v4537 = vsub.s32 %v4534, %v4536
        %v4538 = vrot.slane %v4510, %v4537
        %v4539 = vcombine.high %v4517, %v4517
        %v4540 = vcombine.high %v4524, %v4524
        %v4541 = vcombine.high %v4531, %v4531
        %v4542 = vcombine.high %v4538, %v4538
        %v4544 = vunpack.c.l.s4 1966171168
        %v4545 = vunpack.c.0.s8 %v4544
        %v4546 = vlaneseq
        %v4547 = vshrl.u32 %v4546, 7
        %v4548 = vsub.s32 %v4545, %v4547
        %v4549 = vrot.slane %v4426, %v4548
        %v4551 = vunpack.c.l.s4 1966171168
        %v4552 = vunpack.c.0.s8 %v4551
        %v4553 = vlaneseq
        %v4554 = vshrl.u32 %v4553, 7
        %v4555 = vsub.s32 %v4552, %v4554
        %v4556 = vrot.slane %v4549, %v4555
        %v4557 = vcombine.low %v4454, %v4468
        %v4558 = vcombine.low %v4476, %v4478
        %v4559 = vcombine.low %v4461, %v4475
        %v4560 = vcombine.low %v4477, %v4479
        %v4562 = vunpack.c.l.s4 1966171168
        %v4563 = vunpack.c.0.s8 %v4562
        %v4564 = vlaneseq
        %v4565 = vshrl.u32 %v4564, 7
        %v4566 = vsub.s32 %v4563, %v4565
        %v4567 = vrot.slane %v4557, %v4566
        %v4569 = vunpack.c.l.s4 1966171168
        %v4570 = vunpack.c.0.s8 %v4569
        %v4571 = vlaneseq
        %v4572 = vshrl.u32 %v4571, 7
        %v4573 = vsub.s32 %v4570, %v4572
        %v4574 = vrot.slane %v4558, %v4573
        %v4576 = vunpack.c.l.s4 1966171168
        %v4577 = vunpack.c.0.s8 %v4576
        %v4578 = vlaneseq
        %v4579 = vshrl.u32 %v4578, 7
        %v4580 = vsub.s32 %v4577, %v4579
        %v4581 = vrot.slane %v4559, %v4580
        %v4583 = vunpack.c.l.s4 1966171168
        %v4584 = vunpack.c.0.s8 %v4583
        %v4585 = vlaneseq
        %v4586 = vshrl.u32 %v4585, 7
        %v4587 = vsub.s32 %v4584, %v4586
        %v4588 = vrot.slane %v4560, %v4587
        %v4589 = vcombine.low %v4567, %v4574
        %v4590 = vcombine.low %v4581, %v4588
        %v4592 = vunpack.c.l.s4 1966171168
        %v4593 = vunpack.c.0.s8 %v4592
        %v4594 = vlaneseq
        %v4595 = vshrl.u32 %v4594, 7
        %v4596 = vsub.s32 %v4593, %v4595
        %v4597 = vrot.slane %v4589, %v4596
        %v4599 = vunpack.c.l.s4 1966171168
        %v4600 = vunpack.c.0.s8 %v4599
        %v4601 = vlaneseq
        %v4602 = vshrl.u32 %v4601, 7
        %v4603 = vsub.s32 %v4600, %v4602
        %v4604 = vrot.slane %v4590, %v4603
        %v4605 = vcombine.low %v4597, %v4604
        %v4606 = vcombine.low %v4493, %v4517
        %v4607 = vcombine.low %v4531, %v4539
        %v4608 = vcombine.low %v4541, %v4524
        %v4609 = vcombine.low %v4538, %v4540
        %v4611 = vunpack.c.l.s4 1966171168
        %v4612 = vunpack.c.0.s8 %v4611
        %v4613 = vlaneseq
        %v4614 = vshrl.u32 %v4613, 7
        %v4615 = vsub.s32 %v4612, %v4614
        %v4616 = vrot.slane %v4606, %v4615
        %v4618 = vunpack.c.l.s4 1966171168
        %v4619 = vunpack.c.0.s8 %v4618
        %v4620 = vlaneseq
        %v4621 = vshrl.u32 %v4620, 7
        %v4622 = vsub.s32 %v4619, %v4621
        %v4623 = vrot.slane %v4607, %v4622
        %v4625 = vunpack.c.l.s4 1966171168
        %v4626 = vunpack.c.0.s8 %v4625
        %v4627 = vlaneseq
        %v4628 = vshrl.u32 %v4627, 7
        %v4629 = vsub.s32 %v4626, %v4628
        %v4630 = vrot.slane %v4608, %v4629
        %v4632 = vunpack.c.l.s4 1966171168
        %v4633 = vunpack.c.0.s8 %v4632
        %v4634 = vlaneseq
        %v4635 = vshrl.u32 %v4634, 7
        %v4636 = vsub.s32 %v4633, %v4635
        %v4637 = vrot.slane %v4609, %v4636
        %v4638 = vcombine.low %v4616, %v4623
        %v4639 = vcombine.low %v4630, %v4637
        %v4641 = vunpack.c.l.s4 1966171168
        %v4642 = vunpack.c.0.s8 %v4641
        %v4643 = vlaneseq
        %v4644 = vshrl.u32 %v4643, 7
        %v4645 = vsub.s32 %v4642, %v4644
        %v4646 = vrot.slane %v4638, %v4645
        %v4648 = vunpack.c.l.s4 1966171168
        %v4649 = vunpack.c.0.s8 %v4648
        %v4650 = vlaneseq
        %v4651 = vshrl.u32 %v4650, 7
        %v4652 = vsub.s32 %v4649, %v4651
        %v4653 = vrot.slane %v4639, %v4652
        %v4654 = vcombine.low %v4646, %v4653
        %v4655 = vcombine.low %v4542, %v4556
        %v4657 = vunpack.c.l.s4 1966171168
        %v4658 = vunpack.c.0.s8 %v4657
        %v4659 = vlaneseq
        %v4660 = vshrl.u32 %v4659, 7
        %v4661 = vsub.s32 %v4658, %v4660
        %v4662 = vrot.slane %v4655, %v4661
        %v4664 = vunpack.c.l.s4 1966171168
        %v4665 = vunpack.c.0.s8 %v4664
        %v4666 = vlaneseq
        %v4667 = vshrl.u32 %v4666, 7
        %v4668 = vsub.s32 %v4665, %v4667
        %v4669 = vrot.slane %v4662, %v4668
        %v4673 = vpack.c.bf16 %v4654, %v4605
        %v4674 = vpack.c.bf16 %v4669, %v4669
        %v4679 = vunpack.c.l.b16 %v2971
        %v4680 = vunpack.c.l.b16 %v2973
        %v4681 = vunpack.c.l.b16 %v2975
        %v4682 = vunpack.c.l.b16 %v2977
        %v4683 = vpack.c.b16 %v4680, %v4679
        %v4684 = vpack.c.b16 %v4682, %v4681
        %v4688 = vsel %vm2995, %v4673, 0
        %v4691 = vsel %vm2995, %v4674, 0
        %4693 = vmatprep.subr.bf16.mxu0 0
        %4694 = vmatpush1.bf16.msra.mxu0 0
        %4695 = vmatprep.subr.bf16.mxu0 0
        %4696 = vmatpush1.bf16.msra.mxu0 0
        %4697 = vmatprep.subr.bf16.mxu0 0
        %4698 = vmatpush1.bf16.msra.mxu0 0
        %4699 = vmatprep.subr.bf16.mxu0 0
        %4700 = vmatpush1.bf16.msra.mxu0 0
        %4701 = vmatprep.subr.bf16.mxu0 0
        %4702 = vmatpush1.bf16.msra.mxu0 0
        %4703 = vmatprep.subr.bf16.mxu0 0
        %4704 = vmatpush1.bf16.msra.mxu0 0
        %4705 = vmatprep.subr.bf16.mxu0 0
        %4706 = vmatpush1.bf16.msra.mxu0 %v4684
        %4707 = vmatprep.subr.bf16.mxu0 0
        %4708 = vmatpush1.bf16.msra.mxu0 %v4683
        %4709 = vmatprep.subr.bf16.mxu0 0
        %4710 = vmatpush2.bf16.msra.mxu0 0
        %4711 = vmatprep.subr.bf16.mxu0 0
        %4712 = vmatpush2.bf16.msra.mxu0 0
        %4713 = vmatprep.subr.bf16.mxu0 0
        %4714 = vmatpush2.bf16.msra.mxu0 0
        %4715 = vmatprep.subr.bf16.mxu0 0
        %4716 = vmatpush2.bf16.msra.mxu0 0
        %4717 = vmatprep.subr.bf16.mxu0 0
        %4718 = vmatpush2.bf16.msra.mxu0 0
        %4719 = vmatprep.subr.bf16.mxu0 0
        %4720 = vmatpush2.bf16.msra.mxu0 0
        %4721 = vmatprep.subr.bf16.mxu0 0
        %4722 = vmatpush2.bf16.msra.mxu0 0
        %4723 = vmatprep.subr.bf16.mxu0 0
        %4724 = vmatpush2.bf16.msra.mxu0 0
        %4725 = vmatprep.mubr.bf16.mxu0 0
        %4726 = vmatmul.mubr.bf16.gmra.mxu0 %v4688
        %v4727 = vpop.f32.mrf.mxu0
        %v4728 = vadd.f32 0.0, %v4727
        %v4729 = vpop.f32.mrf.mxu0
        %v4730 = vpop.f32.mrf.mxu0
        %v4731 = vadd.f32 0.0, %v4730
        %v4732 = vpop.f32.mrf.mxu0
        %4733 = vmatprep.mubr.bf16.mxu0 0
        %4734 = vmatmul.mubr.bf16.gmra.mxu0 %v4691
        %v4735 = vpop.f32.mrf.mxu0
        %v4736 = vadd.f32 0.0, %v4735
        %v4737 = vpop.f32.mrf.mxu0
        %v4738 = vpop.f32.mrf.mxu0
        %v4739 = vpop.f32.mrf.mxu0
        %4740 = vdwg.mxu0
        %v4741 = vadd.f32 %v448, %v4728
        %v4742 = vadd.f32 %v451, %v4731
        %v4743 = vadd.f32 %v456, %v4736
        %4745 = vrot.lane.b32.xlu0 %v3056, 32
        %v4746 = vpop.permute.xlu0 %4745
        %v4748 = vadd.f32 %v4741, %v4746
        %v4749 = vadd.f32 %v4742, %v4746
        %v4750 = vadd.f32 %v4743, %v4746
        %v4751 = vsel %vm2995, %v4748, 0.0
        %4752 = vadd.xlane.f32.xlu0 %v4751
        %v4753 = vpop.xlane.xlu0 %4752
        %v4754 = vsel %vm2995, %v4749, 0.0
        %4755 = vadd.xlane.f32.xlu0 %v4754
        %v4756 = vpop.xlane.xlu0 %4755
        %v4757 = vsel %vm3002, %v4750, 0.0
        %4758 = vadd.xlane.f32.xlu0 %v4757
        %v4759 = vpop.xlane.xlu0 %4758
        %v4760 = vmul.f32 %v4753, %v3006
        %v4761 = vmul.f32 %v4756, %v3006
        %v4762 = vmul.f32 %v4759, %v3006
        %v4763 = vsub.f32 %v4748, %v4760
        %v4764 = vsub.f32 %v4749, %v4761
        %v4765 = vsub.f32 %v4750, %v4762
        %v4766 = vmul.f32 %v4763, %v4763
        %v4767 = vmul.f32 %v4764, %v4764
        %v4768 = vmul.f32 %v4765, %v4765
        %v4769 = vsel %vm2995, %v4766, 0.0
        %4770 = vadd.xlane.f32.xlu0 %v4769
        %v4771 = vpop.xlane.xlu0 %4770
        %v4772 = vsel %vm2995, %v4767, 0.0
        %4773 = vadd.xlane.f32.xlu0 %v4772
        %v4774 = vpop.xlane.xlu0 %4773
        %v4775 = vsel %vm3002, %v4768, 0.0
        %4776 = vadd.xlane.f32.xlu0 %v4775
        %v4777 = vpop.xlane.xlu0 %4776
        %v4778 = vmul.f32 %v4771, %v3006
        %v4779 = vmul.f32 %v4774, %v3006
        %v4780 = vmul.f32 %v4777, %v3006
        %v4781 = vadd.f32 %v4778, 1e-05
        %v4782 = vadd.f32 %v4779, 1e-05
        %v4783 = vadd.f32 %v4780, 1e-05
        %v4784 = vrsqrt.pop %v4781
        %v4785 = vrsqrt.pop %v4782
        %v4786 = vrsqrt.pop %v4783
        %v4787 = vmul.f32 %v4763, %v4784
        %v4788 = vmul.f32 %v4764, %v4785
        %v4789 = vmul.f32 %v4765, %v4786
        %4790 = vrot.lane.b32.xlu0 %v3040, 64
        %v4791 = vpop.permute.xlu0 %4790
        %v4793 = vmul.f32 %v4787, %v4791
        %v4794 = vmul.f32 %v4788, %v4791
        %v4795 = vmul.f32 %v4789, %v4791
        %4796 = vrot.lane.b32.xlu0 %v3040, 32
        %v4797 = vpop.permute.xlu0 %4796
        %v4799 = vadd.f32 %v4793, %v4797
        %v4800 = vadd.f32 %v4794, %v4797
        %v4801 = vadd.f32 %v4795, %v4797
        %v4802 = vpack.c.bf16 %v4800, %v4799
        %v4803 = vpack.c.bf16 %v4801, %v4801
        %v4804 = vlaneseq
        %v4805 = vshrl.u32 %v4804, 7
        %v4806 = vsub.s32 2, %v4805
        %v4807 = vrot.slane %v2994, %v4806
        %v4808 = vunpack.c.h.b16 %v2970
        %v4809 = vunpack.c.h.b16 %v2972
        %v4810 = vunpack.c.h.b16 %v2974
        %v4811 = vunpack.c.h.b16 %v2976
        %v4812 = vpack.c.b16 %v4809, %v4808
        %v4813 = vpack.c.b16 %v4811, %v4810
        %v4817 = vsel %vm2995, %v4802, 0
        %v4820 = vsel %vm2995, %v4803, 0
        %4822 = vmatprep.subr.bf16.mxu0 0
        %4823 = vmatpush1.bf16.msra.mxu0 0
        %4824 = vmatprep.subr.bf16.mxu0 0
        %4825 = vmatpush1.bf16.msra.mxu0 0
        %4826 = vmatprep.subr.bf16.mxu0 0
        %4827 = vmatpush1.bf16.msra.mxu0 0
        %4828 = vmatprep.subr.bf16.mxu0 0
        %4829 = vmatpush1.bf16.msra.mxu0 0
        %4830 = vmatprep.subr.bf16.mxu0 0
        %4831 = vmatpush1.bf16.msra.mxu0 0
        %4832 = vmatprep.subr.bf16.mxu0 0
        %4833 = vmatpush1.bf16.msra.mxu0 0
        %4834 = vmatprep.subr.bf16.mxu0 0
        %4835 = vmatpush1.bf16.msra.mxu0 %v4813
        %4836 = vmatprep.subr.bf16.mxu0 0
        %4837 = vmatpush1.bf16.msra.mxu0 %v4812
        %4838 = vmatprep.subr.bf16.mxu0 0
        %4839 = vmatpush2.bf16.msra.mxu0 0
        %4840 = vmatprep.subr.bf16.mxu0 0
        %4841 = vmatpush2.bf16.msra.mxu0 0
        %4842 = vmatprep.subr.bf16.mxu0 0
        %4843 = vmatpush2.bf16.msra.mxu0 0
        %4844 = vmatprep.subr.bf16.mxu0 0
        %4845 = vmatpush2.bf16.msra.mxu0 0
        %4846 = vmatprep.subr.bf16.mxu0 0
        %4847 = vmatpush2.bf16.msra.mxu0 0
        %4848 = vmatprep.subr.bf16.mxu0 0
        %4849 = vmatpush2.bf16.msra.mxu0 0
        %4850 = vmatprep.subr.bf16.mxu0 0
        %4851 = vmatpush2.bf16.msra.mxu0 0
        %4852 = vmatprep.subr.bf16.mxu0 0
        %4853 = vmatpush2.bf16.msra.mxu0 0
        %4854 = vmatprep.mubr.bf16.mxu0 0
        %4855 = vmatmul.mubr.bf16.gmra.mxu0 %v4817
        %v4856 = vpop.f32.mrf.mxu0
        %v4857 = vadd.f32 %v4807, %v4856
        %v4858 = vpop.f32.mrf.mxu0
        %v4859 = vpop.f32.mrf.mxu0
        %v4860 = vadd.f32 %v4807, %v4859
        %v4861 = vpop.f32.mrf.mxu0
        %4862 = vmatprep.mubr.bf16.mxu0 0
        %4863 = vmatmul.mubr.bf16.gmra.mxu0 %v4820
        %v4864 = vpop.f32.mrf.mxu0
        %v4865 = vadd.f32 %v4807, %v4864
        %v4866 = vpop.f32.mrf.mxu0
        %v4867 = vpop.f32.mrf.mxu0
        %v4868 = vpop.f32.mrf.mxu0
        %4869 = vdwg.mxu0
        %v4870 = vmul.f32 %v4857, 0.5
        %v4871 = vmul.f32 %v4860, 0.5
        %v4872 = vmul.f32 %v4865, 0.5
        %v4873 = vrcp.pop 1.4142135
        %v4874 = vmul.f32 %v4857, %v4873
        %v4875 = vmul.f32 %v4860, %v4873
        %v4876 = vmul.f32 %v4865, %v4873
        %vm4877 = vcmp.ge.f32.partialorder %v4874, 0.0
        %vm4878 = vcmp.ge.f32.partialorder %v4875, 0.0
        %vm4879 = vcmp.ge.f32.partialorder %v4876, 0.0
        %v4880 = vsel %vm4877, 1.0, -1.0
        %v4881 = vsel %vm4878, 1.0, -1.0
        %v4882 = vsel %vm4879, 1.0, -1.0
        %v4883 = vand.u32 2147483647, %v4874
        %v4884 = vand.u32 2147483647, %v4875
        %v4885 = vand.u32 2147483647, %v4876
        %v4886 = vmul.f32 %v4883, 0.3275911
        %v4887 = vmul.f32 %v4884, 0.3275911
        %v4888 = vmul.f32 %v4885, 0.3275911
        %v4889 = vadd.f32 %v4886, 1.0
        %v4890 = vadd.f32 %v4887, 1.0
        %v4891 = vadd.f32 %v4888, 1.0
        %v4892 = vrcp.pop %v4889
        %v4893 = vmul.f32 1.0, %v4892
        %v4894 = vrcp.pop %v4890
        %v4895 = vmul.f32 1.0, %v4894
        %v4896 = vrcp.pop %v4891
        %v4897 = vmul.f32 1.0, %v4896
        %v4898 = vmul.f32 %v4893, 1.0614054
        %v4899 = vmul.f32 %v4895, 1.0614054
        %v4900 = vmul.f32 %v4897, 1.0614054
        %v4901 = vadd.f32 %v4898, -1.4531521
        %v4902 = vadd.f32 %v4899, -1.4531521
        %v4903 = vadd.f32 %v4900, -1.4531521
        %v4904 = vmul.f32 %v4901, %v4893
        %v4905 = vmul.f32 %v4902, %v4895
        %v4906 = vmul.f32 %v4903, %v4897
        %v4907 = vadd.f32 %v4904, 1.4214138
        %v4908 = vadd.f32 %v4905, 1.4214138
        %v4909 = vadd.f32 %v4906, 1.4214138
        %v4910 = vmul.f32 %v4907, %v4893
        %v4911 = vmul.f32 %v4908, %v4895
        %v4912 = vmul.f32 %v4909, %v4897
        %v4913 = vadd.f32 %v4910, -0.28449672
        %v4914 = vadd.f32 %v4911, -0.28449672
        %v4915 = vadd.f32 %v4912, -0.28449672
        %v4916 = vmul.f32 %v4913, %v4893
        %v4917 = vmul.f32 %v4914, %v4895
        %v4918 = vmul.f32 %v4915, %v4897
        %v4919 = vadd.f32 %v4916, 0.2548296
        %v4920 = vadd.f32 %v4917, 0.2548296
        %v4921 = vadd.f32 %v4918, 0.2548296
        %v4922 = vmul.f32 %v4919, %v4893
        %v4923 = vmul.f32 %v4920, %v4895
        %v4924 = vmul.f32 %v4921, %v4897
        %v4925 = vsub.f32 0.0, %v4883
        %v4926 = vsub.f32 0.0, %v4884
        %v4927 = vsub.f32 0.0, %v4885
        %v4928 = vmul.f32 %v4925, %v4883
        %v4929 = vmul.f32 %v4926, %v4884
        %v4930 = vmul.f32 %v4927, %v4885
        %v4931 = vmul.f32 %v4928, 1.442695
        %v4932 = vpow.pop %v4931
        %v4933 = vmul.f32 %v4929, 1.442695
        %v4934 = vpow.pop %v4933
        %v4935 = vmul.f32 %v4930, 1.442695
        %v4936 = vpow.pop %v4935
        %v4937 = vmul.f32 %v4922, %v4932
        %v4938 = vmul.f32 %v4923, %v4934
        %v4939 = vmul.f32 %v4924, %v4936
        %v4940 = vsub.f32 1.0, %v4937
        %v4941 = vsub.f32 1.0, %v4938
        %v4942 = vsub.f32 1.0, %v4939
        %v4943 = vmul.f32 %v4880, %v4940
        %v4944 = vmul.f32 %v4881, %v4941
        %v4945 = vmul.f32 %v4882, %v4942
        %v4946 = vadd.f32 %v4943, 1.0
        %v4947 = vadd.f32 %v4944, 1.0
        %v4948 = vadd.f32 %v4945, 1.0
        %v4949 = vmul.f32 %v4870, %v4946
        %v4950 = vmul.f32 %v4871, %v4947
        %v4951 = vmul.f32 %v4872, %v4948
        %v4952 = vpack.c.bf16 %v4950, %v4949
        %v4953 = vpack.c.bf16 %v4951, %v4951
        %v4970 = vunpack.c.l.b16 %v2978
        %v4971 = vunpack.c.l.b16 %v2979
        %v4972 = vunpack.c.l.b16 %v2980
        %v4973 = vunpack.c.l.b16 %v2981
        %v4974 = vunpack.c.l.b16 %v2982
        %v4975 = vunpack.c.l.b16 %v2983
        %v4976 = vunpack.c.l.b16 %v2984
        %v4977 = vunpack.c.l.b16 %v2985
        %v4978 = vunpack.c.l.b16 %v2986
        %v4979 = vunpack.c.l.b16 %v2987
        %v4980 = vunpack.c.l.b16 %v2988
        %v4981 = vunpack.c.l.b16 %v2989
        %v4982 = vunpack.c.l.b16 %v2990
        %v4983 = vunpack.c.l.b16 %v2991
        %v4984 = vunpack.c.l.b16 %v2992
        %v4985 = vunpack.c.l.b16 %v2993
        %v4986 = vpack.c.b16 %v4971, %v4970
        %v4987 = vpack.c.b16 %v4973, %v4972
        %v4988 = vpack.c.b16 %v4975, %v4974
        %v4989 = vpack.c.b16 %v4977, %v4976
        %v4990 = vpack.c.b16 %v4979, %v4978
        %v4991 = vpack.c.b16 %v4981, %v4980
        %v4992 = vpack.c.b16 %v4983, %v4982
        %v4993 = vpack.c.b16 %v4985, %v4984
        %5002 = vmatprep.subr.bf16.mxu0 0
        %5003 = vmatpush1.bf16.msra.mxu0 %v4993
        %5004 = vmatprep.subr.bf16.mxu0 0
        %5005 = vmatpush1.bf16.msra.mxu0 %v4992
        %5006 = vmatprep.subr.bf16.mxu0 0
        %5007 = vmatpush1.bf16.msra.mxu0 %v4991
        %5008 = vmatprep.subr.bf16.mxu0 0
        %5009 = vmatpush1.bf16.msra.mxu0 %v4990
        %5010 = vmatprep.subr.bf16.mxu0 0
        %5011 = vmatpush1.bf16.msra.mxu0 %v4989
        %5012 = vmatprep.subr.bf16.mxu0 0
        %5013 = vmatpush1.bf16.msra.mxu0 %v4988
        %5014 = vmatprep.subr.bf16.mxu0 0
        %5015 = vmatpush1.bf16.msra.mxu0 %v4987
        %5016 = vmatprep.subr.bf16.mxu0 0
        %5017 = vmatpush1.bf16.msra.mxu0 %v4986
        %5018 = vmatprep.subr.bf16.mxu0 0
        %5019 = vmatpush2.bf16.msra.mxu0 0
        %5020 = vmatprep.subr.bf16.mxu0 0
        %5021 = vmatpush2.bf16.msra.mxu0 0
        %5022 = vmatprep.subr.bf16.mxu0 0
        %5023 = vmatpush2.bf16.msra.mxu0 0
        %5024 = vmatprep.subr.bf16.mxu0 0
        %5025 = vmatpush2.bf16.msra.mxu0 0
        %5026 = vmatprep.subr.bf16.mxu0 0
        %5027 = vmatpush2.bf16.msra.mxu0 0
        %5028 = vmatprep.subr.bf16.mxu0 0
        %5029 = vmatpush2.bf16.msra.mxu0 0
        %5030 = vmatprep.subr.bf16.mxu0 0
        %5031 = vmatpush2.bf16.msra.mxu0 0
        %5032 = vmatprep.subr.bf16.mxu0 0
        %5033 = vmatpush2.bf16.msra.mxu0 0
        %5034 = vmatprep.mubr.bf16.mxu0 0
        %5035 = vmatmul.mubr.bf16.gmra.mxu0 %v4952
        %v5036 = vpop.f32.mrf.mxu0
        %v5037 = vadd.f32 0.0, %v5036
        %v5038 = vpop.f32.mrf.mxu0
        %v5039 = vpop.f32.mrf.mxu0
        %v5040 = vadd.f32 0.0, %v5039
        %v5041 = vpop.f32.mrf.mxu0
        %5042 = vmatprep.mubr.bf16.mxu0 0
        %5043 = vmatmul.mubr.bf16.gmra.mxu0 %v4953
        %v5044 = vpop.f32.mrf.mxu0
        %v5045 = vadd.f32 0.0, %v5044
        %v5046 = vpop.f32.mrf.mxu0
        %v5047 = vpop.f32.mrf.mxu0
        %v5048 = vpop.f32.mrf.mxu0
        %5049 = vdwg.mxu0
        %v5050 = vadd.f32 %v4748, %v5037
        %v5051 = vadd.f32 %v4749, %v5040
        %v5052 = vadd.f32 %v4750, %v5045
        %v5053 = vlaneseq
        %v5054 = vshrl.u32 %v5053, 7
        %v5055 = vsub.s32 3, %v5054
        %v5056 = vrot.slane %v2994, %v5055
        %v5057 = vadd.f32 %v5050, %v5056
        %v5058 = vadd.f32 %v5051, %v5056
        %v5059 = vadd.f32 %v5052, %v5056
        %s5060 = scalar_lea.vmem %s6, 48
        %v5061 = vld [vmem:[%s5060] sm:$0xff]
        %v5062 = vld [vmem:[%s5060 + $0x8] sm:$0xf]
        %v5063 = vld [vmem:[%s5060 + $0xc] sm:$0xff]
        %v5064 = vld [vmem:[%s5060 + $0x14] sm:$0xf]
        %v5065 = vld [vmem:[%s5060 + $0x18] sm:$0xff]
        %v5066 = vld [vmem:[%s5060 + $0x20] sm:$0xf]
        %v5067 = vld [vmem:[%s5060 + $0x24] sm:$0xff]
        %v5068 = vld [vmem:[%s5060 + $0x2c] sm:$0xf]
        %s5069 = scalar_lea.vmem %s7, 64
        %v5070 = vld [vmem:[%s5069] sm:$0xf]
        %v5071 = vld [vmem:[%s5069 + $0x4] sm:$0xf]
        %v5072 = vld [vmem:[%s5069 + $0x8] sm:$0xf]
        %v5073 = vld [vmem:[%s5069 + $0xc] sm:$0xf]
        %v5074 = vld [vmem:[%s5069 + $0x10] sm:$0xf]
        %v5075 = vld [vmem:[%s5069 + $0x14] sm:$0xf]
        %v5076 = vld [vmem:[%s5069 + $0x18] sm:$0xf]
        %v5077 = vld [vmem:[%s5069 + $0x1c] sm:$0xf]
        %v5078 = vld [vmem:[%s5069 + $0x20] sm:$0xf]
        %v5079 = vld [vmem:[%s5069 + $0x24] sm:$0xf]
        %v5080 = vld [vmem:[%s5069 + $0x28] sm:$0xf]
        %v5081 = vld [vmem:[%s5069 + $0x2c] sm:$0xf]
        %v5082 = vld [vmem:[%s5069 + $0x30] sm:$0xf]
        %v5083 = vld [vmem:[%s5069 + $0x34] sm:$0xf]
        %v5084 = vld [vmem:[%s5069 + $0x38] sm:$0xf]
        %v5085 = vld [vmem:[%s5069 + $0x3c] sm:$0xf]
        %s5086 = scalar_lea.vmem %s8, 4
        %v5087 = vld [vmem:[%s5086] sm:$0xf]
        %v5088 = vsel %vm2995, %v5057, 0.0
        %5089 = vadd.xlane.f32.xlu0 %v5088
        %v5090 = vpop.xlane.xlu0 %5089
        %v5091 = vsel %vm2995, %v5058, 0.0
        %5092 = vadd.xlane.f32.xlu0 %v5091
        %v5093 = vpop.xlane.xlu0 %5092
        %v5094 = vsel %vm3002, %v5059, 0.0
        %5095 = vadd.xlane.f32.xlu0 %v5094
        %v5096 = vpop.xlane.xlu0 %5095
        %v5097 = vmul.f32 %v5090, %v3006
        %v5098 = vmul.f32 %v5093, %v3006
        %v5099 = vmul.f32 %v5096, %v3006
        %v5100 = vsub.f32 %v5057, %v5097
        %v5101 = vsub.f32 %v5058, %v5098
        %v5102 = vsub.f32 %v5059, %v5099
        %v5103 = vmul.f32 %v5100, %v5100
        %v5104 = vmul.f32 %v5101, %v5101
        %v5105 = vmul.f32 %v5102, %v5102
        %v5106 = vsel %vm2995, %v5103, 0.0
        %5107 = vadd.xlane.f32.xlu0 %v5106
        %v5108 = vpop.xlane.xlu0 %5107
        %v5109 = vsel %vm2995, %v5104, 0.0
        %5110 = vadd.xlane.f32.xlu0 %v5109
        %v5111 = vpop.xlane.xlu0 %5110
        %v5112 = vsel %vm3002, %v5105, 0.0
        %5113 = vadd.xlane.f32.xlu0 %v5112
        %v5114 = vpop.xlane.xlu0 %5113
        %v5115 = vmul.f32 %v5108, %v3006
        %v5116 = vmul.f32 %v5111, %v3006
        %v5117 = vmul.f32 %v5114, %v3006
        %v5118 = vadd.f32 %v5115, 1e-05
        %v5119 = vadd.f32 %v5116, 1e-05
        %v5120 = vadd.f32 %v5117, 1e-05
        %v5121 = vrsqrt.pop %v5118
        %v5122 = vrsqrt.pop %v5119
        %v5123 = vrsqrt.pop %v5120
        %v5124 = vmul.f32 %v5100, %v5121
        %v5125 = vmul.f32 %v5101, %v5122
        %v5126 = vmul.f32 %v5102, %v5123
        %v5127 = vlaneseq
        %v5128 = vshrl.u32 %v5127, 7
        %v5129 = vsub.s32 0, %v5128
        %v5130 = vrot.slane %v5087, %v5129
        %v5131 = vmul.f32 %v5124, %v5130
        %v5132 = vmul.f32 %v5125, %v5130
        %v5133 = vmul.f32 %v5126, %v5130
        %5135 = vrot.lane.b32.xlu0 %v5130, 96
        %v5136 = vpop.permute.xlu0 %5135
        %v5138 = vadd.f32 %v5131, %v5136
        %v5139 = vadd.f32 %v5132, %v5136
        %v5140 = vadd.f32 %v5133, %v5136
        %v5141 = vpack.c.bf16 %v5139, %v5138
        %v5142 = vpack.c.bf16 %v5140, %v5140
        %v5143 = vlaneseq
        %v5144 = vshrl.u32 %v5143, 7
        %v5145 = vsub.s32 1, %v5144
        %v5146 = vrot.slane %v5087, %v5145
        %v5151 = vunpack.c.l.b16 %v5061
        %v5152 = vunpack.c.l.b16 %v5063
        %v5153 = vunpack.c.l.b16 %v5065
        %v5154 = vunpack.c.l.b16 %v5067
        %v5155 = vpack.c.b16 %v5152, %v5151
        %v5156 = vpack.c.b16 %v5154, %v5153
        %v5160 = vsel %vm2995, %v5141, 0
        %v5163 = vsel %vm2995, %v5142, 0
        %5165 = vmatprep.subr.bf16.mxu0 0
        %5166 = vmatpush1.bf16.msra.mxu0 0
        %5167 = vmatprep.subr.bf16.mxu0 0
        %5168 = vmatpush1.bf16.msra.mxu0 0
        %5169 = vmatprep.subr.bf16.mxu0 0
        %5170 = vmatpush1.bf16.msra.mxu0 0
        %5171 = vmatprep.subr.bf16.mxu0 0
        %5172 = vmatpush1.bf16.msra.mxu0 0
        %5173 = vmatprep.subr.bf16.mxu0 0
        %5174 = vmatpush1.bf16.msra.mxu0 0
        %5175 = vmatprep.subr.bf16.mxu0 0
        %5176 = vmatpush1.bf16.msra.mxu0 0
        %5177 = vmatprep.subr.bf16.mxu0 0
        %5178 = vmatpush1.bf16.msra.mxu0 %v5156
        %5179 = vmatprep.subr.bf16.mxu0 0
        %5180 = vmatpush1.bf16.msra.mxu0 %v5155
        %5181 = vmatprep.subr.bf16.mxu0 0
        %5182 = vmatpush2.bf16.msra.mxu0 0
        %5183 = vmatprep.subr.bf16.mxu0 0
        %5184 = vmatpush2.bf16.msra.mxu0 0
        %5185 = vmatprep.subr.bf16.mxu0 0
        %5186 = vmatpush2.bf16.msra.mxu0 0
        %5187 = vmatprep.subr.bf16.mxu0 0
        %5188 = vmatpush2.bf16.msra.mxu0 0
        %5189 = vmatprep.subr.bf16.mxu0 0
        %5190 = vmatpush2.bf16.msra.mxu0 0
        %5191 = vmatprep.subr.bf16.mxu0 0
        %5192 = vmatpush2.bf16.msra.mxu0 0
        %5193 = vmatprep.subr.bf16.mxu0 0
        %5194 = vmatpush2.bf16.msra.mxu0 0
        %5195 = vmatprep.subr.bf16.mxu0 0
        %5196 = vmatpush2.bf16.msra.mxu0 0
        %5197 = vmatprep.mubr.bf16.mxu0 0
        %5198 = vmatmul.mubr.bf16.gmra.mxu0 %v5160
        %v5199 = vpop.f32.mrf.mxu0
        %v5200 = vadd.f32 %v5146, %v5199
        %v5201 = vpop.f32.mrf.mxu0
        %v5202 = vpop.f32.mrf.mxu0
        %v5203 = vadd.f32 %v5146, %v5202
        %v5204 = vpop.f32.mrf.mxu0
        %5205 = vmatprep.mubr.bf16.mxu0 0
        %5206 = vmatmul.mubr.bf16.gmra.mxu0 %v5163
        %v5207 = vpop.f32.mrf.mxu0
        %v5208 = vadd.f32 %v5146, %v5207
        %v5209 = vpop.f32.mrf.mxu0
        %v5210 = vpop.f32.mrf.mxu0
        %v5211 = vpop.f32.mrf.mxu0
        %5212 = vdwg.mxu0
        %v5216 = vcombine.high %v5200, %v5200
        %v5218 = vunpack.c.l.s4 1966171168
        %v5219 = vunpack.c.0.s8 %v5218
        %v5220 = vlaneseq
        %v5221 = vshrl.u32 %v5220, 7
        %v5222 = vsub.s32 %v5219, %v5221
        %v5223 = vrot.slane %v5200, %v5222
        %v5225 = vunpack.c.l.s4 1966171168
        %v5226 = vunpack.c.0.s8 %v5225
        %v5227 = vlaneseq
        %v5228 = vshrl.u32 %v5227, 7
        %v5229 = vsub.s32 %v5226, %v5228
        %v5230 = vrot.slane %v5216, %v5229
        %v5231 = vcombine.high %v5223, %v5223
        %v5232 = vcombine.high %v5230, %v5230
        %v5234 = vunpack.c.l.s4 1966171168
        %v5235 = vunpack.c.0.s8 %v5234
        %v5236 = vlaneseq
        %v5237 = vshrl.u32 %v5236, 7
        %v5238 = vsub.s32 %v5235, %v5237
        %v5239 = vrot.slane %v5223, %v5238
        %v5241 = vunpack.c.l.s4 1966171168
        %v5242 = vunpack.c.0.s8 %v5241
        %v5243 = vlaneseq
        %v5244 = vshrl.u32 %v5243, 7
        %v5245 = vsub.s32 %v5242, %v5244
        %v5246 = vrot.slane %v5230, %v5245
        %v5248 = vunpack.c.l.s4 1966171168
        %v5249 = vunpack.c.0.s8 %v5248
        %v5250 = vlaneseq
        %v5251 = vshrl.u32 %v5250, 7
        %v5252 = vsub.s32 %v5249, %v5251
        %v5253 = vrot.slane %v5231, %v5252
        %v5255 = vunpack.c.l.s4 1966171168
        %v5256 = vunpack.c.0.s8 %v5255
        %v5257 = vlaneseq
        %v5258 = vshrl.u32 %v5257, 7
        %v5259 = vsub.s32 %v5256, %v5258
        %v5260 = vrot.slane %v5232, %v5259
        %v5261 = vcombine.high %v5239, %v5239
        %v5262 = vcombine.high %v5246, %v5246
        %v5263 = vcombine.high %v5253, %v5253
        %v5264 = vcombine.high %v5260, %v5260
        %v5265 = vcombine.high %v5203, %v5203
        %v5267 = vunpack.c.l.s4 1966171168
        %v5268 = vunpack.c.0.s8 %v5267
        %v5269 = vlaneseq
        %v5270 = vshrl.u32 %v5269, 7
        %v5271 = vsub.s32 %v5268, %v5270
        %v5272 = vrot.slane %v5203, %v5271
        %v5274 = vunpack.c.l.s4 1966171168
        %v5275 = vunpack.c.0.s8 %v5274
        %v5276 = vlaneseq
        %v5277 = vshrl.u32 %v5276, 7
        %v5278 = vsub.s32 %v5275, %v5277
        %v5279 = vrot.slane %v5265, %v5278
        %v5280 = vcombine.high %v5272, %v5272
        %v5281 = vcombine.high %v5279, %v5279
        %v5283 = vunpack.c.l.s4 1966171168
        %v5284 = vunpack.c.0.s8 %v5283
        %v5285 = vlaneseq
        %v5286 = vshrl.u32 %v5285, 7
        %v5287 = vsub.s32 %v5284, %v5286
        %v5288 = vrot.slane %v5272, %v5287
        %v5290 = vunpack.c.l.s4 1966171168
        %v5291 = vunpack.c.0.s8 %v5290
        %v5292 = vlaneseq
        %v5293 = vshrl.u32 %v5292, 7
        %v5294 = vsub.s32 %v5291, %v5293
        %v5295 = vrot.slane %v5279, %v5294
        %v5297 = vunpack.c.l.s4 1966171168
        %v5298 = vunpack.c.0.s8 %v5297
        %v5299 = vlaneseq
        %v5300 = vshrl.u32 %v5299, 7
        %v5301 = vsub.s32 %v5298, %v5300
        %v5302 = vrot.slane %v5280, %v5301
        %v5304 = vunpack.c.l.s4 1966171168
        %v5305 = vunpack.c.0.s8 %v5304
        %v5306 = vlaneseq
        %v5307 = vshrl.u32 %v5306, 7
        %v5308 = vsub.s32 %v5305, %v5307
        %v5309 = vrot.slane %v5281, %v5308
        %v5310 = vcombine.high %v5288, %v5288
        %v5311 = vcombine.high %v5295, %v5295
        %v5312 = vcombine.high %v5302, %v5302
        %v5313 = vcombine.high %v5309, %v5309
        %v5315 = vunpack.c.l.s4 1966171168
        %v5316 = vunpack.c.0.s8 %v5315
        %v5317 = vlaneseq
        %v5318 = vshrl.u32 %v5317, 7
        %v5319 = vsub.s32 %v5316, %v5318
        %v5320 = vrot.slane %v5208, %v5319
        %v5321 = vcombine.high %v5320, %v5320
        %v5323 = vunpack.c.l.s4 1966171168
        %v5324 = vunpack.c.0.s8 %v5323
        %v5325 = vlaneseq
        %v5326 = vshrl.u32 %v5325, 7
        %v5327 = vsub.s32 %v5324, %v5326
        %v5328 = vrot.slane %v5320, %v5327
        %v5330 = vunpack.c.l.s4 1966171168
        %v5331 = vunpack.c.0.s8 %v5330
        %v5332 = vlaneseq
        %v5333 = vshrl.u32 %v5332, 7
        %v5334 = vsub.s32 %v5331, %v5333
        %v5335 = vrot.slane %v5321, %v5334
        %v5336 = vcombine.low %v5239, %v5253
        %v5337 = vcombine.low %v5261, %v5263
        %v5338 = vcombine.low %v5246, %v5260
        %v5339 = vcombine.low %v5262, %v5264
        %v5341 = vunpack.c.l.s4 1966171168
        %v5342 = vunpack.c.0.s8 %v5341
        %v5343 = vlaneseq
        %v5344 = vshrl.u32 %v5343, 7
        %v5345 = vsub.s32 %v5342, %v5344
        %v5346 = vrot.slane %v5336, %v5345
        %v5348 = vunpack.c.l.s4 1966171168
        %v5349 = vunpack.c.0.s8 %v5348
        %v5350 = vlaneseq
        %v5351 = vshrl.u32 %v5350, 7
        %v5352 = vsub.s32 %v5349, %v5351
        %v5353 = vrot.slane %v5337, %v5352
        %v5355 = vunpack.c.l.s4 1966171168
        %v5356 = vunpack.c.0.s8 %v5355
        %v5357 = vlaneseq
        %v5358 = vshrl.u32 %v5357, 7
        %v5359 = vsub.s32 %v5356, %v5358
        %v5360 = vrot.slane %v5338, %v5359
        %v5362 = vunpack.c.l.s4 1966171168
        %v5363 = vunpack.c.0.s8 %v5362
        %v5364 = vlaneseq
        %v5365 = vshrl.u32 %v5364, 7
        %v5366 = vsub.s32 %v5363, %v5365
        %v5367 = vrot.slane %v5339, %v5366
        %v5368 = vcombine.low %v5346, %v5353
        %v5369 = vcombine.low %v5360, %v5367
        %v5371 = vunpack.c.l.s4 1966171168
        %v5372 = vunpack.c.0.s8 %v5371
        %v5373 = vlaneseq
        %v5374 = vshrl.u32 %v5373, 7
        %v5375 = vsub.s32 %v5372, %v5374
        %v5376 = vrot.slane %v5368, %v5375
        %v5378 = vunpack.c.l.s4 1966171168
        %v5379 = vunpack.c.0.s8 %v5378
        %v5380 = vlaneseq
        %v5381 = vshrl.u32 %v5380, 7
        %v5382 = vsub.s32 %v5379, %v5381
        %v5383 = vrot.slane %v5369, %v5382
        %v5384 = vcombine.low %v5376, %v5383
        %v5386 = vunpack.c.l.s4 1966171168
        %v5387 = vunpack.c.0.s8 %v5386
        %v5388 = vlaneseq
        %v5389 = vshrl.u32 %v5388, 7
        %v5390 = vsub.s32 %v5387, %v5389
        %v5391 = vrot.slane %v5288, %v5390
        %v5393 = vunpack.c.l.s4 1966171168
        %v5394 = vunpack.c.0.s8 %v5393
        %v5395 = vlaneseq
        %v5396 = vshrl.u32 %v5395, 7
        %v5397 = vsub.s32 %v5394, %v5396
        %v5398 = vrot.slane %v5391, %v5397
        %v5399 = vcombine.low %v5302, %v5310
        %v5400 = vcombine.low %v5312, %v5295
        %v5401 = vcombine.low %v5309, %v5311
        %v5402 = vcombine.low %v5313, %v5328
        %v5404 = vunpack.c.l.s4 1966171168
        %v5405 = vunpack.c.0.s8 %v5404
        %v5406 = vlaneseq
        %v5407 = vshrl.u32 %v5406, 7
        %v5408 = vsub.s32 %v5405, %v5407
        %v5409 = vrot.slane %v5399, %v5408
        %v5411 = vunpack.c.l.s4 1966171168
        %v5412 = vunpack.c.0.s8 %v5411
        %v5413 = vlaneseq
        %v5414 = vshrl.u32 %v5413, 7
        %v5415 = vsub.s32 %v5412, %v5414
        %v5416 = vrot.slane %v5400, %v5415
        %v5418 = vunpack.c.l.s4 1966171168
        %v5419 = vunpack.c.0.s8 %v5418
        %v5420 = vlaneseq
        %v5421 = vshrl.u32 %v5420, 7
        %v5422 = vsub.s32 %v5419, %v5421
        %v5423 = vrot.slane %v5401, %v5422
        %v5425 = vunpack.c.l.s4 1966171168
        %v5426 = vunpack.c.0.s8 %v5425
        %v5427 = vlaneseq
        %v5428 = vshrl.u32 %v5427, 7
        %v5429 = vsub.s32 %v5426, %v5428
        %v5430 = vrot.slane %v5402, %v5429
        %v5431 = vcombine.low %v5409, %v5416
        %v5432 = vcombine.low %v5423, %v5430
        %v5434 = vunpack.c.l.s4 1966171168
        %v5435 = vunpack.c.0.s8 %v5434
        %v5436 = vlaneseq
        %v5437 = vshrl.u32 %v5436, 7
        %v5438 = vsub.s32 %v5435, %v5437
        %v5439 = vrot.slane %v5431, %v5438
        %v5441 = vunpack.c.l.s4 1966171168
        %v5442 = vunpack.c.0.s8 %v5441
        %v5443 = vlaneseq
        %v5444 = vshrl.u32 %v5443, 7
        %v5445 = vsub.s32 %v5442, %v5444
        %v5446 = vrot.slane %v5432, %v5445
        %v5447 = vcombine.low %v5439, %v5446
        %v5449 = vunpack.c.l.s4 1966171168
        %v5450 = vunpack.c.0.s8 %v5449
        %v5451 = vlaneseq
        %v5452 = vshrl.u32 %v5451, 7
        %v5453 = vsub.s32 %v5450, %v5452
        %v5454 = vrot.slane %v5335, %v5453
        %v5456 = vunpack.c.l.s4 1966171168
        %v5457 = vunpack.c.0.s8 %v5456
        %v5458 = vlaneseq
        %v5459 = vshrl.u32 %v5458, 7
        %v5460 = vsub.s32 %v5457, %v5459
        %v5461 = vrot.slane %v5454, %v5460
        %v5466 = vpack.c.bf16 %v5398, %v5384
        %v5467 = vpack.c.bf16 %v5461, %v5447
        %5469 = vrot.lane.b32.xlu0 %v5466, 96
        %v5470 = vpop.permute.xlu0 %5469
        %v5472 = vsel %vm402, %v5466, 0
        %v5475 = vsel %vm402, %v5470, 0
        %5477 = vmatprep.subr.bf16.mxu0 0
        %5478 = vmatpush1.bf16.xpose.msra.mxu0 0
        %5479 = vmatprep.subr.bf16.mxu0 0
        %5480 = vmatpush1.bf16.xpose.msra.mxu0 0
        %5481 = vmatprep.subr.bf16.mxu0 0
        %5482 = vmatpush1.bf16.xpose.msra.mxu0 0
        %5483 = vmatprep.subr.bf16.mxu0 0
        %5484 = vmatpush1.bf16.xpose.msra.mxu0 0
        %5485 = vmatprep.subr.bf16.mxu0 0
        %5486 = vmatpush1.bf16.xpose.msra.mxu0 0
        %5487 = vmatprep.subr.bf16.mxu0 0
        %5488 = vmatpush1.bf16.xpose.msra.mxu0 0
        %5489 = vmatprep.subr.bf16.mxu0 0
        %5490 = vmatpush1.bf16.xpose.msra.mxu0 0
        %5491 = vmatprep.subr.bf16.mxu0 0
        %5492 = vmatpush1.bf16.xpose.msra.mxu0 %v5475
        %5493 = vmatprep.subr.bf16.mxu0 0
        %5494 = vmatpush2.bf16.xpose.msra.mxu0 0
        %5495 = vmatprep.subr.bf16.mxu0 0
        %5496 = vmatpush2.bf16.xpose.msra.mxu0 0
        %5497 = vmatprep.subr.bf16.mxu0 0
        %5498 = vmatpush2.bf16.xpose.msra.mxu0 0
        %5499 = vmatprep.subr.bf16.mxu0 0
        %5500 = vmatpush2.bf16.xpose.msra.mxu0 0
        %5501 = vmatprep.subr.bf16.mxu0 0
        %5502 = vmatpush2.bf16.xpose.msra.mxu0 0
        %5503 = vmatprep.subr.bf16.mxu0 0
        %5504 = vmatpush2.bf16.xpose.msra.mxu0 0
        %5505 = vmatprep.subr.bf16.mxu0 0
        %5506 = vmatpush2.bf16.xpose.msra.mxu0 0
        %5507 = vmatprep.subr.bf16.mxu0 0
        %5508 = vmatpush2.bf16.xpose.msra.mxu0 0
        %5509 = vmatprep.mubr.bf16.mxu0 0
        %5510 = vmatmul.mubr.bf16.gmra.mxu0 %v5472
        %v5511 = vpop.f32.mrf.mxu0
        %v5512 = vadd.f32 0.0, %v5511
        %v5513 = vpop.f32.mrf.mxu0
        %v5514 = vpop.f32.mrf.mxu0
        %v5515 = vadd.f32 0.0, %v5514
        %v5516 = vpop.f32.mrf.mxu0
        %5517 = vdwg.mxu0
        %5519 = vrot.lane.b32.xlu0 %v5467, 96
        %v5520 = vpop.permute.xlu0 %5519
        %v5522 = vsel %vm402, %v5467, 0
        %v5525 = vsel %vm402, %v5520, 0
        %5527 = vmatprep.subr.bf16.mxu0 0
        %5528 = vmatpush1.bf16.xpose.msra.mxu0 0
        %5529 = vmatprep.subr.bf16.mxu0 0
        %5530 = vmatpush1.bf16.xpose.msra.mxu0 0
        %5531 = vmatprep.subr.bf16.mxu0 0
        %5532 = vmatpush1.bf16.xpose.msra.mxu0 0
        %5533 = vmatprep.subr.bf16.mxu0 0
        %5534 = vmatpush1.bf16.xpose.msra.mxu0 0
        %5535 = vmatprep.subr.bf16.mxu0 0
        %5536 = vmatpush1.bf16.xpose.msra.mxu0 0
        %5537 = vmatprep.subr.bf16.mxu0 0
        %5538 = vmatpush1.bf16.xpose.msra.mxu0 0
        %5539 = vmatprep.subr.bf16.mxu0 0
        %5540 = vmatpush1.bf16.xpose.msra.mxu0 0
        %5541 = vmatprep.subr.bf16.mxu0 0
        %5542 = vmatpush1.bf16.xpose.msra.mxu0 %v5525
        %5543 = vmatprep.subr.bf16.mxu0 0
        %5544 = vmatpush2.bf16.xpose.msra.mxu0 0
        %5545 = vmatprep.subr.bf16.mxu0 0
        %5546 = vmatpush2.bf16.xpose.msra.mxu0 0
        %5547 = vmatprep.subr.bf16.mxu0 0
        %5548 = vmatpush2.bf16.xpose.msra.mxu0 0
        %5549 = vmatprep.subr.bf16.mxu0 0
        %5550 = vmatpush2.bf16.xpose.msra.mxu0 0
        %5551 = vmatprep.subr.bf16.mxu0 0
        %5552 = vmatpush2.bf16.xpose.msra.mxu0 0
        %5553 = vmatprep.subr.bf16.mxu0 0
        %5554 = vmatpush2.bf16.xpose.msra.mxu0 0
        %5555 = vmatprep.subr.bf16.mxu0 0
        %5556 = vmatpush2.bf16.xpose.msra.mxu0 0
        %5557 = vmatprep.subr.bf16.mxu0 0
        %5558 = vmatpush2.bf16.xpose.msra.mxu0 0
        %5559 = vmatprep.mubr.bf16.mxu0 0
        %5560 = vmatmul.mubr.bf16.gmra.mxu0 %v5522
        %v5561 = vpop.f32.mrf.mxu0
        %v5562 = vadd.f32 0.0, %v5561
        %v5563 = vpop.f32.mrf.mxu0
        %v5564 = vpop.f32.mrf.mxu0
        %v5565 = vadd.f32 0.0, %v5564
        %v5566 = vpop.f32.mrf.mxu0
        %5567 = vdwg.mxu0
        %v5568 = vsel %vm3478, %v5512, -inf
        %5569 = vmax.xlane.f32.xlu0 %v5568
        %v5570 = vpop.xlane.xlu0 %5569
        %v5571 = vsel %vm3482, %v5515, -inf
        %5572 = vmax.xlane.f32.xlu0 %v5571
        %v5573 = vpop.xlane.xlu0 %5572
        %v5574 = vsel %vm3478, %v5562, -inf
        %5575 = vmax.xlane.f32.xlu0 %v5574
        %v5576 = vpop.xlane.xlu0 %5575
        %v5577 = vsel %vm3482, %v5565, -inf
        %5578 = vmax.xlane.f32.xlu0 %v5577
        %v5579 = vpop.xlane.xlu0 %5578
        %v5580 = vsub.f32 %v5512, %v5570
        %v5581 = vsub.f32 %v5515, %v5573
        %v5582 = vsub.f32 %v5562, %v5576
        %v5583 = vsub.f32 %v5565, %v5579
        %v5584 = vmul.f32 %v5580, 1.442695
        %v5585 = vpow.pop %v5584
        %v5586 = vmul.f32 %v5581, 1.442695
        %v5587 = vpow.pop %v5586
        %v5588 = vmul.f32 %v5582, 1.442695
        %v5589 = vpow.pop %v5588
        %v5590 = vmul.f32 %v5583, 1.442695
        %v5591 = vpow.pop %v5590
        %v5592 = vsel %vm3478, %v5585, 0.0
        %5593 = vadd.xlane.f32.xlu0 %v5592
        %v5594 = vpop.xlane.xlu0 %5593
        %v5595 = vsel %vm3482, %v5587, 0.0
        %5596 = vadd.xlane.f32.xlu0 %v5595
        %v5597 = vpop.xlane.xlu0 %5596
        %v5598 = vsel %vm3478, %v5589, 0.0
        %5599 = vadd.xlane.f32.xlu0 %v5598
        %v5600 = vpop.xlane.xlu0 %5599
        %v5601 = vsel %vm3482, %v5591, 0.0
        %5602 = vadd.xlane.f32.xlu0 %v5601
        %v5603 = vpop.xlane.xlu0 %5602
        %v5604 = vrcp.pop %v5594
        %v5605 = vmul.f32 %v5585, %v5604
        %v5606 = vrcp.pop %v5597
        %v5607 = vmul.f32 %v5587, %v5606
        %v5608 = vrcp.pop %v5600
        %v5609 = vmul.f32 %v5589, %v5608
        %v5610 = vrcp.pop %v5603
        %v5611 = vmul.f32 %v5591, %v5610
        %v5612 = vpack.c.bf16 %v5607, %v5605
        %v5613 = vpack.c.bf16 %v5611, %v5609
        %5614 = vrot.lane.b32.xlu0 %v5466, 64
        %v5615 = vpop.permute.xlu0 %5614
        %v5617 = vsel %vm3478, %v5612, 0
        %v5620 = vand.u32 %v5615, %v3533
        %5622 = vmatprep.subr.bf16.mxu0 0
        %5623 = vmatpush1.bf16.msra.mxu0 0
        %5624 = vmatprep.subr.bf16.mxu0 0
        %5625 = vmatpush1.bf16.msra.mxu0 0
        %5626 = vmatprep.subr.bf16.mxu0 0
        %5627 = vmatpush1.bf16.msra.mxu0 0
        %5628 = vmatprep.subr.bf16.mxu0 0
        %5629 = vmatpush1.bf16.msra.mxu0 0
        %5630 = vmatprep.subr.bf16.mxu0 0
        %5631 = vmatpush1.bf16.msra.mxu0 0
        %5632 = vmatprep.subr.bf16.mxu0 0
        %5633 = vmatpush1.bf16.msra.mxu0 0
        %5634 = vmatprep.subr.bf16.mxu0 0
        %5635 = vmatpush1.bf16.msra.mxu0 0
        %5636 = vmatprep.subr.bf16.mxu0 0
        %5637 = vmatpush1.bf16.msra.mxu0 %v5620
        %5638 = vmatprep.subr.bf16.mxu0 0
        %5639 = vmatpush2.bf16.msra.mxu0 0
        %5640 = vmatprep.subr.bf16.mxu0 0
        %5641 = vmatpush2.bf16.msra.mxu0 0
        %5642 = vmatprep.subr.bf16.mxu0 0
        %5643 = vmatpush2.bf16.msra.mxu0 0
        %5644 = vmatprep.subr.bf16.mxu0 0
        %5645 = vmatpush2.bf16.msra.mxu0 0
        %5646 = vmatprep.subr.bf16.mxu0 0
        %5647 = vmatpush2.bf16.msra.mxu0 0
        %5648 = vmatprep.subr.bf16.mxu0 0
        %5649 = vmatpush2.bf16.msra.mxu0 0
        %5650 = vmatprep.subr.bf16.mxu0 0
        %5651 = vmatpush2.bf16.msra.mxu0 0
        %5652 = vmatprep.subr.bf16.mxu0 0
        %5653 = vmatpush2.bf16.msra.mxu0 0
        %5654 = vmatprep.mubr.bf16.mxu0 0
        %5655 = vmatmul.mubr.bf16.gmra.mxu0 %v5617
        %v5656 = vpop.f32.mrf.mxu0
        %v5657 = vadd.f32 0.0, %v5656
        %v5658 = vpop.f32.mrf.mxu0
        %v5659 = vpop.f32.mrf.mxu0
        %v5660 = vadd.f32 0.0, %v5659
        %v5661 = vpop.f32.mrf.mxu0
        %5662 = vdwg.mxu0
        %5663 = vrot.lane.b32.xlu0 %v5467, 64
        %v5664 = vpop.permute.xlu0 %5663
        %v5666 = vsel %vm3478, %v5613, 0
        %v5669 = vand.u32 %v5664, %v3533
        %5671 = vmatprep.subr.bf16.mxu0 0
        %5672 = vmatpush1.bf16.msra.mxu0 0
        %5673 = vmatprep.subr.bf16.mxu0 0
        %5674 = vmatpush1.bf16.msra.mxu0 0
        %5675 = vmatprep.subr.bf16.mxu0 0
        %5676 = vmatpush1.bf16.msra.mxu0 0
        %5677 = vmatprep.subr.bf16.mxu0 0
        %5678 = vmatpush1.bf16.msra.mxu0 0
        %5679 = vmatprep.subr.bf16.mxu0 0
        %5680 = vmatpush1.bf16.msra.mxu0 0
        %5681 = vmatprep.subr.bf16.mxu0 0
        %5682 = vmatpush1.bf16.msra.mxu0 0
        %5683 = vmatprep.subr.bf16.mxu0 0
        %5684 = vmatpush1.bf16.msra.mxu0 0
        %5685 = vmatprep.subr.bf16.mxu0 0
        %5686 = vmatpush1.bf16.msra.mxu0 %v5669
        %5687 = vmatprep.subr.bf16.mxu0 0
        %5688 = vmatpush2.bf16.msra.mxu0 0
        %5689 = vmatprep.subr.bf16.mxu0 0
        %5690 = vmatpush2.bf16.msra.mxu0 0
        %5691 = vmatprep.subr.bf16.mxu0 0
        %5692 = vmatpush2.bf16.msra.mxu0 0
        %5693 = vmatprep.subr.bf16.mxu0 0
        %5694 = vmatpush2.bf16.msra.mxu0 0
        %5695 = vmatprep.subr.bf16.mxu0 0
        %5696 = vmatpush2.bf16.msra.mxu0 0
        %5697 = vmatprep.subr.bf16.mxu0 0
        %5698 = vmatpush2.bf16.msra.mxu0 0
        %5699 = vmatprep.subr.bf16.mxu0 0
        %5700 = vmatpush2.bf16.msra.mxu0 0
        %5701 = vmatprep.subr.bf16.mxu0 0
        %5702 = vmatpush2.bf16.msra.mxu0 0
        %5703 = vmatprep.mubr.bf16.mxu0 0
        %5704 = vmatmul.mubr.bf16.gmra.mxu0 %v5666
        %v5705 = vpop.f32.mrf.mxu0
        %v5706 = vadd.f32 0.0, %v5705
        %v5707 = vpop.f32.mrf.mxu0
        %v5708 = vpop.f32.mrf.mxu0
        %v5709 = vadd.f32 0.0, %v5708
        %v5710 = vpop.f32.mrf.mxu0
        %5711 = vdwg.mxu0
        %5712 = vrot.lane.b32.xlu0 %v5466, 120
        %v5713 = vpop.permute.xlu0 %5712
        %5714 = vrot.lane.b32.xlu0 %v5466, 88
        %v5715 = vpop.permute.xlu0 %5714
        %v5717 = vsel %vm402, %v5713, 0
        %v5720 = vsel %vm402, %v5715, 0
        %5722 = vmatprep.subr.bf16.mxu0 0
        %5723 = vmatpush1.bf16.xpose.msra.mxu0 0
        %5724 = vmatprep.subr.bf16.mxu0 0
        %5725 = vmatpush1.bf16.xpose.msra.mxu0 0
        %5726 = vmatprep.subr.bf16.mxu0 0
        %5727 = vmatpush1.bf16.xpose.msra.mxu0 0
        %5728 = vmatprep.subr.bf16.mxu0 0
        %5729 = vmatpush1.bf16.xpose.msra.mxu0 0
        %5730 = vmatprep.subr.bf16.mxu0 0
        %5731 = vmatpush1.bf16.xpose.msra.mxu0 0
        %5732 = vmatprep.subr.bf16.mxu0 0
        %5733 = vmatpush1.bf16.xpose.msra.mxu0 0
        %5734 = vmatprep.subr.bf16.mxu0 0
        %5735 = vmatpush1.bf16.xpose.msra.mxu0 0
        %5736 = vmatprep.subr.bf16.mxu0 0
        %5737 = vmatpush1.bf16.xpose.msra.mxu0 %v5720
        %5738 = vmatprep.subr.bf16.mxu0 0
        %5739 = vmatpush2.bf16.xpose.msra.mxu0 0
        %5740 = vmatprep.subr.bf16.mxu0 0
        %5741 = vmatpush2.bf16.xpose.msra.mxu0 0
        %5742 = vmatprep.subr.bf16.mxu0 0
        %5743 = vmatpush2.bf16.xpose.msra.mxu0 0
        %5744 = vmatprep.subr.bf16.mxu0 0
        %5745 = vmatpush2.bf16.xpose.msra.mxu0 0
        %5746 = vmatprep.subr.bf16.mxu0 0
        %5747 = vmatpush2.bf16.xpose.msra.mxu0 0
        %5748 = vmatprep.subr.bf16.mxu0 0
        %5749 = vmatpush2.bf16.xpose.msra.mxu0 0
        %5750 = vmatprep.subr.bf16.mxu0 0
        %5751 = vmatpush2.bf16.xpose.msra.mxu0 0
        %5752 = vmatprep.subr.bf16.mxu0 0
        %5753 = vmatpush2.bf16.xpose.msra.mxu0 0
        %5754 = vmatprep.mubr.bf16.mxu0 0
        %5755 = vmatmul.mubr.bf16.gmra.mxu0 %v5717
        %v5756 = vpop.f32.mrf.mxu0
        %v5757 = vadd.f32 0.0, %v5756
        %v5758 = vpop.f32.mrf.mxu0
        %v5759 = vpop.f32.mrf.mxu0
        %v5760 = vadd.f32 0.0, %v5759
        %v5761 = vpop.f32.mrf.mxu0
        %5762 = vdwg.mxu0
        %5763 = vrot.lane.b32.xlu0 %v5467, 120
        %v5764 = vpop.permute.xlu0 %5763
        %5765 = vrot.lane.b32.xlu0 %v5467, 88
        %v5766 = vpop.permute.xlu0 %5765
        %v5768 = vsel %vm402, %v5764, 0
        %v5771 = vsel %vm402, %v5766, 0
        %5773 = vmatprep.subr.bf16.mxu0 0
        %5774 = vmatpush1.bf16.xpose.msra.mxu0 0
        %5775 = vmatprep.subr.bf16.mxu0 0
        %5776 = vmatpush1.bf16.xpose.msra.mxu0 0
        %5777 = vmatprep.subr.bf16.mxu0 0
        %5778 = vmatpush1.bf16.xpose.msra.mxu0 0
        %5779 = vmatprep.subr.bf16.mxu0 0
        %5780 = vmatpush1.bf16.xpose.msra.mxu0 0
        %5781 = vmatprep.subr.bf16.mxu0 0
        %5782 = vmatpush1.bf16.xpose.msra.mxu0 0
        %5783 = vmatprep.subr.bf16.mxu0 0
        %5784 = vmatpush1.bf16.xpose.msra.mxu0 0
        %5785 = vmatprep.subr.bf16.mxu0 0
        %5786 = vmatpush1.bf16.xpose.msra.mxu0 0
        %5787 = vmatprep.subr.bf16.mxu0 0
        %5788 = vmatpush1.bf16.xpose.msra.mxu0 %v5771
        %5789 = vmatprep.subr.bf16.mxu0 0
        %5790 = vmatpush2.bf16.xpose.msra.mxu0 0
        %5791 = vmatprep.subr.bf16.mxu0 0
        %5792 = vmatpush2.bf16.xpose.msra.mxu0 0
        %5793 = vmatprep.subr.bf16.mxu0 0
        %5794 = vmatpush2.bf16.xpose.msra.mxu0 0
        %5795 = vmatprep.subr.bf16.mxu0 0
        %5796 = vmatpush2.bf16.xpose.msra.mxu0 0
        %5797 = vmatprep.subr.bf16.mxu0 0
        %5798 = vmatpush2.bf16.xpose.msra.mxu0 0
        %5799 = vmatprep.subr.bf16.mxu0 0
        %5800 = vmatpush2.bf16.xpose.msra.mxu0 0
        %5801 = vmatprep.subr.bf16.mxu0 0
        %5802 = vmatpush2.bf16.xpose.msra.mxu0 0
        %5803 = vmatprep.subr.bf16.mxu0 0
        %5804 = vmatpush2.bf16.xpose.msra.mxu0 0
        %5805 = vmatprep.mubr.bf16.mxu0 0
        %5806 = vmatmul.mubr.bf16.gmra.mxu0 %v5768
        %v5807 = vpop.f32.mrf.mxu0
        %v5808 = vadd.f32 0.0, %v5807
        %v5809 = vpop.f32.mrf.mxu0
        %v5810 = vpop.f32.mrf.mxu0
        %v5811 = vadd.f32 0.0, %v5810
        %v5812 = vpop.f32.mrf.mxu0
        %5813 = vdwg.mxu0
        %v5814 = vsel %vm3478, %v5757, -inf
        %5815 = vmax.xlane.f32.xlu0 %v5814
        %v5816 = vpop.xlane.xlu0 %5815
        %v5817 = vsel %vm3482, %v5760, -inf
        %5818 = vmax.xlane.f32.xlu0 %v5817
        %v5819 = vpop.xlane.xlu0 %5818
        %v5820 = vsel %vm3478, %v5808, -inf
        %5821 = vmax.xlane.f32.xlu0 %v5820
        %v5822 = vpop.xlane.xlu0 %5821
        %v5823 = vsel %vm3482, %v5811, -inf
        %5824 = vmax.xlane.f32.xlu0 %v5823
        %v5825 = vpop.xlane.xlu0 %5824
        %v5826 = vsub.f32 %v5757, %v5816
        %v5827 = vsub.f32 %v5760, %v5819
        %v5828 = vsub.f32 %v5808, %v5822
        %v5829 = vsub.f32 %v5811, %v5825
        %v5830 = vmul.f32 %v5826, 1.442695
        %v5831 = vpow.pop %v5830
        %v5832 = vmul.f32 %v5827, 1.442695
        %v5833 = vpow.pop %v5832
        %v5834 = vmul.f32 %v5828, 1.442695
        %v5835 = vpow.pop %v5834
        %v5836 = vmul.f32 %v5829, 1.442695
        %v5837 = vpow.pop %v5836
        %v5838 = vsel %vm3478, %v5831, 0.0
        %5839 = vadd.xlane.f32.xlu0 %v5838
        %v5840 = vpop.xlane.xlu0 %5839
        %v5841 = vsel %vm3482, %v5833, 0.0
        %5842 = vadd.xlane.f32.xlu0 %v5841
        %v5843 = vpop.xlane.xlu0 %5842
        %v5844 = vsel %vm3478, %v5835, 0.0
        %5845 = vadd.xlane.f32.xlu0 %v5844
        %v5846 = vpop.xlane.xlu0 %5845
        %v5847 = vsel %vm3482, %v5837, 0.0
        %5848 = vadd.xlane.f32.xlu0 %v5847
        %v5849 = vpop.xlane.xlu0 %5848
        %v5850 = vrcp.pop %v5840
        %v5851 = vmul.f32 %v5831, %v5850
        %v5852 = vrcp.pop %v5843
        %v5853 = vmul.f32 %v5833, %v5852
        %v5854 = vrcp.pop %v5846
        %v5855 = vmul.f32 %v5835, %v5854
        %v5856 = vrcp.pop %v5849
        %v5857 = vmul.f32 %v5837, %v5856
        %v5858 = vpack.c.bf16 %v5853, %v5851
        %v5859 = vpack.c.bf16 %v5857, %v5855
        %5860 = vrot.lane.b32.xlu0 %v5466, 56
        %v5861 = vpop.permute.xlu0 %5860
        %v5863 = vsel %vm3478, %v5858, 0
        %v5866 = vand.u32 %v5861, %v3533
        %5868 = vmatprep.subr.bf16.mxu0 0
        %5869 = vmatpush1.bf16.msra.mxu0 0
        %5870 = vmatprep.subr.bf16.mxu0 0
        %5871 = vmatpush1.bf16.msra.mxu0 0
        %5872 = vmatprep.subr.bf16.mxu0 0
        %5873 = vmatpush1.bf16.msra.mxu0 0
        %5874 = vmatprep.subr.bf16.mxu0 0
        %5875 = vmatpush1.bf16.msra.mxu0 0
        %5876 = vmatprep.subr.bf16.mxu0 0
        %5877 = vmatpush1.bf16.msra.mxu0 0
        %5878 = vmatprep.subr.bf16.mxu0 0
        %5879 = vmatpush1.bf16.msra.mxu0 0
        %5880 = vmatprep.subr.bf16.mxu0 0
        %5881 = vmatpush1.bf16.msra.mxu0 0
        %5882 = vmatprep.subr.bf16.mxu0 0
        %5883 = vmatpush1.bf16.msra.mxu0 %v5866
        %5884 = vmatprep.subr.bf16.mxu0 0
        %5885 = vmatpush2.bf16.msra.mxu0 0
        %5886 = vmatprep.subr.bf16.mxu0 0
        %5887 = vmatpush2.bf16.msra.mxu0 0
        %5888 = vmatprep.subr.bf16.mxu0 0
        %5889 = vmatpush2.bf16.msra.mxu0 0
        %5890 = vmatprep.subr.bf16.mxu0 0
        %5891 = vmatpush2.bf16.msra.mxu0 0
        %5892 = vmatprep.subr.bf16.mxu0 0
        %5893 = vmatpush2.bf16.msra.mxu0 0
        %5894 = vmatprep.subr.bf16.mxu0 0
        %5895 = vmatpush2.bf16.msra.mxu0 0
        %5896 = vmatprep.subr.bf16.mxu0 0
        %5897 = vmatpush2.bf16.msra.mxu0 0
        %5898 = vmatprep.subr.bf16.mxu0 0
        %5899 = vmatpush2.bf16.msra.mxu0 0
        %5900 = vmatprep.mubr.bf16.mxu0 0
        %5901 = vmatmul.mubr.bf16.gmra.mxu0 %v5863
        %v5902 = vpop.f32.mrf.mxu0
        %v5903 = vadd.f32 0.0, %v5902
        %v5904 = vpop.f32.mrf.mxu0
        %v5905 = vpop.f32.mrf.mxu0
        %v5906 = vadd.f32 0.0, %v5905
        %v5907 = vpop.f32.mrf.mxu0
        %5908 = vdwg.mxu0
        %5909 = vrot.lane.b32.xlu0 %v5467, 56
        %v5910 = vpop.permute.xlu0 %5909
        %v5912 = vsel %vm3478, %v5859, 0
        %v5915 = vand.u32 %v5910, %v3533
        %5917 = vmatprep.subr.bf16.mxu0 0
        %5918 = vmatpush1.bf16.msra.mxu0 0
        %5919 = vmatprep.subr.bf16.mxu0 0
        %5920 = vmatpush1.bf16.msra.mxu0 0
        %5921 = vmatprep.subr.bf16.mxu0 0
        %5922 = vmatpush1.bf16.msra.mxu0 0
        %5923 = vmatprep.subr.bf16.mxu0 0
        %5924 = vmatpush1.bf16.msra.mxu0 0
        %5925 = vmatprep.subr.bf16.mxu0 0
        %5926 = vmatpush1.bf16.msra.mxu0 0
        %5927 = vmatprep.subr.bf16.mxu0 0
        %5928 = vmatpush1.bf16.msra.mxu0 0
        %5929 = vmatprep.subr.bf16.mxu0 0
        %5930 = vmatpush1.bf16.msra.mxu0 0
        %5931 = vmatprep.subr.bf16.mxu0 0
        %5932 = vmatpush1.bf16.msra.mxu0 %v5915
        %5933 = vmatprep.subr.bf16.mxu0 0
        %5934 = vmatpush2.bf16.msra.mxu0 0
        %5935 = vmatprep.subr.bf16.mxu0 0
        %5936 = vmatpush2.bf16.msra.mxu0 0
        %5937 = vmatprep.subr.bf16.mxu0 0
        %5938 = vmatpush2.bf16.msra.mxu0 0
        %5939 = vmatprep.subr.bf16.mxu0 0
        %5940 = vmatpush2.bf16.msra.mxu0 0
        %5941 = vmatprep.subr.bf16.mxu0 0
        %5942 = vmatpush2.bf16.msra.mxu0 0
        %5943 = vmatprep.subr.bf16.mxu0 0
        %5944 = vmatpush2.bf16.msra.mxu0 0
        %5945 = vmatprep.subr.bf16.mxu0 0
        %5946 = vmatpush2.bf16.msra.mxu0 0
        %5947 = vmatprep.subr.bf16.mxu0 0
        %5948 = vmatpush2.bf16.msra.mxu0 0
        %5949 = vmatprep.mubr.bf16.mxu0 0
        %5950 = vmatmul.mubr.bf16.gmra.mxu0 %v5912
        %v5951 = vpop.f32.mrf.mxu0
        %v5952 = vadd.f32 0.0, %v5951
        %v5953 = vpop.f32.mrf.mxu0
        %v5954 = vpop.f32.mrf.mxu0
        %v5955 = vadd.f32 0.0, %v5954
        %v5956 = vpop.f32.mrf.mxu0
        %5957 = vdwg.mxu0
        %5958 = vrot.lane.b32.xlu0 %v5466, 112
        %v5959 = vpop.permute.xlu0 %5958
        %5960 = vrot.lane.b32.xlu0 %v5466, 80
        %v5961 = vpop.permute.xlu0 %5960
        %v5963 = vsel %vm402, %v5959, 0
        %v5966 = vsel %vm402, %v5961, 0
        %5968 = vmatprep.subr.bf16.mxu0 0
        %5969 = vmatpush1.bf16.xpose.msra.mxu0 0
        %5970 = vmatprep.subr.bf16.mxu0 0
        %5971 = vmatpush1.bf16.xpose.msra.mxu0 0
        %5972 = vmatprep.subr.bf16.mxu0 0
        %5973 = vmatpush1.bf16.xpose.msra.mxu0 0
        %5974 = vmatprep.subr.bf16.mxu0 0
        %5975 = vmatpush1.bf16.xpose.msra.mxu0 0
        %5976 = vmatprep.subr.bf16.mxu0 0
        %5977 = vmatpush1.bf16.xpose.msra.mxu0 0
        %5978 = vmatprep.subr.bf16.mxu0 0
        %5979 = vmatpush1.bf16.xpose.msra.mxu0 0
        %5980 = vmatprep.subr.bf16.mxu0 0
        %5981 = vmatpush1.bf16.xpose.msra.mxu0 0
        %5982 = vmatprep.subr.bf16.mxu0 0
        %5983 = vmatpush1.bf16.xpose.msra.mxu0 %v5966
        %5984 = vmatprep.subr.bf16.mxu0 0
        %5985 = vmatpush2.bf16.xpose.msra.mxu0 0
        %5986 = vmatprep.subr.bf16.mxu0 0
        %5987 = vmatpush2.bf16.xpose.msra.mxu0 0
        %5988 = vmatprep.subr.bf16.mxu0 0
        %5989 = vmatpush2.bf16.xpose.msra.mxu0 0
        %5990 = vmatprep.subr.bf16.mxu0 0
        %5991 = vmatpush2.bf16.xpose.msra.mxu0 0
        %5992 = vmatprep.subr.bf16.mxu0 0
        %5993 = vmatpush2.bf16.xpose.msra.mxu0 0
        %5994 = vmatprep.subr.bf16.mxu0 0
        %5995 = vmatpush2.bf16.xpose.msra.mxu0 0
        %5996 = vmatprep.subr.bf16.mxu0 0
        %5997 = vmatpush2.bf16.xpose.msra.mxu0 0
        %5998 = vmatprep.subr.bf16.mxu0 0
        %5999 = vmatpush2.bf16.xpose.msra.mxu0 0
        %6000 = vmatprep.mubr.bf16.mxu0 0
        %6001 = vmatmul.mubr.bf16.gmra.mxu0 %v5963
        %v6002 = vpop.f32.mrf.mxu0
        %v6003 = vadd.f32 0.0, %v6002
        %v6004 = vpop.f32.mrf.mxu0
        %v6005 = vpop.f32.mrf.mxu0
        %v6006 = vadd.f32 0.0, %v6005
        %v6007 = vpop.f32.mrf.mxu0
        %6008 = vdwg.mxu0
        %6009 = vrot.lane.b32.xlu0 %v5467, 112
        %v6010 = vpop.permute.xlu0 %6009
        %6011 = vrot.lane.b32.xlu0 %v5467, 80
        %v6012 = vpop.permute.xlu0 %6011
        %v6014 = vsel %vm402, %v6010, 0
        %v6017 = vsel %vm402, %v6012, 0
        %6019 = vmatprep.subr.bf16.mxu0 0
        %6020 = vmatpush1.bf16.xpose.msra.mxu0 0
        %6021 = vmatprep.subr.bf16.mxu0 0
        %6022 = vmatpush1.bf16.xpose.msra.mxu0 0
        %6023 = vmatprep.subr.bf16.mxu0 0
        %6024 = vmatpush1.bf16.xpose.msra.mxu0 0
        %6025 = vmatprep.subr.bf16.mxu0 0
        %6026 = vmatpush1.bf16.xpose.msra.mxu0 0
        %6027 = vmatprep.subr.bf16.mxu0 0
        %6028 = vmatpush1.bf16.xpose.msra.mxu0 0
        %6029 = vmatprep.subr.bf16.mxu0 0
        %6030 = vmatpush1.bf16.xpose.msra.mxu0 0
        %6031 = vmatprep.subr.bf16.mxu0 0
        %6032 = vmatpush1.bf16.xpose.msra.mxu0 0
        %6033 = vmatprep.subr.bf16.mxu0 0
        %6034 = vmatpush1.bf16.xpose.msra.mxu0 %v6017
        %6035 = vmatprep.subr.bf16.mxu0 0
        %6036 = vmatpush2.bf16.xpose.msra.mxu0 0
        %6037 = vmatprep.subr.bf16.mxu0 0
        %6038 = vmatpush2.bf16.xpose.msra.mxu0 0
        %6039 = vmatprep.subr.bf16.mxu0 0
        %6040 = vmatpush2.bf16.xpose.msra.mxu0 0
        %6041 = vmatprep.subr.bf16.mxu0 0
        %6042 = vmatpush2.bf16.xpose.msra.mxu0 0
        %6043 = vmatprep.subr.bf16.mxu0 0
        %6044 = vmatpush2.bf16.xpose.msra.mxu0 0
        %6045 = vmatprep.subr.bf16.mxu0 0
        %6046 = vmatpush2.bf16.xpose.msra.mxu0 0
        %6047 = vmatprep.subr.bf16.mxu0 0
        %6048 = vmatpush2.bf16.xpose.msra.mxu0 0
        %6049 = vmatprep.subr.bf16.mxu0 0
        %6050 = vmatpush2.bf16.xpose.msra.mxu0 0
        %6051 = vmatprep.mubr.bf16.mxu0 0
        %6052 = vmatmul.mubr.bf16.gmra.mxu0 %v6014
        %v6053 = vpop.f32.mrf.mxu0
        %v6054 = vadd.f32 0.0, %v6053
        %v6055 = vpop.f32.mrf.mxu0
        %v6056 = vpop.f32.mrf.mxu0
        %v6057 = vadd.f32 0.0, %v6056
        %v6058 = vpop.f32.mrf.mxu0
        %6059 = vdwg.mxu0
        %v6060 = vsel %vm3478, %v6003, -inf
        %6061 = vmax.xlane.f32.xlu0 %v6060
        %v6062 = vpop.xlane.xlu0 %6061
        %v6063 = vsel %vm3482, %v6006, -inf
        %6064 = vmax.xlane.f32.xlu0 %v6063
        %v6065 = vpop.xlane.xlu0 %6064
        %v6066 = vsel %vm3478, %v6054, -inf
        %6067 = vmax.xlane.f32.xlu0 %v6066
        %v6068 = vpop.xlane.xlu0 %6067
        %v6069 = vsel %vm3482, %v6057, -inf
        %6070 = vmax.xlane.f32.xlu0 %v6069
        %v6071 = vpop.xlane.xlu0 %6070
        %v6072 = vsub.f32 %v6003, %v6062
        %v6073 = vsub.f32 %v6006, %v6065
        %v6074 = vsub.f32 %v6054, %v6068
        %v6075 = vsub.f32 %v6057, %v6071
        %v6076 = vmul.f32 %v6072, 1.442695
        %v6077 = vpow.pop %v6076
        %v6078 = vmul.f32 %v6073, 1.442695
        %v6079 = vpow.pop %v6078
        %v6080 = vmul.f32 %v6074, 1.442695
        %v6081 = vpow.pop %v6080
        %v6082 = vmul.f32 %v6075, 1.442695
        %v6083 = vpow.pop %v6082
        %v6084 = vsel %vm3478, %v6077, 0.0
        %6085 = vadd.xlane.f32.xlu0 %v6084
        %v6086 = vpop.xlane.xlu0 %6085
        %v6087 = vsel %vm3482, %v6079, 0.0
        %6088 = vadd.xlane.f32.xlu0 %v6087
        %v6089 = vpop.xlane.xlu0 %6088
        %v6090 = vsel %vm3478, %v6081, 0.0
        %6091 = vadd.xlane.f32.xlu0 %v6090
        %v6092 = vpop.xlane.xlu0 %6091
        %v6093 = vsel %vm3482, %v6083, 0.0
        %6094 = vadd.xlane.f32.xlu0 %v6093
        %v6095 = vpop.xlane.xlu0 %6094
        %v6096 = vrcp.pop %v6086
        %v6097 = vmul.f32 %v6077, %v6096
        %v6098 = vrcp.pop %v6089
        %v6099 = vmul.f32 %v6079, %v6098
        %v6100 = vrcp.pop %v6092
        %v6101 = vmul.f32 %v6081, %v6100
        %v6102 = vrcp.pop %v6095
        %v6103 = vmul.f32 %v6083, %v6102
        %v6104 = vpack.c.bf16 %v6099, %v6097
        %v6105 = vpack.c.bf16 %v6103, %v6101
        %6106 = vrot.lane.b32.xlu0 %v5466, 48
        %v6107 = vpop.permute.xlu0 %6106
        %v6109 = vsel %vm3478, %v6104, 0
        %v6112 = vand.u32 %v6107, %v3533
        %6114 = vmatprep.subr.bf16.mxu0 0
        %6115 = vmatpush1.bf16.msra.mxu0 0
        %6116 = vmatprep.subr.bf16.mxu0 0
        %6117 = vmatpush1.bf16.msra.mxu0 0
        %6118 = vmatprep.subr.bf16.mxu0 0
        %6119 = vmatpush1.bf16.msra.mxu0 0
        %6120 = vmatprep.subr.bf16.mxu0 0
        %6121 = vmatpush1.bf16.msra.mxu0 0
        %6122 = vmatprep.subr.bf16.mxu0 0
        %6123 = vmatpush1.bf16.msra.mxu0 0
        %6124 = vmatprep.subr.bf16.mxu0 0
        %6125 = vmatpush1.bf16.msra.mxu0 0
        %6126 = vmatprep.subr.bf16.mxu0 0
        %6127 = vmatpush1.bf16.msra.mxu0 0
        %6128 = vmatprep.subr.bf16.mxu0 0
        %6129 = vmatpush1.bf16.msra.mxu0 %v6112
        %6130 = vmatprep.subr.bf16.mxu0 0
        %6131 = vmatpush2.bf16.msra.mxu0 0
        %6132 = vmatprep.subr.bf16.mxu0 0
        %6133 = vmatpush2.bf16.msra.mxu0 0
        %6134 = vmatprep.subr.bf16.mxu0 0
        %6135 = vmatpush2.bf16.msra.mxu0 0
        %6136 = vmatprep.subr.bf16.mxu0 0
        %6137 = vmatpush2.bf16.msra.mxu0 0
        %6138 = vmatprep.subr.bf16.mxu0 0
        %6139 = vmatpush2.bf16.msra.mxu0 0
        %6140 = vmatprep.subr.bf16.mxu0 0
        %6141 = vmatpush2.bf16.msra.mxu0 0
        %6142 = vmatprep.subr.bf16.mxu0 0
        %6143 = vmatpush2.bf16.msra.mxu0 0
        %6144 = vmatprep.subr.bf16.mxu0 0
        %6145 = vmatpush2.bf16.msra.mxu0 0
        %6146 = vmatprep.mubr.bf16.mxu0 0
        %6147 = vmatmul.mubr.bf16.gmra.mxu0 %v6109
        %v6148 = vpop.f32.mrf.mxu0
        %v6149 = vadd.f32 0.0, %v6148
        %v6150 = vpop.f32.mrf.mxu0
        %v6151 = vpop.f32.mrf.mxu0
        %v6152 = vadd.f32 0.0, %v6151
        %v6153 = vpop.f32.mrf.mxu0
        %6154 = vdwg.mxu0
        %6155 = vrot.lane.b32.xlu0 %v5467, 48
        %v6156 = vpop.permute.xlu0 %6155
        %v6158 = vsel %vm3478, %v6105, 0
        %v6161 = vand.u32 %v6156, %v3533
        %6163 = vmatprep.subr.bf16.mxu0 0
        %6164 = vmatpush1.bf16.msra.mxu0 0
        %6165 = vmatprep.subr.bf16.mxu0 0
        %6166 = vmatpush1.bf16.msra.mxu0 0
        %6167 = vmatprep.subr.bf16.mxu0 0
        %6168 = vmatpush1.bf16.msra.mxu0 0
        %6169 = vmatprep.subr.bf16.mxu0 0
        %6170 = vmatpush1.bf16.msra.mxu0 0
        %6171 = vmatprep.subr.bf16.mxu0 0
        %6172 = vmatpush1.bf16.msra.mxu0 0
        %6173 = vmatprep.subr.bf16.mxu0 0
        %6174 = vmatpush1.bf16.msra.mxu0 0
        %6175 = vmatprep.subr.bf16.mxu0 0
        %6176 = vmatpush1.bf16.msra.mxu0 0
        %6177 = vmatprep.subr.bf16.mxu0 0
        %6178 = vmatpush1.bf16.msra.mxu0 %v6161
        %6179 = vmatprep.subr.bf16.mxu0 0
        %6180 = vmatpush2.bf16.msra.mxu0 0
        %6181 = vmatprep.subr.bf16.mxu0 0
        %6182 = vmatpush2.bf16.msra.mxu0 0
        %6183 = vmatprep.subr.bf16.mxu0 0
        %6184 = vmatpush2.bf16.msra.mxu0 0
        %6185 = vmatprep.subr.bf16.mxu0 0
        %6186 = vmatpush2.bf16.msra.mxu0 0
        %6187 = vmatprep.subr.bf16.mxu0 0
        %6188 = vmatpush2.bf16.msra.mxu0 0
        %6189 = vmatprep.subr.bf16.mxu0 0
        %6190 = vmatpush2.bf16.msra.mxu0 0
        %6191 = vmatprep.subr.bf16.mxu0 0
        %6192 = vmatpush2.bf16.msra.mxu0 0
        %6193 = vmatprep.subr.bf16.mxu0 0
        %6194 = vmatpush2.bf16.msra.mxu0 0
        %6195 = vmatprep.mubr.bf16.mxu0 0
        %6196 = vmatmul.mubr.bf16.gmra.mxu0 %v6158
        %v6197 = vpop.f32.mrf.mxu0
        %v6198 = vadd.f32 0.0, %v6197
        %v6199 = vpop.f32.mrf.mxu0
        %v6200 = vpop.f32.mrf.mxu0
        %v6201 = vadd.f32 0.0, %v6200
        %v6202 = vpop.f32.mrf.mxu0
        %6203 = vdwg.mxu0
        %6204 = vrot.lane.b32.xlu0 %v5466, 104
        %v6205 = vpop.permute.xlu0 %6204
        %6206 = vrot.lane.b32.xlu0 %v5466, 72
        %v6207 = vpop.permute.xlu0 %6206
        %v6209 = vsel %vm402, %v6205, 0
        %v6212 = vsel %vm402, %v6207, 0
        %6214 = vmatprep.subr.bf16.mxu0 0
        %6215 = vmatpush1.bf16.xpose.msra.mxu0 0
        %6216 = vmatprep.subr.bf16.mxu0 0
        %6217 = vmatpush1.bf16.xpose.msra.mxu0 0
        %6218 = vmatprep.subr.bf16.mxu0 0
        %6219 = vmatpush1.bf16.xpose.msra.mxu0 0
        %6220 = vmatprep.subr.bf16.mxu0 0
        %6221 = vmatpush1.bf16.xpose.msra.mxu0 0
        %6222 = vmatprep.subr.bf16.mxu0 0
        %6223 = vmatpush1.bf16.xpose.msra.mxu0 0
        %6224 = vmatprep.subr.bf16.mxu0 0
        %6225 = vmatpush1.bf16.xpose.msra.mxu0 0
        %6226 = vmatprep.subr.bf16.mxu0 0
        %6227 = vmatpush1.bf16.xpose.msra.mxu0 0
        %6228 = vmatprep.subr.bf16.mxu0 0
        %6229 = vmatpush1.bf16.xpose.msra.mxu0 %v6212
        %6230 = vmatprep.subr.bf16.mxu0 0
        %6231 = vmatpush2.bf16.xpose.msra.mxu0 0
        %6232 = vmatprep.subr.bf16.mxu0 0
        %6233 = vmatpush2.bf16.xpose.msra.mxu0 0
        %6234 = vmatprep.subr.bf16.mxu0 0
        %6235 = vmatpush2.bf16.xpose.msra.mxu0 0
        %6236 = vmatprep.subr.bf16.mxu0 0
        %6237 = vmatpush2.bf16.xpose.msra.mxu0 0
        %6238 = vmatprep.subr.bf16.mxu0 0
        %6239 = vmatpush2.bf16.xpose.msra.mxu0 0
        %6240 = vmatprep.subr.bf16.mxu0 0
        %6241 = vmatpush2.bf16.xpose.msra.mxu0 0
        %6242 = vmatprep.subr.bf16.mxu0 0
        %6243 = vmatpush2.bf16.xpose.msra.mxu0 0
        %6244 = vmatprep.subr.bf16.mxu0 0
        %6245 = vmatpush2.bf16.xpose.msra.mxu0 0
        %6246 = vmatprep.mubr.bf16.mxu0 0
        %6247 = vmatmul.mubr.bf16.gmra.mxu0 %v6209
        %v6248 = vpop.f32.mrf.mxu0
        %v6249 = vadd.f32 0.0, %v6248
        %v6250 = vpop.f32.mrf.mxu0
        %v6251 = vpop.f32.mrf.mxu0
        %v6252 = vadd.f32 0.0, %v6251
        %v6253 = vpop.f32.mrf.mxu0
        %6254 = vdwg.mxu0
        %6255 = vrot.lane.b32.xlu0 %v5467, 104
        %v6256 = vpop.permute.xlu0 %6255
        %6257 = vrot.lane.b32.xlu0 %v5467, 72
        %v6258 = vpop.permute.xlu0 %6257
        %v6260 = vsel %vm402, %v6256, 0
        %v6263 = vsel %vm402, %v6258, 0
        %6265 = vmatprep.subr.bf16.mxu0 0
        %6266 = vmatpush1.bf16.xpose.msra.mxu0 0
        %6267 = vmatprep.subr.bf16.mxu0 0
        %6268 = vmatpush1.bf16.xpose.msra.mxu0 0
        %6269 = vmatprep.subr.bf16.mxu0 0
        %6270 = vmatpush1.bf16.xpose.msra.mxu0 0
        %6271 = vmatprep.subr.bf16.mxu0 0
        %6272 = vmatpush1.bf16.xpose.msra.mxu0 0
        %6273 = vmatprep.subr.bf16.mxu0 0
        %6274 = vmatpush1.bf16.xpose.msra.mxu0 0
        %6275 = vmatprep.subr.bf16.mxu0 0
        %6276 = vmatpush1.bf16.xpose.msra.mxu0 0
        %6277 = vmatprep.subr.bf16.mxu0 0
        %6278 = vmatpush1.bf16.xpose.msra.mxu0 0
        %6279 = vmatprep.subr.bf16.mxu0 0
        %6280 = vmatpush1.bf16.xpose.msra.mxu0 %v6263
        %6281 = vmatprep.subr.bf16.mxu0 0
        %6282 = vmatpush2.bf16.xpose.msra.mxu0 0
        %6283 = vmatprep.subr.bf16.mxu0 0
        %6284 = vmatpush2.bf16.xpose.msra.mxu0 0
        %6285 = vmatprep.subr.bf16.mxu0 0
        %6286 = vmatpush2.bf16.xpose.msra.mxu0 0
        %6287 = vmatprep.subr.bf16.mxu0 0
        %6288 = vmatpush2.bf16.xpose.msra.mxu0 0
        %6289 = vmatprep.subr.bf16.mxu0 0
        %6290 = vmatpush2.bf16.xpose.msra.mxu0 0
        %6291 = vmatprep.subr.bf16.mxu0 0
        %6292 = vmatpush2.bf16.xpose.msra.mxu0 0
        %6293 = vmatprep.subr.bf16.mxu0 0
        %6294 = vmatpush2.bf16.xpose.msra.mxu0 0
        %6295 = vmatprep.subr.bf16.mxu0 0
        %6296 = vmatpush2.bf16.xpose.msra.mxu0 0
        %6297 = vmatprep.mubr.bf16.mxu0 0
        %6298 = vmatmul.mubr.bf16.gmra.mxu0 %v6260
        %v6299 = vpop.f32.mrf.mxu0
        %v6300 = vadd.f32 0.0, %v6299
        %v6301 = vpop.f32.mrf.mxu0
        %v6302 = vpop.f32.mrf.mxu0
        %v6303 = vadd.f32 0.0, %v6302
        %v6304 = vpop.f32.mrf.mxu0
        %6305 = vdwg.mxu0
        %v6306 = vsel %vm3478, %v6249, -inf
        %6307 = vmax.xlane.f32.xlu0 %v6306
        %v6308 = vpop.xlane.xlu0 %6307
        %v6309 = vsel %vm3482, %v6252, -inf
        %6310 = vmax.xlane.f32.xlu0 %v6309
        %v6311 = vpop.xlane.xlu0 %6310
        %v6312 = vsel %vm3478, %v6300, -inf
        %6313 = vmax.xlane.f32.xlu0 %v6312
        %v6314 = vpop.xlane.xlu0 %6313
        %v6315 = vsel %vm3482, %v6303, -inf
        %6316 = vmax.xlane.f32.xlu0 %v6315
        %v6317 = vpop.xlane.xlu0 %6316
        %v6318 = vsub.f32 %v6249, %v6308
        %v6319 = vsub.f32 %v6252, %v6311
        %v6320 = vsub.f32 %v6300, %v6314
        %v6321 = vsub.f32 %v6303, %v6317
        %v6322 = vmul.f32 %v6318, 1.442695
        %v6323 = vpow.pop %v6322
        %v6324 = vmul.f32 %v6319, 1.442695
        %v6325 = vpow.pop %v6324
        %v6326 = vmul.f32 %v6320, 1.442695
        %v6327 = vpow.pop %v6326
        %v6328 = vmul.f32 %v6321, 1.442695
        %v6329 = vpow.pop %v6328
        %v6330 = vsel %vm3478, %v6323, 0.0
        %6331 = vadd.xlane.f32.xlu0 %v6330
        %v6332 = vpop.xlane.xlu0 %6331
        %v6333 = vsel %vm3482, %v6325, 0.0
        %6334 = vadd.xlane.f32.xlu0 %v6333
        %v6335 = vpop.xlane.xlu0 %6334
        %v6336 = vsel %vm3478, %v6327, 0.0
        %6337 = vadd.xlane.f32.xlu0 %v6336
        %v6338 = vpop.xlane.xlu0 %6337
        %v6339 = vsel %vm3482, %v6329, 0.0
        %6340 = vadd.xlane.f32.xlu0 %v6339
        %v6341 = vpop.xlane.xlu0 %6340
        %v6342 = vrcp.pop %v6332
        %v6343 = vmul.f32 %v6323, %v6342
        %v6344 = vrcp.pop %v6335
        %v6345 = vmul.f32 %v6325, %v6344
        %v6346 = vrcp.pop %v6338
        %v6347 = vmul.f32 %v6327, %v6346
        %v6348 = vrcp.pop %v6341
        %v6349 = vmul.f32 %v6329, %v6348
        %v6350 = vpack.c.bf16 %v6345, %v6343
        %v6351 = vpack.c.bf16 %v6349, %v6347
        %6352 = vrot.lane.b32.xlu0 %v5466, 40
        %v6353 = vpop.permute.xlu0 %6352
        %v6355 = vsel %vm3478, %v6350, 0
        %v6358 = vand.u32 %v6353, %v3533
        %6360 = vmatprep.subr.bf16.mxu0 0
        %6361 = vmatpush1.bf16.msra.mxu0 0
        %6362 = vmatprep.subr.bf16.mxu0 0
        %6363 = vmatpush1.bf16.msra.mxu0 0
        %6364 = vmatprep.subr.bf16.mxu0 0
        %6365 = vmatpush1.bf16.msra.mxu0 0
        %6366 = vmatprep.subr.bf16.mxu0 0
        %6367 = vmatpush1.bf16.msra.mxu0 0
        %6368 = vmatprep.subr.bf16.mxu0 0
        %6369 = vmatpush1.bf16.msra.mxu0 0
        %6370 = vmatprep.subr.bf16.mxu0 0
        %6371 = vmatpush1.bf16.msra.mxu0 0
        %6372 = vmatprep.subr.bf16.mxu0 0
        %6373 = vmatpush1.bf16.msra.mxu0 0
        %6374 = vmatprep.subr.bf16.mxu0 0
        %6375 = vmatpush1.bf16.msra.mxu0 %v6358
        %6376 = vmatprep.subr.bf16.mxu0 0
        %6377 = vmatpush2.bf16.msra.mxu0 0
        %6378 = vmatprep.subr.bf16.mxu0 0
        %6379 = vmatpush2.bf16.msra.mxu0 0
        %6380 = vmatprep.subr.bf16.mxu0 0
        %6381 = vmatpush2.bf16.msra.mxu0 0
        %6382 = vmatprep.subr.bf16.mxu0 0
        %6383 = vmatpush2.bf16.msra.mxu0 0
        %6384 = vmatprep.subr.bf16.mxu0 0
        %6385 = vmatpush2.bf16.msra.mxu0 0
        %6386 = vmatprep.subr.bf16.mxu0 0
        %6387 = vmatpush2.bf16.msra.mxu0 0
        %6388 = vmatprep.subr.bf16.mxu0 0
        %6389 = vmatpush2.bf16.msra.mxu0 0
        %6390 = vmatprep.subr.bf16.mxu0 0
        %6391 = vmatpush2.bf16.msra.mxu0 0
        %6392 = vmatprep.mubr.bf16.mxu0 0
        %6393 = vmatmul.mubr.bf16.gmra.mxu0 %v6355
        %v6394 = vpop.f32.mrf.mxu0
        %v6395 = vadd.f32 0.0, %v6394
        %v6396 = vpop.f32.mrf.mxu0
        %v6397 = vpop.f32.mrf.mxu0
        %v6398 = vadd.f32 0.0, %v6397
        %v6399 = vpop.f32.mrf.mxu0
        %6400 = vdwg.mxu0
        %6401 = vrot.lane.b32.xlu0 %v5467, 40
        %v6402 = vpop.permute.xlu0 %6401
        %v6404 = vsel %vm3478, %v6351, 0
        %v6407 = vand.u32 %v6402, %v3533
        %6409 = vmatprep.subr.bf16.mxu0 0
        %6410 = vmatpush1.bf16.msra.mxu0 0
        %6411 = vmatprep.subr.bf16.mxu0 0
        %6412 = vmatpush1.bf16.msra.mxu0 0
        %6413 = vmatprep.subr.bf16.mxu0 0
        %6414 = vmatpush1.bf16.msra.mxu0 0
        %6415 = vmatprep.subr.bf16.mxu0 0
        %6416 = vmatpush1.bf16.msra.mxu0 0
        %6417 = vmatprep.subr.bf16.mxu0 0
        %6418 = vmatpush1.bf16.msra.mxu0 0
        %6419 = vmatprep.subr.bf16.mxu0 0
        %6420 = vmatpush1.bf16.msra.mxu0 0
        %6421 = vmatprep.subr.bf16.mxu0 0
        %6422 = vmatpush1.bf16.msra.mxu0 0
        %6423 = vmatprep.subr.bf16.mxu0 0
        %6424 = vmatpush1.bf16.msra.mxu0 %v6407
        %6425 = vmatprep.subr.bf16.mxu0 0
        %6426 = vmatpush2.bf16.msra.mxu0 0
        %6427 = vmatprep.subr.bf16.mxu0 0
        %6428 = vmatpush2.bf16.msra.mxu0 0
        %6429 = vmatprep.subr.bf16.mxu0 0
        %6430 = vmatpush2.bf16.msra.mxu0 0
        %6431 = vmatprep.subr.bf16.mxu0 0
        %6432 = vmatpush2.bf16.msra.mxu0 0
        %6433 = vmatprep.subr.bf16.mxu0 0
        %6434 = vmatpush2.bf16.msra.mxu0 0
        %6435 = vmatprep.subr.bf16.mxu0 0
        %6436 = vmatpush2.bf16.msra.mxu0 0
        %6437 = vmatprep.subr.bf16.mxu0 0
        %6438 = vmatpush2.bf16.msra.mxu0 0
        %6439 = vmatprep.subr.bf16.mxu0 0
        %6440 = vmatpush2.bf16.msra.mxu0 0
        %6441 = vmatprep.mubr.bf16.mxu0 0
        %6442 = vmatmul.mubr.bf16.gmra.mxu0 %v6404
        %v6443 = vpop.f32.mrf.mxu0
        %v6444 = vadd.f32 0.0, %v6443
        %v6445 = vpop.f32.mrf.mxu0
        %v6446 = vpop.f32.mrf.mxu0
        %v6447 = vadd.f32 0.0, %v6446
        %v6448 = vpop.f32.mrf.mxu0
        %6449 = vdwg.mxu0
        %6454 = vrot.lane.b32.xlu0 %v5903, 8
        %v6455 = vpop.permute.xlu0 %6454
        %6456 = vrot.lane.b32.xlu0 %v5906, 8
        %v6457 = vpop.permute.xlu0 %6456
        %6458 = vrot.lane.b32.xlu0 %v5952, 8
        %v6459 = vpop.permute.xlu0 %6458
        %6460 = vrot.lane.b32.xlu0 %v5955, 8
        %v6461 = vpop.permute.xlu0 %6460
        %6470 = vrot.lane.b32.xlu0 %v6149, 16
        %v6471 = vpop.permute.xlu0 %6470
        %6472 = vrot.lane.b32.xlu0 %v6152, 16
        %v6473 = vpop.permute.xlu0 %6472
        %6474 = vrot.lane.b32.xlu0 %v6198, 16
        %v6475 = vpop.permute.xlu0 %6474
        %6476 = vrot.lane.b32.xlu0 %v6201, 16
        %v6477 = vpop.permute.xlu0 %6476
        %6486 = vrot.lane.b32.xlu0 %v6395, 24
        %v6487 = vpop.permute.xlu0 %6486
        %6488 = vrot.lane.b32.xlu0 %v6398, 24
        %v6489 = vpop.permute.xlu0 %6488
        %6490 = vrot.lane.b32.xlu0 %v6444, 24
        %v6491 = vpop.permute.xlu0 %6490
        %6492 = vrot.lane.b32.xlu0 %v6447, 24
        %v6493 = vpop.permute.xlu0 %6492
        %v6498 = vsel %vm402, %v5657, %v6455
        %v6499 = vsel %vm402, %v5660, %v6457
        %v6500 = vsel %vm402, %v5706, %v6459
        %v6501 = vsel %vm402, %v5709, %v6461
        %v6502 = vsel %vm4417, %v6498, %v6471
        %v6503 = vsel %vm4417, %v6499, %v6473
        %v6504 = vsel %vm4417, %v6500, %v6475
        %v6505 = vsel %vm4417, %v6501, %v6477
        %v6506 = vsel %vm4422, %v6502, %v6487
        %v6507 = vsel %vm4422, %v6503, %v6489
        %v6508 = vsel %vm4422, %v6504, %v6491
        %v6509 = vsel %vm4422, %v6505, %v6493
        %v6514 = vcombine.high %v6506, %v6506
        %v6516 = vunpack.c.l.s4 1966171168
        %v6517 = vunpack.c.0.s8 %v6516
        %v6518 = vlaneseq
        %v6519 = vshrl.u32 %v6518, 7
        %v6520 = vsub.s32 %v6517, %v6519
        %v6521 = vrot.slane %v6506, %v6520
        %v6523 = vunpack.c.l.s4 1966171168
        %v6524 = vunpack.c.0.s8 %v6523
        %v6525 = vlaneseq
        %v6526 = vshrl.u32 %v6525, 7
        %v6527 = vsub.s32 %v6524, %v6526
        %v6528 = vrot.slane %v6514, %v6527
        %v6529 = vcombine.high %v6521, %v6521
        %v6530 = vcombine.high %v6528, %v6528
        %v6532 = vunpack.c.l.s4 1966171168
        %v6533 = vunpack.c.0.s8 %v6532
        %v6534 = vlaneseq
        %v6535 = vshrl.u32 %v6534, 7
        %v6536 = vsub.s32 %v6533, %v6535
        %v6537 = vrot.slane %v6521, %v6536
        %v6539 = vunpack.c.l.s4 1966171168
        %v6540 = vunpack.c.0.s8 %v6539
        %v6541 = vlaneseq
        %v6542 = vshrl.u32 %v6541, 7
        %v6543 = vsub.s32 %v6540, %v6542
        %v6544 = vrot.slane %v6528, %v6543
        %v6546 = vunpack.c.l.s4 1966171168
        %v6547 = vunpack.c.0.s8 %v6546
        %v6548 = vlaneseq
        %v6549 = vshrl.u32 %v6548, 7
        %v6550 = vsub.s32 %v6547, %v6549
        %v6551 = vrot.slane %v6529, %v6550
        %v6553 = vunpack.c.l.s4 1966171168
        %v6554 = vunpack.c.0.s8 %v6553
        %v6555 = vlaneseq
        %v6556 = vshrl.u32 %v6555, 7
        %v6557 = vsub.s32 %v6554, %v6556
        %v6558 = vrot.slane %v6530, %v6557
        %v6559 = vcombine.high %v6537, %v6537
        %v6560 = vcombine.high %v6544, %v6544
        %v6561 = vcombine.high %v6551, %v6551
        %v6562 = vcombine.high %v6558, %v6558
        %v6564 = vunpack.c.l.s4 1966171168
        %v6565 = vunpack.c.0.s8 %v6564
        %v6566 = vlaneseq
        %v6567 = vshrl.u32 %v6566, 7
        %v6568 = vsub.s32 %v6565, %v6567
        %v6569 = vrot.slane %v6507, %v6568
        %v6571 = vunpack.c.l.s4 1966171168
        %v6572 = vunpack.c.0.s8 %v6571
        %v6573 = vlaneseq
        %v6574 = vshrl.u32 %v6573, 7
        %v6575 = vsub.s32 %v6572, %v6574
        %v6576 = vrot.slane %v6569, %v6575
        %v6577 = vcombine.high %v6508, %v6508
        %v6579 = vunpack.c.l.s4 1966171168
        %v6580 = vunpack.c.0.s8 %v6579
        %v6581 = vlaneseq
        %v6582 = vshrl.u32 %v6581, 7
        %v6583 = vsub.s32 %v6580, %v6582
        %v6584 = vrot.slane %v6508, %v6583
        %v6586 = vunpack.c.l.s4 1966171168
        %v6587 = vunpack.c.0.s8 %v6586
        %v6588 = vlaneseq
        %v6589 = vshrl.u32 %v6588, 7
        %v6590 = vsub.s32 %v6587, %v6589
        %v6591 = vrot.slane %v6577, %v6590
        %v6592 = vcombine.high %v6584, %v6584
        %v6593 = vcombine.high %v6591, %v6591
        %v6595 = vunpack.c.l.s4 1966171168
        %v6596 = vunpack.c.0.s8 %v6595
        %v6597 = vlaneseq
        %v6598 = vshrl.u32 %v6597, 7
        %v6599 = vsub.s32 %v6596, %v6598
        %v6600 = vrot.slane %v6584, %v6599
        %v6602 = vunpack.c.l.s4 1966171168
        %v6603 = vunpack.c.0.s8 %v6602
        %v6604 = vlaneseq
        %v6605 = vshrl.u32 %v6604, 7
        %v6606 = vsub.s32 %v6603, %v6605
        %v6607 = vrot.slane %v6591, %v6606
        %v6609 = vunpack.c.l.s4 1966171168
        %v6610 = vunpack.c.0.s8 %v6609
        %v6611 = vlaneseq
        %v6612 = vshrl.u32 %v6611, 7
        %v6613 = vsub.s32 %v6610, %v6612
        %v6614 = vrot.slane %v6592, %v6613
        %v6616 = vunpack.c.l.s4 1966171168
        %v6617 = vunpack.c.0.s8 %v6616
        %v6618 = vlaneseq
        %v6619 = vshrl.u32 %v6618, 7
        %v6620 = vsub.s32 %v6617, %v6619
        %v6621 = vrot.slane %v6593, %v6620
        %v6622 = vcombine.high %v6600, %v6600
        %v6623 = vcombine.high %v6607, %v6607
        %v6624 = vcombine.high %v6614, %v6614
        %v6625 = vcombine.high %v6621, %v6621
        %v6627 = vunpack.c.l.s4 1966171168
        %v6628 = vunpack.c.0.s8 %v6627
        %v6629 = vlaneseq
        %v6630 = vshrl.u32 %v6629, 7
        %v6631 = vsub.s32 %v6628, %v6630
        %v6632 = vrot.slane %v6509, %v6631
        %v6634 = vunpack.c.l.s4 1966171168
        %v6635 = vunpack.c.0.s8 %v6634
        %v6636 = vlaneseq
        %v6637 = vshrl.u32 %v6636, 7
        %v6638 = vsub.s32 %v6635, %v6637
        %v6639 = vrot.slane %v6632, %v6638
        %v6640 = vcombine.low %v6537, %v6551
        %v6641 = vcombine.low %v6559, %v6561
        %v6642 = vcombine.low %v6544, %v6558
        %v6643 = vcombine.low %v6560, %v6562
        %v6645 = vunpack.c.l.s4 1966171168
        %v6646 = vunpack.c.0.s8 %v6645
        %v6647 = vlaneseq
        %v6648 = vshrl.u32 %v6647, 7
        %v6649 = vsub.s32 %v6646, %v6648
        %v6650 = vrot.slane %v6640, %v6649
        %v6652 = vunpack.c.l.s4 1966171168
        %v6653 = vunpack.c.0.s8 %v6652
        %v6654 = vlaneseq
        %v6655 = vshrl.u32 %v6654, 7
        %v6656 = vsub.s32 %v6653, %v6655
        %v6657 = vrot.slane %v6641, %v6656
        %v6659 = vunpack.c.l.s4 1966171168
        %v6660 = vunpack.c.0.s8 %v6659
        %v6661 = vlaneseq
        %v6662 = vshrl.u32 %v6661, 7
        %v6663 = vsub.s32 %v6660, %v6662
        %v6664 = vrot.slane %v6642, %v6663
        %v6666 = vunpack.c.l.s4 1966171168
        %v6667 = vunpack.c.0.s8 %v6666
        %v6668 = vlaneseq
        %v6669 = vshrl.u32 %v6668, 7
        %v6670 = vsub.s32 %v6667, %v6669
        %v6671 = vrot.slane %v6643, %v6670
        %v6672 = vcombine.low %v6650, %v6657
        %v6673 = vcombine.low %v6664, %v6671
        %v6675 = vunpack.c.l.s4 1966171168
        %v6676 = vunpack.c.0.s8 %v6675
        %v6677 = vlaneseq
        %v6678 = vshrl.u32 %v6677, 7
        %v6679 = vsub.s32 %v6676, %v6678
        %v6680 = vrot.slane %v6672, %v6679
        %v6682 = vunpack.c.l.s4 1966171168
        %v6683 = vunpack.c.0.s8 %v6682
        %v6684 = vlaneseq
        %v6685 = vshrl.u32 %v6684, 7
        %v6686 = vsub.s32 %v6683, %v6685
        %v6687 = vrot.slane %v6673, %v6686
        %v6688 = vcombine.low %v6680, %v6687
        %v6689 = vcombine.low %v6576, %v6600
        %v6690 = vcombine.low %v6614, %v6622
        %v6691 = vcombine.low %v6624, %v6607
        %v6692 = vcombine.low %v6621, %v6623
        %v6694 = vunpack.c.l.s4 1966171168
        %v6695 = vunpack.c.0.s8 %v6694
        %v6696 = vlaneseq
        %v6697 = vshrl.u32 %v6696, 7
        %v6698 = vsub.s32 %v6695, %v6697
        %v6699 = vrot.slane %v6689, %v6698
        %v6701 = vunpack.c.l.s4 1966171168
        %v6702 = vunpack.c.0.s8 %v6701
        %v6703 = vlaneseq
        %v6704 = vshrl.u32 %v6703, 7
        %v6705 = vsub.s32 %v6702, %v6704
        %v6706 = vrot.slane %v6690, %v6705
        %v6708 = vunpack.c.l.s4 1966171168
        %v6709 = vunpack.c.0.s8 %v6708
        %v6710 = vlaneseq
        %v6711 = vshrl.u32 %v6710, 7
        %v6712 = vsub.s32 %v6709, %v6711
        %v6713 = vrot.slane %v6691, %v6712
        %v6715 = vunpack.c.l.s4 1966171168
        %v6716 = vunpack.c.0.s8 %v6715
        %v6717 = vlaneseq
        %v6718 = vshrl.u32 %v6717, 7
        %v6719 = vsub.s32 %v6716, %v6718
        %v6720 = vrot.slane %v6692, %v6719
        %v6721 = vcombine.low %v6699, %v6706
        %v6722 = vcombine.low %v6713, %v6720
        %v6724 = vunpack.c.l.s4 1966171168
        %v6725 = vunpack.c.0.s8 %v6724
        %v6726 = vlaneseq
        %v6727 = vshrl.u32 %v6726, 7
        %v6728 = vsub.s32 %v6725, %v6727
        %v6729 = vrot.slane %v6721, %v6728
        %v6731 = vunpack.c.l.s4 1966171168
        %v6732 = vunpack.c.0.s8 %v6731
        %v6733 = vlaneseq
        %v6734 = vshrl.u32 %v6733, 7
        %v6735 = vsub.s32 %v6732, %v6734
        %v6736 = vrot.slane %v6722, %v6735
        %v6737 = vcombine.low %v6729, %v6736
        %v6738 = vcombine.low %v6625, %v6639
        %v6740 = vunpack.c.l.s4 1966171168
        %v6741 = vunpack.c.0.s8 %v6740
        %v6742 = vlaneseq
        %v6743 = vshrl.u32 %v6742, 7
        %v6744 = vsub.s32 %v6741, %v6743
        %v6745 = vrot.slane %v6738, %v6744
        %v6747 = vunpack.c.l.s4 1966171168
        %v6748 = vunpack.c.0.s8 %v6747
        %v6749 = vlaneseq
        %v6750 = vshrl.u32 %v6749, 7
        %v6751 = vsub.s32 %v6748, %v6750
        %v6752 = vrot.slane %v6745, %v6751
        %v6756 = vpack.c.bf16 %v6737, %v6688
        %v6757 = vpack.c.bf16 %v6752, %v6752
        %v6762 = vunpack.c.l.b16 %v5062
        %v6763 = vunpack.c.l.b16 %v5064
        %v6764 = vunpack.c.l.b16 %v5066
        %v6765 = vunpack.c.l.b16 %v5068
        %v6766 = vpack.c.b16 %v6763, %v6762
        %v6767 = vpack.c.b16 %v6765, %v6764
        %v6771 = vsel %vm2995, %v6756, 0
        %v6774 = vsel %vm2995, %v6757, 0
        %6776 = vmatprep.subr.bf16.mxu0 0
        %6777 = vmatpush1.bf16.msra.mxu0 0
        %6778 = vmatprep.subr.bf16.mxu0 0
        %6779 = vmatpush1.bf16.msra.mxu0 0
        %6780 = vmatprep.subr.bf16.mxu0 0
        %6781 = vmatpush1.bf16.msra.mxu0 0
        %6782 = vmatprep.subr.bf16.mxu0 0
        %6783 = vmatpush1.bf16.msra.mxu0 0
        %6784 = vmatprep.subr.bf16.mxu0 0
        %6785 = vmatpush1.bf16.msra.mxu0 0
        %6786 = vmatprep.subr.bf16.mxu0 0
        %6787 = vmatpush1.bf16.msra.mxu0 0
        %6788 = vmatprep.subr.bf16.mxu0 0
        %6789 = vmatpush1.bf16.msra.mxu0 %v6767
        %6790 = vmatprep.subr.bf16.mxu0 0
        %6791 = vmatpush1.bf16.msra.mxu0 %v6766
        %6792 = vmatprep.subr.bf16.mxu0 0
        %6793 = vmatpush2.bf16.msra.mxu0 0
        %6794 = vmatprep.subr.bf16.mxu0 0
        %6795 = vmatpush2.bf16.msra.mxu0 0
        %6796 = vmatprep.subr.bf16.mxu0 0
        %6797 = vmatpush2.bf16.msra.mxu0 0
        %6798 = vmatprep.subr.bf16.mxu0 0
        %6799 = vmatpush2.bf16.msra.mxu0 0
        %6800 = vmatprep.subr.bf16.mxu0 0
        %6801 = vmatpush2.bf16.msra.mxu0 0
        %6802 = vmatprep.subr.bf16.mxu0 0
        %6803 = vmatpush2.bf16.msra.mxu0 0
        %6804 = vmatprep.subr.bf16.mxu0 0
        %6805 = vmatpush2.bf16.msra.mxu0 0
        %6806 = vmatprep.subr.bf16.mxu0 0
        %6807 = vmatpush2.bf16.msra.mxu0 0
        %6808 = vmatprep.mubr.bf16.mxu0 0
        %6809 = vmatmul.mubr.bf16.gmra.mxu0 %v6771
        %v6810 = vpop.f32.mrf.mxu0
        %v6811 = vadd.f32 0.0, %v6810
        %v6812 = vpop.f32.mrf.mxu0
        %v6813 = vpop.f32.mrf.mxu0
        %v6814 = vadd.f32 0.0, %v6813
        %v6815 = vpop.f32.mrf.mxu0
        %6816 = vmatprep.mubr.bf16.mxu0 0
        %6817 = vmatmul.mubr.bf16.gmra.mxu0 %v6774
        %v6818 = vpop.f32.mrf.mxu0
        %v6819 = vadd.f32 0.0, %v6818
        %v6820 = vpop.f32.mrf.mxu0
        %v6821 = vpop.f32.mrf.mxu0
        %v6822 = vpop.f32.mrf.mxu0
        %6823 = vdwg.mxu0
        %v6824 = vadd.f32 %v5057, %v6811
        %v6825 = vadd.f32 %v5058, %v6814
        %v6826 = vadd.f32 %v5059, %v6819
        %6828 = vrot.lane.b32.xlu0 %v5146, 32
        %v6829 = vpop.permute.xlu0 %6828
        %v6831 = vadd.f32 %v6824, %v6829
        %v6832 = vadd.f32 %v6825, %v6829
        %v6833 = vadd.f32 %v6826, %v6829
        %v6834 = vsel %vm2995, %v6831, 0.0
        %6835 = vadd.xlane.f32.xlu0 %v6834
        %v6836 = vpop.xlane.xlu0 %6835
        %v6837 = vsel %vm2995, %v6832, 0.0
        %6838 = vadd.xlane.f32.xlu0 %v6837
        %v6839 = vpop.xlane.xlu0 %6838
        %v6840 = vsel %vm3002, %v6833, 0.0
        %6841 = vadd.xlane.f32.xlu0 %v6840
        %v6842 = vpop.xlane.xlu0 %6841
        %v6843 = vmul.f32 %v6836, %v3006
        %v6844 = vmul.f32 %v6839, %v3006
        %v6845 = vmul.f32 %v6842, %v3006
        %v6846 = vsub.f32 %v6831, %v6843
        %v6847 = vsub.f32 %v6832, %v6844
        %v6848 = vsub.f32 %v6833, %v6845
        %v6849 = vmul.f32 %v6846, %v6846
        %v6850 = vmul.f32 %v6847, %v6847
        %v6851 = vmul.f32 %v6848, %v6848
        %v6852 = vsel %vm2995, %v6849, 0.0
        %6853 = vadd.xlane.f32.xlu0 %v6852
        %v6854 = vpop.xlane.xlu0 %6853
        %v6855 = vsel %vm2995, %v6850, 0.0
        %6856 = vadd.xlane.f32.xlu0 %v6855
        %v6857 = vpop.xlane.xlu0 %6856
        %v6858 = vsel %vm3002, %v6851, 0.0
        %6859 = vadd.xlane.f32.xlu0 %v6858
        %v6860 = vpop.xlane.xlu0 %6859
        %v6861 = vmul.f32 %v6854, %v3006
        %v6862 = vmul.f32 %v6857, %v3006
        %v6863 = vmul.f32 %v6860, %v3006
        %v6864 = vadd.f32 %v6861, 1e-05
        %v6865 = vadd.f32 %v6862, 1e-05
        %v6866 = vadd.f32 %v6863, 1e-05
        %v6867 = vrsqrt.pop %v6864
        %v6868 = vrsqrt.pop %v6865
        %v6869 = vrsqrt.pop %v6866
        %v6870 = vmul.f32 %v6846, %v6867
        %v6871 = vmul.f32 %v6847, %v6868
        %v6872 = vmul.f32 %v6848, %v6869
        %6873 = vrot.lane.b32.xlu0 %v5130, 64
        %v6874 = vpop.permute.xlu0 %6873
        %v6876 = vmul.f32 %v6870, %v6874
        %v6877 = vmul.f32 %v6871, %v6874
        %v6878 = vmul.f32 %v6872, %v6874
        %6879 = vrot.lane.b32.xlu0 %v5130, 32
        %v6880 = vpop.permute.xlu0 %6879
        %v6882 = vadd.f32 %v6876, %v6880
        %v6883 = vadd.f32 %v6877, %v6880
        %v6884 = vadd.f32 %v6878, %v6880
        %v6885 = vpack.c.bf16 %v6883, %v6882
        %v6886 = vpack.c.bf16 %v6884, %v6884
        %v6887 = vlaneseq
        %v6888 = vshrl.u32 %v6887, 7
        %v6889 = vsub.s32 2, %v6888
        %v6890 = vrot.slane %v5087, %v6889
        %v6891 = vunpack.c.h.b16 %v5061
        %v6892 = vunpack.c.h.b16 %v5063
        %v6893 = vunpack.c.h.b16 %v5065
        %v6894 = vunpack.c.h.b16 %v5067
        %v6895 = vpack.c.b16 %v6892, %v6891
        %v6896 = vpack.c.b16 %v6894, %v6893
        %v6900 = vsel %vm2995, %v6885, 0
        %v6903 = vsel %vm2995, %v6886, 0
        %6905 = vmatprep.subr.bf16.mxu0 0
        %6906 = vmatpush1.bf16.msra.mxu0 0
        %6907 = vmatprep.subr.bf16.mxu0 0
        %6908 = vmatpush1.bf16.msra.mxu0 0
        %6909 = vmatprep.subr.bf16.mxu0 0
        %6910 = vmatpush1.bf16.msra.mxu0 0
        %6911 = vmatprep.subr.bf16.mxu0 0
        %6912 = vmatpush1.bf16.msra.mxu0 0
        %6913 = vmatprep.subr.bf16.mxu0 0
        %6914 = vmatpush1.bf16.msra.mxu0 0
        %6915 = vmatprep.subr.bf16.mxu0 0
        %6916 = vmatpush1.bf16.msra.mxu0 0
        %6917 = vmatprep.subr.bf16.mxu0 0
        %6918 = vmatpush1.bf16.msra.mxu0 %v6896
        %6919 = vmatprep.subr.bf16.mxu0 0
        %6920 = vmatpush1.bf16.msra.mxu0 %v6895
        %6921 = vmatprep.subr.bf16.mxu0 0
        %6922 = vmatpush2.bf16.msra.mxu0 0
        %6923 = vmatprep.subr.bf16.mxu0 0
        %6924 = vmatpush2.bf16.msra.mxu0 0
        %6925 = vmatprep.subr.bf16.mxu0 0
        %6926 = vmatpush2.bf16.msra.mxu0 0
        %6927 = vmatprep.subr.bf16.mxu0 0
        %6928 = vmatpush2.bf16.msra.mxu0 0
        %6929 = vmatprep.subr.bf16.mxu0 0
        %6930 = vmatpush2.bf16.msra.mxu0 0
        %6931 = vmatprep.subr.bf16.mxu0 0
        %6932 = vmatpush2.bf16.msra.mxu0 0
        %6933 = vmatprep.subr.bf16.mxu0 0
        %6934 = vmatpush2.bf16.msra.mxu0 0
        %6935 = vmatprep.subr.bf16.mxu0 0
        %6936 = vmatpush2.bf16.msra.mxu0 0
        %6937 = vmatprep.mubr.bf16.mxu0 0
        %6938 = vmatmul.mubr.bf16.gmra.mxu0 %v6900
        %v6939 = vpop.f32.mrf.mxu0
        %v6940 = vadd.f32 %v6890, %v6939
        %v6941 = vpop.f32.mrf.mxu0
        %v6942 = vpop.f32.mrf.mxu0
        %v6943 = vadd.f32 %v6890, %v6942
        %v6944 = vpop.f32.mrf.mxu0
        %6945 = vmatprep.mubr.bf16.mxu0 0
        %6946 = vmatmul.mubr.bf16.gmra.mxu0 %v6903
        %v6947 = vpop.f32.mrf.mxu0
        %v6948 = vadd.f32 %v6890, %v6947
        %v6949 = vpop.f32.mrf.mxu0
        %v6950 = vpop.f32.mrf.mxu0
        %v6951 = vpop.f32.mrf.mxu0
        %6952 = vdwg.mxu0
        %v6953 = vmul.f32 %v6940, 0.5
        %v6954 = vmul.f32 %v6943, 0.5
        %v6955 = vmul.f32 %v6948, 0.5
        %v6956 = vmul.f32 %v6940, %v4873
        %v6957 = vmul.f32 %v6943, %v4873
        %v6958 = vmul.f32 %v6948, %v4873
        %vm6959 = vcmp.ge.f32.partialorder %v6956, 0.0
        %vm6960 = vcmp.ge.f32.partialorder %v6957, 0.0
        %vm6961 = vcmp.ge.f32.partialorder %v6958, 0.0
        %v6962 = vsel %vm6959, 1.0, -1.0
        %v6963 = vsel %vm6960, 1.0, -1.0
        %v6964 = vsel %vm6961, 1.0, -1.0
        %v6965 = vand.u32 2147483647, %v6956
        %v6966 = vand.u32 2147483647, %v6957
        %v6967 = vand.u32 2147483647, %v6958
        %v6968 = vmul.f32 %v6965, 0.3275911
        %v6969 = vmul.f32 %v6966, 0.3275911
        %v6970 = vmul.f32 %v6967, 0.3275911
        %v6971 = vadd.f32 %v6968, 1.0
        %v6972 = vadd.f32 %v6969, 1.0
        %v6973 = vadd.f32 %v6970, 1.0
        %v6974 = vrcp.pop %v6971
        %v6975 = vmul.f32 1.0, %v6974
        %v6976 = vrcp.pop %v6972
        %v6977 = vmul.f32 1.0, %v6976
        %v6978 = vrcp.pop %v6973
        %v6979 = vmul.f32 1.0, %v6978
        %v6980 = vmul.f32 %v6975, 1.0614054
        %v6981 = vmul.f32 %v6977, 1.0614054
        %v6982 = vmul.f32 %v6979, 1.0614054
        %v6983 = vadd.f32 %v6980, -1.4531521
        %v6984 = vadd.f32 %v6981, -1.4531521
        %v6985 = vadd.f32 %v6982, -1.4531521
        %v6986 = vmul.f32 %v6983, %v6975
        %v6987 = vmul.f32 %v6984, %v6977
        %v6988 = vmul.f32 %v6985, %v6979
        %v6989 = vadd.f32 %v6986, 1.4214138
        %v6990 = vadd.f32 %v6987, 1.4214138
        %v6991 = vadd.f32 %v6988, 1.4214138
        %v6992 = vmul.f32 %v6989, %v6975
        %v6993 = vmul.f32 %v6990, %v6977
        %v6994 = vmul.f32 %v6991, %v6979
        %v6995 = vadd.f32 %v6992, -0.28449672
        %v6996 = vadd.f32 %v6993, -0.28449672
        %v6997 = vadd.f32 %v6994, -0.28449672
        %v6998 = vmul.f32 %v6995, %v6975
        %v6999 = vmul.f32 %v6996, %v6977
        %v7000 = vmul.f32 %v6997, %v6979
        %v7001 = vadd.f32 %v6998, 0.2548296
        %v7002 = vadd.f32 %v6999, 0.2548296
        %v7003 = vadd.f32 %v7000, 0.2548296
        %v7004 = vmul.f32 %v7001, %v6975
        %v7005 = vmul.f32 %v7002, %v6977
        %v7006 = vmul.f32 %v7003, %v6979
        %v7007 = vsub.f32 0.0, %v6965
        %v7008 = vsub.f32 0.0, %v6966
        %v7009 = vsub.f32 0.0, %v6967
        %v7010 = vmul.f32 %v7007, %v6965
        %v7011 = vmul.f32 %v7008, %v6966
        %v7012 = vmul.f32 %v7009, %v6967
        %v7013 = vmul.f32 %v7010, 1.442695
        %v7014 = vpow.pop %v7013
        %v7015 = vmul.f32 %v7011, 1.442695
        %v7016 = vpow.pop %v7015
        %v7017 = vmul.f32 %v7012, 1.442695
        %v7018 = vpow.pop %v7017
        %v7019 = vmul.f32 %v7004, %v7014
        %v7020 = vmul.f32 %v7005, %v7016
        %v7021 = vmul.f32 %v7006, %v7018
        %v7022 = vsub.f32 1.0, %v7019
        %v7023 = vsub.f32 1.0, %v7020
        %v7024 = vsub.f32 1.0, %v7021
        %v7025 = vmul.f32 %v6962, %v7022
        %v7026 = vmul.f32 %v6963, %v7023
        %v7027 = vmul.f32 %v6964, %v7024
        %v7028 = vadd.f32 %v7025, 1.0
        %v7029 = vadd.f32 %v7026, 1.0
        %v7030 = vadd.f32 %v7027, 1.0
        %v7031 = vmul.f32 %v6953, %v7028
        %v7032 = vmul.f32 %v6954, %v7029
        %v7033 = vmul.f32 %v6955, %v7030
        %v7034 = vpack.c.bf16 %v7032, %v7031
        %v7035 = vpack.c.bf16 %v7033, %v7033
        %v7052 = vunpack.c.l.b16 %v5070
        %v7053 = vunpack.c.l.b16 %v5071
        %v7054 = vunpack.c.l.b16 %v5072
        %v7055 = vunpack.c.l.b16 %v5073
        %v7056 = vunpack.c.l.b16 %v5074
        %v7057 = vunpack.c.l.b16 %v5075
        %v7058 = vunpack.c.l.b16 %v5076
        %v7059 = vunpack.c.l.b16 %v5077
        %v7060 = vunpack.c.l.b16 %v5078
        %v7061 = vunpack.c.l.b16 %v5079
        %v7062 = vunpack.c.l.b16 %v5080
        %v7063 = vunpack.c.l.b16 %v5081
        %v7064 = vunpack.c.l.b16 %v5082
        %v7065 = vunpack.c.l.b16 %v5083
        %v7066 = vunpack.c.l.b16 %v5084
        %v7067 = vunpack.c.l.b16 %v5085
        %v7068 = vpack.c.b16 %v7053, %v7052
        %v7069 = vpack.c.b16 %v7055, %v7054
        %v7070 = vpack.c.b16 %v7057, %v7056
        %v7071 = vpack.c.b16 %v7059, %v7058
        %v7072 = vpack.c.b16 %v7061, %v7060
        %v7073 = vpack.c.b16 %v7063, %v7062
        %v7074 = vpack.c.b16 %v7065, %v7064
        %v7075 = vpack.c.b16 %v7067, %v7066
        %7084 = vmatprep.subr.bf16.mxu0 0
        %7085 = vmatpush1.bf16.msra.mxu0 %v7075
        %7086 = vmatprep.subr.bf16.mxu0 0
        %7087 = vmatpush1.bf16.msra.mxu0 %v7074
        %7088 = vmatprep.subr.bf16.mxu0 0
        %7089 = vmatpush1.bf16.msra.mxu0 %v7073
        %7090 = vmatprep.subr.bf16.mxu0 0
        %7091 = vmatpush1.bf16.msra.mxu0 %v7072
        %7092 = vmatprep.subr.bf16.mxu0 0
        %7093 = vmatpush1.bf16.msra.mxu0 %v7071
        %7094 = vmatprep.subr.bf16.mxu0 0
        %7095 = vmatpush1.bf16.msra.mxu0 %v7070
        %7096 = vmatprep.subr.bf16.mxu0 0
        %7097 = vmatpush1.bf16.msra.mxu0 %v7069
        %7098 = vmatprep.subr.bf16.mxu0 0
        %7099 = vmatpush1.bf16.msra.mxu0 %v7068
        %7100 = vmatprep.subr.bf16.mxu0 0
        %7101 = vmatpush2.bf16.msra.mxu0 0
        %7102 = vmatprep.subr.bf16.mxu0 0
        %7103 = vmatpush2.bf16.msra.mxu0 0
        %7104 = vmatprep.subr.bf16.mxu0 0
        %7105 = vmatpush2.bf16.msra.mxu0 0
        %7106 = vmatprep.subr.bf16.mxu0 0
        %7107 = vmatpush2.bf16.msra.mxu0 0
        %7108 = vmatprep.subr.bf16.mxu0 0
        %7109 = vmatpush2.bf16.msra.mxu0 0
        %7110 = vmatprep.subr.bf16.mxu0 0
        %7111 = vmatpush2.bf16.msra.mxu0 0
        %7112 = vmatprep.subr.bf16.mxu0 0
        %7113 = vmatpush2.bf16.msra.mxu0 0
        %7114 = vmatprep.subr.bf16.mxu0 0
        %7115 = vmatpush2.bf16.msra.mxu0 0
        %7116 = vmatprep.mubr.bf16.mxu0 0
        %7117 = vmatmul.mubr.bf16.gmra.mxu0 %v7034
        %v7118 = vpop.f32.mrf.mxu0
        %v7119 = vadd.f32 0.0, %v7118
        %v7120 = vpop.f32.mrf.mxu0
        %v7121 = vpop.f32.mrf.mxu0
        %v7122 = vadd.f32 0.0, %v7121
        %v7123 = vpop.f32.mrf.mxu0
        %7124 = vmatprep.mubr.bf16.mxu0 0
        %7125 = vmatmul.mubr.bf16.gmra.mxu0 %v7035
        %v7126 = vpop.f32.mrf.mxu0
        %v7127 = vadd.f32 0.0, %v7126
        %v7128 = vpop.f32.mrf.mxu0
        %v7129 = vpop.f32.mrf.mxu0
        %v7130 = vpop.f32.mrf.mxu0
        %7131 = vdwg.mxu0
        %v7132 = vadd.f32 %v6831, %v7119
        %v7133 = vadd.f32 %v6832, %v7122
        %v7134 = vadd.f32 %v6833, %v7127
        %v7135 = vlaneseq
        %v7136 = vshrl.u32 %v7135, 7
        %v7137 = vsub.s32 3, %v7136
        %v7138 = vrot.slane %v5087, %v7137
        %v7139 = vadd.f32 %v7132, %v7138
        %v7140 = vadd.f32 %v7133, %v7138
        %v7141 = vadd.f32 %v7134, %v7138
        %v7145 = vcombine.high %v7139, %v7139
        %v7147 = vunpack.c.l.s4 1966171168
        %v7148 = vunpack.c.0.s8 %v7147
        %v7149 = vlaneseq
        %v7150 = vshrl.u32 %v7149, 7
        %v7151 = vsub.s32 %v7148, %v7150
        %v7152 = vrot.slane %v7139, %v7151
        %v7154 = vunpack.c.l.s4 1966171168
        %v7155 = vunpack.c.0.s8 %v7154
        %v7156 = vlaneseq
        %v7157 = vshrl.u32 %v7156, 7
        %v7158 = vsub.s32 %v7155, %v7157
        %v7159 = vrot.slane %v7145, %v7158
        %v7160 = vcombine.high %v7152, %v7152
        %v7161 = vcombine.high %v7159, %v7159
        %v7163 = vunpack.c.l.s4 1966171168
        %v7164 = vunpack.c.0.s8 %v7163
        %v7165 = vlaneseq
        %v7166 = vshrl.u32 %v7165, 7
        %v7167 = vsub.s32 %v7164, %v7166
        %v7168 = vrot.slane %v7152, %v7167
        %v7170 = vunpack.c.l.s4 1966171168
        %v7171 = vunpack.c.0.s8 %v7170
        %v7172 = vlaneseq
        %v7173 = vshrl.u32 %v7172, 7
        %v7174 = vsub.s32 %v7171, %v7173
        %v7175 = vrot.slane %v7159, %v7174
        %v7177 = vunpack.c.l.s4 1966171168
        %v7178 = vunpack.c.0.s8 %v7177
        %v7179 = vlaneseq
        %v7180 = vshrl.u32 %v7179, 7
        %v7181 = vsub.s32 %v7178, %v7180
        %v7182 = vrot.slane %v7160, %v7181
        %v7184 = vunpack.c.l.s4 1966171168
        %v7185 = vunpack.c.0.s8 %v7184
        %v7186 = vlaneseq
        %v7187 = vshrl.u32 %v7186, 7
        %v7188 = vsub.s32 %v7185, %v7187
        %v7189 = vrot.slane %v7161, %v7188
        %v7190 = vcombine.high %v7168, %v7168
        %v7191 = vcombine.high %v7175, %v7175
        %v7192 = vcombine.high %v7182, %v7182
        %v7193 = vcombine.high %v7189, %v7189
        %v7194 = vcombine.high %v7140, %v7140
        %v7196 = vunpack.c.l.s4 1966171168
        %v7197 = vunpack.c.0.s8 %v7196
        %v7198 = vlaneseq
        %v7199 = vshrl.u32 %v7198, 7
        %v7200 = vsub.s32 %v7197, %v7199
        %v7201 = vrot.slane %v7140, %v7200
        %v7203 = vunpack.c.l.s4 1966171168
        %v7204 = vunpack.c.0.s8 %v7203
        %v7205 = vlaneseq
        %v7206 = vshrl.u32 %v7205, 7
        %v7207 = vsub.s32 %v7204, %v7206
        %v7208 = vrot.slane %v7194, %v7207
        %v7209 = vcombine.high %v7201, %v7201
        %v7210 = vcombine.high %v7208, %v7208
        %v7212 = vunpack.c.l.s4 1966171168
        %v7213 = vunpack.c.0.s8 %v7212
        %v7214 = vlaneseq
        %v7215 = vshrl.u32 %v7214, 7
        %v7216 = vsub.s32 %v7213, %v7215
        %v7217 = vrot.slane %v7201, %v7216
        %v7219 = vunpack.c.l.s4 1966171168
        %v7220 = vunpack.c.0.s8 %v7219
        %v7221 = vlaneseq
        %v7222 = vshrl.u32 %v7221, 7
        %v7223 = vsub.s32 %v7220, %v7222
        %v7224 = vrot.slane %v7208, %v7223
        %v7226 = vunpack.c.l.s4 1966171168
        %v7227 = vunpack.c.0.s8 %v7226
        %v7228 = vlaneseq
        %v7229 = vshrl.u32 %v7228, 7
        %v7230 = vsub.s32 %v7227, %v7229
        %v7231 = vrot.slane %v7209, %v7230
        %v7233 = vunpack.c.l.s4 1966171168
        %v7234 = vunpack.c.0.s8 %v7233
        %v7235 = vlaneseq
        %v7236 = vshrl.u32 %v7235, 7
        %v7237 = vsub.s32 %v7234, %v7236
        %v7238 = vrot.slane %v7210, %v7237
        %v7239 = vcombine.high %v7217, %v7217
        %v7240 = vcombine.high %v7224, %v7224
        %v7241 = vcombine.high %v7231, %v7231
        %v7242 = vcombine.high %v7238, %v7238
        %v7244 = vunpack.c.l.s4 1966171168
        %v7245 = vunpack.c.0.s8 %v7244
        %v7246 = vlaneseq
        %v7247 = vshrl.u32 %v7246, 7
        %v7248 = vsub.s32 %v7245, %v7247
        %v7249 = vrot.slane %v7141, %v7248
        %v7250 = vcombine.high %v7249, %v7249
        %v7252 = vunpack.c.l.s4 1966171168
        %v7253 = vunpack.c.0.s8 %v7252
        %v7254 = vlaneseq
        %v7255 = vshrl.u32 %v7254, 7
        %v7256 = vsub.s32 %v7253, %v7255
        %v7257 = vrot.slane %v7249, %v7256
        %v7259 = vunpack.c.l.s4 1966171168
        %v7260 = vunpack.c.0.s8 %v7259
        %v7261 = vlaneseq
        %v7262 = vshrl.u32 %v7261, 7
        %v7263 = vsub.s32 %v7260, %v7262
        %v7264 = vrot.slane %v7250, %v7263
        %v7265 = vcombine.low %v7168, %v7182
        %v7266 = vcombine.low %v7190, %v7192
        %v7267 = vcombine.low %v7175, %v7189
        %v7268 = vcombine.low %v7191, %v7193
        %v7270 = vunpack.c.l.s4 1966171168
        %v7271 = vunpack.c.0.s8 %v7270
        %v7272 = vlaneseq
        %v7273 = vshrl.u32 %v7272, 7
        %v7274 = vsub.s32 %v7271, %v7273
        %v7275 = vrot.slane %v7265, %v7274
        %v7277 = vunpack.c.l.s4 1966171168
        %v7278 = vunpack.c.0.s8 %v7277
        %v7279 = vlaneseq
        %v7280 = vshrl.u32 %v7279, 7
        %v7281 = vsub.s32 %v7278, %v7280
        %v7282 = vrot.slane %v7266, %v7281
        %v7284 = vunpack.c.l.s4 1966171168
        %v7285 = vunpack.c.0.s8 %v7284
        %v7286 = vlaneseq
        %v7287 = vshrl.u32 %v7286, 7
        %v7288 = vsub.s32 %v7285, %v7287
        %v7289 = vrot.slane %v7267, %v7288
        %v7291 = vunpack.c.l.s4 1966171168
        %v7292 = vunpack.c.0.s8 %v7291
        %v7293 = vlaneseq
        %v7294 = vshrl.u32 %v7293, 7
        %v7295 = vsub.s32 %v7292, %v7294
        %v7296 = vrot.slane %v7268, %v7295
        %v7297 = vcombine.low %v7275, %v7282
        %v7298 = vcombine.low %v7289, %v7296
        %v7300 = vunpack.c.l.s4 1966171168
        %v7301 = vunpack.c.0.s8 %v7300
        %v7302 = vlaneseq
        %v7303 = vshrl.u32 %v7302, 7
        %v7304 = vsub.s32 %v7301, %v7303
        %v7305 = vrot.slane %v7297, %v7304
        %v7307 = vunpack.c.l.s4 1966171168
        %v7308 = vunpack.c.0.s8 %v7307
        %v7309 = vlaneseq
        %v7310 = vshrl.u32 %v7309, 7
        %v7311 = vsub.s32 %v7308, %v7310
        %v7312 = vrot.slane %v7298, %v7311
        %v7313 = vcombine.low %v7305, %v7312
        %v7315 = vunpack.c.l.s4 1966171168
        %v7316 = vunpack.c.0.s8 %v7315
        %v7317 = vlaneseq
        %v7318 = vshrl.u32 %v7317, 7
        %v7319 = vsub.s32 %v7316, %v7318
        %v7320 = vrot.slane %v7217, %v7319
        %v7322 = vunpack.c.l.s4 1966171168
        %v7323 = vunpack.c.0.s8 %v7322
        %v7324 = vlaneseq
        %v7325 = vshrl.u32 %v7324, 7
        %v7326 = vsub.s32 %v7323, %v7325
        %v7327 = vrot.slane %v7320, %v7326
        %v7328 = vcombine.low %v7231, %v7239
        %v7329 = vcombine.low %v7241, %v7224
        %v7330 = vcombine.low %v7238, %v7240
        %v7331 = vcombine.low %v7242, %v7257
        %v7333 = vunpack.c.l.s4 1966171168
        %v7334 = vunpack.c.0.s8 %v7333
        %v7335 = vlaneseq
        %v7336 = vshrl.u32 %v7335, 7
        %v7337 = vsub.s32 %v7334, %v7336
        %v7338 = vrot.slane %v7328, %v7337
        %v7340 = vunpack.c.l.s4 1966171168
        %v7341 = vunpack.c.0.s8 %v7340
        %v7342 = vlaneseq
        %v7343 = vshrl.u32 %v7342, 7
        %v7344 = vsub.s32 %v7341, %v7343
        %v7345 = vrot.slane %v7329, %v7344
        %v7347 = vunpack.c.l.s4 1966171168
        %v7348 = vunpack.c.0.s8 %v7347
        %v7349 = vlaneseq
        %v7350 = vshrl.u32 %v7349, 7
        %v7351 = vsub.s32 %v7348, %v7350
        %v7352 = vrot.slane %v7330, %v7351
        %v7354 = vunpack.c.l.s4 1966171168
        %v7355 = vunpack.c.0.s8 %v7354
        %v7356 = vlaneseq
        %v7357 = vshrl.u32 %v7356, 7
        %v7358 = vsub.s32 %v7355, %v7357
        %v7359 = vrot.slane %v7331, %v7358
        %v7360 = vcombine.low %v7338, %v7345
        %v7361 = vcombine.low %v7352, %v7359
        %v7363 = vunpack.c.l.s4 1966171168
        %v7364 = vunpack.c.0.s8 %v7363
        %v7365 = vlaneseq
        %v7366 = vshrl.u32 %v7365, 7
        %v7367 = vsub.s32 %v7364, %v7366
        %v7368 = vrot.slane %v7360, %v7367
        %v7370 = vunpack.c.l.s4 1966171168
        %v7371 = vunpack.c.0.s8 %v7370
        %v7372 = vlaneseq
        %v7373 = vshrl.u32 %v7372, 7
        %v7374 = vsub.s32 %v7371, %v7373
        %v7375 = vrot.slane %v7361, %v7374
        %v7376 = vcombine.low %v7368, %v7375
        %v7378 = vunpack.c.l.s4 1966171168
        %v7379 = vunpack.c.0.s8 %v7378
        %v7380 = vlaneseq
        %v7381 = vshrl.u32 %v7380, 7
        %v7382 = vsub.s32 %v7379, %v7381
        %v7383 = vrot.slane %v7264, %v7382
        %v7385 = vunpack.c.l.s4 1966171168
        %v7386 = vunpack.c.0.s8 %v7385
        %v7387 = vlaneseq
        %v7388 = vshrl.u32 %v7387, 7
        %v7389 = vsub.s32 %v7386, %v7388
        %v7390 = vrot.slane %v7383, %v7389
        %v7395 = vsel %vm2995, %v7313, 0.0
        %vm7396 = vcmask 253952
        %v7397 = vsel %vm7396, %v7327, 0.0
        %v7398 = vadd.f32 %v7395, %v7397
        %v7399 = vrot.slane %v7398, 4
        %v7400 = vadd.f32 %v7398, %v7399
        %v7401 = vrot.slane %v7400, 2
        %v7402 = vadd.f32 %v7400, %v7401
        %v7403 = vrot.slane %v7402, 1
        %v7404 = vadd.f32 %v7402, %v7403
        %v7405 = vsel %vm2995, %v7376, 0.0
        %v7406 = vsel %vm7396, %v7390, 0.0
        %v7407 = vadd.f32 %v7405, %v7406
        %v7408 = vrot.slane %v7407, 4
        %v7409 = vadd.f32 %v7407, %v7408
        %v7410 = vrot.slane %v7409, 2
        %v7411 = vadd.f32 %v7409, %v7410
        %v7412 = vrot.slane %v7411, 1
        %v7413 = vadd.f32 %v7411, %v7412
        %v7414 = vrcp.pop 9.0
        %v7415 = vmul.f32 %v7404, %v7414
        %v7416 = vmul.f32 %v7413, %v7414
        %s7417 = scalar_lea.vmem %s9, 2
        %v7418 = vld [vmem:[%s7417] sm:$0x3]
        %vm7421 = vcmask 1041409
        %v7422 = vsel %vm7421, %v7416, %v7415
        %v7424 = vsel %vm3002, %v7422, 0.0
        %7425 = vadd.xlane.f32.xlu0 %v7424
        %v7426 = vpop.xlane.xlu0 %7425
        %v7427 = vmul.f32 %v7426, %v3006
        %v7429 = vrot.slane %v7427, 1
        %v7432 = vsub.f32 %v7415, %v7427
        %v7433 = vsub.f32 %v7416, %v7429
        %v7434 = vmul.f32 %v7432, %v7432
        %v7435 = vmul.f32 %v7433, %v7433
        %v7438 = vrot.slane %v7435, 7
        %v7439 = vsel %vm7421, %v7438, %v7434
        %v7441 = vsel %vm3002, %v7439, 0.0
        %7442 = vadd.xlane.f32.xlu0 %v7441
        %v7443 = vpop.xlane.xlu0 %7442
        %v7444 = vmul.f32 %v7443, %v3006
        %v7445 = vadd.f32 %v7444, 1e-05
        %v7446 = vrsqrt.pop %v7445
        %v7448 = vrot.slane %v7446, 1
        %v7451 = vmul.f32 %v7432, %v7446
        %v7452 = vmul.f32 %v7433, %v7448
        %v7453 = vlaneseq
        %v7454 = vshrl.u32 %v7453, 7
        %v7455 = vsub.s32 0, %v7454
        %v7456 = vrot.slane %v7418, %v7455
        %v7457 = vmul.f32 %v7451, %v7456
        %v7458 = vmul.f32 %v7452, %v7456
        %v7459 = vlaneseq
        %v7460 = vshrl.u32 %v7459, 7
        %v7461 = vsub.s32 1, %v7460
        %v7462 = vrot.slane %v7418, %v7461
        %v7463 = vadd.f32 %v7457, %v7462
        %v7464 = vadd.f32 %v7458, %v7462
        %s7465 = scalar_lea.vmem %s10, 32
        %v7466 = vld [vmem:[%s7465] sm:$0xff]
        %v7467 = vld [vmem:[%s7465 + $0x8] sm:$0xff]
        %v7468 = vld [vmem:[%s7465 + $0x10] sm:$0xff]
        %v7469 = vld [vmem:[%s7465 + $0x18] sm:$0xff]
        %s7470 = scalar_lea.vmem %s11, 1
        %v7471 = vld [vmem:[%s7470] sm:$0x1]
        %v7473 = vlaneseq
        %v7474 = vshrl.u32 %v7473, 7
        %v7475 = vsub.s32 0, %v7474
        %v7476 = vrot.slane %v7471, %v7475
        %v7480 = vrot.slane %v7464, 7
        %v7481 = vsel %vm7421, %v7480, %v7463
        %v7482 = vsel %vm2995, %v7481, 0
        %7484 = vmatprep.subr.mxu0 0.0
        %7485 = vmatpush1.msra.mxu0 0.0
        %7486 = vmatprep.subr.mxu0 0.0
        %7487 = vmatpush1.msra.mxu0 0.0
        %7488 = vmatprep.subr.mxu0 0.0
        %7489 = vmatpush1.msra.mxu0 0.0
        %7490 = vmatprep.subr.mxu0 0.0
        %7491 = vmatpush1.msra.mxu0 0.0
        %7492 = vmatprep.subr.mxu0 0.0
        %7493 = vmatpush1.msra.mxu0 0.0
        %7494 = vmatprep.subr.mxu0 0.0
        %7495 = vmatpush1.msra.mxu0 0.0
        %7496 = vmatprep.subr.mxu0 0.0
        %7497 = vmatpush1.msra.mxu0 0.0
        %7498 = vmatprep.subr.mxu0 0.0
        %7499 = vmatpush1.msra.mxu0 0.0
        %7500 = vmatprep.subr.mxu0 0.0
        %7501 = vmatpush1.msra.mxu0 0.0
        %7502 = vmatprep.subr.mxu0 0.0
        %7503 = vmatpush1.msra.mxu0 0.0
        %7504 = vmatprep.subr.mxu0 0.0
        %7505 = vmatpush1.msra.mxu0 0.0
        %7506 = vmatprep.subr.mxu0 0.0
        %7507 = vmatpush1.msra.mxu0 0.0
        %7508 = vmatprep.subr.mxu0 0.0
        %7509 = vmatpush1.msra.mxu0 %v7469
        %7510 = vmatprep.subr.mxu0 0.0
        %7511 = vmatpush1.msra.mxu0 %v7468
        %7512 = vmatprep.subr.mxu0 0.0
        %7513 = vmatpush1.msra.mxu0 %v7467
        %7514 = vmatprep.subr.mxu0 0.0
        %7515 = vmatpush1.msra.mxu0 %v7466
        %7516 = vmatprep.subr.mxu0 0.0
        %7517 = vmatpush2.msra.mxu0 0.0
        %7518 = vmatprep.subr.mxu0 0.0
        %7519 = vmatpush2.msra.mxu0 0.0
        %7520 = vmatprep.subr.mxu0 0.0
        %7521 = vmatpush2.msra.mxu0 0.0
        %7522 = vmatprep.subr.mxu0 0.0
        %7523 = vmatpush2.msra.mxu0 0.0
        %7524 = vmatprep.subr.mxu0 0.0
        %7525 = vmatpush2.msra.mxu0 0.0
        %7526 = vmatprep.subr.mxu0 0.0
        %7527 = vmatpush2.msra.mxu0 0.0
        %7528 = vmatprep.subr.mxu0 0.0
        %7529 = vmatpush2.msra.mxu0 0.0
        %7530 = vmatprep.subr.mxu0 0.0
        %7531 = vmatpush2.msra.mxu0 0.0
        %7532 = vmatprep.subr.mxu0 0.0
        %7533 = vmatpush2.msra.mxu0 0.0
        %7534 = vmatprep.subr.mxu0 0.0
        %7535 = vmatpush2.msra.mxu0 0.0
        %7536 = vmatprep.subr.mxu0 0.0
        %7537 = vmatpush2.msra.mxu0 0.0
        %7538 = vmatprep.subr.mxu0 0.0
        %7539 = vmatpush2.msra.mxu0 0.0
        %7540 = vmatprep.subr.mxu0 0.0
        %7541 = vmatpush2.msra.mxu0 0.0
        %7542 = vmatprep.subr.mxu0 0.0
        %7543 = vmatpush2.msra.mxu0 0.0
        %7544 = vmatprep.subr.mxu0 0.0
        %7545 = vmatpush2.msra.mxu0 0.0
        %7546 = vmatprep.subr.mxu0 0.0
        %7547 = vmatpush2.msra.mxu0 0.0
        %7548 = vmatprep.mubr.f32.mxu0 0.0
        %7549 = vmatmul.mubr.f32.gmra.mxu0 %v7482
        %v7550 = vpop.f32.mrf.mxu0
        %v7551 = vadd.f32 %v7476, %v7550
        %v7552 = vpop.f32.mrf.mxu0
        %7553 = vdwg.mxu0
        %vm7554 = vcmask 1024
        %7555 = vst.msk [vmem:[%s391] sm:$0x3] %vm7554, %v7551
      $region76: #{tpu_custom_call.1} parent=67 // pred_fallthru
        _
      %p7556 = scmp.lt.s32.totalorder %s23, 1
      %s7557 = scalar_select %p7556, %s23, 1
      %s7558 = smul.addr %s7557, 2
      %s7559 = scalar_lea.vmem %s12, %s7558
      // Predicated region
      $region77: #{tpu_custom_call.1} parent=67 // pred_check
        %p7560 = pneg %p293
      $region78: #{tpu_custom_call.1} parent=67 // pred_check_branch
        %7562 = sbr.rel (%p7560) target = $region80
      $region79: #{tpu_custom_call.1} parent=67 // pred_region
        _
      $region80: #{tpu_custom_call.1} parent=67 // pred_fallthru
        _
    $region68: #{tpu_custom_call.1} parent=5 // pred_fallthru
      _
    %p7563 = scmp.le.s32.totalorder 2, %s18
    // Predicated region
    $region81: #{tpu_custom_call.1} parent=5 // pred_check
      %p7564 = pneg %p7563
    $region82: #{tpu_custom_call.1} parent=5 // pred_check_branch
      %7566 = sbr.rel (%p7564) target = $region84
    $region83: #{tpu_custom_call.1} parent=5 // pred_region
      %s7567 = ssub.s32 %s18, 2
      // Predicated region
      $region85: #{tpu_custom_call.1} parent=83 // pred_check
        %p7568 = pneg %p299
      $region86: #{tpu_custom_call.1} parent=83 // pred_check_branch
        %7570 = sbr.rel (%p7568) target = $region88
      $region87: #{tpu_custom_call.1} parent=83 // pred_region
        %p7571 = scmp.lt.s32.totalorder %s24, 1
        %s7572 = scalar_select %p7571, %s24, 1
        %s7573 = smul.addr %s7572, 2
        %s7574 = scalar_lea.vmem %s12, %s7573
      $region88: #{tpu_custom_call.1} parent=83 // pred_fallthru
        _
    $region84: #{tpu_custom_call.1} parent=5 // pred_fallthru
      _
  $region6: #{tpu_custom_call.1} parent=0 // loop_footer
    %s22 = sadd.s32 1, %s18
  $region7: #{tpu_custom_call.1} parent=0 // loop_footer_branch
    %17 = sbr.rel target = $region3
  $region8: #{tpu_custom_call.1} parent=0 // loop_exit
    _

</llo_original>
